<compile_context>
chip_gen: v7x
topology: tpu7x:2x2x1
jax: 0.10.0
libtpu: 0.0.40
codegen_flags: <defaults>
</compile_context>

<pallas_src>
import math

import jax
import jax.numpy as jnp
from jax.experimental import pallas as pl
from jax.experimental.pallas import tpu as pltpu

# ---------------------------------------------------------------------------
# Model configuration (small, but shape-consistent with an SD3-style MMDiT)
# ---------------------------------------------------------------------------
B = 2              # batch
C_IN = 4           # latent channels in
OUT_C = 4          # latent channels out
H = W = 16         # latent spatial size
PATCH = 2          # patch size
GRID_H = H // PATCH
GRID_W = W // PATCH
N_IMG = GRID_H * GRID_W          # image tokens (64)
T_TXT = 8                        # prompt sequence length
JOINT_DIM = 32                   # prompt_embeds feature dim
POOLED_DIM = 32                  # pooled_prompt_embeds dim
HEADS = 4
HEAD_DIM = 16
INNER = HEADS * HEAD_DIM         # 64
TIME_SIN_DIM = 256
FF_DIM = 4 * INNER               # 256
N_LAYERS = 2
LN_EPS = 1e-6
T_ALL = N_IMG + T_TXT            # 72 joint tokens
PATCH_DIM = C_IN * PATCH * PATCH         # 16
OUT_PATCH_DIM = PATCH * PATCH * OUT_C    # 16

LANE = 128                        # TPU lane width; stride of fused-matmul chunks
N_MOD = 12                        # 6 adaLN chunks x 2 streams per layer
N_ROW_GROUPS = N_IMG // 8         # 8 token groups -> (8,128) lane-dense output slab

MXU_DTYPE = jnp.bfloat16          # MXU operand dtype; accumulation & elementwise stay f32

_INPUT_NAMES = ("x_patches", "prompt", "silu_t")
_WEIGHT_NAMES = (
    "patch_w", "pos_bias",
    "ctx_w", "ctx_b",
    "mod_w", "mod_b",
    "qkv_w", "qkv_b", "qkn_w",
    "attn_out_w", "attn_out_b",
    "ff1_w", "ff1_b", "ff2_w", "ff2_b",
    "nout_w", "nout_b",
    "proj_w", "proj_b",
)


# ---------------------------------------------------------------------------
# In-kernel helpers (traced inside the fused kernel)
# ---------------------------------------------------------------------------
def _dense(x, w, b):
    """y = x @ w + b; x cast to bf16, w already bf16, f32 accumulation & bias."""
    y = jnp.dot(x.astype(MXU_DTYPE), w, preferred_element_type=jnp.float32)
    return y + b


def _layernorm_mod(x, scale, shift):
    """AdaLN: LayerNorm (no affine) followed by (1+scale)*x + shift (all f32 stats)."""
    mu = jnp.mean(x, axis=-1, keepdims=True)
    var = jnp.mean(jnp.square(x - mu), axis=-1, keepdims=True)
    xn = (x - mu) * jax.lax.rsqrt(var + LN_EPS)
    return xn * (1.0 + scale) + shift


# ---------------------------------------------------------------------------
# The fused MMDiT kernel (one grid step == one batch element)
# ---------------------------------------------------------------------------
def _mmdit_kernel(*args):
    names = _INPUT_NAMES + _WEIGHT_NAMES
    refs = dict(zip(names, args[: len(names)]))
    o_ref = args[len(names)]

    # ---- per-batch input slice (leading block dim of size 1 squeezed by [0]) ----
    x_p = refs["x_patches"][0]          # (N_IMG, PATCH_DIM)
    prm = refs["prompt"][0]             # (T_TXT, JOINT_DIM)
    silu_t = refs["silu_t"][0]          # (1, INNER)  (silu(time+pooled emb), from wrapper)

    # ---- patch embed (+ pos embed + patch bias folded into one resident add) ----
    x = _dense(x_p, refs["patch_w"][...], refs["pos_bias"][...])     # (N_IMG, INNER)

    # ---- context embedder ----
    ctx = _dense(prm, refs["ctx_w"][...], refs["ctx_b"][...])        # (T_TXT, INNER)

    # Per-head lane masks: head split done with masking + summation so no
    # sub-128 unaligned lane slicing is needed inside the attention loop.
    lane_idx = jax.lax.broadcasted_iota(jnp.int32, (1, INNER), 1)
    head_masks = [
        jnp.logical_and(lane_idx >= h * HEAD_DIM,
                        lane_idx < (h + 1) * HEAD_DIM).astype(jnp.float32)
        for h in range(HEADS)
    ]
    attn_scale = 1.0 / math.sqrt(HEAD_DIM)

    for l in range(N_LAYERS):
        # ---- fused adaLN-Zero modulation: ONE matmul for all 12 chunks of both streams.
        # Each chunk occupies its own 128-lane slot -> 128-aligned extraction slices.
        mods = _dense(silu_t, refs["mod_w"][l], refs["mod_b"][l])    # (1, 12*128)

        def chunk(c, _m=mods):
            return _m[:, c * LANE: c * LANE + INNER]                  # (1, INNER)

        sh_msa, sc_msa, g_msa, sh_mlp, sc_mlp, g_mlp = [chunk(c) for c in range(6)]
        csh_msa, csc_msa, cg_msa, csh_mlp, csc_mlp, cg_mlp = [chunk(6 + c) for c in range(6)]

        x_n = _layernorm_mod(x, sc_msa, sh_msa)        # (N_IMG, INNER)
        c_n = _layernorm_mod(ctx, csc_msa, csh_msa)    # (T_TXT, INNER)

        # ---- fused joint q/k/v: one matmul per stream, q/k/v at 128-aligned lane slots ----
        qkv_x = _dense(x_n, refs["qkv_w"][l, 0], refs["qkv_b"][l, 0])   # (N_IMG, 3*128)
        qkv_c = _dense(c_n, refs["qkv_w"][l, 1], refs["qkv_b"][l, 1])   # (T_TXT, 3*128)
        qkv = jnp.concatenate([qkv_x, qkv_c], axis=0)                   # (T_ALL, 3*128)
        q = qkv[:, 0:INNER]
        k = qkv[:, LANE:LANE + INNER]
        v = qkv[:, 2 * LANE:2 * LANE + INNER]

        qn = refs["qkn_w"][l, 0]        # (1, INNER): per-head rms weight tiled across heads
        kn = refs["qkn_w"][l, 1]
        # TODO(synk): diffusers SD3.5 uses separate norm_added_q/norm_added_k weights for
        # the context q/k projections; one shared per-block rms weight is applied to the
        # joint (image+context) q/k here.

        # ---- multi-head joint attention with RMS qk-norm (head split via lane masks) ----
        attn = jnp.zeros((T_ALL, INNER), jnp.float32)
        for m in head_masks:
            qm = q * m
            km = k * m
            vm = v * m
            q_h = qm * jax.lax.rsqrt(
                jnp.sum(qm * qm, axis=-1, keepdims=True) * (1.0 / HEAD_DIM) + LN_EPS) * qn
            k_h = km * jax.lax.rsqrt(
                jnp.sum(km * km, axis=-1, keepdims=True) * (1.0 / HEAD_DIM) + LN_EPS) * kn
            s = jax.lax.dot_general(
                q_h.astype(MXU_DTYPE), k_h.astype(MXU_DTYPE),
                (((1,), (1,)), ((), ())),
                preferred_element_type=jnp.float32) * attn_scale       # (T_ALL, T_ALL)
            s = s - jnp.max(s, axis=-1, keepdims=True)
            p = jnp.exp(s)
            # softmax denominator on the EUP (approx reciprocal) instead of a VALU divide
            p = p * pl.reciprocal(jnp.sum(p, axis=-1, keepdims=True), approx=True)
            # vm is zero outside this head's 16 lanes -> the sum assembles all heads.
            attn = attn + jnp.dot(p.astype(MXU_DTYPE), vm.astype(MXU_DTYPE),
                                  preferred_element_type=jnp.float32)

        x_attn = _dense(attn[:N_IMG, :], refs["attn_out_w"][l, 0], refs["attn_out_b"][l, 0])
        c_attn = _dense(attn[N_IMG:, :], refs["attn_out_w"][l, 1], refs["attn_out_b"][l, 1])

        # ---- residuals + gated MLPs (all fused in-VMEM) ----
        x = x + g_msa * x_attn
        x_n2 = _layernorm_mod(x, sc_mlp, sh_mlp)
        h1 = _dense(x_n2, refs["ff1_w"][l, 0], refs["ff1_b"][l, 0])
        h1 = jax.nn.gelu(h1, approximate=True)
        x = x + g_mlp * _dense(h1, refs["ff2_w"][l, 0], refs["ff2_b"][l, 0])

        ctx = ctx + cg_msa * c_attn
        c_n2 = _layernorm_mod(ctx, csc_mlp, csh_mlp)
        hc = _dense(c_n2, refs["ff1_w"][l, 1], refs["ff1_b"][l, 1])
        hc = jax.nn.gelu(hc, approximate=True)
        ctx = ctx + cg_mlp * _dense(hc, refs["ff2_w"][l, 1], refs["ff2_b"][l, 1])
        # TODO(synk): real SD3 uses context_pre_only (no context out-proj/FF) in the final
        # block; all joint blocks are treated uniformly here.

    # ---- final AdaLayerNormContinuous (fused scale/shift matmul, 128-aligned slots) ----
    nout = _dense(silu_t, refs["nout_w"][...], refs["nout_b"][...])     # (1, 2*128)
    scale_o = nout[:, 0:INNER]
    shift_o = nout[:, LANE:LANE + INNER]
    x = _layernorm_mod(x, scale_o, shift_o)

    # ---- lane-dense proj_out: each group of 8 tokens is projected straight into its own
    # 16-lane slot of an (8, 128) slab via placement-expanded weights -> one full f32 vreg,
    # single unmasked store.  The tiny un-permute happens in the JAX wrapper.
    slab = jnp.zeros((N_ROW_GROUPS, LANE), jnp.float32)
    for j in range(N_ROW_GROUPS):
        xj = x[j * 8:(j + 1) * 8, :].astype(MXU_DTYPE)                  # (8, INNER)
        slab = slab + jnp.dot(xj, refs["proj_w"][j],
                              preferred_element_type=jnp.float32)       # (8, 128)
    o_ref[0] = (slab + refs["proj_b"][...]).astype(o_ref.dtype)


# ---------------------------------------------------------------------------
# pallas_call wrapper: grid over batch ("parallel" for v7x megacore), weights
# as full-VMEM blocks with constant index maps (fetched once, kept resident).
# TODO(synk): at real SD3.5 dims the resident-weight design exceeds v7x's 64 MiB/TC VMEM;
# a per-layer grid axis / emit_pipeline over layer weight slabs would be needed there.
# ---------------------------------------------------------------------------
def _mmdit_pallas(x_patches, prompt, silu_t, flat_weights):
    b = x_patches.shape[0]
    batch_inputs = (x_patches, prompt, silu_t)

    def batch_spec(a):
        nd = a.ndim
        return pl.BlockSpec((1,) + a.shape[1:], lambda i, _n=nd: (i,) + (0,) * (_n - 1))

    def weight_spec(a):
        nd = a.ndim
        return pl.BlockSpec(a.shape, lambda i, _n=nd: (0,) * _n)

    in_specs = [batch_spec(a) for a in batch_inputs] + [weight_spec(a) for a in flat_weights]

    return pl.pallas_call(
        _mmdit_kernel,
        out_shape=jax.ShapeDtypeStruct((b, N_ROW_GROUPS, LANE), jnp.float32),
        grid=(b,),
        in_specs=in_specs,
        out_specs=pl.BlockSpec((1, N_ROW_GROUPS, LANE), lambda i: (i, 0, 0)),
        compiler_params=pltpu.CompilerParams(dimension_semantics=("parallel",)),
    )(*batch_inputs, *flat_weights)


# ---------------------------------------------------------------------------
# Glue (pure JAX): sinusoidal table, timestep/pooled MLP, patchify / unpatchify
# ---------------------------------------------------------------------------
def sinusoidal_timestep_embedding(timesteps, dim):
    # diffusers get_timestep_embedding: flip_sin_to_cos=True, downscale_freq_shift=0
    half = dim // 2
    exponent = -math.log(10000.0) * jnp.arange(half, dtype=jnp.float32) / half
    freqs = jnp.exp(exponent)
    args = timesteps.astype(jnp.float32)[:, None] * freqs[None, :]
    return jnp.concatenate([jnp.cos(args), jnp.sin(args)], axis=-1)


def mmdit_forward(params, latent, timestep, prompt_embeds, pooled):
    b, c, h, w = latent.shape
    gh, gw = h // PATCH, w // PATCH

    # patchify: NCHW -> (B, tokens, C*P*P)  (pure layout work kept outside the kernel)
    x = latent.reshape(b, c, gh, PATCH, gw, PATCH)
    x = jnp.transpose(x, (0, 2, 4, 1, 3, 5)).reshape(b, gh * gw, c * PATCH * PATCH)

    # combined timestep + pooled text embedding (tiny single-row MLPs -> do in XLA,
    # pass only the silu'd conditioning vector to the kernel)
    t_sin = sinusoidal_timestep_embedding(timestep, TIME_SIN_DIM)      # (B, 256)

    def mlp(y, w1, b1, w2, b2):
        hdn = y @ w1 + b1
        hdn = hdn * jax.nn.sigmoid(hdn)
        return hdn @ w2 + b2

    temb = (mlp(t_sin, params["t1_w"], params["t1_b"], params["t2_w"], params["t2_b"])
            + mlp(pooled, params["p1_w"], params["p1_b"], params["p2_w"], params["p2_b"]))
    silu_t = (temb * jax.nn.sigmoid(temb)).reshape(b, 1, INNER)

    flat_weights = [params[n] for n in _WEIGHT_NAMES]
    slab = _mmdit_pallas(x, prompt_embeds, silu_t, flat_weights)        # (B, 8, 128)

    # un-permute the lane-dense slab: slab[b, r, j*16+c] = token (j*8 + r), patch value c
    out = slab.reshape(b, N_ROW_GROUPS, N_IMG // N_ROW_GROUPS, OUT_PATCH_DIM)
    out = jnp.transpose(out, (0, 2, 1, 3)).reshape(b, N_IMG, OUT_PATCH_DIM)

    # unpatchify back to NCHW
    out = out.reshape(b, gh, gw, PATCH, PATCH, OUT_C)
    out = jnp.einsum("nhwpqc->nchpwq", out)
    return out.reshape(b, OUT_C, h, w)


def stable_diffusion_wrapper_forward(params, latent_model_input, timestep,
                                     prompt_embeds, pooled_prompt_embeds):
    return mmdit_forward(params, latent_model_input, timestep,
                         prompt_embeds, pooled_prompt_embeds)


# ---------------------------------------------------------------------------
# Deterministic parameter initialization (MXU-facing weights stored as bf16,
# fused/padded layouts built here so the kernel sees lane-aligned chunks)
# ---------------------------------------------------------------------------
def init_params(key):
    keys = iter(jax.random.split(key, 128))

    def w(*shape, s=0.02):
        return jax.random.normal(next(keys), shape, jnp.float32) * s

    def zeros(*shape):
        return jnp.zeros(shape, jnp.float32)

    def fuse_lanes(mats):
        """Place each (K, n<=128) chunk matrix in its own 128-lane slot (zero pad)."""
        return jnp.concatenate(
            [jnp.pad(m, ((0, 0), (0, LANE - m.shape[-1]))) for m in mats], axis=-1)

    bf16 = jnp.bfloat16
    L = N_LAYERS

    # fused adaLN-Zero modulation: per layer, 12 chunks
    # (image: shift/scale/gate msa, shift/scale/gate mlp; then the same 6 for context)
    mod_w = jnp.stack([fuse_lanes([w(INNER, INNER) for _ in range(N_MOD)])
                       for _ in range(L)]).astype(bf16)                 # (L, INNER, 12*128)
    mod_b = zeros(L, 1, N_MOD * LANE)

    # fused q/k/v: per layer, per stream (0=image, 1=context); q/k/v at lane slots 0/128/256
    qkv_w = jnp.stack([
        jnp.stack([fuse_lanes([w(INNER, INNER) for _ in range(3)]) for _ in range(2)])
        for _ in range(L)]).astype(bf16)                                # (L, 2, INNER, 3*128)
    qkv_b = zeros(L, 2, 1, 3 * LANE)

    qkn_w = jnp.ones((L, 2, 1, INNER), jnp.float32)                     # rms q/k-norm weights

    attn_out_w = w(L, 2, INNER, INNER).astype(bf16)
    attn_out_b = zeros(L, 2, 1, INNER)
    ff1_w = w(L, 2, INNER, FF_DIM).astype(bf16)
    ff1_b = zeros(L, 2, 1, FF_DIM)
    ff2_w = w(L, 2, FF_DIM, INNER).astype(bf16)
    ff2_b = zeros(L, 2, 1, INNER)

    # final AdaLayerNormContinuous: scale at lanes [0,64), shift at [128,192)
    nout_w = fuse_lanes([w(INNER, INNER), w(INNER, INNER)]).astype(bf16)  # (INNER, 2*128)
    nout_b = zeros(1, 2 * LANE)

    # proj_out expanded so 8-token row groups land directly in a lane-dense (8,128) slab
    proj_base = w(INNER, OUT_PATCH_DIM)
    proj_w = jnp.stack(
        [jnp.pad(proj_base,
                 ((0, 0), (j * OUT_PATCH_DIM, LANE - (j + 1) * OUT_PATCH_DIM)))
         for j in range(N_ROW_GROUPS)]).astype(bf16)                    # (8, INNER, 128)
    proj_b = zeros(1, LANE)            # group-tiled proj_out bias (zero at init)

    return dict(
        # kernel-resident weights
        patch_w=w(PATCH_DIM, INNER).astype(bf16),
        pos_bias=w(N_IMG, INNER),                       # pos_embed (+ patch bias, zero here)
        ctx_w=w(JOINT_DIM, INNER).astype(bf16), ctx_b=zeros(1, INNER),
        mod_w=mod_w, mod_b=mod_b,
        qkv_w=qkv_w, qkv_b=qkv_b, qkn_w=qkn_w,
        attn_out_w=attn_out_w, attn_out_b=attn_out_b,
        ff1_w=ff1_w, ff1_b=ff1_b, ff2_w=ff2_w, ff2_b=ff2_b,
        nout_w=nout_w, nout_b=nout_b,
        proj_w=proj_w, proj_b=proj_b,
        # timestep / pooled-text embedding MLPs (evaluated in the XLA wrapper)
        t1_w=w(TIME_SIN_DIM, INNER), t1_b=zeros(1, INNER),
        t2_w=w(INNER, INNER), t2_b=zeros(1, INNER),
        p1_w=w(POOLED_DIM, INNER), p1_b=zeros(1, INNER),
        p2_w=w(INNER, INNER), p2_b=zeros(1, INNER),
    )


if __name__ == "__main__":
    root = jax.random.PRNGKey(0)
    k_param, k_lat, k_t, k_prm, k_pool = jax.random.split(root, 5)

    params = init_params(k_param)

    latent_model_input = jax.random.normal(k_lat, (B, C_IN, H, W), jnp.float32)
    timestep = jax.random.uniform(k_t, (B,), jnp.float32, 0.0, 1000.0)
    prompt_embeds = jax.random.normal(k_prm, (B, T_TXT, JOINT_DIM), jnp.float32)
    pooled_prompt_embeds = jax.random.normal(k_pool, (B, POOLED_DIM), jnp.float32)

    fwd = jax.jit(stable_diffusion_wrapper_forward)
    noise_pred = fwd(params, latent_model_input, timestep, prompt_embeds, pooled_prompt_embeds)
    noise_pred = jax.block_until_ready(noise_pred)

    assert noise_pred.shape == (B, OUT_C, H, W), noise_pred.shape
    assert noise_pred.dtype == jnp.float32
    assert bool(jnp.all(jnp.isfinite(noise_pred)))
    print("KERNEL_OK")
</pallas_src>

<mosaic_0001>
module attributes {stable_mosaic.version = 11 : i64} {
  func.func @_mmdit_kernel(%arg0: i32, %arg1: memref<1x64x16xf32, #tpu.memory_space<vmem>>, %arg2: memref<1x8x32xf32, #tpu.memory_space<vmem>>, %arg3: memref<1x1x64xf32, #tpu.memory_space<vmem>>, %arg4: memref<16x64xbf16, #tpu.memory_space<vmem>>, %arg5: memref<64x64xf32, #tpu.memory_space<vmem>>, %arg6: memref<32x64xbf16, #tpu.memory_space<vmem>>, %arg7: memref<1x64xf32, #tpu.memory_space<vmem>>, %arg8: memref<2x64x1536xbf16, #tpu.memory_space<vmem>>, %arg9: memref<2x1x1536xf32, #tpu.memory_space<vmem>>, %arg10: memref<2x2x64x384xbf16, #tpu.memory_space<vmem>>, %arg11: memref<2x2x1x384xf32, #tpu.memory_space<vmem>>, %arg12: memref<2x2x1x64xf32, #tpu.memory_space<vmem>>, %arg13: memref<2x2x64x64xbf16, #tpu.memory_space<vmem>>, %arg14: memref<2x2x1x64xf32, #tpu.memory_space<vmem>>, %arg15: memref<2x2x64x256xbf16, #tpu.memory_space<vmem>>, %arg16: memref<2x2x1x256xf32, #tpu.memory_space<vmem>>, %arg17: memref<2x2x256x64xbf16, #tpu.memory_space<vmem>>, %arg18: memref<2x2x1x64xf32, #tpu.memory_space<vmem>>, %arg19: memref<64x256xbf16, #tpu.memory_space<vmem>>, %arg20: memref<1x256xf32, #tpu.memory_space<vmem>>, %arg21: memref<8x64x128xbf16, #tpu.memory_space<vmem>>, %arg22: memref<1x128xf32, #tpu.memory_space<vmem>>, %arg23: memref<1x8x128xf32, #tpu.memory_space<vmem>>) attributes {dimension_semantics = [#tpu.dimension_semantics<parallel>], iteration_bounds = array<i64: 2>, scalar_prefetch = 0 : i64, scratch_operands = 0 : i64, tpu.core_type = #tpu.core_type<tc>, window_params = [{transform_indices = @transform_0, window_bounds = array<i64: 1, 64, 16>}, {transform_indices = @transform_1, window_bounds = array<i64: 1, 8, 32>}, {transform_indices = @transform_2, window_bounds = array<i64: 1, 1, 64>}, {pipeline_mode = #tpu.pipeline_mode<synchronous>, transform_indices = @transform_3, window_bounds = array<i64: 16, 64>}, {pipeline_mode = #tpu.pipeline_mode<synchronous>, transform_indices = @transform_4, window_bounds = array<i64: 64, 64>}, {pipeline_mode = #tpu.pipeline_mode<synchronous>, transform_indices = @transform_5, window_bounds = array<i64: 32, 64>}, {pipeline_mode = #tpu.pipeline_mode<synchronous>, transform_indices = @transform_6, window_bounds = array<i64: 1, 64>}, {pipeline_mode = #tpu.pipeline_mode<synchronous>, transform_indices = @transform_7, window_bounds = array<i64: 2, 64, 1536>}, {pipeline_mode = #tpu.pipeline_mode<synchronous>, transform_indices = @transform_8, window_bounds = array<i64: 2, 1, 1536>}, {pipeline_mode = #tpu.pipeline_mode<synchronous>, transform_indices = @transform_9, window_bounds = array<i64: 2, 2, 64, 384>}, {pipeline_mode = #tpu.pipeline_mode<synchronous>, transform_indices = @transform_10, window_bounds = array<i64: 2, 2, 1, 384>}, {pipeline_mode = #tpu.pipeline_mode<synchronous>, transform_indices = @transform_11, window_bounds = array<i64: 2, 2, 1, 64>}, {pipeline_mode = #tpu.pipeline_mode<synchronous>, transform_indices = @transform_12, window_bounds = array<i64: 2, 2, 64, 64>}, {pipeline_mode = #tpu.pipeline_mode<synchronous>, transform_indices = @transform_13, window_bounds = array<i64: 2, 2, 1, 64>}, {pipeline_mode = #tpu.pipeline_mode<synchronous>, transform_indices = @transform_14, window_bounds = array<i64: 2, 2, 64, 256>}, {pipeline_mode = #tpu.pipeline_mode<synchronous>, transform_indices = @transform_15, window_bounds = array<i64: 2, 2, 1, 256>}, {pipeline_mode = #tpu.pipeline_mode<synchronous>, transform_indices = @transform_16, window_bounds = array<i64: 2, 2, 256, 64>}, {pipeline_mode = #tpu.pipeline_mode<synchronous>, transform_indices = @transform_17, window_bounds = array<i64: 2, 2, 1, 64>}, {pipeline_mode = #tpu.pipeline_mode<synchronous>, transform_indices = @transform_18, window_bounds = array<i64: 64, 256>}, {pipeline_mode = #tpu.pipeline_mode<synchronous>, transform_indices = @transform_19, window_bounds = array<i64: 1, 256>}, {pipeline_mode = #tpu.pipeline_mode<synchronous>, transform_indices = @transform_20, window_bounds = array<i64: 8, 64, 128>}, {pipeline_mode = #tpu.pipeline_mode<synchronous>, transform_indices = @transform_21, window_bounds = array<i64: 1, 128>}, {transform_indices = @transform_22, window_bounds = array<i64: 1, 8, 128>}]} {
    %c0 = arith.constant 0 : index
    %c0_0 = arith.constant 0 : index
    %c0_1 = arith.constant 0 : index
    %0 = vector.load %arg1[%c0, %c0_0, %c0_1] : memref<1x64x16xf32, #tpu.memory_space<vmem>>, vector<1x64x16xf32>
    %1 = vector.shape_cast %0 : vector<1x64x16xf32> to vector<64x16xf32>
    %c0_2 = arith.constant 0 : index
    %c0_3 = arith.constant 0 : index
    %c0_4 = arith.constant 0 : index
    %2 = vector.load %arg2[%c0_2, %c0_3, %c0_4] : memref<1x8x32xf32, #tpu.memory_space<vmem>>, vector<1x8x32xf32>
    %3 = vector.shape_cast %2 : vector<1x8x32xf32> to vector<8x32xf32>
    %c0_5 = arith.constant 0 : index
    %c0_6 = arith.constant 0 : index
    %c0_7 = arith.constant 0 : index
    %4 = vector.load %arg3[%c0_5, %c0_6, %c0_7] : memref<1x1x64xf32, #tpu.memory_space<vmem>>, vector<1x1x64xf32>
    %5 = vector.shape_cast %4 : vector<1x1x64xf32> to vector<1x64xf32>
    %c0_8 = arith.constant 0 : index
    %c0_9 = arith.constant 0 : index
    %6 = vector.load %arg4[%c0_8, %c0_9] : memref<16x64xbf16, #tpu.memory_space<vmem>>, vector<16x64xbf16>
    %c0_10 = arith.constant 0 : index
    %c0_11 = arith.constant 0 : index
    %7 = vector.load %arg5[%c0_10, %c0_11] : memref<64x64xf32, #tpu.memory_space<vmem>>, vector<64x64xf32>
    %8 = arith.truncf %1 : vector<64x16xf32> to vector<64x16xbf16>
    %cst = arith.constant dense<0.000000e+00> : vector<64x64xf32>
    %9 = tpu.matmul %8, %6, %cst {dimension_numbers = #tpu.dot_dimension_numbers<[1], [0], [0], [1], [0, 0, 1, 1], [], []>} : vector<64x16xbf16>, vector<16x64xbf16>, vector<64x64xf32> -> vector<64x64xf32>
    %10 = arith.addf %9, %7 : vector<64x64xf32>
    %c0_12 = arith.constant 0 : index
    %c0_13 = arith.constant 0 : index
    %11 = vector.load %arg6[%c0_12, %c0_13] : memref<32x64xbf16, #tpu.memory_space<vmem>>, vector<32x64xbf16>
    %c0_14 = arith.constant 0 : index
    %c0_15 = arith.constant 0 : index
    %12 = vector.load %arg7[%c0_14, %c0_15] : memref<1x64xf32, #tpu.memory_space<vmem>>, vector<1x64xf32>
    %13 = arith.truncf %3 : vector<8x32xf32> to vector<8x32xbf16>
    %cst_16 = arith.constant dense<0.000000e+00> : vector<8x64xf32>
    %14 = tpu.matmul %13, %11, %cst_16 {dimension_numbers = #tpu.dot_dimension_numbers<[1], [0], [0], [1], [0, 0, 1, 1], [], []>} : vector<8x32xbf16>, vector<32x64xbf16>, vector<8x64xf32> -> vector<8x64xf32>
    %15 = vector.broadcast %12 : vector<1x64xf32> to vector<8x64xf32>
    %16 = arith.addf %14, %15 : vector<8x64xf32>
    %17 = tpu.iota {dimensions = array<i32: 1>} : vector<1x64xi32>
    %c0_i32 = arith.constant 0 : i32
    %18 = vector.broadcast %c0_i32 : i32 to vector<1x64xi32>
    %19 = arith.cmpi sge, %17, %18 : vector<1x64xi32>
    %c16_i32 = arith.constant 16 : i32
    %20 = vector.broadcast %c16_i32 : i32 to vector<1x64xi32>
    %21 = arith.cmpi slt, %17, %20 : vector<1x64xi32>
    %22 = arith.andi %19, %21 : vector<1x64xi1>
    %23 = arith.extui %22 : vector<1x64xi1> to vector<1x64xi32>
    %24 = arith.sitofp %23 : vector<1x64xi32> to vector<1x64xf32>
    %c16_i32_17 = arith.constant 16 : i32
    %25 = vector.broadcast %c16_i32_17 : i32 to vector<1x64xi32>
    %26 = arith.cmpi sge, %17, %25 : vector<1x64xi32>
    %c32_i32 = arith.constant 32 : i32
    %27 = vector.broadcast %c32_i32 : i32 to vector<1x64xi32>
    %28 = arith.cmpi slt, %17, %27 : vector<1x64xi32>
    %29 = arith.andi %26, %28 : vector<1x64xi1>
    %30 = arith.extui %29 : vector<1x64xi1> to vector<1x64xi32>
    %31 = arith.sitofp %30 : vector<1x64xi32> to vector<1x64xf32>
    %c32_i32_18 = arith.constant 32 : i32
    %32 = vector.broadcast %c32_i32_18 : i32 to vector<1x64xi32>
    %33 = arith.cmpi sge, %17, %32 : vector<1x64xi32>
    %c48_i32 = arith.constant 48 : i32
    %34 = vector.broadcast %c48_i32 : i32 to vector<1x64xi32>
    %35 = arith.cmpi slt, %17, %34 : vector<1x64xi32>
    %36 = arith.andi %33, %35 : vector<1x64xi1>
    %37 = arith.extui %36 : vector<1x64xi1> to vector<1x64xi32>
    %38 = arith.sitofp %37 : vector<1x64xi32> to vector<1x64xf32>
    %c48_i32_19 = arith.constant 48 : i32
    %39 = vector.broadcast %c48_i32_19 : i32 to vector<1x64xi32>
    %40 = arith.cmpi sge, %17, %39 : vector<1x64xi32>
    %c64_i32 = arith.constant 64 : i32
    %41 = vector.broadcast %c64_i32 : i32 to vector<1x64xi32>
    %42 = arith.cmpi slt, %17, %41 : vector<1x64xi32>
    %43 = arith.andi %40, %42 : vector<1x64xi1>
    %44 = arith.extui %43 : vector<1x64xi1> to vector<1x64xi32>
    %45 = arith.sitofp %44 : vector<1x64xi32> to vector<1x64xf32>
    %c0_20 = arith.constant 0 : index
    %c0_21 = arith.constant 0 : index
    %c0_22 = arith.constant 0 : index
    %46 = vector.load %arg8[%c0_20, %c0_21, %c0_22] : memref<2x64x1536xbf16, #tpu.memory_space<vmem>>, vector<1x64x1536xbf16>
    %47 = vector.shape_cast %46 : vector<1x64x1536xbf16> to vector<64x1536xbf16>
    %c0_23 = arith.constant 0 : index
    %c0_24 = arith.constant 0 : index
    %c0_25 = arith.constant 0 : index
    %48 = vector.load %arg9[%c0_23, %c0_24, %c0_25] : memref<2x1x1536xf32, #tpu.memory_space<vmem>>, vector<1x1x1536xf32>
    %49 = vector.shape_cast %48 : vector<1x1x1536xf32> to vector<1x1536xf32>
    %50 = arith.truncf %5 : vector<1x64xf32> to vector<1x64xbf16>
    %cst_26 = arith.constant dense<0.000000e+00> : vector<1x1536xf32>
    %51 = tpu.matmul %50, %47, %cst_26 {dimension_numbers = #tpu.dot_dimension_numbers<[1], [0], [0], [1], [0, 0, 1, 1], [], []>} : vector<1x64xbf16>, vector<64x1536xbf16>, vector<1x1536xf32> -> vector<1x1536xf32>
    %52 = arith.addf %51, %49 : vector<1x1536xf32>
    %53 = vector.extract_strided_slice %52 {offsets = [0, 0], sizes = [1, 64], strides = [1, 1]} : vector<1x1536xf32> to vector<1x64xf32>
    %54 = vector.extract_strided_slice %52 {offsets = [0, 128], sizes = [1, 64], strides = [1, 1]} : vector<1x1536xf32> to vector<1x64xf32>
    %55 = vector.extract_strided_slice %52 {offsets = [0, 256], sizes = [1, 64], strides = [1, 1]} : vector<1x1536xf32> to vector<1x64xf32>
    %56 = vector.extract_strided_slice %52 {offsets = [0, 384], sizes = [1, 64], strides = [1, 1]} : vector<1x1536xf32> to vector<1x64xf32>
    %57 = vector.extract_strided_slice %52 {offsets = [0, 512], sizes = [1, 64], strides = [1, 1]} : vector<1x1536xf32> to vector<1x64xf32>
    %58 = vector.extract_strided_slice %52 {offsets = [0, 640], sizes = [1, 64], strides = [1, 1]} : vector<1x1536xf32> to vector<1x64xf32>
    %59 = vector.extract_strided_slice %52 {offsets = [0, 768], sizes = [1, 64], strides = [1, 1]} : vector<1x1536xf32> to vector<1x64xf32>
    %60 = vector.extract_strided_slice %52 {offsets = [0, 896], sizes = [1, 64], strides = [1, 1]} : vector<1x1536xf32> to vector<1x64xf32>
    %61 = vector.extract_strided_slice %52 {offsets = [0, 1024], sizes = [1, 64], strides = [1, 1]} : vector<1x1536xf32> to vector<1x64xf32>
    %62 = vector.extract_strided_slice %52 {offsets = [0, 1152], sizes = [1, 64], strides = [1, 1]} : vector<1x1536xf32> to vector<1x64xf32>
    %63 = vector.extract_strided_slice %52 {offsets = [0, 1280], sizes = [1, 64], strides = [1, 1]} : vector<1x1536xf32> to vector<1x64xf32>
    %64 = vector.extract_strided_slice %52 {offsets = [0, 1408], sizes = [1, 64], strides = [1, 1]} : vector<1x1536xf32> to vector<1x64xf32>
    %cst_27 = arith.constant dense<0.000000e+00> : vector<64xf32>
    %65 = vector.multi_reduction <add>, %10, %cst_27 [1] : vector<64x64xf32> to vector<64xf32>
    %66 = vector.shape_cast %65 : vector<64xf32> to vector<64x1xf32>
    %cst_28 = arith.constant 6.400000e+01 : f32
    %67 = vector.broadcast %cst_28 : f32 to vector<64x1xf32>
    %68 = arith.divf %66, %67 : vector<64x1xf32>
    %69 = vector.broadcast %68 : vector<64x1xf32> to vector<64x64xf32>
    %70 = arith.subf %10, %69 : vector<64x64xf32>
    %71 = arith.mulf %70, %70 : vector<64x64xf32>
    %cst_29 = arith.constant dense<0.000000e+00> : vector<64xf32>
    %72 = vector.multi_reduction <add>, %71, %cst_29 [1] : vector<64x64xf32> to vector<64xf32>
    %73 = vector.shape_cast %72 : vector<64xf32> to vector<64x1xf32>
    %cst_30 = arith.constant 6.400000e+01 : f32
    %74 = vector.broadcast %cst_30 : f32 to vector<64x1xf32>
    %75 = arith.divf %73, %74 : vector<64x1xf32>
    %76 = vector.broadcast %68 : vector<64x1xf32> to vector<64x64xf32>
    %77 = arith.subf %10, %76 : vector<64x64xf32>
    %cst_31 = arith.constant 9.99999997E-7 : f32
    %78 = vector.broadcast %cst_31 : f32 to vector<64x1xf32>
    %79 = arith.addf %75, %78 : vector<64x1xf32>
    %80 = math.rsqrt %79 : vector<64x1xf32>
    %81 = vector.broadcast %80 : vector<64x1xf32> to vector<64x64xf32>
    %82 = arith.mulf %77, %81 : vector<64x64xf32>
    %cst_32 = arith.constant 1.000000e+00 : f32
    %83 = vector.broadcast %cst_32 : f32 to vector<1x64xf32>
    %84 = arith.addf %83, %54 : vector<1x64xf32>
    %85 = vector.broadcast %84 : vector<1x64xf32> to vector<64x64xf32>
    %86 = arith.mulf %82, %85 : vector<64x64xf32>
    %87 = vector.broadcast %53 : vector<1x64xf32> to vector<64x64xf32>
    %88 = arith.addf %86, %87 : vector<64x64xf32>
    %cst_33 = arith.constant dense<0.000000e+00> : vector<8xf32>
    %89 = vector.multi_reduction <add>, %16, %cst_33 [1] : vector<8x64xf32> to vector<8xf32>
    %90 = vector.shape_cast %89 : vector<8xf32> to vector<8x1xf32>
    %cst_34 = arith.constant 6.400000e+01 : f32
    %91 = vector.broadcast %cst_34 : f32 to vector<8x1xf32>
    %92 = arith.divf %90, %91 : vector<8x1xf32>
    %93 = vector.broadcast %92 : vector<8x1xf32> to vector<8x64xf32>
    %94 = arith.subf %16, %93 : vector<8x64xf32>
    %95 = arith.mulf %94, %94 : vector<8x64xf32>
    %cst_35 = arith.constant dense<0.000000e+00> : vector<8xf32>
    %96 = vector.multi_reduction <add>, %95, %cst_35 [1] : vector<8x64xf32> to vector<8xf32>
    %97 = vector.shape_cast %96 : vector<8xf32> to vector<8x1xf32>
    %cst_36 = arith.constant 6.400000e+01 : f32
    %98 = vector.broadcast %cst_36 : f32 to vector<8x1xf32>
    %99 = arith.divf %97, %98 : vector<8x1xf32>
    %100 = vector.broadcast %92 : vector<8x1xf32> to vector<8x64xf32>
    %101 = arith.subf %16, %100 : vector<8x64xf32>
    %cst_37 = arith.constant 9.99999997E-7 : f32
    %102 = vector.broadcast %cst_37 : f32 to vector<8x1xf32>
    %103 = arith.addf %99, %102 : vector<8x1xf32>
    %104 = math.rsqrt %103 : vector<8x1xf32>
    %105 = vector.broadcast %104 : vector<8x1xf32> to vector<8x64xf32>
    %106 = arith.mulf %101, %105 : vector<8x64xf32>
    %cst_38 = arith.constant 1.000000e+00 : f32
    %107 = vector.broadcast %cst_38 : f32 to vector<1x64xf32>
    %108 = arith.addf %107, %60 : vector<1x64xf32>
    %109 = vector.broadcast %108 : vector<1x64xf32> to vector<8x64xf32>
    %110 = arith.mulf %106, %109 : vector<8x64xf32>
    %111 = vector.broadcast %59 : vector<1x64xf32> to vector<8x64xf32>
    %112 = arith.addf %110, %111 : vector<8x64xf32>
    %c0_39 = arith.constant 0 : index
    %c0_40 = arith.constant 0 : index
    %c0_41 = arith.constant 0 : index
    %c0_42 = arith.constant 0 : index
    %113 = vector.load %arg10[%c0_39, %c0_40, %c0_41, %c0_42] : memref<2x2x64x384xbf16, #tpu.memory_space<vmem>>, vector<1x1x64x384xbf16>
    %114 = vector.shape_cast %113 : vector<1x1x64x384xbf16> to vector<64x384xbf16>
    %c0_43 = arith.constant 0 : index
    %c0_44 = arith.constant 0 : index
    %c0_45 = arith.constant 0 : index
    %c0_46 = arith.constant 0 : index
    %115 = vector.load %arg11[%c0_43, %c0_44, %c0_45, %c0_46] : memref<2x2x1x384xf32, #tpu.memory_space<vmem>>, vector<1x1x1x384xf32>
    %116 = vector.shape_cast %115 : vector<1x1x1x384xf32> to vector<1x384xf32>
    %117 = arith.truncf %88 : vector<64x64xf32> to vector<64x64xbf16>
    %cst_47 = arith.constant dense<0.000000e+00> : vector<64x384xf32>
    %118 = tpu.matmul %117, %114, %cst_47 {dimension_numbers = #tpu.dot_dimension_numbers<[1], [0], [0], [1], [0, 0, 1, 1], [], []>} : vector<64x64xbf16>, vector<64x384xbf16>, vector<64x384xf32> -> vector<64x384xf32>
    %119 = vector.broadcast %116 : vector<1x384xf32> to vector<64x384xf32>
    %120 = arith.addf %118, %119 : vector<64x384xf32>
    %c0_48 = arith.constant 0 : index
    %c1 = arith.constant 1 : index
    %c0_49 = arith.constant 0 : index
    %c0_50 = arith.constant 0 : index
    %121 = vector.load %arg10[%c0_48, %c1, %c0_49, %c0_50] : memref<2x2x64x384xbf16, #tpu.memory_space<vmem>>, vector<1x1x64x384xbf16>
    %122 = vector.shape_cast %121 : vector<1x1x64x384xbf16> to vector<64x384xbf16>
    %c0_51 = arith.constant 0 : index
    %c1_52 = arith.constant 1 : index
    %c0_53 = arith.constant 0 : index
    %c0_54 = arith.constant 0 : index
    %123 = vector.load %arg11[%c0_51, %c1_52, %c0_53, %c0_54] : memref<2x2x1x384xf32, #tpu.memory_space<vmem>>, vector<1x1x1x384xf32>
    %124 = vector.shape_cast %123 : vector<1x1x1x384xf32> to vector<1x384xf32>
    %125 = arith.truncf %112 : vector<8x64xf32> to vector<8x64xbf16>
    %cst_55 = arith.constant dense<0.000000e+00> : vector<8x384xf32>
    %126 = tpu.matmul %125, %122, %cst_55 {dimension_numbers = #tpu.dot_dimension_numbers<[1], [0], [0], [1], [0, 0, 1, 1], [], []>} : vector<8x64xbf16>, vector<64x384xbf16>, vector<8x384xf32> -> vector<8x384xf32>
    %127 = vector.broadcast %124 : vector<1x384xf32> to vector<8x384xf32>
    %128 = arith.addf %126, %127 : vector<8x384xf32>
    %129 = tpu.concatenate %120, %128 in 0 : vector<64x384xf32>, vector<8x384xf32> -> vector<72x384xf32>
    %130 = vector.extract_strided_slice %129 {offsets = [0, 0], sizes = [72, 64], strides = [1, 1]} : vector<72x384xf32> to vector<72x64xf32>
    %131 = vector.extract_strided_slice %129 {offsets = [0, 128], sizes = [72, 64], strides = [1, 1]} : vector<72x384xf32> to vector<72x64xf32>
    %132 = vector.extract_strided_slice %129 {offsets = [0, 256], sizes = [72, 64], strides = [1, 1]} : vector<72x384xf32> to vector<72x64xf32>
    %c0_56 = arith.constant 0 : index
    %c0_57 = arith.constant 0 : index
    %c0_58 = arith.constant 0 : index
    %c0_59 = arith.constant 0 : index
    %133 = vector.load %arg12[%c0_56, %c0_57, %c0_58, %c0_59] : memref<2x2x1x64xf32, #tpu.memory_space<vmem>>, vector<1x1x1x64xf32>
    %134 = vector.shape_cast %133 : vector<1x1x1x64xf32> to vector<1x64xf32>
    %c0_60 = arith.constant 0 : index
    %c1_61 = arith.constant 1 : index
    %c0_62 = arith.constant 0 : index
    %c0_63 = arith.constant 0 : index
    %135 = vector.load %arg12[%c0_60, %c1_61, %c0_62, %c0_63] : memref<2x2x1x64xf32, #tpu.memory_space<vmem>>, vector<1x1x1x64xf32>
    %136 = vector.shape_cast %135 : vector<1x1x1x64xf32> to vector<1x64xf32>
    %cst_64 = arith.constant 0.000000e+00 : f32
    %137 = vector.broadcast %cst_64 : f32 to vector<72x64xf32>
    %138 = vector.broadcast %24 : vector<1x64xf32> to vector<72x64xf32>
    %139 = arith.mulf %130, %138 : vector<72x64xf32>
    %140 = vector.broadcast %24 : vector<1x64xf32> to vector<72x64xf32>
    %141 = arith.mulf %131, %140 : vector<72x64xf32>
    %142 = vector.broadcast %24 : vector<1x64xf32> to vector<72x64xf32>
    %143 = arith.mulf %132, %142 : vector<72x64xf32>
    %144 = arith.mulf %139, %139 : vector<72x64xf32>
    %cst_65 = arith.constant dense<0.000000e+00> : vector<72xf32>
    %145 = vector.multi_reduction <add>, %144, %cst_65 [1] : vector<72x64xf32> to vector<72xf32>
    %146 = vector.shape_cast %145 : vector<72xf32> to vector<72x1xf32>
    %cst_66 = arith.constant 6.250000e-02 : f32
    %147 = vector.broadcast %cst_66 : f32 to vector<72x1xf32>
    %148 = arith.mulf %146, %147 : vector<72x1xf32>
    %cst_67 = arith.constant 9.99999997E-7 : f32
    %149 = vector.broadcast %cst_67 : f32 to vector<72x1xf32>
    %150 = arith.addf %148, %149 : vector<72x1xf32>
    %151 = math.rsqrt %150 : vector<72x1xf32>
    %152 = vector.broadcast %151 : vector<72x1xf32> to vector<72x64xf32>
    %153 = arith.mulf %139, %152 : vector<72x64xf32>
    %154 = vector.broadcast %134 : vector<1x64xf32> to vector<72x64xf32>
    %155 = arith.mulf %153, %154 : vector<72x64xf32>
    %156 = arith.mulf %141, %141 : vector<72x64xf32>
    %cst_68 = arith.constant dense<0.000000e+00> : vector<72xf32>
    %157 = vector.multi_reduction <add>, %156, %cst_68 [1] : vector<72x64xf32> to vector<72xf32>
    %158 = vector.shape_cast %157 : vector<72xf32> to vector<72x1xf32>
    %cst_69 = arith.constant 6.250000e-02 : f32
    %159 = vector.broadcast %cst_69 : f32 to vector<72x1xf32>
    %160 = arith.mulf %158, %159 : vector<72x1xf32>
    %cst_70 = arith.constant 9.99999997E-7 : f32
    %161 = vector.broadcast %cst_70 : f32 to vector<72x1xf32>
    %162 = arith.addf %160, %161 : vector<72x1xf32>
    %163 = math.rsqrt %162 : vector<72x1xf32>
    %164 = vector.broadcast %163 : vector<72x1xf32> to vector<72x64xf32>
    %165 = arith.mulf %141, %164 : vector<72x64xf32>
    %166 = vector.broadcast %136 : vector<1x64xf32> to vector<72x64xf32>
    %167 = arith.mulf %165, %166 : vector<72x64xf32>
    %168 = arith.truncf %155 : vector<72x64xf32> to vector<72x64xbf16>
    %169 = arith.truncf %167 : vector<72x64xf32> to vector<72x64xbf16>
    %cst_71 = arith.constant dense<0.000000e+00> : vector<72x72xf32>
    %170 = tpu.matmul %168, %169, %cst_71 {dimension_numbers = #tpu.dot_dimension_numbers<[1], [1], [0], [0], [0, 0, 1, 0], [], []>} : vector<72x64xbf16>, vector<72x64xbf16>, vector<72x72xf32> -> vector<72x72xf32>
    %cst_72 = arith.constant 2.500000e-01 : f32
    %171 = vector.broadcast %cst_72 : f32 to vector<72x72xf32>
    %172 = arith.mulf %170, %171 : vector<72x72xf32>
    %cst_73 = arith.constant dense<0xFF800000> : vector<72xf32>
    %173 = vector.multi_reduction <maximumf>, %172, %cst_73 [1] : vector<72x72xf32> to vector<72xf32>
    %174 = vector.shape_cast %173 : vector<72xf32> to vector<72x1xf32>
    %175 = vector.broadcast %174 : vector<72x1xf32> to vector<72x72xf32>
    %176 = arith.subf %172, %175 : vector<72x72xf32>
    %177 = math.exp %176 : vector<72x72xf32>
    %cst_74 = arith.constant dense<0.000000e+00> : vector<72xf32>
    %178 = vector.multi_reduction <add>, %177, %cst_74 [1] : vector<72x72xf32> to vector<72xf32>
    %179 = vector.shape_cast %178 : vector<72xf32> to vector<72x1xf32>
    %180 = tpu.reciprocal %179 {approx = true} : vector<72x1xf32> -> vector<72x1xf32>
    %181 = vector.broadcast %180 : vector<72x1xf32> to vector<72x72xf32>
    %182 = arith.mulf %177, %181 : vector<72x72xf32>
    %183 = arith.truncf %182 : vector<72x72xf32> to vector<72x72xbf16>
    %184 = arith.truncf %143 : vector<72x64xf32> to vector<72x64xbf16>
    %cst_75 = arith.constant dense<0.000000e+00> : vector<72x64xf32>
    %185 = tpu.matmul %183, %184, %cst_75 {dimension_numbers = #tpu.dot_dimension_numbers<[1], [0], [0], [1], [0, 0, 1, 1], [], []>} : vector<72x72xbf16>, vector<72x64xbf16>, vector<72x64xf32> -> vector<72x64xf32>
    %186 = arith.addf %137, %185 : vector<72x64xf32>
    %187 = vector.broadcast %31 : vector<1x64xf32> to vector<72x64xf32>
    %188 = arith.mulf %130, %187 : vector<72x64xf32>
    %189 = vector.broadcast %31 : vector<1x64xf32> to vector<72x64xf32>
    %190 = arith.mulf %131, %189 : vector<72x64xf32>
    %191 = vector.broadcast %31 : vector<1x64xf32> to vector<72x64xf32>
    %192 = arith.mulf %132, %191 : vector<72x64xf32>
    %193 = arith.mulf %188, %188 : vector<72x64xf32>
    %cst_76 = arith.constant dense<0.000000e+00> : vector<72xf32>
    %194 = vector.multi_reduction <add>, %193, %cst_76 [1] : vector<72x64xf32> to vector<72xf32>
    %195 = vector.shape_cast %194 : vector<72xf32> to vector<72x1xf32>
    %cst_77 = arith.constant 6.250000e-02 : f32
    %196 = vector.broadcast %cst_77 : f32 to vector<72x1xf32>
    %197 = arith.mulf %195, %196 : vector<72x1xf32>
    %cst_78 = arith.constant 9.99999997E-7 : f32
    %198 = vector.broadcast %cst_78 : f32 to vector<72x1xf32>
    %199 = arith.addf %197, %198 : vector<72x1xf32>
    %200 = math.rsqrt %199 : vector<72x1xf32>
    %201 = vector.broadcast %200 : vector<72x1xf32> to vector<72x64xf32>
    %202 = arith.mulf %188, %201 : vector<72x64xf32>
    %203 = vector.broadcast %134 : vector<1x64xf32> to vector<72x64xf32>
    %204 = arith.mulf %202, %203 : vector<72x64xf32>
    %205 = arith.mulf %190, %190 : vector<72x64xf32>
    %cst_79 = arith.constant dense<0.000000e+00> : vector<72xf32>
    %206 = vector.multi_reduction <add>, %205, %cst_79 [1] : vector<72x64xf32> to vector<72xf32>
    %207 = vector.shape_cast %206 : vector<72xf32> to vector<72x1xf32>
    %cst_80 = arith.constant 6.250000e-02 : f32
    %208 = vector.broadcast %cst_80 : f32 to vector<72x1xf32>
    %209 = arith.mulf %207, %208 : vector<72x1xf32>
    %cst_81 = arith.constant 9.99999997E-7 : f32
    %210 = vector.broadcast %cst_81 : f32 to vector<72x1xf32>
    %211 = arith.addf %209, %210 : vector<72x1xf32>
    %212 = math.rsqrt %211 : vector<72x1xf32>
    %213 = vector.broadcast %212 : vector<72x1xf32> to vector<72x64xf32>
    %214 = arith.mulf %190, %213 : vector<72x64xf32>
    %215 = vector.broadcast %136 : vector<1x64xf32> to vector<72x64xf32>
    %216 = arith.mulf %214, %215 : vector<72x64xf32>
    %217 = arith.truncf %204 : vector<72x64xf32> to vector<72x64xbf16>
    %218 = arith.truncf %216 : vector<72x64xf32> to vector<72x64xbf16>
    %cst_82 = arith.constant dense<0.000000e+00> : vector<72x72xf32>
    %219 = tpu.matmul %217, %218, %cst_82 {dimension_numbers = #tpu.dot_dimension_numbers<[1], [1], [0], [0], [0, 0, 1, 0], [], []>} : vector<72x64xbf16>, vector<72x64xbf16>, vector<72x72xf32> -> vector<72x72xf32>
    %cst_83 = arith.constant 2.500000e-01 : f32
    %220 = vector.broadcast %cst_83 : f32 to vector<72x72xf32>
    %221 = arith.mulf %219, %220 : vector<72x72xf32>
    %cst_84 = arith.constant dense<0xFF800000> : vector<72xf32>
    %222 = vector.multi_reduction <maximumf>, %221, %cst_84 [1] : vector<72x72xf32> to vector<72xf32>
    %223 = vector.shape_cast %222 : vector<72xf32> to vector<72x1xf32>
    %224 = vector.broadcast %223 : vector<72x1xf32> to vector<72x72xf32>
    %225 = arith.subf %221, %224 : vector<72x72xf32>
    %226 = math.exp %225 : vector<72x72xf32>
    %cst_85 = arith.constant dense<0.000000e+00> : vector<72xf32>
    %227 = vector.multi_reduction <add>, %226, %cst_85 [1] : vector<72x72xf32> to vector<72xf32>
    %228 = vector.shape_cast %227 : vector<72xf32> to vector<72x1xf32>
    %229 = tpu.reciprocal %228 {approx = true} : vector<72x1xf32> -> vector<72x1xf32>
    %230 = vector.broadcast %229 : vector<72x1xf32> to vector<72x72xf32>
    %231 = arith.mulf %226, %230 : vector<72x72xf32>
    %232 = arith.truncf %231 : vector<72x72xf32> to vector<72x72xbf16>
    %233 = arith.truncf %192 : vector<72x64xf32> to vector<72x64xbf16>
    %cst_86 = arith.constant dense<0.000000e+00> : vector<72x64xf32>
    %234 = tpu.matmul %232, %233, %cst_86 {dimension_numbers = #tpu.dot_dimension_numbers<[1], [0], [0], [1], [0, 0, 1, 1], [], []>} : vector<72x72xbf16>, vector<72x64xbf16>, vector<72x64xf32> -> vector<72x64xf32>
    %235 = arith.addf %186, %234 : vector<72x64xf32>
    %236 = vector.broadcast %38 : vector<1x64xf32> to vector<72x64xf32>
    %237 = arith.mulf %130, %236 : vector<72x64xf32>
    %238 = vector.broadcast %38 : vector<1x64xf32> to vector<72x64xf32>
    %239 = arith.mulf %131, %238 : vector<72x64xf32>
    %240 = vector.broadcast %38 : vector<1x64xf32> to vector<72x64xf32>
    %241 = arith.mulf %132, %240 : vector<72x64xf32>
    %242 = arith.mulf %237, %237 : vector<72x64xf32>
    %cst_87 = arith.constant dense<0.000000e+00> : vector<72xf32>
    %243 = vector.multi_reduction <add>, %242, %cst_87 [1] : vector<72x64xf32> to vector<72xf32>
    %244 = vector.shape_cast %243 : vector<72xf32> to vector<72x1xf32>
    %cst_88 = arith.constant 6.250000e-02 : f32
    %245 = vector.broadcast %cst_88 : f32 to vector<72x1xf32>
    %246 = arith.mulf %244, %245 : vector<72x1xf32>
    %cst_89 = arith.constant 9.99999997E-7 : f32
    %247 = vector.broadcast %cst_89 : f32 to vector<72x1xf32>
    %248 = arith.addf %246, %247 : vector<72x1xf32>
    %249 = math.rsqrt %248 : vector<72x1xf32>
    %250 = vector.broadcast %249 : vector<72x1xf32> to vector<72x64xf32>
    %251 = arith.mulf %237, %250 : vector<72x64xf32>
    %252 = vector.broadcast %134 : vector<1x64xf32> to vector<72x64xf32>
    %253 = arith.mulf %251, %252 : vector<72x64xf32>
    %254 = arith.mulf %239, %239 : vector<72x64xf32>
    %cst_90 = arith.constant dense<0.000000e+00> : vector<72xf32>
    %255 = vector.multi_reduction <add>, %254, %cst_90 [1] : vector<72x64xf32> to vector<72xf32>
    %256 = vector.shape_cast %255 : vector<72xf32> to vector<72x1xf32>
    %cst_91 = arith.constant 6.250000e-02 : f32
    %257 = vector.broadcast %cst_91 : f32 to vector<72x1xf32>
    %258 = arith.mulf %256, %257 : vector<72x1xf32>
    %cst_92 = arith.constant 9.99999997E-7 : f32
    %259 = vector.broadcast %cst_92 : f32 to vector<72x1xf32>
    %260 = arith.addf %258, %259 : vector<72x1xf32>
    %261 = math.rsqrt %260 : vector<72x1xf32>
    %262 = vector.broadcast %261 : vector<72x1xf32> to vector<72x64xf32>
    %263 = arith.mulf %239, %262 : vector<72x64xf32>
    %264 = vector.broadcast %136 : vector<1x64xf32> to vector<72x64xf32>
    %265 = arith.mulf %263, %264 : vector<72x64xf32>
    %266 = arith.truncf %253 : vector<72x64xf32> to vector<72x64xbf16>
    %267 = arith.truncf %265 : vector<72x64xf32> to vector<72x64xbf16>
    %cst_93 = arith.constant dense<0.000000e+00> : vector<72x72xf32>
    %268 = tpu.matmul %266, %267, %cst_93 {dimension_numbers = #tpu.dot_dimension_numbers<[1], [1], [0], [0], [0, 0, 1, 0], [], []>} : vector<72x64xbf16>, vector<72x64xbf16>, vector<72x72xf32> -> vector<72x72xf32>
    %cst_94 = arith.constant 2.500000e-01 : f32
    %269 = vector.broadcast %cst_94 : f32 to vector<72x72xf32>
    %270 = arith.mulf %268, %269 : vector<72x72xf32>
    %cst_95 = arith.constant dense<0xFF800000> : vector<72xf32>
    %271 = vector.multi_reduction <maximumf>, %270, %cst_95 [1] : vector<72x72xf32> to vector<72xf32>
    %272 = vector.shape_cast %271 : vector<72xf32> to vector<72x1xf32>
    %273 = vector.broadcast %272 : vector<72x1xf32> to vector<72x72xf32>
    %274 = arith.subf %270, %273 : vector<72x72xf32>
    %275 = math.exp %274 : vector<72x72xf32>
    %cst_96 = arith.constant dense<0.000000e+00> : vector<72xf32>
    %276 = vector.multi_reduction <add>, %275, %cst_96 [1] : vector<72x72xf32> to vector<72xf32>
    %277 = vector.shape_cast %276 : vector<72xf32> to vector<72x1xf32>
    %278 = tpu.reciprocal %277 {approx = true} : vector<72x1xf32> -> vector<72x1xf32>
    %279 = vector.broadcast %278 : vector<72x1xf32> to vector<72x72xf32>
    %280 = arith.mulf %275, %279 : vector<72x72xf32>
    %281 = arith.truncf %280 : vector<72x72xf32> to vector<72x72xbf16>
    %282 = arith.truncf %241 : vector<72x64xf32> to vector<72x64xbf16>
    %cst_97 = arith.constant dense<0.000000e+00> : vector<72x64xf32>
    %283 = tpu.matmul %281, %282, %cst_97 {dimension_numbers = #tpu.dot_dimension_numbers<[1], [0], [0], [1], [0, 0, 1, 1], [], []>} : vector<72x72xbf16>, vector<72x64xbf16>, vector<72x64xf32> -> vector<72x64xf32>
    %284 = arith.addf %235, %283 : vector<72x64xf32>
    %285 = vector.broadcast %45 : vector<1x64xf32> to vector<72x64xf32>
    %286 = arith.mulf %130, %285 : vector<72x64xf32>
    %287 = vector.broadcast %45 : vector<1x64xf32> to vector<72x64xf32>
    %288 = arith.mulf %131, %287 : vector<72x64xf32>
    %289 = vector.broadcast %45 : vector<1x64xf32> to vector<72x64xf32>
    %290 = arith.mulf %132, %289 : vector<72x64xf32>
    %291 = arith.mulf %286, %286 : vector<72x64xf32>
    %cst_98 = arith.constant dense<0.000000e+00> : vector<72xf32>
    %292 = vector.multi_reduction <add>, %291, %cst_98 [1] : vector<72x64xf32> to vector<72xf32>
    %293 = vector.shape_cast %292 : vector<72xf32> to vector<72x1xf32>
    %cst_99 = arith.constant 6.250000e-02 : f32
    %294 = vector.broadcast %cst_99 : f32 to vector<72x1xf32>
    %295 = arith.mulf %293, %294 : vector<72x1xf32>
    %cst_100 = arith.constant 9.99999997E-7 : f32
    %296 = vector.broadcast %cst_100 : f32 to vector<72x1xf32>
    %297 = arith.addf %295, %296 : vector<72x1xf32>
    %298 = math.rsqrt %297 : vector<72x1xf32>
    %299 = vector.broadcast %298 : vector<72x1xf32> to vector<72x64xf32>
    %300 = arith.mulf %286, %299 : vector<72x64xf32>
    %301 = vector.broadcast %134 : vector<1x64xf32> to vector<72x64xf32>
    %302 = arith.mulf %300, %301 : vector<72x64xf32>
    %303 = arith.mulf %288, %288 : vector<72x64xf32>
    %cst_101 = arith.constant dense<0.000000e+00> : vector<72xf32>
    %304 = vector.multi_reduction <add>, %303, %cst_101 [1] : vector<72x64xf32> to vector<72xf32>
    %305 = vector.shape_cast %304 : vector<72xf32> to vector<72x1xf32>
    %cst_102 = arith.constant 6.250000e-02 : f32
    %306 = vector.broadcast %cst_102 : f32 to vector<72x1xf32>
    %307 = arith.mulf %305, %306 : vector<72x1xf32>
    %cst_103 = arith.constant 9.99999997E-7 : f32
    %308 = vector.broadcast %cst_103 : f32 to vector<72x1xf32>
    %309 = arith.addf %307, %308 : vector<72x1xf32>
    %310 = math.rsqrt %309 : vector<72x1xf32>
    %311 = vector.broadcast %310 : vector<72x1xf32> to vector<72x64xf32>
    %312 = arith.mulf %288, %311 : vector<72x64xf32>
    %313 = vector.broadcast %136 : vector<1x64xf32> to vector<72x64xf32>
    %314 = arith.mulf %312, %313 : vector<72x64xf32>
    %315 = arith.truncf %302 : vector<72x64xf32> to vector<72x64xbf16>
    %316 = arith.truncf %314 : vector<72x64xf32> to vector<72x64xbf16>
    %cst_104 = arith.constant dense<0.000000e+00> : vector<72x72xf32>
    %317 = tpu.matmul %315, %316, %cst_104 {dimension_numbers = #tpu.dot_dimension_numbers<[1], [1], [0], [0], [0, 0, 1, 0], [], []>} : vector<72x64xbf16>, vector<72x64xbf16>, vector<72x72xf32> -> vector<72x72xf32>
    %cst_105 = arith.constant 2.500000e-01 : f32
    %318 = vector.broadcast %cst_105 : f32 to vector<72x72xf32>
    %319 = arith.mulf %317, %318 : vector<72x72xf32>
    %cst_106 = arith.constant dense<0xFF800000> : vector<72xf32>
    %320 = vector.multi_reduction <maximumf>, %319, %cst_106 [1] : vector<72x72xf32> to vector<72xf32>
    %321 = vector.shape_cast %320 : vector<72xf32> to vector<72x1xf32>
    %322 = vector.broadcast %321 : vector<72x1xf32> to vector<72x72xf32>
    %323 = arith.subf %319, %322 : vector<72x72xf32>
    %324 = math.exp %323 : vector<72x72xf32>
    %cst_107 = arith.constant dense<0.000000e+00> : vector<72xf32>
    %325 = vector.multi_reduction <add>, %324, %cst_107 [1] : vector<72x72xf32> to vector<72xf32>
    %326 = vector.shape_cast %325 : vector<72xf32> to vector<72x1xf32>
    %327 = tpu.reciprocal %326 {approx = true} : vector<72x1xf32> -> vector<72x1xf32>
    %328 = vector.broadcast %327 : vector<72x1xf32> to vector<72x72xf32>
    %329 = arith.mulf %324, %328 : vector<72x72xf32>
    %330 = arith.truncf %329 : vector<72x72xf32> to vector<72x72xbf16>
    %331 = arith.truncf %290 : vector<72x64xf32> to vector<72x64xbf16>
    %cst_108 = arith.constant dense<0.000000e+00> : vector<72x64xf32>
    %332 = tpu.matmul %330, %331, %cst_108 {dimension_numbers = #tpu.dot_dimension_numbers<[1], [0], [0], [1], [0, 0, 1, 1], [], []>} : vector<72x72xbf16>, vector<72x64xbf16>, vector<72x64xf32> -> vector<72x64xf32>
    %333 = arith.addf %284, %332 : vector<72x64xf32>
    %334 = vector.extract_strided_slice %333 {offsets = [0, 0], sizes = [64, 64], strides = [1, 1]} : vector<72x64xf32> to vector<64x64xf32>
    %c0_109 = arith.constant 0 : index
    %c0_110 = arith.constant 0 : index
    %c0_111 = arith.constant 0 : index
    %c0_112 = arith.constant 0 : index
    %335 = vector.load %arg13[%c0_109, %c0_110, %c0_111, %c0_112] : memref<2x2x64x64xbf16, #tpu.memory_space<vmem>>, vector<1x1x64x64xbf16>
    %336 = vector.shape_cast %335 : vector<1x1x64x64xbf16> to vector<64x64xbf16>
    %c0_113 = arith.constant 0 : index
    %c0_114 = arith.constant 0 : index
    %c0_115 = arith.constant 0 : index
    %c0_116 = arith.constant 0 : index
    %337 = vector.load %arg14[%c0_113, %c0_114, %c0_115, %c0_116] : memref<2x2x1x64xf32, #tpu.memory_space<vmem>>, vector<1x1x1x64xf32>
    %338 = vector.shape_cast %337 : vector<1x1x1x64xf32> to vector<1x64xf32>
    %339 = arith.truncf %334 : vector<64x64xf32> to vector<64x64xbf16>
    %cst_117 = arith.constant dense<0.000000e+00> : vector<64x64xf32>
    %340 = tpu.matmul %339, %336, %cst_117 {dimension_numbers = #tpu.dot_dimension_numbers<[1], [0], [0], [1], [0, 0, 1, 1], [], []>} : vector<64x64xbf16>, vector<64x64xbf16>, vector<64x64xf32> -> vector<64x64xf32>
    %341 = vector.broadcast %338 : vector<1x64xf32> to vector<64x64xf32>
    %342 = arith.addf %340, %341 : vector<64x64xf32>
    %343 = vector.extract_strided_slice %333 {offsets = [64, 0], sizes = [8, 64], strides = [1, 1]} : vector<72x64xf32> to vector<8x64xf32>
    %c0_118 = arith.constant 0 : index
    %c1_119 = arith.constant 1 : index
    %c0_120 = arith.constant 0 : index
    %c0_121 = arith.constant 0 : index
    %344 = vector.load %arg13[%c0_118, %c1_119, %c0_120, %c0_121] : memref<2x2x64x64xbf16, #tpu.memory_space<vmem>>, vector<1x1x64x64xbf16>
    %345 = vector.shape_cast %344 : vector<1x1x64x64xbf16> to vector<64x64xbf16>
    %c0_122 = arith.constant 0 : index
    %c1_123 = arith.constant 1 : index
    %c0_124 = arith.constant 0 : index
    %c0_125 = arith.constant 0 : index
    %346 = vector.load %arg14[%c0_122, %c1_123, %c0_124, %c0_125] : memref<2x2x1x64xf32, #tpu.memory_space<vmem>>, vector<1x1x1x64xf32>
    %347 = vector.shape_cast %346 : vector<1x1x1x64xf32> to vector<1x64xf32>
    %348 = arith.truncf %343 : vector<8x64xf32> to vector<8x64xbf16>
    %cst_126 = arith.constant dense<0.000000e+00> : vector<8x64xf32>
    %349 = tpu.matmul %348, %345, %cst_126 {dimension_numbers = #tpu.dot_dimension_numbers<[1], [0], [0], [1], [0, 0, 1, 1], [], []>} : vector<8x64xbf16>, vector<64x64xbf16>, vector<8x64xf32> -> vector<8x64xf32>
    %350 = vector.broadcast %347 : vector<1x64xf32> to vector<8x64xf32>
    %351 = arith.addf %349, %350 : vector<8x64xf32>
    %352 = vector.broadcast %55 : vector<1x64xf32> to vector<64x64xf32>
    %353 = arith.mulf %352, %342 : vector<64x64xf32>
    %354 = arith.addf %10, %353 : vector<64x64xf32>
    %cst_127 = arith.constant dense<0.000000e+00> : vector<64xf32>
    %355 = vector.multi_reduction <add>, %354, %cst_127 [1] : vector<64x64xf32> to vector<64xf32>
    %356 = vector.shape_cast %355 : vector<64xf32> to vector<64x1xf32>
    %cst_128 = arith.constant 6.400000e+01 : f32
    %357 = vector.broadcast %cst_128 : f32 to vector<64x1xf32>
    %358 = arith.divf %356, %357 : vector<64x1xf32>
    %359 = vector.broadcast %358 : vector<64x1xf32> to vector<64x64xf32>
    %360 = arith.subf %354, %359 : vector<64x64xf32>
    %361 = arith.mulf %360, %360 : vector<64x64xf32>
    %cst_129 = arith.constant dense<0.000000e+00> : vector<64xf32>
    %362 = vector.multi_reduction <add>, %361, %cst_129 [1] : vector<64x64xf32> to vector<64xf32>
    %363 = vector.shape_cast %362 : vector<64xf32> to vector<64x1xf32>
    %cst_130 = arith.constant 6.400000e+01 : f32
    %364 = vector.broadcast %cst_130 : f32 to vector<64x1xf32>
    %365 = arith.divf %363, %364 : vector<64x1xf32>
    %366 = vector.broadcast %358 : vector<64x1xf32> to vector<64x64xf32>
    %367 = arith.subf %354, %366 : vector<64x64xf32>
    %cst_131 = arith.constant 9.99999997E-7 : f32
    %368 = vector.broadcast %cst_131 : f32 to vector<64x1xf32>
    %369 = arith.addf %365, %368 : vector<64x1xf32>
    %370 = math.rsqrt %369 : vector<64x1xf32>
    %371 = vector.broadcast %370 : vector<64x1xf32> to vector<64x64xf32>
    %372 = arith.mulf %367, %371 : vector<64x64xf32>
    %cst_132 = arith.constant 1.000000e+00 : f32
    %373 = vector.broadcast %cst_132 : f32 to vector<1x64xf32>
    %374 = arith.addf %373, %57 : vector<1x64xf32>
    %375 = vector.broadcast %374 : vector<1x64xf32> to vector<64x64xf32>
    %376 = arith.mulf %372, %375 : vector<64x64xf32>
    %377 = vector.broadcast %56 : vector<1x64xf32> to vector<64x64xf32>
    %378 = arith.addf %376, %377 : vector<64x64xf32>
    %c0_133 = arith.constant 0 : index
    %c0_134 = arith.constant 0 : index
    %c0_135 = arith.constant 0 : index
    %c0_136 = arith.constant 0 : index
    %379 = vector.load %arg15[%c0_133, %c0_134, %c0_135, %c0_136] : memref<2x2x64x256xbf16, #tpu.memory_space<vmem>>, vector<1x1x64x256xbf16>
    %380 = vector.shape_cast %379 : vector<1x1x64x256xbf16> to vector<64x256xbf16>
    %c0_137 = arith.constant 0 : index
    %c0_138 = arith.constant 0 : index
    %c0_139 = arith.constant 0 : index
    %c0_140 = arith.constant 0 : index
    %381 = vector.load %arg16[%c0_137, %c0_138, %c0_139, %c0_140] : memref<2x2x1x256xf32, #tpu.memory_space<vmem>>, vector<1x1x1x256xf32>
    %382 = vector.shape_cast %381 : vector<1x1x1x256xf32> to vector<1x256xf32>
    %383 = arith.truncf %378 : vector<64x64xf32> to vector<64x64xbf16>
    %cst_141 = arith.constant dense<0.000000e+00> : vector<64x256xf32>
    %384 = tpu.matmul %383, %380, %cst_141 {dimension_numbers = #tpu.dot_dimension_numbers<[1], [0], [0], [1], [0, 0, 1, 1], [], []>} : vector<64x64xbf16>, vector<64x256xbf16>, vector<64x256xf32> -> vector<64x256xf32>
    %385 = vector.broadcast %382 : vector<1x256xf32> to vector<64x256xf32>
    %386 = arith.addf %384, %385 : vector<64x256xf32>
    %387 = arith.mulf %386, %386 : vector<64x256xf32>
    %388 = arith.mulf %386, %387 : vector<64x256xf32>
    %cst_142 = arith.constant 4.471500e-02 : f32
    %389 = vector.broadcast %cst_142 : f32 to vector<64x256xf32>
    %390 = arith.mulf %389, %388 : vector<64x256xf32>
    %391 = arith.addf %386, %390 : vector<64x256xf32>
    %cst_143 = arith.constant 0.797884583 : f32
    %392 = vector.broadcast %cst_143 : f32 to vector<64x256xf32>
    %393 = arith.mulf %392, %391 : vector<64x256xf32>
    %394 = math.tanh %393 : vector<64x256xf32>
    %cst_144 = arith.constant 1.000000e+00 : f32
    %395 = vector.broadcast %cst_144 : f32 to vector<64x256xf32>
    %396 = arith.addf %395, %394 : vector<64x256xf32>
    %cst_145 = arith.constant 5.000000e-01 : f32
    %397 = vector.broadcast %cst_145 : f32 to vector<64x256xf32>
    %398 = arith.mulf %397, %396 : vector<64x256xf32>
    %399 = arith.mulf %386, %398 : vector<64x256xf32>
    %c0_146 = arith.constant 0 : index
    %c0_147 = arith.constant 0 : index
    %c0_148 = arith.constant 0 : index
    %c0_149 = arith.constant 0 : index
    %400 = vector.load %arg17[%c0_146, %c0_147, %c0_148, %c0_149] : memref<2x2x256x64xbf16, #tpu.memory_space<vmem>>, vector<1x1x256x64xbf16>
    %401 = vector.shape_cast %400 : vector<1x1x256x64xbf16> to vector<256x64xbf16>
    %c0_150 = arith.constant 0 : index
    %c0_151 = arith.constant 0 : index
    %c0_152 = arith.constant 0 : index
    %c0_153 = arith.constant 0 : index
    %402 = vector.load %arg18[%c0_150, %c0_151, %c0_152, %c0_153] : memref<2x2x1x64xf32, #tpu.memory_space<vmem>>, vector<1x1x1x64xf32>
    %403 = vector.shape_cast %402 : vector<1x1x1x64xf32> to vector<1x64xf32>
    %404 = arith.truncf %399 : vector<64x256xf32> to vector<64x256xbf16>
    %cst_154 = arith.constant dense<0.000000e+00> : vector<64x64xf32>
    %405 = tpu.matmul %404, %401, %cst_154 {dimension_numbers = #tpu.dot_dimension_numbers<[1], [0], [0], [1], [0, 0, 1, 1], [], []>} : vector<64x256xbf16>, vector<256x64xbf16>, vector<64x64xf32> -> vector<64x64xf32>
    %406 = vector.broadcast %403 : vector<1x64xf32> to vector<64x64xf32>
    %407 = arith.addf %405, %406 : vector<64x64xf32>
    %408 = vector.broadcast %58 : vector<1x64xf32> to vector<64x64xf32>
    %409 = arith.mulf %408, %407 : vector<64x64xf32>
    %410 = arith.addf %354, %409 : vector<64x64xf32>
    %411 = vector.broadcast %61 : vector<1x64xf32> to vector<8x64xf32>
    %412 = arith.mulf %411, %351 : vector<8x64xf32>
    %413 = arith.addf %16, %412 : vector<8x64xf32>
    %cst_155 = arith.constant dense<0.000000e+00> : vector<8xf32>
    %414 = vector.multi_reduction <add>, %413, %cst_155 [1] : vector<8x64xf32> to vector<8xf32>
    %415 = vector.shape_cast %414 : vector<8xf32> to vector<8x1xf32>
    %cst_156 = arith.constant 6.400000e+01 : f32
    %416 = vector.broadcast %cst_156 : f32 to vector<8x1xf32>
    %417 = arith.divf %415, %416 : vector<8x1xf32>
    %418 = vector.broadcast %417 : vector<8x1xf32> to vector<8x64xf32>
    %419 = arith.subf %413, %418 : vector<8x64xf32>
    %420 = arith.mulf %419, %419 : vector<8x64xf32>
    %cst_157 = arith.constant dense<0.000000e+00> : vector<8xf32>
    %421 = vector.multi_reduction <add>, %420, %cst_157 [1] : vector<8x64xf32> to vector<8xf32>
    %422 = vector.shape_cast %421 : vector<8xf32> to vector<8x1xf32>
    %cst_158 = arith.constant 6.400000e+01 : f32
    %423 = vector.broadcast %cst_158 : f32 to vector<8x1xf32>
    %424 = arith.divf %422, %423 : vector<8x1xf32>
    %425 = vector.broadcast %417 : vector<8x1xf32> to vector<8x64xf32>
    %426 = arith.subf %413, %425 : vector<8x64xf32>
    %cst_159 = arith.constant 9.99999997E-7 : f32
    %427 = vector.broadcast %cst_159 : f32 to vector<8x1xf32>
    %428 = arith.addf %424, %427 : vector<8x1xf32>
    %429 = math.rsqrt %428 : vector<8x1xf32>
    %430 = vector.broadcast %429 : vector<8x1xf32> to vector<8x64xf32>
    %431 = arith.mulf %426, %430 : vector<8x64xf32>
    %cst_160 = arith.constant 1.000000e+00 : f32
    %432 = vector.broadcast %cst_160 : f32 to vector<1x64xf32>
    %433 = arith.addf %432, %63 : vector<1x64xf32>
    %434 = vector.broadcast %433 : vector<1x64xf32> to vector<8x64xf32>
    %435 = arith.mulf %431, %434 : vector<8x64xf32>
    %436 = vector.broadcast %62 : vector<1x64xf32> to vector<8x64xf32>
    %437 = arith.addf %435, %436 : vector<8x64xf32>
    %c0_161 = arith.constant 0 : index
    %c1_162 = arith.constant 1 : index
    %c0_163 = arith.constant 0 : index
    %c0_164 = arith.constant 0 : index
    %438 = vector.load %arg15[%c0_161, %c1_162, %c0_163, %c0_164] : memref<2x2x64x256xbf16, #tpu.memory_space<vmem>>, vector<1x1x64x256xbf16>
    %439 = vector.shape_cast %438 : vector<1x1x64x256xbf16> to vector<64x256xbf16>
    %c0_165 = arith.constant 0 : index
    %c1_166 = arith.constant 1 : index
    %c0_167 = arith.constant 0 : index
    %c0_168 = arith.constant 0 : index
    %440 = vector.load %arg16[%c0_165, %c1_166, %c0_167, %c0_168] : memref<2x2x1x256xf32, #tpu.memory_space<vmem>>, vector<1x1x1x256xf32>
    %441 = vector.shape_cast %440 : vector<1x1x1x256xf32> to vector<1x256xf32>
    %442 = arith.truncf %437 : vector<8x64xf32> to vector<8x64xbf16>
    %cst_169 = arith.constant dense<0.000000e+00> : vector<8x256xf32>
    %443 = tpu.matmul %442, %439, %cst_169 {dimension_numbers = #tpu.dot_dimension_numbers<[1], [0], [0], [1], [0, 0, 1, 1], [], []>} : vector<8x64xbf16>, vector<64x256xbf16>, vector<8x256xf32> -> vector<8x256xf32>
    %444 = vector.broadcast %441 : vector<1x256xf32> to vector<8x256xf32>
    %445 = arith.addf %443, %444 : vector<8x256xf32>
    %446 = arith.mulf %445, %445 : vector<8x256xf32>
    %447 = arith.mulf %445, %446 : vector<8x256xf32>
    %cst_170 = arith.constant 4.471500e-02 : f32
    %448 = vector.broadcast %cst_170 : f32 to vector<8x256xf32>
    %449 = arith.mulf %448, %447 : vector<8x256xf32>
    %450 = arith.addf %445, %449 : vector<8x256xf32>
    %cst_171 = arith.constant 0.797884583 : f32
    %451 = vector.broadcast %cst_171 : f32 to vector<8x256xf32>
    %452 = arith.mulf %451, %450 : vector<8x256xf32>
    %453 = math.tanh %452 : vector<8x256xf32>
    %cst_172 = arith.constant 1.000000e+00 : f32
    %454 = vector.broadcast %cst_172 : f32 to vector<8x256xf32>
    %455 = arith.addf %454, %453 : vector<8x256xf32>
    %cst_173 = arith.constant 5.000000e-01 : f32
    %456 = vector.broadcast %cst_173 : f32 to vector<8x256xf32>
    %457 = arith.mulf %456, %455 : vector<8x256xf32>
    %458 = arith.mulf %445, %457 : vector<8x256xf32>
    %c0_174 = arith.constant 0 : index
    %c1_175 = arith.constant 1 : index
    %c0_176 = arith.constant 0 : index
    %c0_177 = arith.constant 0 : index
    %459 = vector.load %arg17[%c0_174, %c1_175, %c0_176, %c0_177] : memref<2x2x256x64xbf16, #tpu.memory_space<vmem>>, vector<1x1x256x64xbf16>
    %460 = vector.shape_cast %459 : vector<1x1x256x64xbf16> to vector<256x64xbf16>
    %c0_178 = arith.constant 0 : index
    %c1_179 = arith.constant 1 : index
    %c0_180 = arith.constant 0 : index
    %c0_181 = arith.constant 0 : index
    %461 = vector.load %arg18[%c0_178, %c1_179, %c0_180, %c0_181] : memref<2x2x1x64xf32, #tpu.memory_space<vmem>>, vector<1x1x1x64xf32>
    %462 = vector.shape_cast %461 : vector<1x1x1x64xf32> to vector<1x64xf32>
    %463 = arith.truncf %458 : vector<8x256xf32> to vector<8x256xbf16>
    %cst_182 = arith.constant dense<0.000000e+00> : vector<8x64xf32>
    %464 = tpu.matmul %463, %460, %cst_182 {dimension_numbers = #tpu.dot_dimension_numbers<[1], [0], [0], [1], [0, 0, 1, 1], [], []>} : vector<8x256xbf16>, vector<256x64xbf16>, vector<8x64xf32> -> vector<8x64xf32>
    %465 = vector.broadcast %462 : vector<1x64xf32> to vector<8x64xf32>
    %466 = arith.addf %464, %465 : vector<8x64xf32>
    %467 = vector.broadcast %64 : vector<1x64xf32> to vector<8x64xf32>
    %468 = arith.mulf %467, %466 : vector<8x64xf32>
    %469 = arith.addf %413, %468 : vector<8x64xf32>
    %c1_183 = arith.constant 1 : index
    %c0_184 = arith.constant 0 : index
    %c0_185 = arith.constant 0 : index
    %470 = vector.load %arg8[%c1_183, %c0_184, %c0_185] : memref<2x64x1536xbf16, #tpu.memory_space<vmem>>, vector<1x64x1536xbf16>
    %471 = vector.shape_cast %470 : vector<1x64x1536xbf16> to vector<64x1536xbf16>
    %c1_186 = arith.constant 1 : index
    %c0_187 = arith.constant 0 : index
    %c0_188 = arith.constant 0 : index
    %472 = vector.load %arg9[%c1_186, %c0_187, %c0_188] : memref<2x1x1536xf32, #tpu.memory_space<vmem>>, vector<1x1x1536xf32>
    %473 = vector.shape_cast %472 : vector<1x1x1536xf32> to vector<1x1536xf32>
    %474 = arith.truncf %5 : vector<1x64xf32> to vector<1x64xbf16>
    %cst_189 = arith.constant dense<0.000000e+00> : vector<1x1536xf32>
    %475 = tpu.matmul %474, %471, %cst_189 {dimension_numbers = #tpu.dot_dimension_numbers<[1], [0], [0], [1], [0, 0, 1, 1], [], []>} : vector<1x64xbf16>, vector<64x1536xbf16>, vector<1x1536xf32> -> vector<1x1536xf32>
    %476 = arith.addf %475, %473 : vector<1x1536xf32>
    %477 = vector.extract_strided_slice %476 {offsets = [0, 0], sizes = [1, 64], strides = [1, 1]} : vector<1x1536xf32> to vector<1x64xf32>
    %478 = vector.extract_strided_slice %476 {offsets = [0, 128], sizes = [1, 64], strides = [1, 1]} : vector<1x1536xf32> to vector<1x64xf32>
    %479 = vector.extract_strided_slice %476 {offsets = [0, 256], sizes = [1, 64], strides = [1, 1]} : vector<1x1536xf32> to vector<1x64xf32>
    %480 = vector.extract_strided_slice %476 {offsets = [0, 384], sizes = [1, 64], strides = [1, 1]} : vector<1x1536xf32> to vector<1x64xf32>
    %481 = vector.extract_strided_slice %476 {offsets = [0, 512], sizes = [1, 64], strides = [1, 1]} : vector<1x1536xf32> to vector<1x64xf32>
    %482 = vector.extract_strided_slice %476 {offsets = [0, 640], sizes = [1, 64], strides = [1, 1]} : vector<1x1536xf32> to vector<1x64xf32>
    %483 = vector.extract_strided_slice %476 {offsets = [0, 768], sizes = [1, 64], strides = [1, 1]} : vector<1x1536xf32> to vector<1x64xf32>
    %484 = vector.extract_strided_slice %476 {offsets = [0, 896], sizes = [1, 64], strides = [1, 1]} : vector<1x1536xf32> to vector<1x64xf32>
    %cst_190 = arith.constant dense<0.000000e+00> : vector<64xf32>
    %485 = vector.multi_reduction <add>, %410, %cst_190 [1] : vector<64x64xf32> to vector<64xf32>
    %486 = vector.shape_cast %485 : vector<64xf32> to vector<64x1xf32>
    %cst_191 = arith.constant 6.400000e+01 : f32
    %487 = vector.broadcast %cst_191 : f32 to vector<64x1xf32>
    %488 = arith.divf %486, %487 : vector<64x1xf32>
    %489 = vector.broadcast %488 : vector<64x1xf32> to vector<64x64xf32>
    %490 = arith.subf %410, %489 : vector<64x64xf32>
    %491 = arith.mulf %490, %490 : vector<64x64xf32>
    %cst_192 = arith.constant dense<0.000000e+00> : vector<64xf32>
    %492 = vector.multi_reduction <add>, %491, %cst_192 [1] : vector<64x64xf32> to vector<64xf32>
    %493 = vector.shape_cast %492 : vector<64xf32> to vector<64x1xf32>
    %cst_193 = arith.constant 6.400000e+01 : f32
    %494 = vector.broadcast %cst_193 : f32 to vector<64x1xf32>
    %495 = arith.divf %493, %494 : vector<64x1xf32>
    %496 = vector.broadcast %488 : vector<64x1xf32> to vector<64x64xf32>
    %497 = arith.subf %410, %496 : vector<64x64xf32>
    %cst_194 = arith.constant 9.99999997E-7 : f32
    %498 = vector.broadcast %cst_194 : f32 to vector<64x1xf32>
    %499 = arith.addf %495, %498 : vector<64x1xf32>
    %500 = math.rsqrt %499 : vector<64x1xf32>
    %501 = vector.broadcast %500 : vector<64x1xf32> to vector<64x64xf32>
    %502 = arith.mulf %497, %501 : vector<64x64xf32>
    %cst_195 = arith.constant 1.000000e+00 : f32
    %503 = vector.broadcast %cst_195 : f32 to vector<1x64xf32>
    %504 = arith.addf %503, %478 : vector<1x64xf32>
    %505 = vector.broadcast %504 : vector<1x64xf32> to vector<64x64xf32>
    %506 = arith.mulf %502, %505 : vector<64x64xf32>
    %507 = vector.broadcast %477 : vector<1x64xf32> to vector<64x64xf32>
    %508 = arith.addf %506, %507 : vector<64x64xf32>
    %cst_196 = arith.constant dense<0.000000e+00> : vector<8xf32>
    %509 = vector.multi_reduction <add>, %469, %cst_196 [1] : vector<8x64xf32> to vector<8xf32>
    %510 = vector.shape_cast %509 : vector<8xf32> to vector<8x1xf32>
    %cst_197 = arith.constant 6.400000e+01 : f32
    %511 = vector.broadcast %cst_197 : f32 to vector<8x1xf32>
    %512 = arith.divf %510, %511 : vector<8x1xf32>
    %513 = vector.broadcast %512 : vector<8x1xf32> to vector<8x64xf32>
    %514 = arith.subf %469, %513 : vector<8x64xf32>
    %515 = arith.mulf %514, %514 : vector<8x64xf32>
    %cst_198 = arith.constant dense<0.000000e+00> : vector<8xf32>
    %516 = vector.multi_reduction <add>, %515, %cst_198 [1] : vector<8x64xf32> to vector<8xf32>
    %517 = vector.shape_cast %516 : vector<8xf32> to vector<8x1xf32>
    %cst_199 = arith.constant 6.400000e+01 : f32
    %518 = vector.broadcast %cst_199 : f32 to vector<8x1xf32>
    %519 = arith.divf %517, %518 : vector<8x1xf32>
    %520 = vector.broadcast %512 : vector<8x1xf32> to vector<8x64xf32>
    %521 = arith.subf %469, %520 : vector<8x64xf32>
    %cst_200 = arith.constant 9.99999997E-7 : f32
    %522 = vector.broadcast %cst_200 : f32 to vector<8x1xf32>
    %523 = arith.addf %519, %522 : vector<8x1xf32>
    %524 = math.rsqrt %523 : vector<8x1xf32>
    %525 = vector.broadcast %524 : vector<8x1xf32> to vector<8x64xf32>
    %526 = arith.mulf %521, %525 : vector<8x64xf32>
    %cst_201 = arith.constant 1.000000e+00 : f32
    %527 = vector.broadcast %cst_201 : f32 to vector<1x64xf32>
    %528 = arith.addf %527, %484 : vector<1x64xf32>
    %529 = vector.broadcast %528 : vector<1x64xf32> to vector<8x64xf32>
    %530 = arith.mulf %526, %529 : vector<8x64xf32>
    %531 = vector.broadcast %483 : vector<1x64xf32> to vector<8x64xf32>
    %532 = arith.addf %530, %531 : vector<8x64xf32>
    %c1_202 = arith.constant 1 : index
    %c0_203 = arith.constant 0 : index
    %c0_204 = arith.constant 0 : index
    %c0_205 = arith.constant 0 : index
    %533 = vector.load %arg10[%c1_202, %c0_203, %c0_204, %c0_205] : memref<2x2x64x384xbf16, #tpu.memory_space<vmem>>, vector<1x1x64x384xbf16>
    %534 = vector.shape_cast %533 : vector<1x1x64x384xbf16> to vector<64x384xbf16>
    %c1_206 = arith.constant 1 : index
    %c0_207 = arith.constant 0 : index
    %c0_208 = arith.constant 0 : index
    %c0_209 = arith.constant 0 : index
    %535 = vector.load %arg11[%c1_206, %c0_207, %c0_208, %c0_209] : memref<2x2x1x384xf32, #tpu.memory_space<vmem>>, vector<1x1x1x384xf32>
    %536 = vector.shape_cast %535 : vector<1x1x1x384xf32> to vector<1x384xf32>
    %537 = arith.truncf %508 : vector<64x64xf32> to vector<64x64xbf16>
    %cst_210 = arith.constant dense<0.000000e+00> : vector<64x384xf32>
    %538 = tpu.matmul %537, %534, %cst_210 {dimension_numbers = #tpu.dot_dimension_numbers<[1], [0], [0], [1], [0, 0, 1, 1], [], []>} : vector<64x64xbf16>, vector<64x384xbf16>, vector<64x384xf32> -> vector<64x384xf32>
    %539 = vector.broadcast %536 : vector<1x384xf32> to vector<64x384xf32>
    %540 = arith.addf %538, %539 : vector<64x384xf32>
    %c1_211 = arith.constant 1 : index
    %c1_212 = arith.constant 1 : index
    %c0_213 = arith.constant 0 : index
    %c0_214 = arith.constant 0 : index
    %541 = vector.load %arg10[%c1_211, %c1_212, %c0_213, %c0_214] : memref<2x2x64x384xbf16, #tpu.memory_space<vmem>>, vector<1x1x64x384xbf16>
    %542 = vector.shape_cast %541 : vector<1x1x64x384xbf16> to vector<64x384xbf16>
    %c1_215 = arith.constant 1 : index
    %c1_216 = arith.constant 1 : index
    %c0_217 = arith.constant 0 : index
    %c0_218 = arith.constant 0 : index
    %543 = vector.load %arg11[%c1_215, %c1_216, %c0_217, %c0_218] : memref<2x2x1x384xf32, #tpu.memory_space<vmem>>, vector<1x1x1x384xf32>
    %544 = vector.shape_cast %543 : vector<1x1x1x384xf32> to vector<1x384xf32>
    %545 = arith.truncf %532 : vector<8x64xf32> to vector<8x64xbf16>
    %cst_219 = arith.constant dense<0.000000e+00> : vector<8x384xf32>
    %546 = tpu.matmul %545, %542, %cst_219 {dimension_numbers = #tpu.dot_dimension_numbers<[1], [0], [0], [1], [0, 0, 1, 1], [], []>} : vector<8x64xbf16>, vector<64x384xbf16>, vector<8x384xf32> -> vector<8x384xf32>
    %547 = vector.broadcast %544 : vector<1x384xf32> to vector<8x384xf32>
    %548 = arith.addf %546, %547 : vector<8x384xf32>
    %549 = tpu.concatenate %540, %548 in 0 : vector<64x384xf32>, vector<8x384xf32> -> vector<72x384xf32>
    %550 = vector.extract_strided_slice %549 {offsets = [0, 0], sizes = [72, 64], strides = [1, 1]} : vector<72x384xf32> to vector<72x64xf32>
    %551 = vector.extract_strided_slice %549 {offsets = [0, 128], sizes = [72, 64], strides = [1, 1]} : vector<72x384xf32> to vector<72x64xf32>
    %552 = vector.extract_strided_slice %549 {offsets = [0, 256], sizes = [72, 64], strides = [1, 1]} : vector<72x384xf32> to vector<72x64xf32>
    %c1_220 = arith.constant 1 : index
    %c0_221 = arith.constant 0 : index
    %c0_222 = arith.constant 0 : index
    %c0_223 = arith.constant 0 : index
    %553 = vector.load %arg12[%c1_220, %c0_221, %c0_222, %c0_223] : memref<2x2x1x64xf32, #tpu.memory_space<vmem>>, vector<1x1x1x64xf32>
    %554 = vector.shape_cast %553 : vector<1x1x1x64xf32> to vector<1x64xf32>
    %c1_224 = arith.constant 1 : index
    %c1_225 = arith.constant 1 : index
    %c0_226 = arith.constant 0 : index
    %c0_227 = arith.constant 0 : index
    %555 = vector.load %arg12[%c1_224, %c1_225, %c0_226, %c0_227] : memref<2x2x1x64xf32, #tpu.memory_space<vmem>>, vector<1x1x1x64xf32>
    %556 = vector.shape_cast %555 : vector<1x1x1x64xf32> to vector<1x64xf32>
    %cst_228 = arith.constant 0.000000e+00 : f32
    %557 = vector.broadcast %cst_228 : f32 to vector<72x64xf32>
    %558 = vector.broadcast %24 : vector<1x64xf32> to vector<72x64xf32>
    %559 = arith.mulf %550, %558 : vector<72x64xf32>
    %560 = vector.broadcast %24 : vector<1x64xf32> to vector<72x64xf32>
    %561 = arith.mulf %551, %560 : vector<72x64xf32>
    %562 = vector.broadcast %24 : vector<1x64xf32> to vector<72x64xf32>
    %563 = arith.mulf %552, %562 : vector<72x64xf32>
    %564 = arith.mulf %559, %559 : vector<72x64xf32>
    %cst_229 = arith.constant dense<0.000000e+00> : vector<72xf32>
    %565 = vector.multi_reduction <add>, %564, %cst_229 [1] : vector<72x64xf32> to vector<72xf32>
    %566 = vector.shape_cast %565 : vector<72xf32> to vector<72x1xf32>
    %cst_230 = arith.constant 6.250000e-02 : f32
    %567 = vector.broadcast %cst_230 : f32 to vector<72x1xf32>
    %568 = arith.mulf %566, %567 : vector<72x1xf32>
    %cst_231 = arith.constant 9.99999997E-7 : f32
    %569 = vector.broadcast %cst_231 : f32 to vector<72x1xf32>
    %570 = arith.addf %568, %569 : vector<72x1xf32>
    %571 = math.rsqrt %570 : vector<72x1xf32>
    %572 = vector.broadcast %571 : vector<72x1xf32> to vector<72x64xf32>
    %573 = arith.mulf %559, %572 : vector<72x64xf32>
    %574 = vector.broadcast %554 : vector<1x64xf32> to vector<72x64xf32>
    %575 = arith.mulf %573, %574 : vector<72x64xf32>
    %576 = arith.mulf %561, %561 : vector<72x64xf32>
    %cst_232 = arith.constant dense<0.000000e+00> : vector<72xf32>
    %577 = vector.multi_reduction <add>, %576, %cst_232 [1] : vector<72x64xf32> to vector<72xf32>
    %578 = vector.shape_cast %577 : vector<72xf32> to vector<72x1xf32>
    %cst_233 = arith.constant 6.250000e-02 : f32
    %579 = vector.broadcast %cst_233 : f32 to vector<72x1xf32>
    %580 = arith.mulf %578, %579 : vector<72x1xf32>
    %cst_234 = arith.constant 9.99999997E-7 : f32
    %581 = vector.broadcast %cst_234 : f32 to vector<72x1xf32>
    %582 = arith.addf %580, %581 : vector<72x1xf32>
    %583 = math.rsqrt %582 : vector<72x1xf32>
    %584 = vector.broadcast %583 : vector<72x1xf32> to vector<72x64xf32>
    %585 = arith.mulf %561, %584 : vector<72x64xf32>
    %586 = vector.broadcast %556 : vector<1x64xf32> to vector<72x64xf32>
    %587 = arith.mulf %585, %586 : vector<72x64xf32>
    %588 = arith.truncf %575 : vector<72x64xf32> to vector<72x64xbf16>
    %589 = arith.truncf %587 : vector<72x64xf32> to vector<72x64xbf16>
    %cst_235 = arith.constant dense<0.000000e+00> : vector<72x72xf32>
    %590 = tpu.matmul %588, %589, %cst_235 {dimension_numbers = #tpu.dot_dimension_numbers<[1], [1], [0], [0], [0, 0, 1, 0], [], []>} : vector<72x64xbf16>, vector<72x64xbf16>, vector<72x72xf32> -> vector<72x72xf32>
    %cst_236 = arith.constant 2.500000e-01 : f32
    %591 = vector.broadcast %cst_236 : f32 to vector<72x72xf32>
    %592 = arith.mulf %590, %591 : vector<72x72xf32>
    %cst_237 = arith.constant dense<0xFF800000> : vector<72xf32>
    %593 = vector.multi_reduction <maximumf>, %592, %cst_237 [1] : vector<72x72xf32> to vector<72xf32>
    %594 = vector.shape_cast %593 : vector<72xf32> to vector<72x1xf32>
    %595 = vector.broadcast %594 : vector<72x1xf32> to vector<72x72xf32>
    %596 = arith.subf %592, %595 : vector<72x72xf32>
    %597 = math.exp %596 : vector<72x72xf32>
    %cst_238 = arith.constant dense<0.000000e+00> : vector<72xf32>
    %598 = vector.multi_reduction <add>, %597, %cst_238 [1] : vector<72x72xf32> to vector<72xf32>
    %599 = vector.shape_cast %598 : vector<72xf32> to vector<72x1xf32>
    %600 = tpu.reciprocal %599 {approx = true} : vector<72x1xf32> -> vector<72x1xf32>
    %601 = vector.broadcast %600 : vector<72x1xf32> to vector<72x72xf32>
    %602 = arith.mulf %597, %601 : vector<72x72xf32>
    %603 = arith.truncf %602 : vector<72x72xf32> to vector<72x72xbf16>
    %604 = arith.truncf %563 : vector<72x64xf32> to vector<72x64xbf16>
    %cst_239 = arith.constant dense<0.000000e+00> : vector<72x64xf32>
    %605 = tpu.matmul %603, %604, %cst_239 {dimension_numbers = #tpu.dot_dimension_numbers<[1], [0], [0], [1], [0, 0, 1, 1], [], []>} : vector<72x72xbf16>, vector<72x64xbf16>, vector<72x64xf32> -> vector<72x64xf32>
    %606 = arith.addf %557, %605 : vector<72x64xf32>
    %607 = vector.broadcast %31 : vector<1x64xf32> to vector<72x64xf32>
    %608 = arith.mulf %550, %607 : vector<72x64xf32>
    %609 = vector.broadcast %31 : vector<1x64xf32> to vector<72x64xf32>
    %610 = arith.mulf %551, %609 : vector<72x64xf32>
    %611 = vector.broadcast %31 : vector<1x64xf32> to vector<72x64xf32>
    %612 = arith.mulf %552, %611 : vector<72x64xf32>
    %613 = arith.mulf %608, %608 : vector<72x64xf32>
    %cst_240 = arith.constant dense<0.000000e+00> : vector<72xf32>
    %614 = vector.multi_reduction <add>, %613, %cst_240 [1] : vector<72x64xf32> to vector<72xf32>
    %615 = vector.shape_cast %614 : vector<72xf32> to vector<72x1xf32>
    %cst_241 = arith.constant 6.250000e-02 : f32
    %616 = vector.broadcast %cst_241 : f32 to vector<72x1xf32>
    %617 = arith.mulf %615, %616 : vector<72x1xf32>
    %cst_242 = arith.constant 9.99999997E-7 : f32
    %618 = vector.broadcast %cst_242 : f32 to vector<72x1xf32>
    %619 = arith.addf %617, %618 : vector<72x1xf32>
    %620 = math.rsqrt %619 : vector<72x1xf32>
    %621 = vector.broadcast %620 : vector<72x1xf32> to vector<72x64xf32>
    %622 = arith.mulf %608, %621 : vector<72x64xf32>
    %623 = vector.broadcast %554 : vector<1x64xf32> to vector<72x64xf32>
    %624 = arith.mulf %622, %623 : vector<72x64xf32>
    %625 = arith.mulf %610, %610 : vector<72x64xf32>
    %cst_243 = arith.constant dense<0.000000e+00> : vector<72xf32>
    %626 = vector.multi_reduction <add>, %625, %cst_243 [1] : vector<72x64xf32> to vector<72xf32>
    %627 = vector.shape_cast %626 : vector<72xf32> to vector<72x1xf32>
    %cst_244 = arith.constant 6.250000e-02 : f32
    %628 = vector.broadcast %cst_244 : f32 to vector<72x1xf32>
    %629 = arith.mulf %627, %628 : vector<72x1xf32>
    %cst_245 = arith.constant 9.99999997E-7 : f32
    %630 = vector.broadcast %cst_245 : f32 to vector<72x1xf32>
    %631 = arith.addf %629, %630 : vector<72x1xf32>
    %632 = math.rsqrt %631 : vector<72x1xf32>
    %633 = vector.broadcast %632 : vector<72x1xf32> to vector<72x64xf32>
    %634 = arith.mulf %610, %633 : vector<72x64xf32>
    %635 = vector.broadcast %556 : vector<1x64xf32> to vector<72x64xf32>
    %636 = arith.mulf %634, %635 : vector<72x64xf32>
    %637 = arith.truncf %624 : vector<72x64xf32> to vector<72x64xbf16>
    %638 = arith.truncf %636 : vector<72x64xf32> to vector<72x64xbf16>
    %cst_246 = arith.constant dense<0.000000e+00> : vector<72x72xf32>
    %639 = tpu.matmul %637, %638, %cst_246 {dimension_numbers = #tpu.dot_dimension_numbers<[1], [1], [0], [0], [0, 0, 1, 0], [], []>} : vector<72x64xbf16>, vector<72x64xbf16>, vector<72x72xf32> -> vector<72x72xf32>
    %cst_247 = arith.constant 2.500000e-01 : f32
    %640 = vector.broadcast %cst_247 : f32 to vector<72x72xf32>
    %641 = arith.mulf %639, %640 : vector<72x72xf32>
    %cst_248 = arith.constant dense<0xFF800000> : vector<72xf32>
    %642 = vector.multi_reduction <maximumf>, %641, %cst_248 [1] : vector<72x72xf32> to vector<72xf32>
    %643 = vector.shape_cast %642 : vector<72xf32> to vector<72x1xf32>
    %644 = vector.broadcast %643 : vector<72x1xf32> to vector<72x72xf32>
    %645 = arith.subf %641, %644 : vector<72x72xf32>
    %646 = math.exp %645 : vector<72x72xf32>
    %cst_249 = arith.constant dense<0.000000e+00> : vector<72xf32>
    %647 = vector.multi_reduction <add>, %646, %cst_249 [1] : vector<72x72xf32> to vector<72xf32>
    %648 = vector.shape_cast %647 : vector<72xf32> to vector<72x1xf32>
    %649 = tpu.reciprocal %648 {approx = true} : vector<72x1xf32> -> vector<72x1xf32>
    %650 = vector.broadcast %649 : vector<72x1xf32> to vector<72x72xf32>
    %651 = arith.mulf %646, %650 : vector<72x72xf32>
    %652 = arith.truncf %651 : vector<72x72xf32> to vector<72x72xbf16>
    %653 = arith.truncf %612 : vector<72x64xf32> to vector<72x64xbf16>
    %cst_250 = arith.constant dense<0.000000e+00> : vector<72x64xf32>
    %654 = tpu.matmul %652, %653, %cst_250 {dimension_numbers = #tpu.dot_dimension_numbers<[1], [0], [0], [1], [0, 0, 1, 1], [], []>} : vector<72x72xbf16>, vector<72x64xbf16>, vector<72x64xf32> -> vector<72x64xf32>
    %655 = arith.addf %606, %654 : vector<72x64xf32>
    %656 = vector.broadcast %38 : vector<1x64xf32> to vector<72x64xf32>
    %657 = arith.mulf %550, %656 : vector<72x64xf32>
    %658 = vector.broadcast %38 : vector<1x64xf32> to vector<72x64xf32>
    %659 = arith.mulf %551, %658 : vector<72x64xf32>
    %660 = vector.broadcast %38 : vector<1x64xf32> to vector<72x64xf32>
    %661 = arith.mulf %552, %660 : vector<72x64xf32>
    %662 = arith.mulf %657, %657 : vector<72x64xf32>
    %cst_251 = arith.constant dense<0.000000e+00> : vector<72xf32>
    %663 = vector.multi_reduction <add>, %662, %cst_251 [1] : vector<72x64xf32> to vector<72xf32>
    %664 = vector.shape_cast %663 : vector<72xf32> to vector<72x1xf32>
    %cst_252 = arith.constant 6.250000e-02 : f32
    %665 = vector.broadcast %cst_252 : f32 to vector<72x1xf32>
    %666 = arith.mulf %664, %665 : vector<72x1xf32>
    %cst_253 = arith.constant 9.99999997E-7 : f32
    %667 = vector.broadcast %cst_253 : f32 to vector<72x1xf32>
    %668 = arith.addf %666, %667 : vector<72x1xf32>
    %669 = math.rsqrt %668 : vector<72x1xf32>
    %670 = vector.broadcast %669 : vector<72x1xf32> to vector<72x64xf32>
    %671 = arith.mulf %657, %670 : vector<72x64xf32>
    %672 = vector.broadcast %554 : vector<1x64xf32> to vector<72x64xf32>
    %673 = arith.mulf %671, %672 : vector<72x64xf32>
    %674 = arith.mulf %659, %659 : vector<72x64xf32>
    %cst_254 = arith.constant dense<0.000000e+00> : vector<72xf32>
    %675 = vector.multi_reduction <add>, %674, %cst_254 [1] : vector<72x64xf32> to vector<72xf32>
    %676 = vector.shape_cast %675 : vector<72xf32> to vector<72x1xf32>
    %cst_255 = arith.constant 6.250000e-02 : f32
    %677 = vector.broadcast %cst_255 : f32 to vector<72x1xf32>
    %678 = arith.mulf %676, %677 : vector<72x1xf32>
    %cst_256 = arith.constant 9.99999997E-7 : f32
    %679 = vector.broadcast %cst_256 : f32 to vector<72x1xf32>
    %680 = arith.addf %678, %679 : vector<72x1xf32>
    %681 = math.rsqrt %680 : vector<72x1xf32>
    %682 = vector.broadcast %681 : vector<72x1xf32> to vector<72x64xf32>
    %683 = arith.mulf %659, %682 : vector<72x64xf32>
    %684 = vector.broadcast %556 : vector<1x64xf32> to vector<72x64xf32>
    %685 = arith.mulf %683, %684 : vector<72x64xf32>
    %686 = arith.truncf %673 : vector<72x64xf32> to vector<72x64xbf16>
    %687 = arith.truncf %685 : vector<72x64xf32> to vector<72x64xbf16>
    %cst_257 = arith.constant dense<0.000000e+00> : vector<72x72xf32>
    %688 = tpu.matmul %686, %687, %cst_257 {dimension_numbers = #tpu.dot_dimension_numbers<[1], [1], [0], [0], [0, 0, 1, 0], [], []>} : vector<72x64xbf16>, vector<72x64xbf16>, vector<72x72xf32> -> vector<72x72xf32>
    %cst_258 = arith.constant 2.500000e-01 : f32
    %689 = vector.broadcast %cst_258 : f32 to vector<72x72xf32>
    %690 = arith.mulf %688, %689 : vector<72x72xf32>
    %cst_259 = arith.constant dense<0xFF800000> : vector<72xf32>
    %691 = vector.multi_reduction <maximumf>, %690, %cst_259 [1] : vector<72x72xf32> to vector<72xf32>
    %692 = vector.shape_cast %691 : vector<72xf32> to vector<72x1xf32>
    %693 = vector.broadcast %692 : vector<72x1xf32> to vector<72x72xf32>
    %694 = arith.subf %690, %693 : vector<72x72xf32>
    %695 = math.exp %694 : vector<72x72xf32>
    %cst_260 = arith.constant dense<0.000000e+00> : vector<72xf32>
    %696 = vector.multi_reduction <add>, %695, %cst_260 [1] : vector<72x72xf32> to vector<72xf32>
    %697 = vector.shape_cast %696 : vector<72xf32> to vector<72x1xf32>
    %698 = tpu.reciprocal %697 {approx = true} : vector<72x1xf32> -> vector<72x1xf32>
    %699 = vector.broadcast %698 : vector<72x1xf32> to vector<72x72xf32>
    %700 = arith.mulf %695, %699 : vector<72x72xf32>
    %701 = arith.truncf %700 : vector<72x72xf32> to vector<72x72xbf16>
    %702 = arith.truncf %661 : vector<72x64xf32> to vector<72x64xbf16>
    %cst_261 = arith.constant dense<0.000000e+00> : vector<72x64xf32>
    %703 = tpu.matmul %701, %702, %cst_261 {dimension_numbers = #tpu.dot_dimension_numbers<[1], [0], [0], [1], [0, 0, 1, 1], [], []>} : vector<72x72xbf16>, vector<72x64xbf16>, vector<72x64xf32> -> vector<72x64xf32>
    %704 = arith.addf %655, %703 : vector<72x64xf32>
    %705 = vector.broadcast %45 : vector<1x64xf32> to vector<72x64xf32>
    %706 = arith.mulf %550, %705 : vector<72x64xf32>
    %707 = vector.broadcast %45 : vector<1x64xf32> to vector<72x64xf32>
    %708 = arith.mulf %551, %707 : vector<72x64xf32>
    %709 = vector.broadcast %45 : vector<1x64xf32> to vector<72x64xf32>
    %710 = arith.mulf %552, %709 : vector<72x64xf32>
    %711 = arith.mulf %706, %706 : vector<72x64xf32>
    %cst_262 = arith.constant dense<0.000000e+00> : vector<72xf32>
    %712 = vector.multi_reduction <add>, %711, %cst_262 [1] : vector<72x64xf32> to vector<72xf32>
    %713 = vector.shape_cast %712 : vector<72xf32> to vector<72x1xf32>
    %cst_263 = arith.constant 6.250000e-02 : f32
    %714 = vector.broadcast %cst_263 : f32 to vector<72x1xf32>
    %715 = arith.mulf %713, %714 : vector<72x1xf32>
    %cst_264 = arith.constant 9.99999997E-7 : f32
    %716 = vector.broadcast %cst_264 : f32 to vector<72x1xf32>
    %717 = arith.addf %715, %716 : vector<72x1xf32>
    %718 = math.rsqrt %717 : vector<72x1xf32>
    %719 = vector.broadcast %718 : vector<72x1xf32> to vector<72x64xf32>
    %720 = arith.mulf %706, %719 : vector<72x64xf32>
    %721 = vector.broadcast %554 : vector<1x64xf32> to vector<72x64xf32>
    %722 = arith.mulf %720, %721 : vector<72x64xf32>
    %723 = arith.mulf %708, %708 : vector<72x64xf32>
    %cst_265 = arith.constant dense<0.000000e+00> : vector<72xf32>
    %724 = vector.multi_reduction <add>, %723, %cst_265 [1] : vector<72x64xf32> to vector<72xf32>
    %725 = vector.shape_cast %724 : vector<72xf32> to vector<72x1xf32>
    %cst_266 = arith.constant 6.250000e-02 : f32
    %726 = vector.broadcast %cst_266 : f32 to vector<72x1xf32>
    %727 = arith.mulf %725, %726 : vector<72x1xf32>
    %cst_267 = arith.constant 9.99999997E-7 : f32
    %728 = vector.broadcast %cst_267 : f32 to vector<72x1xf32>
    %729 = arith.addf %727, %728 : vector<72x1xf32>
    %730 = math.rsqrt %729 : vector<72x1xf32>
    %731 = vector.broadcast %730 : vector<72x1xf32> to vector<72x64xf32>
    %732 = arith.mulf %708, %731 : vector<72x64xf32>
    %733 = vector.broadcast %556 : vector<1x64xf32> to vector<72x64xf32>
    %734 = arith.mulf %732, %733 : vector<72x64xf32>
    %735 = arith.truncf %722 : vector<72x64xf32> to vector<72x64xbf16>
    %736 = arith.truncf %734 : vector<72x64xf32> to vector<72x64xbf16>
    %cst_268 = arith.constant dense<0.000000e+00> : vector<72x72xf32>
    %737 = tpu.matmul %735, %736, %cst_268 {dimension_numbers = #tpu.dot_dimension_numbers<[1], [1], [0], [0], [0, 0, 1, 0], [], []>} : vector<72x64xbf16>, vector<72x64xbf16>, vector<72x72xf32> -> vector<72x72xf32>
    %cst_269 = arith.constant 2.500000e-01 : f32
    %738 = vector.broadcast %cst_269 : f32 to vector<72x72xf32>
    %739 = arith.mulf %737, %738 : vector<72x72xf32>
    %cst_270 = arith.constant dense<0xFF800000> : vector<72xf32>
    %740 = vector.multi_reduction <maximumf>, %739, %cst_270 [1] : vector<72x72xf32> to vector<72xf32>
    %741 = vector.shape_cast %740 : vector<72xf32> to vector<72x1xf32>
    %742 = vector.broadcast %741 : vector<72x1xf32> to vector<72x72xf32>
    %743 = arith.subf %739, %742 : vector<72x72xf32>
    %744 = math.exp %743 : vector<72x72xf32>
    %cst_271 = arith.constant dense<0.000000e+00> : vector<72xf32>
    %745 = vector.multi_reduction <add>, %744, %cst_271 [1] : vector<72x72xf32> to vector<72xf32>
    %746 = vector.shape_cast %745 : vector<72xf32> to vector<72x1xf32>
    %747 = tpu.reciprocal %746 {approx = true} : vector<72x1xf32> -> vector<72x1xf32>
    %748 = vector.broadcast %747 : vector<72x1xf32> to vector<72x72xf32>
    %749 = arith.mulf %744, %748 : vector<72x72xf32>
    %750 = arith.truncf %749 : vector<72x72xf32> to vector<72x72xbf16>
    %751 = arith.truncf %710 : vector<72x64xf32> to vector<72x64xbf16>
    %cst_272 = arith.constant dense<0.000000e+00> : vector<72x64xf32>
    %752 = tpu.matmul %750, %751, %cst_272 {dimension_numbers = #tpu.dot_dimension_numbers<[1], [0], [0], [1], [0, 0, 1, 1], [], []>} : vector<72x72xbf16>, vector<72x64xbf16>, vector<72x64xf32> -> vector<72x64xf32>
    %753 = arith.addf %704, %752 : vector<72x64xf32>
    %754 = vector.extract_strided_slice %753 {offsets = [0, 0], sizes = [64, 64], strides = [1, 1]} : vector<72x64xf32> to vector<64x64xf32>
    %c1_273 = arith.constant 1 : index
    %c0_274 = arith.constant 0 : index
    %c0_275 = arith.constant 0 : index
    %c0_276 = arith.constant 0 : index
    %755 = vector.load %arg13[%c1_273, %c0_274, %c0_275, %c0_276] : memref<2x2x64x64xbf16, #tpu.memory_space<vmem>>, vector<1x1x64x64xbf16>
    %756 = vector.shape_cast %755 : vector<1x1x64x64xbf16> to vector<64x64xbf16>
    %c1_277 = arith.constant 1 : index
    %c0_278 = arith.constant 0 : index
    %c0_279 = arith.constant 0 : index
    %c0_280 = arith.constant 0 : index
    %757 = vector.load %arg14[%c1_277, %c0_278, %c0_279, %c0_280] : memref<2x2x1x64xf32, #tpu.memory_space<vmem>>, vector<1x1x1x64xf32>
    %758 = vector.shape_cast %757 : vector<1x1x1x64xf32> to vector<1x64xf32>
    %759 = arith.truncf %754 : vector<64x64xf32> to vector<64x64xbf16>
    %cst_281 = arith.constant dense<0.000000e+00> : vector<64x64xf32>
    %760 = tpu.matmul %759, %756, %cst_281 {dimension_numbers = #tpu.dot_dimension_numbers<[1], [0], [0], [1], [0, 0, 1, 1], [], []>} : vector<64x64xbf16>, vector<64x64xbf16>, vector<64x64xf32> -> vector<64x64xf32>
    %761 = vector.broadcast %758 : vector<1x64xf32> to vector<64x64xf32>
    %762 = arith.addf %760, %761 : vector<64x64xf32>
    %763 = vector.broadcast %479 : vector<1x64xf32> to vector<64x64xf32>
    %764 = arith.mulf %763, %762 : vector<64x64xf32>
    %765 = arith.addf %410, %764 : vector<64x64xf32>
    %cst_282 = arith.constant dense<0.000000e+00> : vector<64xf32>
    %766 = vector.multi_reduction <add>, %765, %cst_282 [1] : vector<64x64xf32> to vector<64xf32>
    %767 = vector.shape_cast %766 : vector<64xf32> to vector<64x1xf32>
    %cst_283 = arith.constant 6.400000e+01 : f32
    %768 = vector.broadcast %cst_283 : f32 to vector<64x1xf32>
    %769 = arith.divf %767, %768 : vector<64x1xf32>
    %770 = vector.broadcast %769 : vector<64x1xf32> to vector<64x64xf32>
    %771 = arith.subf %765, %770 : vector<64x64xf32>
    %772 = arith.mulf %771, %771 : vector<64x64xf32>
    %cst_284 = arith.constant dense<0.000000e+00> : vector<64xf32>
    %773 = vector.multi_reduction <add>, %772, %cst_284 [1] : vector<64x64xf32> to vector<64xf32>
    %774 = vector.shape_cast %773 : vector<64xf32> to vector<64x1xf32>
    %cst_285 = arith.constant 6.400000e+01 : f32
    %775 = vector.broadcast %cst_285 : f32 to vector<64x1xf32>
    %776 = arith.divf %774, %775 : vector<64x1xf32>
    %777 = vector.broadcast %769 : vector<64x1xf32> to vector<64x64xf32>
    %778 = arith.subf %765, %777 : vector<64x64xf32>
    %cst_286 = arith.constant 9.99999997E-7 : f32
    %779 = vector.broadcast %cst_286 : f32 to vector<64x1xf32>
    %780 = arith.addf %776, %779 : vector<64x1xf32>
    %781 = math.rsqrt %780 : vector<64x1xf32>
    %782 = vector.broadcast %781 : vector<64x1xf32> to vector<64x64xf32>
    %783 = arith.mulf %778, %782 : vector<64x64xf32>
    %cst_287 = arith.constant 1.000000e+00 : f32
    %784 = vector.broadcast %cst_287 : f32 to vector<1x64xf32>
    %785 = arith.addf %784, %481 : vector<1x64xf32>
    %786 = vector.broadcast %785 : vector<1x64xf32> to vector<64x64xf32>
    %787 = arith.mulf %783, %786 : vector<64x64xf32>
    %788 = vector.broadcast %480 : vector<1x64xf32> to vector<64x64xf32>
    %789 = arith.addf %787, %788 : vector<64x64xf32>
    %c1_288 = arith.constant 1 : index
    %c0_289 = arith.constant 0 : index
    %c0_290 = arith.constant 0 : index
    %c0_291 = arith.constant 0 : index
    %790 = vector.load %arg15[%c1_288, %c0_289, %c0_290, %c0_291] : memref<2x2x64x256xbf16, #tpu.memory_space<vmem>>, vector<1x1x64x256xbf16>
    %791 = vector.shape_cast %790 : vector<1x1x64x256xbf16> to vector<64x256xbf16>
    %c1_292 = arith.constant 1 : index
    %c0_293 = arith.constant 0 : index
    %c0_294 = arith.constant 0 : index
    %c0_295 = arith.constant 0 : index
    %792 = vector.load %arg16[%c1_292, %c0_293, %c0_294, %c0_295] : memref<2x2x1x256xf32, #tpu.memory_space<vmem>>, vector<1x1x1x256xf32>
    %793 = vector.shape_cast %792 : vector<1x1x1x256xf32> to vector<1x256xf32>
    %794 = arith.truncf %789 : vector<64x64xf32> to vector<64x64xbf16>
    %cst_296 = arith.constant dense<0.000000e+00> : vector<64x256xf32>
    %795 = tpu.matmul %794, %791, %cst_296 {dimension_numbers = #tpu.dot_dimension_numbers<[1], [0], [0], [1], [0, 0, 1, 1], [], []>} : vector<64x64xbf16>, vector<64x256xbf16>, vector<64x256xf32> -> vector<64x256xf32>
    %796 = vector.broadcast %793 : vector<1x256xf32> to vector<64x256xf32>
    %797 = arith.addf %795, %796 : vector<64x256xf32>
    %798 = arith.mulf %797, %797 : vector<64x256xf32>
    %799 = arith.mulf %797, %798 : vector<64x256xf32>
    %cst_297 = arith.constant 4.471500e-02 : f32
    %800 = vector.broadcast %cst_297 : f32 to vector<64x256xf32>
    %801 = arith.mulf %800, %799 : vector<64x256xf32>
    %802 = arith.addf %797, %801 : vector<64x256xf32>
    %cst_298 = arith.constant 0.797884583 : f32
    %803 = vector.broadcast %cst_298 : f32 to vector<64x256xf32>
    %804 = arith.mulf %803, %802 : vector<64x256xf32>
    %805 = math.tanh %804 : vector<64x256xf32>
    %cst_299 = arith.constant 1.000000e+00 : f32
    %806 = vector.broadcast %cst_299 : f32 to vector<64x256xf32>
    %807 = arith.addf %806, %805 : vector<64x256xf32>
    %cst_300 = arith.constant 5.000000e-01 : f32
    %808 = vector.broadcast %cst_300 : f32 to vector<64x256xf32>
    %809 = arith.mulf %808, %807 : vector<64x256xf32>
    %810 = arith.mulf %797, %809 : vector<64x256xf32>
    %c1_301 = arith.constant 1 : index
    %c0_302 = arith.constant 0 : index
    %c0_303 = arith.constant 0 : index
    %c0_304 = arith.constant 0 : index
    %811 = vector.load %arg17[%c1_301, %c0_302, %c0_303, %c0_304] : memref<2x2x256x64xbf16, #tpu.memory_space<vmem>>, vector<1x1x256x64xbf16>
    %812 = vector.shape_cast %811 : vector<1x1x256x64xbf16> to vector<256x64xbf16>
    %c1_305 = arith.constant 1 : index
    %c0_306 = arith.constant 0 : index
    %c0_307 = arith.constant 0 : index
    %c0_308 = arith.constant 0 : index
    %813 = vector.load %arg18[%c1_305, %c0_306, %c0_307, %c0_308] : memref<2x2x1x64xf32, #tpu.memory_space<vmem>>, vector<1x1x1x64xf32>
    %814 = vector.shape_cast %813 : vector<1x1x1x64xf32> to vector<1x64xf32>
    %815 = arith.truncf %810 : vector<64x256xf32> to vector<64x256xbf16>
    %cst_309 = arith.constant dense<0.000000e+00> : vector<64x64xf32>
    %816 = tpu.matmul %815, %812, %cst_309 {dimension_numbers = #tpu.dot_dimension_numbers<[1], [0], [0], [1], [0, 0, 1, 1], [], []>} : vector<64x256xbf16>, vector<256x64xbf16>, vector<64x64xf32> -> vector<64x64xf32>
    %817 = vector.broadcast %814 : vector<1x64xf32> to vector<64x64xf32>
    %818 = arith.addf %816, %817 : vector<64x64xf32>
    %819 = vector.broadcast %482 : vector<1x64xf32> to vector<64x64xf32>
    %820 = arith.mulf %819, %818 : vector<64x64xf32>
    %821 = arith.addf %765, %820 : vector<64x64xf32>
    %c0_310 = arith.constant 0 : index
    %c0_311 = arith.constant 0 : index
    %822 = vector.load %arg19[%c0_310, %c0_311] : memref<64x256xbf16, #tpu.memory_space<vmem>>, vector<64x256xbf16>
    %c0_312 = arith.constant 0 : index
    %c0_313 = arith.constant 0 : index
    %823 = vector.load %arg20[%c0_312, %c0_313] : memref<1x256xf32, #tpu.memory_space<vmem>>, vector<1x256xf32>
    %824 = arith.truncf %5 : vector<1x64xf32> to vector<1x64xbf16>
    %cst_314 = arith.constant dense<0.000000e+00> : vector<1x256xf32>
    %825 = tpu.matmul %824, %822, %cst_314 {dimension_numbers = #tpu.dot_dimension_numbers<[1], [0], [0], [1], [0, 0, 1, 1], [], []>} : vector<1x64xbf16>, vector<64x256xbf16>, vector<1x256xf32> -> vector<1x256xf32>
    %826 = arith.addf %825, %823 : vector<1x256xf32>
    %827 = vector.extract_strided_slice %826 {offsets = [0, 0], sizes = [1, 64], strides = [1, 1]} : vector<1x256xf32> to vector<1x64xf32>
    %828 = vector.extract_strided_slice %826 {offsets = [0, 128], sizes = [1, 64], strides = [1, 1]} : vector<1x256xf32> to vector<1x64xf32>
    %cst_315 = arith.constant dense<0.000000e+00> : vector<64xf32>
    %829 = vector.multi_reduction <add>, %821, %cst_315 [1] : vector<64x64xf32> to vector<64xf32>
    %830 = vector.shape_cast %829 : vector<64xf32> to vector<64x1xf32>
    %cst_316 = arith.constant 6.400000e+01 : f32
    %831 = vector.broadcast %cst_316 : f32 to vector<64x1xf32>
    %832 = arith.divf %830, %831 : vector<64x1xf32>
    %833 = vector.broadcast %832 : vector<64x1xf32> to vector<64x64xf32>
    %834 = arith.subf %821, %833 : vector<64x64xf32>
    %835 = arith.mulf %834, %834 : vector<64x64xf32>
    %cst_317 = arith.constant dense<0.000000e+00> : vector<64xf32>
    %836 = vector.multi_reduction <add>, %835, %cst_317 [1] : vector<64x64xf32> to vector<64xf32>
    %837 = vector.shape_cast %836 : vector<64xf32> to vector<64x1xf32>
    %cst_318 = arith.constant 6.400000e+01 : f32
    %838 = vector.broadcast %cst_318 : f32 to vector<64x1xf32>
    %839 = arith.divf %837, %838 : vector<64x1xf32>
    %840 = vector.broadcast %832 : vector<64x1xf32> to vector<64x64xf32>
    %841 = arith.subf %821, %840 : vector<64x64xf32>
    %cst_319 = arith.constant 9.99999997E-7 : f32
    %842 = vector.broadcast %cst_319 : f32 to vector<64x1xf32>
    %843 = arith.addf %839, %842 : vector<64x1xf32>
    %844 = math.rsqrt %843 : vector<64x1xf32>
    %845 = vector.broadcast %844 : vector<64x1xf32> to vector<64x64xf32>
    %846 = arith.mulf %841, %845 : vector<64x64xf32>
    %cst_320 = arith.constant 1.000000e+00 : f32
    %847 = vector.broadcast %cst_320 : f32 to vector<1x64xf32>
    %848 = arith.addf %847, %827 : vector<1x64xf32>
    %849 = vector.broadcast %848 : vector<1x64xf32> to vector<64x64xf32>
    %850 = arith.mulf %846, %849 : vector<64x64xf32>
    %851 = vector.broadcast %828 : vector<1x64xf32> to vector<64x64xf32>
    %852 = arith.addf %850, %851 : vector<64x64xf32>
    %cst_321 = arith.constant 0.000000e+00 : f32
    %853 = vector.broadcast %cst_321 : f32 to vector<8x128xf32>
    %854 = vector.extract_strided_slice %852 {offsets = [0, 0], sizes = [8, 64], strides = [1, 1]} : vector<64x64xf32> to vector<8x64xf32>
    %855 = arith.truncf %854 : vector<8x64xf32> to vector<8x64xbf16>
    %c0_322 = arith.constant 0 : index
    %c0_323 = arith.constant 0 : index
    %c0_324 = arith.constant 0 : index
    %856 = vector.load %arg21[%c0_322, %c0_323, %c0_324] : memref<8x64x128xbf16, #tpu.memory_space<vmem>>, vector<1x64x128xbf16>
    %857 = vector.shape_cast %856 : vector<1x64x128xbf16> to vector<64x128xbf16>
    %cst_325 = arith.constant dense<0.000000e+00> : vector<8x128xf32>
    %858 = tpu.matmul %855, %857, %cst_325 {dimension_numbers = #tpu.dot_dimension_numbers<[1], [0], [0], [1], [0, 0, 1, 1], [], []>} : vector<8x64xbf16>, vector<64x128xbf16>, vector<8x128xf32> -> vector<8x128xf32>
    %859 = arith.addf %853, %858 : vector<8x128xf32>
    %860 = vector.extract_strided_slice %852 {offsets = [8, 0], sizes = [8, 64], strides = [1, 1]} : vector<64x64xf32> to vector<8x64xf32>
    %861 = arith.truncf %860 : vector<8x64xf32> to vector<8x64xbf16>
    %c1_326 = arith.constant 1 : index
    %c0_327 = arith.constant 0 : index
    %c0_328 = arith.constant 0 : index
    %862 = vector.load %arg21[%c1_326, %c0_327, %c0_328] : memref<8x64x128xbf16, #tpu.memory_space<vmem>>, vector<1x64x128xbf16>
    %863 = vector.shape_cast %862 : vector<1x64x128xbf16> to vector<64x128xbf16>
    %cst_329 = arith.constant dense<0.000000e+00> : vector<8x128xf32>
    %864 = tpu.matmul %861, %863, %cst_329 {dimension_numbers = #tpu.dot_dimension_numbers<[1], [0], [0], [1], [0, 0, 1, 1], [], []>} : vector<8x64xbf16>, vector<64x128xbf16>, vector<8x128xf32> -> vector<8x128xf32>
    %865 = arith.addf %859, %864 : vector<8x128xf32>
    %866 = vector.extract_strided_slice %852 {offsets = [16, 0], sizes = [8, 64], strides = [1, 1]} : vector<64x64xf32> to vector<8x64xf32>
    %867 = arith.truncf %866 : vector<8x64xf32> to vector<8x64xbf16>
    %c2 = arith.constant 2 : index
    %c0_330 = arith.constant 0 : index
    %c0_331 = arith.constant 0 : index
    %868 = vector.load %arg21[%c2, %c0_330, %c0_331] : memref<8x64x128xbf16, #tpu.memory_space<vmem>>, vector<1x64x128xbf16>
    %869 = vector.shape_cast %868 : vector<1x64x128xbf16> to vector<64x128xbf16>
    %cst_332 = arith.constant dense<0.000000e+00> : vector<8x128xf32>
    %870 = tpu.matmul %867, %869, %cst_332 {dimension_numbers = #tpu.dot_dimension_numbers<[1], [0], [0], [1], [0, 0, 1, 1], [], []>} : vector<8x64xbf16>, vector<64x128xbf16>, vector<8x128xf32> -> vector<8x128xf32>
    %871 = arith.addf %865, %870 : vector<8x128xf32>
    %872 = vector.extract_strided_slice %852 {offsets = [24, 0], sizes = [8, 64], strides = [1, 1]} : vector<64x64xf32> to vector<8x64xf32>
    %873 = arith.truncf %872 : vector<8x64xf32> to vector<8x64xbf16>
    %c3 = arith.constant 3 : index
    %c0_333 = arith.constant 0 : index
    %c0_334 = arith.constant 0 : index
    %874 = vector.load %arg21[%c3, %c0_333, %c0_334] : memref<8x64x128xbf16, #tpu.memory_space<vmem>>, vector<1x64x128xbf16>
    %875 = vector.shape_cast %874 : vector<1x64x128xbf16> to vector<64x128xbf16>
    %cst_335 = arith.constant dense<0.000000e+00> : vector<8x128xf32>
    %876 = tpu.matmul %873, %875, %cst_335 {dimension_numbers = #tpu.dot_dimension_numbers<[1], [0], [0], [1], [0, 0, 1, 1], [], []>} : vector<8x64xbf16>, vector<64x128xbf16>, vector<8x128xf32> -> vector<8x128xf32>
    %877 = arith.addf %871, %876 : vector<8x128xf32>
    %878 = vector.extract_strided_slice %852 {offsets = [32, 0], sizes = [8, 64], strides = [1, 1]} : vector<64x64xf32> to vector<8x64xf32>
    %879 = arith.truncf %878 : vector<8x64xf32> to vector<8x64xbf16>
    %c4 = arith.constant 4 : index
    %c0_336 = arith.constant 0 : index
    %c0_337 = arith.constant 0 : index
    %880 = vector.load %arg21[%c4, %c0_336, %c0_337] : memref<8x64x128xbf16, #tpu.memory_space<vmem>>, vector<1x64x128xbf16>
    %881 = vector.shape_cast %880 : vector<1x64x128xbf16> to vector<64x128xbf16>
    %cst_338 = arith.constant dense<0.000000e+00> : vector<8x128xf32>
    %882 = tpu.matmul %879, %881, %cst_338 {dimension_numbers = #tpu.dot_dimension_numbers<[1], [0], [0], [1], [0, 0, 1, 1], [], []>} : vector<8x64xbf16>, vector<64x128xbf16>, vector<8x128xf32> -> vector<8x128xf32>
    %883 = arith.addf %877, %882 : vector<8x128xf32>
    %884 = vector.extract_strided_slice %852 {offsets = [40, 0], sizes = [8, 64], strides = [1, 1]} : vector<64x64xf32> to vector<8x64xf32>
    %885 = arith.truncf %884 : vector<8x64xf32> to vector<8x64xbf16>
    %c5 = arith.constant 5 : index
    %c0_339 = arith.constant 0 : index
    %c0_340 = arith.constant 0 : index
    %886 = vector.load %arg21[%c5, %c0_339, %c0_340] : memref<8x64x128xbf16, #tpu.memory_space<vmem>>, vector<1x64x128xbf16>
    %887 = vector.shape_cast %886 : vector<1x64x128xbf16> to vector<64x128xbf16>
    %cst_341 = arith.constant dense<0.000000e+00> : vector<8x128xf32>
    %888 = tpu.matmul %885, %887, %cst_341 {dimension_numbers = #tpu.dot_dimension_numbers<[1], [0], [0], [1], [0, 0, 1, 1], [], []>} : vector<8x64xbf16>, vector<64x128xbf16>, vector<8x128xf32> -> vector<8x128xf32>
    %889 = arith.addf %883, %888 : vector<8x128xf32>
    %890 = vector.extract_strided_slice %852 {offsets = [48, 0], sizes = [8, 64], strides = [1, 1]} : vector<64x64xf32> to vector<8x64xf32>
    %891 = arith.truncf %890 : vector<8x64xf32> to vector<8x64xbf16>
    %c6 = arith.constant 6 : index
    %c0_342 = arith.constant 0 : index
    %c0_343 = arith.constant 0 : index
    %892 = vector.load %arg21[%c6, %c0_342, %c0_343] : memref<8x64x128xbf16, #tpu.memory_space<vmem>>, vector<1x64x128xbf16>
    %893 = vector.shape_cast %892 : vector<1x64x128xbf16> to vector<64x128xbf16>
    %cst_344 = arith.constant dense<0.000000e+00> : vector<8x128xf32>
    %894 = tpu.matmul %891, %893, %cst_344 {dimension_numbers = #tpu.dot_dimension_numbers<[1], [0], [0], [1], [0, 0, 1, 1], [], []>} : vector<8x64xbf16>, vector<64x128xbf16>, vector<8x128xf32> -> vector<8x128xf32>
    %895 = arith.addf %889, %894 : vector<8x128xf32>
    %896 = vector.extract_strided_slice %852 {offsets = [56, 0], sizes = [8, 64], strides = [1, 1]} : vector<64x64xf32> to vector<8x64xf32>
    %897 = arith.truncf %896 : vector<8x64xf32> to vector<8x64xbf16>
    %c7 = arith.constant 7 : index
    %c0_345 = arith.constant 0 : index
    %c0_346 = arith.constant 0 : index
    %898 = vector.load %arg21[%c7, %c0_345, %c0_346] : memref<8x64x128xbf16, #tpu.memory_space<vmem>>, vector<1x64x128xbf16>
    %899 = vector.shape_cast %898 : vector<1x64x128xbf16> to vector<64x128xbf16>
    %cst_347 = arith.constant dense<0.000000e+00> : vector<8x128xf32>
    %900 = tpu.matmul %897, %899, %cst_347 {dimension_numbers = #tpu.dot_dimension_numbers<[1], [0], [0], [1], [0, 0, 1, 1], [], []>} : vector<8x64xbf16>, vector<64x128xbf16>, vector<8x128xf32> -> vector<8x128xf32>
    %901 = arith.addf %895, %900 : vector<8x128xf32>
    %c0_348 = arith.constant 0 : index
    %c0_349 = arith.constant 0 : index
    %902 = vector.load %arg22[%c0_348, %c0_349] : memref<1x128xf32, #tpu.memory_space<vmem>>, vector<1x128xf32>
    %903 = vector.broadcast %902 : vector<1x128xf32> to vector<8x128xf32>
    %904 = arith.addf %901, %903 : vector<8x128xf32>
    %c0_350 = arith.constant 0 : index
    %c0_351 = arith.constant 0 : index
    %c0_352 = arith.constant 0 : index
    %905 = vector.load %arg23[%c0_350, %c0_351, %c0_352] : memref<1x8x128xf32, #tpu.memory_space<vmem>>, vector<1x8x128xf32>
    %906 = vector.shape_cast %905 : vector<1x8x128xf32> to vector<8x128xf32>
    %907 = vector.shape_cast %904 : vector<8x128xf32> to vector<1x8x128xf32>
    tpu.vector_store %arg23[%c0_350, %c0_351, %c0_352], %907 {strides = array<i32>} : memref<1x8x128xf32, #tpu.memory_space<vmem>>, vector<1x8x128xf32>,
    return
  }
  func.func @transform_0(%arg0: i32) -> (i32, i32, i32) {
    %c0_i32 = arith.constant 0 : i32
    %c0_i32_0 = arith.constant 0 : i32
    %c0_i32_1 = arith.constant 0 : i32
    return %arg0, %c0_i32, %c0_i32_0 : i32, i32, i32
  }
  func.func @transform_1(%arg0: i32) -> (i32, i32, i32) {
    %c0_i32 = arith.constant 0 : i32
    %c0_i32_0 = arith.constant 0 : i32
    %c0_i32_1 = arith.constant 0 : i32
    return %arg0, %c0_i32, %c0_i32_0 : i32, i32, i32
  }
  func.func @transform_2(%arg0: i32) -> (i32, i32, i32) {
    %c0_i32 = arith.constant 0 : i32
    %c0_i32_0 = arith.constant 0 : i32
    %c0_i32_1 = arith.constant 0 : i32
    return %arg0, %c0_i32, %c0_i32_0 : i32, i32, i32
  }
  func.func @transform_3(%arg0: i32) -> (i32, i32) {
    %c0_i32 = arith.constant 0 : i32
    %c0_i32_0 = arith.constant 0 : i32
    %c0_i32_1 = arith.constant 0 : i32
    return %c0_i32, %c0_i32_0 : i32, i32
  }
  func.func @transform_4(%arg0: i32) -> (i32, i32) {
    %c0_i32 = arith.constant 0 : i32
    %c0_i32_0 = arith.constant 0 : i32
    %c0_i32_1 = arith.constant 0 : i32
    return %c0_i32, %c0_i32_0 : i32, i32
  }
  func.func @transform_5(%arg0: i32) -> (i32, i32) {
    %c0_i32 = arith.constant 0 : i32
    %c0_i32_0 = arith.constant 0 : i32
    %c0_i32_1 = arith.constant 0 : i32
    return %c0_i32, %c0_i32_0 : i32, i32
  }
  func.func @transform_6(%arg0: i32) -> (i32, i32) {
    %c0_i32 = arith.constant 0 : i32
    %c0_i32_0 = arith.constant 0 : i32
    %c0_i32_1 = arith.constant 0 : i32
    return %c0_i32, %c0_i32_0 : i32, i32
  }
  func.func @transform_7(%arg0: i32) -> (i32, i32, i32) {
    %c0_i32 = arith.constant 0 : i32
    %c0_i32_0 = arith.constant 0 : i32
    %c0_i32_1 = arith.constant 0 : i32
    %c0_i32_2 = arith.constant 0 : i32
    return %c0_i32, %c0_i32_0, %c0_i32_1 : i32, i32, i32
  }
  func.func @transform_8(%arg0: i32) -> (i32, i32, i32) {
    %c0_i32 = arith.constant 0 : i32
    %c0_i32_0 = arith.constant 0 : i32
    %c0_i32_1 = arith.constant 0 : i32
    %c0_i32_2 = arith.constant 0 : i32
    return %c0_i32, %c0_i32_0, %c0_i32_1 : i32, i32, i32
  }
  func.func @transform_9(%arg0: i32) -> (i32, i32, i32, i32) {
    %c0_i32 = arith.constant 0 : i32
    %c0_i32_0 = arith.constant 0 : i32
    %c0_i32_1 = arith.constant 0 : i32
    %c0_i32_2 = arith.constant 0 : i32
    %c0_i32_3 = arith.constant 0 : i32
    return %c0_i32, %c0_i32_0, %c0_i32_1, %c0_i32_2 : i32, i32, i32, i32
  }
  func.func @transform_10(%arg0: i32) -> (i32, i32, i32, i32) {
    %c0_i32 = arith.constant 0 : i32
    %c0_i32_0 = arith.constant 0 : i32
    %c0_i32_1 = arith.constant 0 : i32
    %c0_i32_2 = arith.constant 0 : i32
    %c0_i32_3 = arith.constant 0 : i32
    return %c0_i32, %c0_i32_0, %c0_i32_1, %c0_i32_2 : i32, i32, i32, i32
  }
  func.func @transform_11(%arg0: i32) -> (i32, i32, i32, i32) {
    %c0_i32 = arith.constant 0 : i32
    %c0_i32_0 = arith.constant 0 : i32
    %c0_i32_1 = arith.constant 0 : i32
    %c0_i32_2 = arith.constant 0 : i32
    %c0_i32_3 = arith.constant 0 : i32
    return %c0_i32, %c0_i32_0, %c0_i32_1, %c0_i32_2 : i32, i32, i32, i32
  }
  func.func @transform_12(%arg0: i32) -> (i32, i32, i32, i32) {
    %c0_i32 = arith.constant 0 : i32
    %c0_i32_0 = arith.constant 0 : i32
    %c0_i32_1 = arith.constant 0 : i32
    %c0_i32_2 = arith.constant 0 : i32
    %c0_i32_3 = arith.constant 0 : i32
    return %c0_i32, %c0_i32_0, %c0_i32_1, %c0_i32_2 : i32, i32, i32, i32
  }
  func.func @transform_13(%arg0: i32) -> (i32, i32, i32, i32) {
    %c0_i32 = arith.constant 0 : i32
    %c0_i32_0 = arith.constant 0 : i32
    %c0_i32_1 = arith.constant 0 : i32
    %c0_i32_2 = arith.constant 0 : i32
    %c0_i32_3 = arith.constant 0 : i32
    return %c0_i32, %c0_i32_0, %c0_i32_1, %c0_i32_2 : i32, i32, i32, i32
  }
  func.func @transform_14(%arg0: i32) -> (i32, i32, i32, i32) {
    %c0_i32 = arith.constant 0 : i32
    %c0_i32_0 = arith.constant 0 : i32
    %c0_i32_1 = arith.constant 0 : i32
    %c0_i32_2 = arith.constant 0 : i32
    %c0_i32_3 = arith.constant 0 : i32
    return %c0_i32, %c0_i32_0, %c0_i32_1, %c0_i32_2 : i32, i32, i32, i32
  }
  func.func @transform_15(%arg0: i32) -> (i32, i32, i32, i32) {
    %c0_i32 = arith.constant 0 : i32
    %c0_i32_0 = arith.constant 0 : i32
    %c0_i32_1 = arith.constant 0 : i32
    %c0_i32_2 = arith.constant 0 : i32
    %c0_i32_3 = arith.constant 0 : i32
    return %c0_i32, %c0_i32_0, %c0_i32_1, %c0_i32_2 : i32, i32, i32, i32
  }
  func.func @transform_16(%arg0: i32) -> (i32, i32, i32, i32) {
    %c0_i32 = arith.constant 0 : i32
    %c0_i32_0 = arith.constant 0 : i32
    %c0_i32_1 = arith.constant 0 : i32
    %c0_i32_2 = arith.constant 0 : i32
    %c0_i32_3 = arith.constant 0 : i32
    return %c0_i32, %c0_i32_0, %c0_i32_1, %c0_i32_2 : i32, i32, i32, i32
  }
  func.func @transform_17(%arg0: i32) -> (i32, i32, i32, i32) {
    %c0_i32 = arith.constant 0 : i32
    %c0_i32_0 = arith.constant 0 : i32
    %c0_i32_1 = arith.constant 0 : i32
    %c0_i32_2 = arith.constant 0 : i32
    %c0_i32_3 = arith.constant 0 : i32
    return %c0_i32, %c0_i32_0, %c0_i32_1, %c0_i32_2 : i32, i32, i32, i32
  }
  func.func @transform_18(%arg0: i32) -> (i32, i32) {
    %c0_i32 = arith.constant 0 : i32
    %c0_i32_0 = arith.constant 0 : i32
    %c0_i32_1 = arith.constant 0 : i32
    return %c0_i32, %c0_i32_0 : i32, i32
  }
  func.func @transform_19(%arg0: i32) -> (i32, i32) {
    %c0_i32 = arith.constant 0 : i32
    %c0_i32_0 = arith.constant 0 : i32
    %c0_i32_1 = arith.constant 0 : i32
    return %c0_i32, %c0_i32_0 : i32, i32
  }
  func.func @transform_20(%arg0: i32) -> (i32, i32, i32) {
    %c0_i32 = arith.constant 0 : i32
    %c0_i32_0 = arith.constant 0 : i32
    %c0_i32_1 = arith.constant 0 : i32
    %c0_i32_2 = arith.constant 0 : i32
    return %c0_i32, %c0_i32_0, %c0_i32_1 : i32, i32, i32
  }
  func.func @transform_21(%arg0: i32) -> (i32, i32) {
    %c0_i32 = arith.constant 0 : i32
    %c0_i32_0 = arith.constant 0 : i32
    %c0_i32_1 = arith.constant 0 : i32
    return %c0_i32, %c0_i32_0 : i32, i32
  }
  func.func @transform_22(%arg0: i32) -> (i32, i32, i32) {
    %c0_i32 = arith.constant 0 : i32
    %c0_i32_0 = arith.constant 0 : i32
    %c0_i32_1 = arith.constant 0 : i32
    return %arg0, %c0_i32, %c0_i32_0 : i32, i32, i32
  }
}

</mosaic_0001>

<llo_original>
// kernel: stable_diffusion_wrapper_forward.1
$region0: #{stable_diffusion_wrapper_forward.1}
  #allocation0 [shape = 'u32[]', space=smem, size = 0x4, offset = 0x4, fixed_abs, tag = 'smem constant byte address 0x4 - core index']
  #allocation1 [shape = 'u32[144,128]{1,0:T(1,128)}', space=vmem, size = 0x12000, scoped, tag = 'internal scratch']
  %s0 = inlined_call_operand.vmem [shape: f32[2,64,16], index: 0, kind: input, shape index: {}]
  %s1 = inlined_call_operand.vmem [shape: f32[2,8,32], index: 1, kind: input, shape index: {}]
  %s2 = inlined_call_operand.vmem [shape: f32[2,1,64], index: 2, kind: input, shape index: {}]
  %s3 = inlined_call_operand.vmem [shape: bf16[16,64], index: 3, kind: input, shape index: {}]
  %s4 = inlined_call_operand.vmem [shape: f32[64,64], index: 4, kind: input, shape index: {}]
  %s5 = inlined_call_operand.vmem [shape: bf16[32,64], index: 5, kind: input, shape index: {}]
  %s6 = inlined_call_operand.vmem [shape: f32[1,64], index: 6, kind: input, shape index: {}]
  %s7 = inlined_call_operand.vmem [shape: bf16[2,64,1536], index: 7, kind: input, shape index: {}]
  %s8 = inlined_call_operand.vmem [shape: f32[2,1,1536], index: 8, kind: input, shape index: {}]
  %s9 = inlined_call_operand.vmem [shape: bf16[2,2,64,384], index: 9, kind: input, shape index: {}]
  %s10 = inlined_call_operand.vmem [shape: f32[2,2,1,384], index: 10, kind: input, shape index: {}]
  %s11 = inlined_call_operand.vmem [shape: f32[2,2,1,64], index: 11, kind: input, shape index: {}]
  %s12 = inlined_call_operand.vmem [shape: bf16[2,2,64,64], index: 12, kind: input, shape index: {}]
  %s13 = inlined_call_operand.vmem [shape: f32[2,2,1,64], index: 13, kind: input, shape index: {}]
  %s14 = inlined_call_operand.vmem [shape: bf16[2,2,64,256], index: 14, kind: input, shape index: {}]
  %s15 = inlined_call_operand.vmem [shape: f32[2,2,1,256], index: 15, kind: input, shape index: {}]
  %s16 = inlined_call_operand.vmem [shape: bf16[2,2,256,64], index: 16, kind: input, shape index: {}]
  %s17 = inlined_call_operand.vmem [shape: f32[2,2,1,64], index: 17, kind: input, shape index: {}]
  %s18 = inlined_call_operand.vmem [shape: bf16[64,256], index: 18, kind: input, shape index: {}]
  %s19 = inlined_call_operand.vmem [shape: f32[1,256], index: 19, kind: input, shape index: {}]
  %s20 = inlined_call_operand.vmem [shape: bf16[8,64,128], index: 20, kind: input, shape index: {}]
  %s21 = inlined_call_operand.vmem [shape: f32[1,128], index: 21, kind: input, shape index: {}]
  %s22 = inlined_call_operand.vmem [shape: f32[2,8,128], index: 22, kind: output, shape index: {}]
  %s23 = sld [smem:[#allocation0]]
  $region121: #{stable_diffusion_wrapper_forward.1} parent=0
    _
  %s25 = ssub.s32 1, %s23
  %s26 = scalar_select 0, %s25, %s23
  loop: start=0, step=1, limit=4
  $region2: #{stable_diffusion_wrapper_forward.1} parent=0 // loop_pre_header
    _
  $region3: #{stable_diffusion_wrapper_forward.1} parent=0 // loop_header
    %s28 = sphi 0, %s32
    %p29 = scmp.ge.s32.totalorder %s28, 4
    %s38 = sphi 0, %s40
    %s41 = sphi 0, %s38
    %s42 = sphi 0, %s41
    %s58 = sphi 0, %s42
    %s64 = sphi 0, %s66
    %s67 = sphi 0, %s64
    %s68 = sphi 0, %s67
    %s84 = sphi 0, %s68
    %s90 = sphi 0, %s92
    %s93 = sphi 0, %s90
    %s94 = sphi 0, %s93
    %s110 = sphi 0, %s94
    %s114 = sphi 0, %s114
    %s116 = sphi 0, %s114
    %s117 = sphi 0, %s116
    %s131 = sphi 0, %s117
    %s135 = sphi 0, %s135
    %s137 = sphi 0, %s135
    %s138 = sphi 0, %s137
    %s152 = sphi 0, %s138
    %s156 = sphi 0, %s156
    %s158 = sphi 0, %s156
    %s159 = sphi 0, %s158
    %s173 = sphi 0, %s159
    %s177 = sphi 0, %s177
    %s179 = sphi 0, %s177
    %s180 = sphi 0, %s179
    %s194 = sphi 0, %s180
    %s198 = sphi 0, %s198
    %s200 = sphi 0, %s198
    %s201 = sphi 0, %s200
    %s215 = sphi 0, %s201
    %s219 = sphi 0, %s219
    %s221 = sphi 0, %s219
    %s222 = sphi 0, %s221
    %s236 = sphi 0, %s222
    %s240 = sphi 0, %s240
    %s242 = sphi 0, %s240
    %s243 = sphi 0, %s242
    %s257 = sphi 0, %s243
    %s261 = sphi 0, %s261
    %s263 = sphi 0, %s261
    %s264 = sphi 0, %s263
    %s278 = sphi 0, %s264
    %s282 = sphi 0, %s282
    %s284 = sphi 0, %s282
    %s285 = sphi 0, %s284
    %s299 = sphi 0, %s285
    %s303 = sphi 0, %s303
    %s305 = sphi 0, %s303
    %s306 = sphi 0, %s305
    %s320 = sphi 0, %s306
    %s324 = sphi 0, %s324
    %s326 = sphi 0, %s324
    %s327 = sphi 0, %s326
    %s341 = sphi 0, %s327
    %s345 = sphi 0, %s345
    %s347 = sphi 0, %s345
    %s348 = sphi 0, %s347
    %s362 = sphi 0, %s348
    %s366 = sphi 0, %s366
    %s368 = sphi 0, %s366
    %s369 = sphi 0, %s368
    %s383 = sphi 0, %s369
    %s387 = sphi 0, %s387
    %s389 = sphi 0, %s387
    %s390 = sphi 0, %s389
    %s404 = sphi 0, %s390
    %s408 = sphi 0, %s408
    %s410 = sphi 0, %s408
    %s411 = sphi 0, %s410
    %s425 = sphi 0, %s411
    %s429 = sphi 0, %s429
    %s431 = sphi 0, %s429
    %s432 = sphi 0, %s431
    %s446 = sphi 0, %s432
    %s450 = sphi 0, %s450
    %s452 = sphi 0, %s450
    %s453 = sphi 0, %s452
    %s467 = sphi 0, %s453
    %s471 = sphi 0, %s471
    %s473 = sphi 0, %s471
    %s474 = sphi 0, %s473
    %s488 = sphi 0, %s474
    %s492 = sphi 0, %s492
    %s494 = sphi 0, %s492
    %s495 = sphi 0, %s494
    %s509 = sphi 0, %s495
    %s515 = sphi 0, %s517
    %s518 = sphi 0, %s515
    %s519 = sphi 0, %s518
    %s535 = sphi 0, %s519
  $region4: #{stable_diffusion_wrapper_forward.1} parent=0 // loop_header_branch
    %31 = sbr.rel (%p29) target = $region8
  $region5: #{stable_diffusion_wrapper_forward.1} parent=0 // loop_body
    %s33 = ssub.s32 %s28, 1
    %s34 = ssub.s32 %s28, 2
    %s35 = sadd.s32 %s28, 1
    %s36 = ssub.s32 %s28, %s35
    %p37 = scmp.eq.s32.totalorder %s36, 0
    %s39 = sadd.s32 %s38, 1
    %s40 = scalar_select %p37, %s38, %s39
    %p43 = pneg %p37
    %p44 = scmp.eq.s32.totalorder %s28, 1
    %p45 = por %p43, %p44
    %p46 = scmp.ne.s32.totalorder %s38, %s41
    %p47 = scmp.eq.s32.totalorder %s28, 0
    %p48 = por %p46, %p47
    %p49 = scmp.ne.s32.totalorder %s38, %s41
    %p50 = scmp.eq.s32.totalorder %s33, 1
    %p51 = por %p49, %p50
    %p52 = scmp.ne.s32.totalorder %s41, %s42
    %p53 = scmp.eq.s32.totalorder %s33, 0
    %p54 = por %p52, %p53
    %p55 = scmp.ne.s32.totalorder %s41, %s42
    %p56 = scmp.eq.s32.totalorder %s34, 1
    %p57 = por %p55, %p56
    %p59 = scmp.ne.s32.totalorder %s42, %s58
    %p60 = scmp.eq.s32.totalorder %s34, 0
    %p61 = por %p59, %p60
    %s62 = ssub.s32 %s28, %s35
    %p63 = scmp.eq.s32.totalorder %s62, 0
    %s65 = sadd.s32 %s64, 1
    %s66 = scalar_select %p63, %s64, %s65
    %p69 = pneg %p63
    %p70 = scmp.eq.s32.totalorder %s28, 1
    %p71 = por %p69, %p70
    %p72 = scmp.ne.s32.totalorder %s64, %s67
    %p73 = scmp.eq.s32.totalorder %s28, 0
    %p74 = por %p72, %p73
    %p75 = scmp.ne.s32.totalorder %s64, %s67
    %p76 = scmp.eq.s32.totalorder %s33, 1
    %p77 = por %p75, %p76
    %p78 = scmp.ne.s32.totalorder %s67, %s68
    %p79 = scmp.eq.s32.totalorder %s33, 0
    %p80 = por %p78, %p79
    %p81 = scmp.ne.s32.totalorder %s67, %s68
    %p82 = scmp.eq.s32.totalorder %s34, 1
    %p83 = por %p81, %p82
    %p85 = scmp.ne.s32.totalorder %s68, %s84
    %p86 = scmp.eq.s32.totalorder %s34, 0
    %p87 = por %p85, %p86
    %s88 = ssub.s32 %s28, %s35
    %p89 = scmp.eq.s32.totalorder %s88, 0
    %s91 = sadd.s32 %s90, 1
    %s92 = scalar_select %p89, %s90, %s91
    %p95 = pneg %p89
    %p96 = scmp.eq.s32.totalorder %s28, 1
    %p97 = por %p95, %p96
    %p98 = scmp.ne.s32.totalorder %s90, %s93
    %p99 = scmp.eq.s32.totalorder %s28, 0
    %p100 = por %p98, %p99
    %p101 = scmp.ne.s32.totalorder %s90, %s93
    %p102 = scmp.eq.s32.totalorder %s33, 1
    %p103 = por %p101, %p102
    %p104 = scmp.ne.s32.totalorder %s93, %s94
    %p105 = scmp.eq.s32.totalorder %s33, 0
    %p106 = por %p104, %p105
    %p107 = scmp.ne.s32.totalorder %s93, %s94
    %p108 = scmp.eq.s32.totalorder %s34, 1
    %p109 = por %p107, %p108
    %p111 = scmp.ne.s32.totalorder %s94, %s110
    %p112 = scmp.eq.s32.totalorder %s34, 0
    %p113 = por %p111, %p112
    %s115 = sadd.s32 %s114, 1
    %p118 = scmp.eq.s32.totalorder %s28, 1
    %p119 = scmp.ne.s32.totalorder %s114, %s116
    %p120 = scmp.eq.s32.totalorder %s28, 0
    %p121 = por %p119, %p120
    %p122 = scmp.ne.s32.totalorder %s114, %s116
    %p123 = scmp.eq.s32.totalorder %s33, 1
    %p124 = por %p122, %p123
    %p125 = scmp.ne.s32.totalorder %s116, %s117
    %p126 = scmp.eq.s32.totalorder %s33, 0
    %p127 = por %p125, %p126
    %p128 = scmp.ne.s32.totalorder %s116, %s117
    %p129 = scmp.eq.s32.totalorder %s34, 1
    %p130 = por %p128, %p129
    %p132 = scmp.ne.s32.totalorder %s117, %s131
    %p133 = scmp.eq.s32.totalorder %s34, 0
    %p134 = por %p132, %p133
    %s136 = sadd.s32 %s135, 1
    %p139 = scmp.eq.s32.totalorder %s28, 1
    %p140 = scmp.ne.s32.totalorder %s135, %s137
    %p141 = scmp.eq.s32.totalorder %s28, 0
    %p142 = por %p140, %p141
    %p143 = scmp.ne.s32.totalorder %s135, %s137
    %p144 = scmp.eq.s32.totalorder %s33, 1
    %p145 = por %p143, %p144
    %p146 = scmp.ne.s32.totalorder %s137, %s138
    %p147 = scmp.eq.s32.totalorder %s33, 0
    %p148 = por %p146, %p147
    %p149 = scmp.ne.s32.totalorder %s137, %s138
    %p150 = scmp.eq.s32.totalorder %s34, 1
    %p151 = por %p149, %p150
    %p153 = scmp.ne.s32.totalorder %s138, %s152
    %p154 = scmp.eq.s32.totalorder %s34, 0
    %p155 = por %p153, %p154
    %s157 = sadd.s32 %s156, 1
    %p160 = scmp.eq.s32.totalorder %s28, 1
    %p161 = scmp.ne.s32.totalorder %s156, %s158
    %p162 = scmp.eq.s32.totalorder %s28, 0
    %p163 = por %p161, %p162
    %p164 = scmp.ne.s32.totalorder %s156, %s158
    %p165 = scmp.eq.s32.totalorder %s33, 1
    %p166 = por %p164, %p165
    %p167 = scmp.ne.s32.totalorder %s158, %s159
    %p168 = scmp.eq.s32.totalorder %s33, 0
    %p169 = por %p167, %p168
    %p170 = scmp.ne.s32.totalorder %s158, %s159
    %p171 = scmp.eq.s32.totalorder %s34, 1
    %p172 = por %p170, %p171
    %p174 = scmp.ne.s32.totalorder %s159, %s173
    %p175 = scmp.eq.s32.totalorder %s34, 0
    %p176 = por %p174, %p175
    %s178 = sadd.s32 %s177, 1
    %p181 = scmp.eq.s32.totalorder %s28, 1
    %p182 = scmp.ne.s32.totalorder %s177, %s179
    %p183 = scmp.eq.s32.totalorder %s28, 0
    %p184 = por %p182, %p183
    %p185 = scmp.ne.s32.totalorder %s177, %s179
    %p186 = scmp.eq.s32.totalorder %s33, 1
    %p187 = por %p185, %p186
    %p188 = scmp.ne.s32.totalorder %s179, %s180
    %p189 = scmp.eq.s32.totalorder %s33, 0
    %p190 = por %p188, %p189
    %p191 = scmp.ne.s32.totalorder %s179, %s180
    %p192 = scmp.eq.s32.totalorder %s34, 1
    %p193 = por %p191, %p192
    %p195 = scmp.ne.s32.totalorder %s180, %s194
    %p196 = scmp.eq.s32.totalorder %s34, 0
    %p197 = por %p195, %p196
    %s199 = sadd.s32 %s198, 1
    %p202 = scmp.eq.s32.totalorder %s28, 1
    %p203 = scmp.ne.s32.totalorder %s198, %s200
    %p204 = scmp.eq.s32.totalorder %s28, 0
    %p205 = por %p203, %p204
    %p206 = scmp.ne.s32.totalorder %s198, %s200
    %p207 = scmp.eq.s32.totalorder %s33, 1
    %p208 = por %p206, %p207
    %p209 = scmp.ne.s32.totalorder %s200, %s201
    %p210 = scmp.eq.s32.totalorder %s33, 0
    %p211 = por %p209, %p210
    %p212 = scmp.ne.s32.totalorder %s200, %s201
    %p213 = scmp.eq.s32.totalorder %s34, 1
    %p214 = por %p212, %p213
    %p216 = scmp.ne.s32.totalorder %s201, %s215
    %p217 = scmp.eq.s32.totalorder %s34, 0
    %p218 = por %p216, %p217
    %s220 = sadd.s32 %s219, 1
    %p223 = scmp.eq.s32.totalorder %s28, 1
    %p224 = scmp.ne.s32.totalorder %s219, %s221
    %p225 = scmp.eq.s32.totalorder %s28, 0
    %p226 = por %p224, %p225
    %p227 = scmp.ne.s32.totalorder %s219, %s221
    %p228 = scmp.eq.s32.totalorder %s33, 1
    %p229 = por %p227, %p228
    %p230 = scmp.ne.s32.totalorder %s221, %s222
    %p231 = scmp.eq.s32.totalorder %s33, 0
    %p232 = por %p230, %p231
    %p233 = scmp.ne.s32.totalorder %s221, %s222
    %p234 = scmp.eq.s32.totalorder %s34, 1
    %p235 = por %p233, %p234
    %p237 = scmp.ne.s32.totalorder %s222, %s236
    %p238 = scmp.eq.s32.totalorder %s34, 0
    %p239 = por %p237, %p238
    %s241 = sadd.s32 %s240, 1
    %p244 = scmp.eq.s32.totalorder %s28, 1
    %p245 = scmp.ne.s32.totalorder %s240, %s242
    %p246 = scmp.eq.s32.totalorder %s28, 0
    %p247 = por %p245, %p246
    %p248 = scmp.ne.s32.totalorder %s240, %s242
    %p249 = scmp.eq.s32.totalorder %s33, 1
    %p250 = por %p248, %p249
    %p251 = scmp.ne.s32.totalorder %s242, %s243
    %p252 = scmp.eq.s32.totalorder %s33, 0
    %p253 = por %p251, %p252
    %p254 = scmp.ne.s32.totalorder %s242, %s243
    %p255 = scmp.eq.s32.totalorder %s34, 1
    %p256 = por %p254, %p255
    %p258 = scmp.ne.s32.totalorder %s243, %s257
    %p259 = scmp.eq.s32.totalorder %s34, 0
    %p260 = por %p258, %p259
    %s262 = sadd.s32 %s261, 1
    %p265 = scmp.eq.s32.totalorder %s28, 1
    %p266 = scmp.ne.s32.totalorder %s261, %s263
    %p267 = scmp.eq.s32.totalorder %s28, 0
    %p268 = por %p266, %p267
    %p269 = scmp.ne.s32.totalorder %s261, %s263
    %p270 = scmp.eq.s32.totalorder %s33, 1
    %p271 = por %p269, %p270
    %p272 = scmp.ne.s32.totalorder %s263, %s264
    %p273 = scmp.eq.s32.totalorder %s33, 0
    %p274 = por %p272, %p273
    %p275 = scmp.ne.s32.totalorder %s263, %s264
    %p276 = scmp.eq.s32.totalorder %s34, 1
    %p277 = por %p275, %p276
    %p279 = scmp.ne.s32.totalorder %s264, %s278
    %p280 = scmp.eq.s32.totalorder %s34, 0
    %p281 = por %p279, %p280
    %s283 = sadd.s32 %s282, 1
    %p286 = scmp.eq.s32.totalorder %s28, 1
    %p287 = scmp.ne.s32.totalorder %s282, %s284
    %p288 = scmp.eq.s32.totalorder %s28, 0
    %p289 = por %p287, %p288
    %p290 = scmp.ne.s32.totalorder %s282, %s284
    %p291 = scmp.eq.s32.totalorder %s33, 1
    %p292 = por %p290, %p291
    %p293 = scmp.ne.s32.totalorder %s284, %s285
    %p294 = scmp.eq.s32.totalorder %s33, 0
    %p295 = por %p293, %p294
    %p296 = scmp.ne.s32.totalorder %s284, %s285
    %p297 = scmp.eq.s32.totalorder %s34, 1
    %p298 = por %p296, %p297
    %p300 = scmp.ne.s32.totalorder %s285, %s299
    %p301 = scmp.eq.s32.totalorder %s34, 0
    %p302 = por %p300, %p301
    %s304 = sadd.s32 %s303, 1
    %p307 = scmp.eq.s32.totalorder %s28, 1
    %p308 = scmp.ne.s32.totalorder %s303, %s305
    %p309 = scmp.eq.s32.totalorder %s28, 0
    %p310 = por %p308, %p309
    %p311 = scmp.ne.s32.totalorder %s303, %s305
    %p312 = scmp.eq.s32.totalorder %s33, 1
    %p313 = por %p311, %p312
    %p314 = scmp.ne.s32.totalorder %s305, %s306
    %p315 = scmp.eq.s32.totalorder %s33, 0
    %p316 = por %p314, %p315
    %p317 = scmp.ne.s32.totalorder %s305, %s306
    %p318 = scmp.eq.s32.totalorder %s34, 1
    %p319 = por %p317, %p318
    %p321 = scmp.ne.s32.totalorder %s306, %s320
    %p322 = scmp.eq.s32.totalorder %s34, 0
    %p323 = por %p321, %p322
    %s325 = sadd.s32 %s324, 1
    %p328 = scmp.eq.s32.totalorder %s28, 1
    %p329 = scmp.ne.s32.totalorder %s324, %s326
    %p330 = scmp.eq.s32.totalorder %s28, 0
    %p331 = por %p329, %p330
    %p332 = scmp.ne.s32.totalorder %s324, %s326
    %p333 = scmp.eq.s32.totalorder %s33, 1
    %p334 = por %p332, %p333
    %p335 = scmp.ne.s32.totalorder %s326, %s327
    %p336 = scmp.eq.s32.totalorder %s33, 0
    %p337 = por %p335, %p336
    %p338 = scmp.ne.s32.totalorder %s326, %s327
    %p339 = scmp.eq.s32.totalorder %s34, 1
    %p340 = por %p338, %p339
    %p342 = scmp.ne.s32.totalorder %s327, %s341
    %p343 = scmp.eq.s32.totalorder %s34, 0
    %p344 = por %p342, %p343
    %s346 = sadd.s32 %s345, 1
    %p349 = scmp.eq.s32.totalorder %s28, 1
    %p350 = scmp.ne.s32.totalorder %s345, %s347
    %p351 = scmp.eq.s32.totalorder %s28, 0
    %p352 = por %p350, %p351
    %p353 = scmp.ne.s32.totalorder %s345, %s347
    %p354 = scmp.eq.s32.totalorder %s33, 1
    %p355 = por %p353, %p354
    %p356 = scmp.ne.s32.totalorder %s347, %s348
    %p357 = scmp.eq.s32.totalorder %s33, 0
    %p358 = por %p356, %p357
    %p359 = scmp.ne.s32.totalorder %s347, %s348
    %p360 = scmp.eq.s32.totalorder %s34, 1
    %p361 = por %p359, %p360
    %p363 = scmp.ne.s32.totalorder %s348, %s362
    %p364 = scmp.eq.s32.totalorder %s34, 0
    %p365 = por %p363, %p364
    %s367 = sadd.s32 %s366, 1
    %p370 = scmp.eq.s32.totalorder %s28, 1
    %p371 = scmp.ne.s32.totalorder %s366, %s368
    %p372 = scmp.eq.s32.totalorder %s28, 0
    %p373 = por %p371, %p372
    %p374 = scmp.ne.s32.totalorder %s366, %s368
    %p375 = scmp.eq.s32.totalorder %s33, 1
    %p376 = por %p374, %p375
    %p377 = scmp.ne.s32.totalorder %s368, %s369
    %p378 = scmp.eq.s32.totalorder %s33, 0
    %p379 = por %p377, %p378
    %p380 = scmp.ne.s32.totalorder %s368, %s369
    %p381 = scmp.eq.s32.totalorder %s34, 1
    %p382 = por %p380, %p381
    %p384 = scmp.ne.s32.totalorder %s369, %s383
    %p385 = scmp.eq.s32.totalorder %s34, 0
    %p386 = por %p384, %p385
    %s388 = sadd.s32 %s387, 1
    %p391 = scmp.eq.s32.totalorder %s28, 1
    %p392 = scmp.ne.s32.totalorder %s387, %s389
    %p393 = scmp.eq.s32.totalorder %s28, 0
    %p394 = por %p392, %p393
    %p395 = scmp.ne.s32.totalorder %s387, %s389
    %p396 = scmp.eq.s32.totalorder %s33, 1
    %p397 = por %p395, %p396
    %p398 = scmp.ne.s32.totalorder %s389, %s390
    %p399 = scmp.eq.s32.totalorder %s33, 0
    %p400 = por %p398, %p399
    %p401 = scmp.ne.s32.totalorder %s389, %s390
    %p402 = scmp.eq.s32.totalorder %s34, 1
    %p403 = por %p401, %p402
    %p405 = scmp.ne.s32.totalorder %s390, %s404
    %p406 = scmp.eq.s32.totalorder %s34, 0
    %p407 = por %p405, %p406
    %s409 = sadd.s32 %s408, 1
    %p412 = scmp.eq.s32.totalorder %s28, 1
    %p413 = scmp.ne.s32.totalorder %s408, %s410
    %p414 = scmp.eq.s32.totalorder %s28, 0
    %p415 = por %p413, %p414
    %p416 = scmp.ne.s32.totalorder %s408, %s410
    %p417 = scmp.eq.s32.totalorder %s33, 1
    %p418 = por %p416, %p417
    %p419 = scmp.ne.s32.totalorder %s410, %s411
    %p420 = scmp.eq.s32.totalorder %s33, 0
    %p421 = por %p419, %p420
    %p422 = scmp.ne.s32.totalorder %s410, %s411
    %p423 = scmp.eq.s32.totalorder %s34, 1
    %p424 = por %p422, %p423
    %p426 = scmp.ne.s32.totalorder %s411, %s425
    %p427 = scmp.eq.s32.totalorder %s34, 0
    %p428 = por %p426, %p427
    %s430 = sadd.s32 %s429, 1
    %p433 = scmp.eq.s32.totalorder %s28, 1
    %p434 = scmp.ne.s32.totalorder %s429, %s431
    %p435 = scmp.eq.s32.totalorder %s28, 0
    %p436 = por %p434, %p435
    %p437 = scmp.ne.s32.totalorder %s429, %s431
    %p438 = scmp.eq.s32.totalorder %s33, 1
    %p439 = por %p437, %p438
    %p440 = scmp.ne.s32.totalorder %s431, %s432
    %p441 = scmp.eq.s32.totalorder %s33, 0
    %p442 = por %p440, %p441
    %p443 = scmp.ne.s32.totalorder %s431, %s432
    %p444 = scmp.eq.s32.totalorder %s34, 1
    %p445 = por %p443, %p444
    %p447 = scmp.ne.s32.totalorder %s432, %s446
    %p448 = scmp.eq.s32.totalorder %s34, 0
    %p449 = por %p447, %p448
    %s451 = sadd.s32 %s450, 1
    %p454 = scmp.eq.s32.totalorder %s28, 1
    %p455 = scmp.ne.s32.totalorder %s450, %s452
    %p456 = scmp.eq.s32.totalorder %s28, 0
    %p457 = por %p455, %p456
    %p458 = scmp.ne.s32.totalorder %s450, %s452
    %p459 = scmp.eq.s32.totalorder %s33, 1
    %p460 = por %p458, %p459
    %p461 = scmp.ne.s32.totalorder %s452, %s453
    %p462 = scmp.eq.s32.totalorder %s33, 0
    %p463 = por %p461, %p462
    %p464 = scmp.ne.s32.totalorder %s452, %s453
    %p465 = scmp.eq.s32.totalorder %s34, 1
    %p466 = por %p464, %p465
    %p468 = scmp.ne.s32.totalorder %s453, %s467
    %p469 = scmp.eq.s32.totalorder %s34, 0
    %p470 = por %p468, %p469
    %s472 = sadd.s32 %s471, 1
    %p475 = scmp.eq.s32.totalorder %s28, 1
    %p476 = scmp.ne.s32.totalorder %s471, %s473
    %p477 = scmp.eq.s32.totalorder %s28, 0
    %p478 = por %p476, %p477
    %p479 = scmp.ne.s32.totalorder %s471, %s473
    %p480 = scmp.eq.s32.totalorder %s33, 1
    %p481 = por %p479, %p480
    %p482 = scmp.ne.s32.totalorder %s473, %s474
    %p483 = scmp.eq.s32.totalorder %s33, 0
    %p484 = por %p482, %p483
    %p485 = scmp.ne.s32.totalorder %s473, %s474
    %p486 = scmp.eq.s32.totalorder %s34, 1
    %p487 = por %p485, %p486
    %p489 = scmp.ne.s32.totalorder %s474, %s488
    %p490 = scmp.eq.s32.totalorder %s34, 0
    %p491 = por %p489, %p490
    %s493 = sadd.s32 %s492, 1
    %p496 = scmp.eq.s32.totalorder %s28, 1
    %p497 = scmp.ne.s32.totalorder %s492, %s494
    %p498 = scmp.eq.s32.totalorder %s28, 0
    %p499 = por %p497, %p498
    %p500 = scmp.ne.s32.totalorder %s492, %s494
    %p501 = scmp.eq.s32.totalorder %s33, 1
    %p502 = por %p500, %p501
    %p503 = scmp.ne.s32.totalorder %s494, %s495
    %p504 = scmp.eq.s32.totalorder %s33, 0
    %p505 = por %p503, %p504
    %p506 = scmp.ne.s32.totalorder %s494, %s495
    %p507 = scmp.eq.s32.totalorder %s34, 1
    %p508 = por %p506, %p507
    %p510 = scmp.ne.s32.totalorder %s495, %s509
    %p511 = scmp.eq.s32.totalorder %s34, 0
    %p512 = por %p510, %p511
    %s513 = ssub.s32 %s28, %s35
    %p514 = scmp.eq.s32.totalorder %s513, 0
    %s516 = sadd.s32 %s515, 1
    %s517 = scalar_select %p514, %s515, %s516
    %p520 = pneg %p514
    %p521 = scmp.eq.s32.totalorder %s28, 1
    %p522 = por %p520, %p521
    %p523 = scmp.ne.s32.totalorder %s515, %s518
    %p524 = scmp.eq.s32.totalorder %s28, 0
    %p525 = por %p523, %p524
    %p526 = scmp.ne.s32.totalorder %s515, %s518
    %p527 = scmp.eq.s32.totalorder %s33, 1
    %p528 = por %p526, %p527
    %p529 = scmp.ne.s32.totalorder %s518, %s519
    %p530 = scmp.eq.s32.totalorder %s33, 0
    %p531 = por %p529, %p530
    %p532 = scmp.ne.s32.totalorder %s518, %s519
    %p533 = scmp.eq.s32.totalorder %s34, 1
    %p534 = por %p532, %p533
    %p536 = scmp.ne.s32.totalorder %s519, %s535
    %p537 = scmp.eq.s32.totalorder %s34, 0
    %p538 = por %p536, %p537
    %p539 = scmp.le.s32.totalorder 1, %s28
    %p540 = scmp.lt.s32.totalorder %s28, 3
    %p541 = pnand %p539, %p540
    %p542 = pneg %p541
    // Predicated region
    $region9: #{stable_diffusion_wrapper_forward.1} parent=5 // pred_check
      _
    $region10: #{stable_diffusion_wrapper_forward.1} parent=5 // pred_check_branch
      %544 = sbr.rel (%p541) target = $region12
    $region11: #{stable_diffusion_wrapper_forward.1} parent=5 // pred_region
      %s545 = ssub.s32 %s28, 1
      // Predicated region
      $region13: #{stable_diffusion_wrapper_forward.1} parent=11 // pred_check
        %p546 = pneg %p127
      $region14: #{stable_diffusion_wrapper_forward.1} parent=11 // pred_check_branch
        %548 = sbr.rel (%p546) target = $region16
      $region15: #{stable_diffusion_wrapper_forward.1} parent=11 // pred_region
        _
      $region16: #{stable_diffusion_wrapper_forward.1} parent=11 // pred_fallthru
        _
      // Predicated region
      $region17: #{stable_diffusion_wrapper_forward.1} parent=11 // pred_check
        %p549 = pneg %p148
      $region18: #{stable_diffusion_wrapper_forward.1} parent=11 // pred_check_branch
        %551 = sbr.rel (%p549) target = $region20
      $region19: #{stable_diffusion_wrapper_forward.1} parent=11 // pred_region
        _
      $region20: #{stable_diffusion_wrapper_forward.1} parent=11 // pred_fallthru
        _
      // Predicated region
      $region21: #{stable_diffusion_wrapper_forward.1} parent=11 // pred_check
        %p552 = pneg %p169
      $region22: #{stable_diffusion_wrapper_forward.1} parent=11 // pred_check_branch
        %554 = sbr.rel (%p552) target = $region24
      $region23: #{stable_diffusion_wrapper_forward.1} parent=11 // pred_region
        _
      $region24: #{stable_diffusion_wrapper_forward.1} parent=11 // pred_fallthru
        _
      // Predicated region
      $region25: #{stable_diffusion_wrapper_forward.1} parent=11 // pred_check
        %p555 = pneg %p190
      $region26: #{stable_diffusion_wrapper_forward.1} parent=11 // pred_check_branch
        %557 = sbr.rel (%p555) target = $region28
      $region27: #{stable_diffusion_wrapper_forward.1} parent=11 // pred_region
        _
      $region28: #{stable_diffusion_wrapper_forward.1} parent=11 // pred_fallthru
        _
      // Predicated region
      $region29: #{stable_diffusion_wrapper_forward.1} parent=11 // pred_check
        %p558 = pneg %p211
      $region30: #{stable_diffusion_wrapper_forward.1} parent=11 // pred_check_branch
        %560 = sbr.rel (%p558) target = $region32
      $region31: #{stable_diffusion_wrapper_forward.1} parent=11 // pred_region
        _
      $region32: #{stable_diffusion_wrapper_forward.1} parent=11 // pred_fallthru
        _
      // Predicated region
      $region33: #{stable_diffusion_wrapper_forward.1} parent=11 // pred_check
        %p561 = pneg %p232
      $region34: #{stable_diffusion_wrapper_forward.1} parent=11 // pred_check_branch
        %563 = sbr.rel (%p561) target = $region36
      $region35: #{stable_diffusion_wrapper_forward.1} parent=11 // pred_region
        _
      $region36: #{stable_diffusion_wrapper_forward.1} parent=11 // pred_fallthru
        _
      // Predicated region
      $region37: #{stable_diffusion_wrapper_forward.1} parent=11 // pred_check
        %p564 = pneg %p253
      $region38: #{stable_diffusion_wrapper_forward.1} parent=11 // pred_check_branch
        %566 = sbr.rel (%p564) target = $region40
      $region39: #{stable_diffusion_wrapper_forward.1} parent=11 // pred_region
        _
      $region40: #{stable_diffusion_wrapper_forward.1} parent=11 // pred_fallthru
        _
      // Predicated region
      $region41: #{stable_diffusion_wrapper_forward.1} parent=11 // pred_check
        %p567 = pneg %p274
      $region42: #{stable_diffusion_wrapper_forward.1} parent=11 // pred_check_branch
        %569 = sbr.rel (%p567) target = $region44
      $region43: #{stable_diffusion_wrapper_forward.1} parent=11 // pred_region
        _
      $region44: #{stable_diffusion_wrapper_forward.1} parent=11 // pred_fallthru
        _
      // Predicated region
      $region45: #{stable_diffusion_wrapper_forward.1} parent=11 // pred_check
        %p570 = pneg %p295
      $region46: #{stable_diffusion_wrapper_forward.1} parent=11 // pred_check_branch
        %572 = sbr.rel (%p570) target = $region48
      $region47: #{stable_diffusion_wrapper_forward.1} parent=11 // pred_region
        _
      $region48: #{stable_diffusion_wrapper_forward.1} parent=11 // pred_fallthru
        _
      // Predicated region
      $region49: #{stable_diffusion_wrapper_forward.1} parent=11 // pred_check
        %p573 = pneg %p316
      $region50: #{stable_diffusion_wrapper_forward.1} parent=11 // pred_check_branch
        %575 = sbr.rel (%p573) target = $region52
      $region51: #{stable_diffusion_wrapper_forward.1} parent=11 // pred_region
        _
      $region52: #{stable_diffusion_wrapper_forward.1} parent=11 // pred_fallthru
        _
      // Predicated region
      $region53: #{stable_diffusion_wrapper_forward.1} parent=11 // pred_check
        %p576 = pneg %p337
      $region54: #{stable_diffusion_wrapper_forward.1} parent=11 // pred_check_branch
        %578 = sbr.rel (%p576) target = $region56
      $region55: #{stable_diffusion_wrapper_forward.1} parent=11 // pred_region
        _
      $region56: #{stable_diffusion_wrapper_forward.1} parent=11 // pred_fallthru
        _
      // Predicated region
      $region57: #{stable_diffusion_wrapper_forward.1} parent=11 // pred_check
        %p579 = pneg %p358
      $region58: #{stable_diffusion_wrapper_forward.1} parent=11 // pred_check_branch
        %581 = sbr.rel (%p579) target = $region60
      $region59: #{stable_diffusion_wrapper_forward.1} parent=11 // pred_region
        _
      $region60: #{stable_diffusion_wrapper_forward.1} parent=11 // pred_fallthru
        _
      // Predicated region
      $region61: #{stable_diffusion_wrapper_forward.1} parent=11 // pred_check
        %p582 = pneg %p379
      $region62: #{stable_diffusion_wrapper_forward.1} parent=11 // pred_check_branch
        %584 = sbr.rel (%p582) target = $region64
      $region63: #{stable_diffusion_wrapper_forward.1} parent=11 // pred_region
        _
      $region64: #{stable_diffusion_wrapper_forward.1} parent=11 // pred_fallthru
        _
      // Predicated region
      $region65: #{stable_diffusion_wrapper_forward.1} parent=11 // pred_check
        %p585 = pneg %p400
      $region66: #{stable_diffusion_wrapper_forward.1} parent=11 // pred_check_branch
        %587 = sbr.rel (%p585) target = $region68
      $region67: #{stable_diffusion_wrapper_forward.1} parent=11 // pred_region
        _
      $region68: #{stable_diffusion_wrapper_forward.1} parent=11 // pred_fallthru
        _
      // Predicated region
      $region69: #{stable_diffusion_wrapper_forward.1} parent=11 // pred_check
        %p588 = pneg %p421
      $region70: #{stable_diffusion_wrapper_forward.1} parent=11 // pred_check_branch
        %590 = sbr.rel (%p588) target = $region72
      $region71: #{stable_diffusion_wrapper_forward.1} parent=11 // pred_region
        _
      $region72: #{stable_diffusion_wrapper_forward.1} parent=11 // pred_fallthru
        _
      // Predicated region
      $region73: #{stable_diffusion_wrapper_forward.1} parent=11 // pred_check
        %p591 = pneg %p442
      $region74: #{stable_diffusion_wrapper_forward.1} parent=11 // pred_check_branch
        %593 = sbr.rel (%p591) target = $region76
      $region75: #{stable_diffusion_wrapper_forward.1} parent=11 // pred_region
        _
      $region76: #{stable_diffusion_wrapper_forward.1} parent=11 // pred_fallthru
        _
      // Predicated region
      $region77: #{stable_diffusion_wrapper_forward.1} parent=11 // pred_check
        %p594 = pneg %p463
      $region78: #{stable_diffusion_wrapper_forward.1} parent=11 // pred_check_branch
        %596 = sbr.rel (%p594) target = $region80
      $region79: #{stable_diffusion_wrapper_forward.1} parent=11 // pred_region
        _
      $region80: #{stable_diffusion_wrapper_forward.1} parent=11 // pred_fallthru
        _
      // Predicated region
      $region81: #{stable_diffusion_wrapper_forward.1} parent=11 // pred_check
        %p597 = pneg %p484
      $region82: #{stable_diffusion_wrapper_forward.1} parent=11 // pred_check_branch
        %599 = sbr.rel (%p597) target = $region84
      $region83: #{stable_diffusion_wrapper_forward.1} parent=11 // pred_region
        _
      $region84: #{stable_diffusion_wrapper_forward.1} parent=11 // pred_fallthru
        _
      // Predicated region
      $region85: #{stable_diffusion_wrapper_forward.1} parent=11 // pred_check
        %p600 = pneg %p505
      $region86: #{stable_diffusion_wrapper_forward.1} parent=11 // pred_check_branch
        %602 = sbr.rel (%p600) target = $region88
      $region87: #{stable_diffusion_wrapper_forward.1} parent=11 // pred_region
        _
      $region88: #{stable_diffusion_wrapper_forward.1} parent=11 // pred_fallthru
        _
    $region12: #{stable_diffusion_wrapper_forward.1} parent=5 // pred_fallthru
      _
    %p603 = scmp.lt.s32.totalorder %s28, 2
    // Predicated region
    $region89: #{stable_diffusion_wrapper_forward.1} parent=5 // pred_check
      %p604 = pneg %p603
    $region90: #{stable_diffusion_wrapper_forward.1} parent=5 // pred_check_branch
      %606 = sbr.rel (%p604) target = $region92
    $region91: #{stable_diffusion_wrapper_forward.1} parent=5 // pred_region
      // Predicated region
      $region93: #{stable_diffusion_wrapper_forward.1} parent=91 // pred_check
        %p607 = pneg %p48
      $region94: #{stable_diffusion_wrapper_forward.1} parent=91 // pred_check_branch
        %609 = sbr.rel (%p607) target = $region96
      $region95: #{stable_diffusion_wrapper_forward.1} parent=91 // pred_region
        %p610 = scmp.lt.s32.totalorder %s28, 1
        %s611 = scalar_select %p610, %s28, 1
        %s612 = smul.addr %s611, 8
        %s613 = smul.addr %s612, 8
        %s614 = scalar_lea.vmem %s0, %s613
      $region96: #{stable_diffusion_wrapper_forward.1} parent=91 // pred_fallthru
        _
      // Predicated region
      $region97: #{stable_diffusion_wrapper_forward.1} parent=91 // pred_check
        %p615 = pneg %p74
      $region98: #{stable_diffusion_wrapper_forward.1} parent=91 // pred_check_branch
        %617 = sbr.rel (%p615) target = $region100
      $region99: #{stable_diffusion_wrapper_forward.1} parent=91 // pred_region
        %p618 = scmp.lt.s32.totalorder %s28, 1
        %s619 = scalar_select %p618, %s28, 1
        %s620 = smul.addr %s619, 8
        %s621 = scalar_lea.vmem %s1, %s620
      $region100: #{stable_diffusion_wrapper_forward.1} parent=91 // pred_fallthru
        _
      // Predicated region
      $region101: #{stable_diffusion_wrapper_forward.1} parent=91 // pred_check
        %p622 = pneg %p100
      $region102: #{stable_diffusion_wrapper_forward.1} parent=91 // pred_check_branch
        %624 = sbr.rel (%p622) target = $region104
      $region103: #{stable_diffusion_wrapper_forward.1} parent=91 // pred_region
        %p625 = scmp.lt.s32.totalorder %s28, 1
        %s626 = scalar_select %p625, %s28, 1
        %s627 = scalar_lea.vmem %s2, %s626
      $region104: #{stable_diffusion_wrapper_forward.1} parent=91 // pred_fallthru
        _
    $region92: #{stable_diffusion_wrapper_forward.1} parent=5 // pred_fallthru
      _
    %p628 = scmp.le.s32.totalorder 1, %s28
    %p629 = scmp.lt.s32.totalorder %s28, 3
    %p630 = pnand %p628, %p629
    %p631 = pneg %p630
    // Predicated region
    $region105: #{stable_diffusion_wrapper_forward.1} parent=5 // pred_check
      _
    $region106: #{stable_diffusion_wrapper_forward.1} parent=5 // pred_check_branch
      %633 = sbr.rel (%p630) target = $region108
    $region107: #{stable_diffusion_wrapper_forward.1} parent=5 // pred_region
      %s634 = ssub.s32 %s28, 1
      %p635 = scmp.lt.s32.totalorder %s33, 1
      %s636 = scalar_select %p635, %s33, 1
      %s637 = smul.addr %s636, 8
      %s638 = smul.addr %s637, 8
      %s639 = scalar_lea.vmem %s0, %s638
      %p640 = pneg %p54
      %p641 = pneg %p51
      %p642 = scmp.lt.s32.totalorder %s33, 1
      %s643 = scalar_select %p642, %s33, 1
      %s644 = smul.addr %s643, 8
      %s645 = scalar_lea.vmem %s1, %s644
      %p646 = pneg %p80
      %p647 = pneg %p77
      %p648 = scmp.lt.s32.totalorder %s33, 1
      %s649 = scalar_select %p648, %s33, 1
      %s650 = scalar_lea.vmem %s2, %s649
      %p651 = pneg %p106
      %p652 = pneg %p103
      %p653 = pneg %p127
      %p654 = pneg %p124
      %p655 = pneg %p148
      %p656 = pneg %p145
      %p657 = pneg %p169
      %p658 = pneg %p166
      %p659 = pneg %p190
      %p660 = pneg %p187
      %p661 = pneg %p211
      %p662 = pneg %p208
      %p663 = pneg %p232
      %p664 = pneg %p229
      %p665 = pneg %p253
      %p666 = pneg %p250
      %p667 = pneg %p274
      %p668 = pneg %p271
      %p669 = pneg %p295
      %p670 = pneg %p292
      %p671 = pneg %p316
      %p672 = pneg %p313
      %p673 = pneg %p337
      %p674 = pneg %p334
      %p675 = pneg %p358
      %p676 = pneg %p355
      %p677 = pneg %p379
      %p678 = pneg %p376
      %p679 = pneg %p400
      %p680 = pneg %p397
      %p681 = pneg %p421
      %p682 = pneg %p418
      %p683 = pneg %p442
      %p684 = pneg %p439
      %p685 = pneg %p463
      %p686 = pneg %p460
      %p687 = pneg %p484
      %p688 = pneg %p481
      %p689 = pneg %p505
      %p690 = pneg %p502
      %p691 = pneg %p531
      %p692 = pneg %p528
      %p693 = scmp.lt.s32.totalorder %s33, 1
      %s694 = scalar_select %p693, %s33, 1
      %s695 = smul.addr %s694, 8
      %s696 = scalar_lea.vmem %s22, %s695
      %p697 = scmp.lt.s32.totalorder %s33, 1
      %s698 = scalar_select %p697, %s33, 1
      %s699 = smul.addr %s698, 8
      %s700 = smul.addr %s699, 8
      %s701 = scalar_lea.vmem %s0, %s700
      %p702 = scmp.lt.s32.totalorder %s33, 1
      %s703 = scalar_select %p702, %s33, 1
      %s704 = smul.addr %s703, 8
      %s705 = scalar_lea.vmem %s1, %s704
      %p706 = scmp.lt.s32.totalorder %s33, 1
      %s707 = scalar_select %p706, %s33, 1
      %s708 = scalar_lea.vmem %s2, %s707
      %p709 = scmp.lt.s32.totalorder %s33, 1
      %s710 = scalar_select %p709, %s33, 1
      %s711 = smul.addr %s710, 8
      %s712 = scalar_lea.vmem %s22, %s711
      %v714 = vld [vmem:[%s701] sm:$0xff]
      %v715 = vld [vmem:[%s701 + $0x8] sm:$0xff]
      %v716 = vld [vmem:[%s701 + $0x10] sm:$0xff]
      %v717 = vld [vmem:[%s701 + $0x18] sm:$0xff]
      %v718 = vld [vmem:[%s701 + $0x20] sm:$0xff]
      %v719 = vld [vmem:[%s701 + $0x28] sm:$0xff]
      %v720 = vld [vmem:[%s701 + $0x30] sm:$0xff]
      %v721 = vld [vmem:[%s701 + $0x38] sm:$0xff]
      %v722 = vld [vmem:[%s705] sm:$0xff]
      %v723 = vld [vmem:[%s708] sm:$0x1]
      %v724 = vld [vmem:[%s3] sm:$0xf]
      %v725 = vld [vmem:[%s3 + $0x4] sm:$0xf]
      %v726 = vld [vmem:[%s4] sm:$0xff]
      %v727 = vld [vmem:[%s4 + $0x8] sm:$0xff]
      %v728 = vld [vmem:[%s4 + $0x10] sm:$0xff]
      %v729 = vld [vmem:[%s4 + $0x18] sm:$0xff]
      %v730 = vld [vmem:[%s4 + $0x20] sm:$0xff]
      %v731 = vld [vmem:[%s4 + $0x28] sm:$0xff]
      %v732 = vld [vmem:[%s4 + $0x30] sm:$0xff]
      %v733 = vld [vmem:[%s4 + $0x38] sm:$0xff]
      %v734 = vpack.c.bf16 %v715, %v714
      %v735 = vpack.c.bf16 %v717, %v716
      %v736 = vpack.c.bf16 %v719, %v718
      %v737 = vpack.c.bf16 %v721, %v720
      %v740 = vunpack.c.l.b16 %v724
      %v741 = vunpack.c.l.b16 %v725
      %v742 = vpack.c.b16 %v741, %v740
      %vm744 = vcmask 130048
      %v746 = vsel %vm744, %v734, 0
      %v749 = vsel %vm744, %v735, 0
      %v752 = vsel %vm744, %v736, 0
      %v755 = vsel %vm744, %v737, 0
      %757 = vmatprep.subr.bf16.mxu0 0
      %758 = vmatpush1.bf16.msra.mxu0 %v742
      %759 = vmatprep.subr.bf16.mxu0 0
      %760 = vmatpush1.bf16.msra.mxu0 0
      %761 = vmatprep.subr.bf16.mxu0 0
      %762 = vmatpush1.bf16.msra.mxu0 0
      %763 = vmatprep.subr.bf16.mxu0 0
      %764 = vmatpush1.bf16.msra.mxu0 0
      %765 = vmatprep.subr.bf16.mxu0 0
      %766 = vmatpush1.bf16.msra.mxu0 0
      %767 = vmatprep.subr.bf16.mxu0 0
      %768 = vmatpush1.bf16.msra.mxu0 0
      %769 = vmatprep.subr.bf16.mxu0 0
      %770 = vmatpush1.bf16.msra.mxu0 0
      %771 = vmatprep.subr.bf16.mxu0 0
      %772 = vmatpush1.bf16.msra.mxu0 0
      %773 = vmatprep.subr.bf16.mxu0 0
      %774 = vmatpush1.bf16.msra.mxu0 0
      %775 = vmatprep.subr.bf16.mxu0 0
      %776 = vmatpush1.bf16.msra.mxu0 0
      %777 = vmatprep.subr.bf16.mxu0 0
      %778 = vmatpush1.bf16.msra.mxu0 0
      %779 = vmatprep.subr.bf16.mxu0 0
      %780 = vmatpush1.bf16.msra.mxu0 0
      %781 = vmatprep.subr.bf16.mxu0 0
      %782 = vmatpush1.bf16.msra.mxu0 0
      %783 = vmatprep.subr.bf16.mxu0 0
      %784 = vmatpush1.bf16.msra.mxu0 0
      %785 = vmatprep.subr.bf16.mxu0 0
      %786 = vmatpush1.bf16.msra.mxu0 0
      %787 = vmatprep.subr.bf16.mxu0 0
      %788 = vmatpush1.bf16.msra.mxu0 0
      %789 = vmatprep.mubr.bf16.mxu0 0
      %790 = vmatmul.mubr.bf16.gmra.mrb[0].mxu0 %v746
      %v791 = vpop.f32.mrb[0].mxu0
      %v792 = vadd.f32 %v726, %v791
      %v793 = vpop.f32.mrb[0].mxu0
      %v794 = vpop.f32.mrb[0].mxu0
      %v795 = vadd.f32 %v727, %v794
      %v796 = vpop.f32.mrb[0].mxu0
      %797 = vmatprep.mubr.bf16.mxu0 0
      %798 = vmatmul.mubr.bf16.gmra.mrb[0].mxu0 %v749
      %v799 = vpop.f32.mrb[0].mxu0
      %v800 = vadd.f32 %v728, %v799
      %v801 = vpop.f32.mrb[0].mxu0
      %v802 = vpop.f32.mrb[0].mxu0
      %v803 = vadd.f32 %v729, %v802
      %v804 = vpop.f32.mrb[0].mxu0
      %805 = vmatprep.mubr.bf16.mxu0 0
      %806 = vmatmul.mubr.bf16.gmra.mrb[0].mxu0 %v752
      %v807 = vpop.f32.mrb[0].mxu0
      %v808 = vadd.f32 %v730, %v807
      %v809 = vpop.f32.mrb[0].mxu0
      %v810 = vpop.f32.mrb[0].mxu0
      %v811 = vadd.f32 %v731, %v810
      %v812 = vpop.f32.mrb[0].mxu0
      %813 = vmatprep.mubr.bf16.mxu0 0
      %814 = vmatmul.mubr.bf16.gmra.mrb[0].mxu0 %v755
      %v815 = vpop.f32.mrb[0].mxu0
      %v816 = vadd.f32 %v732, %v815
      %v817 = vpop.f32.mrb[0].mxu0
      %v818 = vpop.f32.mrb[0].mxu0
      %v819 = vadd.f32 %v733, %v818
      %v820 = vpop.f32.mrb[0].mxu0
      %821 = vdwg.mxu0
      %v822 = vld [vmem:[%s5] sm:$0xf]
      %v823 = vld [vmem:[%s5 + $0x4] sm:$0xf]
      %v824 = vld [vmem:[%s5 + $0x8] sm:$0xf]
      %v825 = vld [vmem:[%s5 + $0xc] sm:$0xf]
      %v826 = vld [vmem:[%s6] sm:$0x1]
      %v827 = vpack.c.bf16 %v722, %v722
      %v829 = vlaneseq
      %v830 = vshrl.u32 %v829, 7
      %v831 = vsub.s32 0, %v830
      %v832 = vrot.slane %v826, %v831
      %v838 = vunpack.c.l.b16 %v822
      %v839 = vunpack.c.l.b16 %v823
      %v840 = vunpack.c.l.b16 %v824
      %v841 = vunpack.c.l.b16 %v825
      %v842 = vpack.c.b16 %v839, %v838
      %v843 = vpack.c.b16 %v841, %v840
      %vm846 = vcmask 261120
      %v848 = vsel %vm846, %v827, 0
      %850 = vmatprep.subr.bf16.mxu0 0
      %851 = vmatpush1.bf16.msra.mxu0 %v842
      %852 = vmatprep.subr.bf16.mxu0 0
      %853 = vmatpush1.bf16.msra.mxu0 %v843
      %854 = vmatprep.subr.bf16.mxu0 0
      %855 = vmatpush1.bf16.msra.mxu0 0
      %856 = vmatprep.subr.bf16.mxu0 0
      %857 = vmatpush1.bf16.msra.mxu0 0
      %858 = vmatprep.subr.bf16.mxu0 0
      %859 = vmatpush1.bf16.msra.mxu0 0
      %860 = vmatprep.subr.bf16.mxu0 0
      %861 = vmatpush1.bf16.msra.mxu0 0
      %862 = vmatprep.subr.bf16.mxu0 0
      %863 = vmatpush1.bf16.msra.mxu0 0
      %864 = vmatprep.subr.bf16.mxu0 0
      %865 = vmatpush1.bf16.msra.mxu0 0
      %866 = vmatprep.subr.bf16.mxu0 0
      %867 = vmatpush1.bf16.msra.mxu0 0
      %868 = vmatprep.subr.bf16.mxu0 0
      %869 = vmatpush1.bf16.msra.mxu0 0
      %870 = vmatprep.subr.bf16.mxu0 0
      %871 = vmatpush1.bf16.msra.mxu0 0
      %872 = vmatprep.subr.bf16.mxu0 0
      %873 = vmatpush1.bf16.msra.mxu0 0
      %874 = vmatprep.subr.bf16.mxu0 0
      %875 = vmatpush1.bf16.msra.mxu0 0
      %876 = vmatprep.subr.bf16.mxu0 0
      %877 = vmatpush1.bf16.msra.mxu0 0
      %878 = vmatprep.subr.bf16.mxu0 0
      %879 = vmatpush1.bf16.msra.mxu0 0
      %880 = vmatprep.subr.bf16.mxu0 0
      %881 = vmatpush1.bf16.msra.mxu0 0
      %882 = vmatprep.mubr.bf16.mxu0 0
      %883 = vmatmul.mubr.bf16.gmra.mrb[0].mxu0 %v848
      %v884 = vpop.f32.mrb[0].mxu0
      %v885 = vadd.f32 %v832, %v884
      %v886 = vpop.f32.mrb[0].mxu0
      %v887 = vpop.f32.mrb[0].mxu0
      %v888 = vpop.f32.mrb[0].mxu0
      %889 = vdwg.mxu0
      %v890 = vlaneseq
      %v891 = vand.u32 %v890, 127
      %vm892 = vcmp.ge.s32.totalorder %v891, 0
      %vm893 = vcmp.lt.s32.totalorder %v891, 16
      %vm894 = vmand %vm892, %vm893
      %v895 = vsel %vm894, 1, 0
      %v896 = vcvt.s32.f32 %v895
      %vm897 = vcmp.ge.s32.totalorder %v891, 16
      %vm898 = vcmp.lt.s32.totalorder %v891, 32
      %vm899 = vmand %vm897, %vm898
      %v900 = vsel %vm899, 1, 0
      %v901 = vcvt.s32.f32 %v900
      %vm902 = vcmp.ge.s32.totalorder %v891, 32
      %vm903 = vcmp.lt.s32.totalorder %v891, 48
      %vm904 = vmand %vm902, %vm903
      %v905 = vsel %vm904, 1, 0
      %v906 = vcvt.s32.f32 %v905
      %vm907 = vcmp.ge.s32.totalorder %v891, 48
      %vm908 = vcmp.lt.s32.totalorder %v891, 64
      %vm909 = vmand %vm907, %vm908
      %v910 = vsel %vm909, 1, 0
      %v911 = vcvt.s32.f32 %v910
      %v912 = vld [vmem:[%s7] sm:$0xff]
      %v913 = vld [vmem:[%s7 + $0x8] sm:$0xff]
      %v914 = vld [vmem:[%s7 + $0x10] sm:$0xff]
      %v915 = vld [vmem:[%s7 + $0x18] sm:$0xff]
      %v916 = vld [vmem:[%s7 + $0x20] sm:$0xff]
      %v917 = vld [vmem:[%s7 + $0x28] sm:$0xff]
      %v918 = vld [vmem:[%s7 + $0x30] sm:$0xff]
      %v919 = vld [vmem:[%s7 + $0x38] sm:$0xff]
      %v920 = vld [vmem:[%s7 + $0x40] sm:$0xff]
      %v921 = vld [vmem:[%s7 + $0x48] sm:$0xff]
      %v922 = vld [vmem:[%s7 + $0x50] sm:$0xff]
      %v923 = vld [vmem:[%s7 + $0x58] sm:$0xff]
      %v924 = vld [vmem:[%s7 + $0x60] sm:$0xff]
      %v925 = vld [vmem:[%s7 + $0x68] sm:$0xff]
      %v926 = vld [vmem:[%s7 + $0x70] sm:$0xff]
      %v927 = vld [vmem:[%s7 + $0x78] sm:$0xff]
      %v928 = vld [vmem:[%s7 + $0x80] sm:$0xff]
      %v929 = vld [vmem:[%s7 + $0x88] sm:$0xff]
      %v930 = vld [vmem:[%s7 + $0x90] sm:$0xff]
      %v931 = vld [vmem:[%s7 + $0x98] sm:$0xff]
      %v932 = vld [vmem:[%s7 + $0xa0] sm:$0xff]
      %v933 = vld [vmem:[%s7 + $0xa8] sm:$0xff]
      %v934 = vld [vmem:[%s7 + $0xb0] sm:$0xff]
      %v935 = vld [vmem:[%s7 + $0xb8] sm:$0xff]
      %v936 = vld [vmem:[%s7 + $0xc0] sm:$0xff]
      %v937 = vld [vmem:[%s7 + $0xc8] sm:$0xff]
      %v938 = vld [vmem:[%s7 + $0xd0] sm:$0xff]
      %v939 = vld [vmem:[%s7 + $0xd8] sm:$0xff]
      %v940 = vld [vmem:[%s7 + $0xe0] sm:$0xff]
      %v941 = vld [vmem:[%s7 + $0xe8] sm:$0xff]
      %v942 = vld [vmem:[%s7 + $0xf0] sm:$0xff]
      %v943 = vld [vmem:[%s7 + $0xf8] sm:$0xff]
      %v944 = vld [vmem:[%s7 + $0x100] sm:$0xff]
      %v945 = vld [vmem:[%s7 + $0x108] sm:$0xff]
      %v946 = vld [vmem:[%s7 + $0x110] sm:$0xff]
      %v947 = vld [vmem:[%s7 + $0x118] sm:$0xff]
      %v948 = vld [vmem:[%s7 + $0x120] sm:$0xff]
      %v949 = vld [vmem:[%s7 + $0x128] sm:$0xff]
      %v950 = vld [vmem:[%s7 + $0x130] sm:$0xff]
      %v951 = vld [vmem:[%s7 + $0x138] sm:$0xff]
      %v952 = vld [vmem:[%s7 + $0x140] sm:$0xff]
      %v953 = vld [vmem:[%s7 + $0x148] sm:$0xff]
      %v954 = vld [vmem:[%s7 + $0x150] sm:$0xff]
      %v955 = vld [vmem:[%s7 + $0x158] sm:$0xff]
      %v956 = vld [vmem:[%s7 + $0x160] sm:$0xff]
      %v957 = vld [vmem:[%s7 + $0x168] sm:$0xff]
      %v958 = vld [vmem:[%s7 + $0x170] sm:$0xff]
      %v959 = vld [vmem:[%s7 + $0x178] sm:$0xff]
      %v960 = vld [vmem:[%s8] sm:$0xff]
      %v961 = vld [vmem:[%s8 + $0x8] sm:$0xf]
      %v962 = vpack.c.bf16 %v723, %v723
      %v1011 = vunpack.c.l.b16 %v912
      %v1012 = vunpack.c.h.b16 %v912
      %v1013 = vunpack.c.l.b16 %v913
      %v1014 = vunpack.c.h.b16 %v913
      %v1015 = vunpack.c.l.b16 %v914
      %v1016 = vunpack.c.h.b16 %v914
      %v1017 = vunpack.c.l.b16 %v915
      %v1018 = vunpack.c.h.b16 %v915
      %v1019 = vunpack.c.l.b16 %v916
      %v1020 = vunpack.c.h.b16 %v916
      %v1021 = vunpack.c.l.b16 %v917
      %v1022 = vunpack.c.h.b16 %v917
      %v1023 = vunpack.c.l.b16 %v918
      %v1024 = vunpack.c.h.b16 %v918
      %v1025 = vunpack.c.l.b16 %v919
      %v1026 = vunpack.c.h.b16 %v919
      %v1027 = vunpack.c.l.b16 %v920
      %v1028 = vunpack.c.h.b16 %v920
      %v1029 = vunpack.c.l.b16 %v921
      %v1030 = vunpack.c.h.b16 %v921
      %v1031 = vunpack.c.l.b16 %v922
      %v1032 = vunpack.c.h.b16 %v922
      %v1033 = vunpack.c.l.b16 %v923
      %v1034 = vunpack.c.h.b16 %v923
      %v1035 = vunpack.c.l.b16 %v924
      %v1036 = vunpack.c.h.b16 %v924
      %v1037 = vunpack.c.l.b16 %v925
      %v1038 = vunpack.c.h.b16 %v925
      %v1039 = vunpack.c.l.b16 %v926
      %v1040 = vunpack.c.h.b16 %v926
      %v1041 = vunpack.c.l.b16 %v927
      %v1042 = vunpack.c.h.b16 %v927
      %v1043 = vunpack.c.l.b16 %v928
      %v1044 = vunpack.c.h.b16 %v928
      %v1045 = vunpack.c.l.b16 %v929
      %v1046 = vunpack.c.h.b16 %v929
      %v1047 = vunpack.c.l.b16 %v930
      %v1048 = vunpack.c.h.b16 %v930
      %v1049 = vunpack.c.l.b16 %v931
      %v1050 = vunpack.c.h.b16 %v931
      %v1051 = vunpack.c.l.b16 %v932
      %v1052 = vunpack.c.h.b16 %v932
      %v1053 = vunpack.c.l.b16 %v933
      %v1054 = vunpack.c.h.b16 %v933
      %v1055 = vunpack.c.l.b16 %v934
      %v1056 = vunpack.c.h.b16 %v934
      %v1057 = vunpack.c.l.b16 %v935
      %v1058 = vunpack.c.h.b16 %v935
      %v1059 = vunpack.c.l.b16 %v936
      %v1060 = vunpack.c.h.b16 %v936
      %v1061 = vunpack.c.l.b16 %v937
      %v1062 = vunpack.c.h.b16 %v937
      %v1063 = vunpack.c.l.b16 %v938
      %v1064 = vunpack.c.h.b16 %v938
      %v1065 = vunpack.c.l.b16 %v939
      %v1066 = vunpack.c.h.b16 %v939
      %v1067 = vunpack.c.l.b16 %v940
      %v1068 = vunpack.c.h.b16 %v940
      %v1069 = vunpack.c.l.b16 %v941
      %v1070 = vunpack.c.h.b16 %v941
      %v1071 = vunpack.c.l.b16 %v942
      %v1072 = vunpack.c.h.b16 %v942
      %v1073 = vunpack.c.l.b16 %v943
      %v1074 = vunpack.c.h.b16 %v943
      %v1075 = vunpack.c.l.b16 %v944
      %v1076 = vunpack.c.h.b16 %v944
      %v1077 = vunpack.c.l.b16 %v945
      %v1078 = vunpack.c.h.b16 %v945
      %v1079 = vunpack.c.l.b16 %v946
      %v1080 = vunpack.c.h.b16 %v946
      %v1081 = vunpack.c.l.b16 %v947
      %v1082 = vunpack.c.h.b16 %v947
      %v1083 = vunpack.c.l.b16 %v948
      %v1084 = vunpack.c.h.b16 %v948
      %v1085 = vunpack.c.l.b16 %v949
      %v1086 = vunpack.c.h.b16 %v949
      %v1087 = vunpack.c.l.b16 %v950
      %v1088 = vunpack.c.h.b16 %v950
      %v1089 = vunpack.c.l.b16 %v951
      %v1090 = vunpack.c.h.b16 %v951
      %v1091 = vunpack.c.l.b16 %v952
      %v1092 = vunpack.c.h.b16 %v952
      %v1093 = vunpack.c.l.b16 %v953
      %v1094 = vunpack.c.h.b16 %v953
      %v1095 = vunpack.c.l.b16 %v954
      %v1096 = vunpack.c.h.b16 %v954
      %v1097 = vunpack.c.l.b16 %v955
      %v1098 = vunpack.c.h.b16 %v955
      %v1099 = vunpack.c.l.b16 %v956
      %v1100 = vunpack.c.h.b16 %v956
      %v1101 = vunpack.c.l.b16 %v957
      %v1102 = vunpack.c.h.b16 %v957
      %v1103 = vunpack.c.l.b16 %v958
      %v1104 = vunpack.c.h.b16 %v958
      %v1105 = vunpack.c.l.b16 %v959
      %v1106 = vunpack.c.h.b16 %v959
      %v1107 = vpack.c.b16 %v1023, %v1011
      %v1108 = vpack.c.b16 %v1024, %v1012
      %v1109 = vpack.c.b16 %v1025, %v1013
      %v1110 = vpack.c.b16 %v1026, %v1014
      %v1111 = vpack.c.b16 %v1027, %v1015
      %v1112 = vpack.c.b16 %v1028, %v1016
      %v1113 = vpack.c.b16 %v1029, %v1017
      %v1114 = vpack.c.b16 %v1030, %v1018
      %v1115 = vpack.c.b16 %v1031, %v1019
      %v1116 = vpack.c.b16 %v1032, %v1020
      %v1117 = vpack.c.b16 %v1033, %v1021
      %v1118 = vpack.c.b16 %v1034, %v1022
      %v1119 = vpack.c.b16 %v1047, %v1035
      %v1120 = vpack.c.b16 %v1048, %v1036
      %v1121 = vpack.c.b16 %v1049, %v1037
      %v1122 = vpack.c.b16 %v1050, %v1038
      %v1123 = vpack.c.b16 %v1051, %v1039
      %v1124 = vpack.c.b16 %v1052, %v1040
      %v1125 = vpack.c.b16 %v1053, %v1041
      %v1126 = vpack.c.b16 %v1054, %v1042
      %v1127 = vpack.c.b16 %v1055, %v1043
      %v1128 = vpack.c.b16 %v1056, %v1044
      %v1129 = vpack.c.b16 %v1057, %v1045
      %v1130 = vpack.c.b16 %v1058, %v1046
      %v1131 = vpack.c.b16 %v1071, %v1059
      %v1132 = vpack.c.b16 %v1072, %v1060
      %v1133 = vpack.c.b16 %v1073, %v1061
      %v1134 = vpack.c.b16 %v1074, %v1062
      %v1135 = vpack.c.b16 %v1075, %v1063
      %v1136 = vpack.c.b16 %v1076, %v1064
      %v1137 = vpack.c.b16 %v1077, %v1065
      %v1138 = vpack.c.b16 %v1078, %v1066
      %v1139 = vpack.c.b16 %v1079, %v1067
      %v1140 = vpack.c.b16 %v1080, %v1068
      %v1141 = vpack.c.b16 %v1081, %v1069
      %v1142 = vpack.c.b16 %v1082, %v1070
      %v1143 = vpack.c.b16 %v1095, %v1083
      %v1144 = vpack.c.b16 %v1096, %v1084
      %v1145 = vpack.c.b16 %v1097, %v1085
      %v1146 = vpack.c.b16 %v1098, %v1086
      %v1147 = vpack.c.b16 %v1099, %v1087
      %v1148 = vpack.c.b16 %v1100, %v1088
      %v1149 = vpack.c.b16 %v1101, %v1089
      %v1150 = vpack.c.b16 %v1102, %v1090
      %v1151 = vpack.c.b16 %v1103, %v1091
      %v1152 = vpack.c.b16 %v1104, %v1092
      %v1153 = vpack.c.b16 %v1105, %v1093
      %v1154 = vpack.c.b16 %v1106, %v1094
      %v1205 = vlaneseq
      %v1206 = vshrl.u32 %v1205, 7
      %v1207 = vsub.s32 0, %v1206
      %v1208 = vrot.slane %v960, %v1207
      %v1209 = vlaneseq
      %v1210 = vshrl.u32 %v1209, 7
      %v1211 = vsub.s32 1, %v1210
      %v1212 = vrot.slane %v960, %v1211
      %v1213 = vlaneseq
      %v1214 = vshrl.u32 %v1213, 7
      %v1215 = vsub.s32 2, %v1214
      %v1216 = vrot.slane %v960, %v1215
      %v1217 = vlaneseq
      %v1218 = vshrl.u32 %v1217, 7
      %v1219 = vsub.s32 3, %v1218
      %v1220 = vrot.slane %v960, %v1219
      %v1221 = vlaneseq
      %v1222 = vshrl.u32 %v1221, 7
      %v1223 = vsub.s32 4, %v1222
      %v1224 = vrot.slane %v960, %v1223
      %v1225 = vlaneseq
      %v1226 = vshrl.u32 %v1225, 7
      %v1227 = vsub.s32 5, %v1226
      %v1228 = vrot.slane %v960, %v1227
      %v1229 = vlaneseq
      %v1230 = vshrl.u32 %v1229, 7
      %v1231 = vsub.s32 6, %v1230
      %v1232 = vrot.slane %v960, %v1231
      %v1233 = vlaneseq
      %v1234 = vshrl.u32 %v1233, 7
      %v1235 = vsub.s32 7, %v1234
      %v1236 = vrot.slane %v960, %v1235
      %v1237 = vlaneseq
      %v1238 = vshrl.u32 %v1237, 7
      %v1239 = vsub.s32 0, %v1238
      %v1240 = vrot.slane %v961, %v1239
      %v1241 = vlaneseq
      %v1242 = vshrl.u32 %v1241, 7
      %v1243 = vsub.s32 1, %v1242
      %v1244 = vrot.slane %v961, %v1243
      %v1245 = vlaneseq
      %v1246 = vshrl.u32 %v1245, 7
      %v1247 = vsub.s32 2, %v1246
      %v1248 = vrot.slane %v961, %v1247
      %v1249 = vlaneseq
      %v1250 = vshrl.u32 %v1249, 7
      %v1251 = vsub.s32 3, %v1250
      %v1252 = vrot.slane %v961, %v1251
      %vm1265 = vcmask 523264
      %v1267 = vsel %vm1265, %v962, 0
      %1269 = vmatprep.subr.bf16.mxu0 %v1108
      %1270 = vmatpush1.bf16.msra.mxu0 %v1107
      %1271 = vmatprep.subr.bf16.mxu0 %v1120
      %1272 = vmatpush1.bf16.msra.mxu0 %v1119
      %1273 = vmatprep.subr.bf16.mxu0 %v1132
      %1274 = vmatpush1.bf16.msra.mxu0 %v1131
      %1275 = vmatprep.subr.bf16.mxu0 %v1144
      %1276 = vmatpush1.bf16.msra.mxu0 %v1143
      %1277 = vmatprep.subr.bf16.mxu0 0
      %1278 = vmatpush1.bf16.msra.mxu0 0
      %1279 = vmatprep.subr.bf16.mxu0 0
      %1280 = vmatpush1.bf16.msra.mxu0 0
      %1281 = vmatprep.subr.bf16.mxu0 0
      %1282 = vmatpush1.bf16.msra.mxu0 0
      %1283 = vmatprep.subr.bf16.mxu0 0
      %1284 = vmatpush1.bf16.msra.mxu0 0
      %1285 = vmatprep.subr.bf16.mxu0 0
      %1286 = vmatpush1.bf16.msra.mxu0 0
      %1287 = vmatprep.subr.bf16.mxu0 0
      %1288 = vmatpush1.bf16.msra.mxu0 0
      %1289 = vmatprep.subr.bf16.mxu0 0
      %1290 = vmatpush1.bf16.msra.mxu0 0
      %1291 = vmatprep.subr.bf16.mxu0 0
      %1292 = vmatpush1.bf16.msra.mxu0 0
      %1293 = vmatprep.subr.bf16.mxu0 0
      %1294 = vmatpush1.bf16.msra.mxu0 0
      %1295 = vmatprep.subr.bf16.mxu0 0
      %1296 = vmatpush1.bf16.msra.mxu0 0
      %1297 = vmatprep.subr.bf16.mxu0 0
      %1298 = vmatpush1.bf16.msra.mxu0 0
      %1299 = vmatprep.subr.bf16.mxu0 0
      %1300 = vmatpush1.bf16.msra.mxu0 0
      %1301 = vmatprep.mubr.bf16.mxu0 0
      %1302 = vmatmul.mubr.bf16.gmra.mrb[0].mxu0 %v1267
      %v1303 = vpop.f32.mrb[0].mxu0
      %v1304 = vadd.f32 %v1208, %v1303
      %v1305 = vpop.f32.mrb[0].mxu0
      %v1306 = vadd.f32 %v1212, %v1305
      %v1307 = vpop.f32.mrb[0].mxu0
      %v1308 = vpop.f32.mrb[0].mxu0
      %1309 = vdwg.mxu0
      %1310 = vmatprep.subr.bf16.mxu0 %v1110
      %1311 = vmatpush1.bf16.msra.mxu0 %v1109
      %1312 = vmatprep.subr.bf16.mxu0 %v1122
      %1313 = vmatpush1.bf16.msra.mxu0 %v1121
      %1314 = vmatprep.subr.bf16.mxu0 %v1134
      %1315 = vmatpush1.bf16.msra.mxu0 %v1133
      %1316 = vmatprep.subr.bf16.mxu0 %v1146
      %1317 = vmatpush1.bf16.msra.mxu0 %v1145
      %1318 = vmatprep.subr.bf16.mxu0 0
      %1319 = vmatpush1.bf16.msra.mxu0 0
      %1320 = vmatprep.subr.bf16.mxu0 0
      %1321 = vmatpush1.bf16.msra.mxu0 0
      %1322 = vmatprep.subr.bf16.mxu0 0
      %1323 = vmatpush1.bf16.msra.mxu0 0
      %1324 = vmatprep.subr.bf16.mxu0 0
      %1325 = vmatpush1.bf16.msra.mxu0 0
      %1326 = vmatprep.subr.bf16.mxu0 0
      %1327 = vmatpush1.bf16.msra.mxu0 0
      %1328 = vmatprep.subr.bf16.mxu0 0
      %1329 = vmatpush1.bf16.msra.mxu0 0
      %1330 = vmatprep.subr.bf16.mxu0 0
      %1331 = vmatpush1.bf16.msra.mxu0 0
      %1332 = vmatprep.subr.bf16.mxu0 0
      %1333 = vmatpush1.bf16.msra.mxu0 0
      %1334 = vmatprep.subr.bf16.mxu0 0
      %1335 = vmatpush1.bf16.msra.mxu0 0
      %1336 = vmatprep.subr.bf16.mxu0 0
      %1337 = vmatpush1.bf16.msra.mxu0 0
      %1338 = vmatprep.subr.bf16.mxu0 0
      %1339 = vmatpush1.bf16.msra.mxu0 0
      %1340 = vmatprep.subr.bf16.mxu0 0
      %1341 = vmatpush1.bf16.msra.mxu0 0
      %1342 = vmatprep.mubr.bf16.mxu0 0
      %1343 = vmatmul.mubr.bf16.gmra.mrb[0].mxu0 %v1267
      %v1344 = vpop.f32.mrb[0].mxu0
      %v1345 = vadd.f32 %v1216, %v1344
      %v1346 = vpop.f32.mrb[0].mxu0
      %v1347 = vadd.f32 %v1220, %v1346
      %v1348 = vpop.f32.mrb[0].mxu0
      %v1349 = vpop.f32.mrb[0].mxu0
      %1350 = vdwg.mxu0
      %1351 = vmatprep.subr.bf16.mxu0 %v1112
      %1352 = vmatpush1.bf16.msra.mxu0 %v1111
      %1353 = vmatprep.subr.bf16.mxu0 %v1124
      %1354 = vmatpush1.bf16.msra.mxu0 %v1123
      %1355 = vmatprep.subr.bf16.mxu0 %v1136
      %1356 = vmatpush1.bf16.msra.mxu0 %v1135
      %1357 = vmatprep.subr.bf16.mxu0 %v1148
      %1358 = vmatpush1.bf16.msra.mxu0 %v1147
      %1359 = vmatprep.subr.bf16.mxu0 0
      %1360 = vmatpush1.bf16.msra.mxu0 0
      %1361 = vmatprep.subr.bf16.mxu0 0
      %1362 = vmatpush1.bf16.msra.mxu0 0
      %1363 = vmatprep.subr.bf16.mxu0 0
      %1364 = vmatpush1.bf16.msra.mxu0 0
      %1365 = vmatprep.subr.bf16.mxu0 0
      %1366 = vmatpush1.bf16.msra.mxu0 0
      %1367 = vmatprep.subr.bf16.mxu0 0
      %1368 = vmatpush1.bf16.msra.mxu0 0
      %1369 = vmatprep.subr.bf16.mxu0 0
      %1370 = vmatpush1.bf16.msra.mxu0 0
      %1371 = vmatprep.subr.bf16.mxu0 0
      %1372 = vmatpush1.bf16.msra.mxu0 0
      %1373 = vmatprep.subr.bf16.mxu0 0
      %1374 = vmatpush1.bf16.msra.mxu0 0
      %1375 = vmatprep.subr.bf16.mxu0 0
      %1376 = vmatpush1.bf16.msra.mxu0 0
      %1377 = vmatprep.subr.bf16.mxu0 0
      %1378 = vmatpush1.bf16.msra.mxu0 0
      %1379 = vmatprep.subr.bf16.mxu0 0
      %1380 = vmatpush1.bf16.msra.mxu0 0
      %1381 = vmatprep.subr.bf16.mxu0 0
      %1382 = vmatpush1.bf16.msra.mxu0 0
      %1383 = vmatprep.mubr.bf16.mxu0 0
      %1384 = vmatmul.mubr.bf16.gmra.mrb[0].mxu0 %v1267
      %v1385 = vpop.f32.mrb[0].mxu0
      %v1386 = vadd.f32 %v1224, %v1385
      %v1387 = vpop.f32.mrb[0].mxu0
      %v1388 = vadd.f32 %v1228, %v1387
      %v1389 = vpop.f32.mrb[0].mxu0
      %v1390 = vpop.f32.mrb[0].mxu0
      %1391 = vdwg.mxu0
      %1392 = vmatprep.subr.bf16.mxu0 %v1114
      %1393 = vmatpush1.bf16.msra.mxu0 %v1113
      %1394 = vmatprep.subr.bf16.mxu0 %v1126
      %1395 = vmatpush1.bf16.msra.mxu0 %v1125
      %1396 = vmatprep.subr.bf16.mxu0 %v1138
      %1397 = vmatpush1.bf16.msra.mxu0 %v1137
      %1398 = vmatprep.subr.bf16.mxu0 %v1150
      %1399 = vmatpush1.bf16.msra.mxu0 %v1149
      %1400 = vmatprep.subr.bf16.mxu0 0
      %1401 = vmatpush1.bf16.msra.mxu0 0
      %1402 = vmatprep.subr.bf16.mxu0 0
      %1403 = vmatpush1.bf16.msra.mxu0 0
      %1404 = vmatprep.subr.bf16.mxu0 0
      %1405 = vmatpush1.bf16.msra.mxu0 0
      %1406 = vmatprep.subr.bf16.mxu0 0
      %1407 = vmatpush1.bf16.msra.mxu0 0
      %1408 = vmatprep.subr.bf16.mxu0 0
      %1409 = vmatpush1.bf16.msra.mxu0 0
      %1410 = vmatprep.subr.bf16.mxu0 0
      %1411 = vmatpush1.bf16.msra.mxu0 0
      %1412 = vmatprep.subr.bf16.mxu0 0
      %1413 = vmatpush1.bf16.msra.mxu0 0
      %1414 = vmatprep.subr.bf16.mxu0 0
      %1415 = vmatpush1.bf16.msra.mxu0 0
      %1416 = vmatprep.subr.bf16.mxu0 0
      %1417 = vmatpush1.bf16.msra.mxu0 0
      %1418 = vmatprep.subr.bf16.mxu0 0
      %1419 = vmatpush1.bf16.msra.mxu0 0
      %1420 = vmatprep.subr.bf16.mxu0 0
      %1421 = vmatpush1.bf16.msra.mxu0 0
      %1422 = vmatprep.subr.bf16.mxu0 0
      %1423 = vmatpush1.bf16.msra.mxu0 0
      %1424 = vmatprep.mubr.bf16.mxu0 0
      %1425 = vmatmul.mubr.bf16.gmra.mrb[0].mxu0 %v1267
      %v1426 = vpop.f32.mrb[0].mxu0
      %v1427 = vadd.f32 %v1232, %v1426
      %v1428 = vpop.f32.mrb[0].mxu0
      %v1429 = vadd.f32 %v1236, %v1428
      %v1430 = vpop.f32.mrb[0].mxu0
      %v1431 = vpop.f32.mrb[0].mxu0
      %1432 = vdwg.mxu0
      %1433 = vmatprep.subr.bf16.mxu0 %v1116
      %1434 = vmatpush1.bf16.msra.mxu0 %v1115
      %1435 = vmatprep.subr.bf16.mxu0 %v1128
      %1436 = vmatpush1.bf16.msra.mxu0 %v1127
      %1437 = vmatprep.subr.bf16.mxu0 %v1140
      %1438 = vmatpush1.bf16.msra.mxu0 %v1139
      %1439 = vmatprep.subr.bf16.mxu0 %v1152
      %1440 = vmatpush1.bf16.msra.mxu0 %v1151
      %1441 = vmatprep.subr.bf16.mxu0 0
      %1442 = vmatpush1.bf16.msra.mxu0 0
      %1443 = vmatprep.subr.bf16.mxu0 0
      %1444 = vmatpush1.bf16.msra.mxu0 0
      %1445 = vmatprep.subr.bf16.mxu0 0
      %1446 = vmatpush1.bf16.msra.mxu0 0
      %1447 = vmatprep.subr.bf16.mxu0 0
      %1448 = vmatpush1.bf16.msra.mxu0 0
      %1449 = vmatprep.subr.bf16.mxu0 0
      %1450 = vmatpush1.bf16.msra.mxu0 0
      %1451 = vmatprep.subr.bf16.mxu0 0
      %1452 = vmatpush1.bf16.msra.mxu0 0
      %1453 = vmatprep.subr.bf16.mxu0 0
      %1454 = vmatpush1.bf16.msra.mxu0 0
      %1455 = vmatprep.subr.bf16.mxu0 0
      %1456 = vmatpush1.bf16.msra.mxu0 0
      %1457 = vmatprep.subr.bf16.mxu0 0
      %1458 = vmatpush1.bf16.msra.mxu0 0
      %1459 = vmatprep.subr.bf16.mxu0 0
      %1460 = vmatpush1.bf16.msra.mxu0 0
      %1461 = vmatprep.subr.bf16.mxu0 0
      %1462 = vmatpush1.bf16.msra.mxu0 0
      %1463 = vmatprep.subr.bf16.mxu0 0
      %1464 = vmatpush1.bf16.msra.mxu0 0
      %1465 = vmatprep.mubr.bf16.mxu0 0
      %1466 = vmatmul.mubr.bf16.gmra.mrb[0].mxu0 %v1267
      %v1467 = vpop.f32.mrb[0].mxu0
      %v1468 = vadd.f32 %v1240, %v1467
      %v1469 = vpop.f32.mrb[0].mxu0
      %v1470 = vadd.f32 %v1244, %v1469
      %v1471 = vpop.f32.mrb[0].mxu0
      %v1472 = vpop.f32.mrb[0].mxu0
      %1473 = vdwg.mxu0
      %1474 = vmatprep.subr.bf16.mxu0 %v1118
      %1475 = vmatpush1.bf16.msra.mxu0 %v1117
      %1476 = vmatprep.subr.bf16.mxu0 %v1130
      %1477 = vmatpush1.bf16.msra.mxu0 %v1129
      %1478 = vmatprep.subr.bf16.mxu0 %v1142
      %1479 = vmatpush1.bf16.msra.mxu0 %v1141
      %1480 = vmatprep.subr.bf16.mxu0 %v1154
      %1481 = vmatpush1.bf16.msra.mxu0 %v1153
      %1482 = vmatprep.subr.bf16.mxu0 0
      %1483 = vmatpush1.bf16.msra.mxu0 0
      %1484 = vmatprep.subr.bf16.mxu0 0
      %1485 = vmatpush1.bf16.msra.mxu0 0
      %1486 = vmatprep.subr.bf16.mxu0 0
      %1487 = vmatpush1.bf16.msra.mxu0 0
      %1488 = vmatprep.subr.bf16.mxu0 0
      %1489 = vmatpush1.bf16.msra.mxu0 0
      %1490 = vmatprep.subr.bf16.mxu0 0
      %1491 = vmatpush1.bf16.msra.mxu0 0
      %1492 = vmatprep.subr.bf16.mxu0 0
      %1493 = vmatpush1.bf16.msra.mxu0 0
      %1494 = vmatprep.subr.bf16.mxu0 0
      %1495 = vmatpush1.bf16.msra.mxu0 0
      %1496 = vmatprep.subr.bf16.mxu0 0
      %1497 = vmatpush1.bf16.msra.mxu0 0
      %1498 = vmatprep.subr.bf16.mxu0 0
      %1499 = vmatpush1.bf16.msra.mxu0 0
      %1500 = vmatprep.subr.bf16.mxu0 0
      %1501 = vmatpush1.bf16.msra.mxu0 0
      %1502 = vmatprep.subr.bf16.mxu0 0
      %1503 = vmatpush1.bf16.msra.mxu0 0
      %1504 = vmatprep.subr.bf16.mxu0 0
      %1505 = vmatpush1.bf16.msra.mxu0 0
      %1506 = vmatprep.mubr.bf16.mxu0 0
      %1507 = vmatmul.mubr.bf16.gmra.mrb[0].mxu0 %v1267
      %v1508 = vpop.f32.mrb[0].mxu0
      %v1509 = vadd.f32 %v1248, %v1508
      %v1510 = vpop.f32.mrb[0].mxu0
      %v1511 = vadd.f32 %v1252, %v1510
      %v1512 = vpop.f32.mrb[0].mxu0
      %v1513 = vpop.f32.mrb[0].mxu0
      %1514 = vdwg.mxu0
      %v1515 = vsel %vm1265, %v792, 0.0
      %1516 = vadd.xlane.f32.xlu0 %v1515
      %v1517 = vpop.xlane.xlu0 %1516
      %v1518 = vsel %vm1265, %v795, 0.0
      %1519 = vadd.xlane.f32.xlu0 %v1518
      %v1520 = vpop.xlane.xlu0 %1519
      %v1521 = vsel %vm1265, %v800, 0.0
      %1522 = vadd.xlane.f32.xlu0 %v1521
      %v1523 = vpop.xlane.xlu0 %1522
      %v1524 = vsel %vm1265, %v803, 0.0
      %1525 = vadd.xlane.f32.xlu0 %v1524
      %v1526 = vpop.xlane.xlu0 %1525
      %v1527 = vsel %vm1265, %v808, 0.0
      %1528 = vadd.xlane.f32.xlu0 %v1527
      %v1529 = vpop.xlane.xlu0 %1528
      %v1530 = vsel %vm1265, %v811, 0.0
      %1531 = vadd.xlane.f32.xlu0 %v1530
      %v1532 = vpop.xlane.xlu0 %1531
      %v1533 = vsel %vm1265, %v816, 0.0
      %1534 = vadd.xlane.f32.xlu0 %v1533
      %v1535 = vpop.xlane.xlu0 %1534
      %v1536 = vsel %vm1265, %v819, 0.0
      %1537 = vadd.xlane.f32.xlu0 %v1536
      %v1538 = vpop.xlane.xlu0 %1537
      %v1539 = vrcp.pop 64.0
      %v1540 = vmul.f32 %v1517, %v1539
      %v1541 = vmul.f32 %v1520, %v1539
      %v1542 = vmul.f32 %v1523, %v1539
      %v1543 = vmul.f32 %v1526, %v1539
      %v1544 = vmul.f32 %v1529, %v1539
      %v1545 = vmul.f32 %v1532, %v1539
      %v1546 = vmul.f32 %v1535, %v1539
      %v1547 = vmul.f32 %v1538, %v1539
      %v1548 = vsub.f32 %v792, %v1540
      %v1549 = vsub.f32 %v795, %v1541
      %v1550 = vsub.f32 %v800, %v1542
      %v1551 = vsub.f32 %v803, %v1543
      %v1552 = vsub.f32 %v808, %v1544
      %v1553 = vsub.f32 %v811, %v1545
      %v1554 = vsub.f32 %v816, %v1546
      %v1555 = vsub.f32 %v819, %v1547
      %v1556 = vmul.f32 %v1548, %v1548
      %v1557 = vmul.f32 %v1549, %v1549
      %v1558 = vmul.f32 %v1550, %v1550
      %v1559 = vmul.f32 %v1551, %v1551
      %v1560 = vmul.f32 %v1552, %v1552
      %v1561 = vmul.f32 %v1553, %v1553
      %v1562 = vmul.f32 %v1554, %v1554
      %v1563 = vmul.f32 %v1555, %v1555
      %v1564 = vsel %vm1265, %v1556, 0.0
      %1565 = vadd.xlane.f32.xlu0 %v1564
      %v1566 = vpop.xlane.xlu0 %1565
      %v1567 = vsel %vm1265, %v1557, 0.0
      %1568 = vadd.xlane.f32.xlu0 %v1567
      %v1569 = vpop.xlane.xlu0 %1568
      %v1570 = vsel %vm1265, %v1558, 0.0
      %1571 = vadd.xlane.f32.xlu0 %v1570
      %v1572 = vpop.xlane.xlu0 %1571
      %v1573 = vsel %vm1265, %v1559, 0.0
      %1574 = vadd.xlane.f32.xlu0 %v1573
      %v1575 = vpop.xlane.xlu0 %1574
      %v1576 = vsel %vm1265, %v1560, 0.0
      %1577 = vadd.xlane.f32.xlu0 %v1576
      %v1578 = vpop.xlane.xlu0 %1577
      %v1579 = vsel %vm1265, %v1561, 0.0
      %1580 = vadd.xlane.f32.xlu0 %v1579
      %v1581 = vpop.xlane.xlu0 %1580
      %v1582 = vsel %vm1265, %v1562, 0.0
      %1583 = vadd.xlane.f32.xlu0 %v1582
      %v1584 = vpop.xlane.xlu0 %1583
      %v1585 = vsel %vm1265, %v1563, 0.0
      %1586 = vadd.xlane.f32.xlu0 %v1585
      %v1587 = vpop.xlane.xlu0 %1586
      %v1588 = vmul.f32 %v1566, %v1539
      %v1589 = vmul.f32 %v1569, %v1539
      %v1590 = vmul.f32 %v1572, %v1539
      %v1591 = vmul.f32 %v1575, %v1539
      %v1592 = vmul.f32 %v1578, %v1539
      %v1593 = vmul.f32 %v1581, %v1539
      %v1594 = vmul.f32 %v1584, %v1539
      %v1595 = vmul.f32 %v1587, %v1539
      %v1596 = vadd.f32 %v1588, 1e-06
      %v1597 = vadd.f32 %v1589, 1e-06
      %v1598 = vadd.f32 %v1590, 1e-06
      %v1599 = vadd.f32 %v1591, 1e-06
      %v1600 = vadd.f32 %v1592, 1e-06
      %v1601 = vadd.f32 %v1593, 1e-06
      %v1602 = vadd.f32 %v1594, 1e-06
      %v1603 = vadd.f32 %v1595, 1e-06
      %v1604 = vrsqrt.pop %v1596
      %v1605 = vrsqrt.pop %v1597
      %v1606 = vrsqrt.pop %v1598
      %v1607 = vrsqrt.pop %v1599
      %v1608 = vrsqrt.pop %v1600
      %v1609 = vrsqrt.pop %v1601
      %v1610 = vrsqrt.pop %v1602
      %v1611 = vrsqrt.pop %v1603
      %v1612 = vmul.f32 %v1548, %v1604
      %v1613 = vmul.f32 %v1549, %v1605
      %v1614 = vmul.f32 %v1550, %v1606
      %v1615 = vmul.f32 %v1551, %v1607
      %v1616 = vmul.f32 %v1552, %v1608
      %v1617 = vmul.f32 %v1553, %v1609
      %v1618 = vmul.f32 %v1554, %v1610
      %v1619 = vmul.f32 %v1555, %v1611
      %v1620 = vadd.f32 %v1306, 1.0
      %v1621 = vlaneseq
      %v1622 = vshrl.u32 %v1621, 7
      %v1623 = vsub.s32 0, %v1622
      %v1624 = vrot.slane %v1620, %v1623
      %v1625 = vmul.f32 %v1612, %v1624
      %v1626 = vmul.f32 %v1613, %v1624
      %v1627 = vmul.f32 %v1614, %v1624
      %v1628 = vmul.f32 %v1615, %v1624
      %v1629 = vmul.f32 %v1616, %v1624
      %v1630 = vmul.f32 %v1617, %v1624
      %v1631 = vmul.f32 %v1618, %v1624
      %v1632 = vmul.f32 %v1619, %v1624
      %v1633 = vlaneseq
      %v1634 = vshrl.u32 %v1633, 7
      %v1635 = vsub.s32 0, %v1634
      %v1636 = vrot.slane %v1304, %v1635
      %v1637 = vadd.f32 %v1625, %v1636
      %v1638 = vadd.f32 %v1626, %v1636
      %v1639 = vadd.f32 %v1627, %v1636
      %v1640 = vadd.f32 %v1628, %v1636
      %v1641 = vadd.f32 %v1629, %v1636
      %v1642 = vadd.f32 %v1630, %v1636
      %v1643 = vadd.f32 %v1631, %v1636
      %v1644 = vadd.f32 %v1632, %v1636
      %v1645 = vsel %vm1265, %v885, 0.0
      %1646 = vadd.xlane.f32.xlu0 %v1645
      %v1647 = vpop.xlane.xlu0 %1646
      %v1648 = vmul.f32 %v1647, %v1539
      %v1649 = vsub.f32 %v885, %v1648
      %v1650 = vmul.f32 %v1649, %v1649
      %v1651 = vsel %vm1265, %v1650, 0.0
      %1652 = vadd.xlane.f32.xlu0 %v1651
      %v1653 = vpop.xlane.xlu0 %1652
      %v1654 = vmul.f32 %v1653, %v1539
      %v1655 = vadd.f32 %v1654, 1e-06
      %v1656 = vrsqrt.pop %v1655
      %v1657 = vmul.f32 %v1649, %v1656
      %v1658 = vadd.f32 %v1429, 1.0
      %v1659 = vlaneseq
      %v1660 = vshrl.u32 %v1659, 7
      %v1661 = vsub.s32 0, %v1660
      %v1662 = vrot.slane %v1658, %v1661
      %v1663 = vmul.f32 %v1657, %v1662
      %v1664 = vlaneseq
      %v1665 = vshrl.u32 %v1664, 7
      %v1666 = vsub.s32 0, %v1665
      %v1667 = vrot.slane %v1427, %v1666
      %v1668 = vadd.f32 %v1663, %v1667
      %v1669 = vld [vmem:[%s9] sm:$0xff]
      %v1670 = vld [vmem:[%s9 + $0x8] sm:$0xf]
      %v1671 = vld [vmem:[%s9 + $0xc] sm:$0xff]
      %v1672 = vld [vmem:[%s9 + $0x14] sm:$0xf]
      %v1673 = vld [vmem:[%s9 + $0x18] sm:$0xff]
      %v1674 = vld [vmem:[%s9 + $0x20] sm:$0xf]
      %v1675 = vld [vmem:[%s9 + $0x24] sm:$0xff]
      %v1676 = vld [vmem:[%s9 + $0x2c] sm:$0xf]
      %v1677 = vld [vmem:[%s9 + $0x30] sm:$0xff]
      %v1678 = vld [vmem:[%s9 + $0x38] sm:$0xf]
      %v1679 = vld [vmem:[%s9 + $0x3c] sm:$0xff]
      %v1680 = vld [vmem:[%s9 + $0x44] sm:$0xf]
      %v1681 = vld [vmem:[%s9 + $0x48] sm:$0xff]
      %v1682 = vld [vmem:[%s9 + $0x50] sm:$0xf]
      %v1683 = vld [vmem:[%s9 + $0x54] sm:$0xff]
      %v1684 = vld [vmem:[%s9 + $0x5c] sm:$0xf]
      %v1685 = vld [vmem:[%s10] sm:$0x7]
      %v1686 = vpack.c.bf16 %v1638, %v1637
      %v1687 = vpack.c.bf16 %v1640, %v1639
      %v1688 = vpack.c.bf16 %v1642, %v1641
      %v1689 = vpack.c.bf16 %v1644, %v1643
      %v1691 = vlaneseq
      %v1692 = vshrl.u32 %v1691, 7
      %v1693 = vsub.s32 0, %v1692
      %v1694 = vrot.slane %v1685, %v1693
      %v1695 = vlaneseq
      %v1696 = vshrl.u32 %v1695, 7
      %v1697 = vsub.s32 1, %v1696
      %v1698 = vrot.slane %v1685, %v1697
      %v1699 = vlaneseq
      %v1700 = vshrl.u32 %v1699, 7
      %v1701 = vsub.s32 2, %v1700
      %v1702 = vrot.slane %v1685, %v1701
      %v1722 = vunpack.c.l.b16 %v1669
      %v1723 = vunpack.c.h.b16 %v1669
      %v1724 = vunpack.c.l.b16 %v1670
      %v1725 = vunpack.c.l.b16 %v1671
      %v1726 = vunpack.c.h.b16 %v1671
      %v1727 = vunpack.c.l.b16 %v1672
      %v1728 = vunpack.c.l.b16 %v1673
      %v1729 = vunpack.c.h.b16 %v1673
      %v1730 = vunpack.c.l.b16 %v1674
      %v1731 = vunpack.c.l.b16 %v1675
      %v1732 = vunpack.c.h.b16 %v1675
      %v1733 = vunpack.c.l.b16 %v1676
      %v1734 = vunpack.c.l.b16 %v1677
      %v1735 = vunpack.c.h.b16 %v1677
      %v1736 = vunpack.c.l.b16 %v1678
      %v1737 = vunpack.c.l.b16 %v1679
      %v1738 = vunpack.c.h.b16 %v1679
      %v1739 = vunpack.c.l.b16 %v1680
      %v1740 = vunpack.c.l.b16 %v1681
      %v1741 = vunpack.c.h.b16 %v1681
      %v1742 = vunpack.c.l.b16 %v1682
      %v1743 = vunpack.c.l.b16 %v1683
      %v1744 = vunpack.c.h.b16 %v1683
      %v1745 = vunpack.c.l.b16 %v1684
      %v1746 = vpack.c.b16 %v1725, %v1722
      %v1747 = vpack.c.b16 %v1726, %v1723
      %v1748 = vpack.c.b16 %v1727, %v1724
      %v1749 = vpack.c.b16 %v1731, %v1728
      %v1750 = vpack.c.b16 %v1732, %v1729
      %v1751 = vpack.c.b16 %v1733, %v1730
      %v1752 = vpack.c.b16 %v1737, %v1734
      %v1753 = vpack.c.b16 %v1738, %v1735
      %v1754 = vpack.c.b16 %v1739, %v1736
      %v1755 = vpack.c.b16 %v1743, %v1740
      %v1756 = vpack.c.b16 %v1744, %v1741
      %v1757 = vpack.c.b16 %v1745, %v1742
      %v1771 = vsel %vm1265, %v1686, 0
      %v1774 = vsel %vm1265, %v1687, 0
      %v1777 = vsel %vm1265, %v1688, 0
      %v1780 = vsel %vm1265, %v1689, 0
      %1782 = vmatprep.subr.bf16.mxu0 %v1747
      %1783 = vmatpush1.bf16.msra.mxu0 %v1746
      %1784 = vmatprep.subr.bf16.mxu0 %v1750
      %1785 = vmatpush1.bf16.msra.mxu0 %v1749
      %1786 = vmatprep.subr.bf16.mxu0 %v1753
      %1787 = vmatpush1.bf16.msra.mxu0 %v1752
      %1788 = vmatprep.subr.bf16.mxu0 %v1756
      %1789 = vmatpush1.bf16.msra.mxu0 %v1755
      %1790 = vmatprep.subr.bf16.mxu0 0
      %1791 = vmatpush1.bf16.msra.mxu0 0
      %1792 = vmatprep.subr.bf16.mxu0 0
      %1793 = vmatpush1.bf16.msra.mxu0 0
      %1794 = vmatprep.subr.bf16.mxu0 0
      %1795 = vmatpush1.bf16.msra.mxu0 0
      %1796 = vmatprep.subr.bf16.mxu0 0
      %1797 = vmatpush1.bf16.msra.mxu0 0
      %1798 = vmatprep.subr.bf16.mxu0 0
      %1799 = vmatpush1.bf16.msra.mxu0 0
      %1800 = vmatprep.subr.bf16.mxu0 0
      %1801 = vmatpush1.bf16.msra.mxu0 0
      %1802 = vmatprep.subr.bf16.mxu0 0
      %1803 = vmatpush1.bf16.msra.mxu0 0
      %1804 = vmatprep.subr.bf16.mxu0 0
      %1805 = vmatpush1.bf16.msra.mxu0 0
      %1806 = vmatprep.subr.bf16.mxu0 0
      %1807 = vmatpush1.bf16.msra.mxu0 0
      %1808 = vmatprep.subr.bf16.mxu0 0
      %1809 = vmatpush1.bf16.msra.mxu0 0
      %1810 = vmatprep.subr.bf16.mxu0 0
      %1811 = vmatpush1.bf16.msra.mxu0 0
      %1812 = vmatprep.subr.bf16.mxu0 0
      %1813 = vmatpush1.bf16.msra.mxu0 0
      %1814 = vmatprep.mubr.bf16.mxu0 0
      %1815 = vmatmul.mubr.bf16.gmra.mrb[0].mxu0 %v1771
      %v1816 = vpop.f32.mrb[0].mxu0
      %v1817 = vadd.f32 %v1694, %v1816
      %v1818 = vpop.f32.mrb[0].mxu0
      %v1819 = vadd.f32 %v1698, %v1818
      %v1820 = vpop.f32.mrb[0].mxu0
      %v1821 = vadd.f32 %v1694, %v1820
      %v1822 = vpop.f32.mrb[0].mxu0
      %v1823 = vadd.f32 %v1698, %v1822
      %1824 = vmatprep.mubr.bf16.mxu0 0
      %1825 = vmatmul.mubr.bf16.gmra.mrb[0].mxu0 %v1774
      %v1826 = vpop.f32.mrb[0].mxu0
      %v1827 = vadd.f32 %v1694, %v1826
      %v1828 = vpop.f32.mrb[0].mxu0
      %v1829 = vadd.f32 %v1698, %v1828
      %v1830 = vpop.f32.mrb[0].mxu0
      %v1831 = vadd.f32 %v1694, %v1830
      %v1832 = vpop.f32.mrb[0].mxu0
      %v1833 = vadd.f32 %v1698, %v1832
      %1834 = vmatprep.mubr.bf16.mxu0 0
      %1835 = vmatmul.mubr.bf16.gmra.mrb[0].mxu0 %v1777
      %v1836 = vpop.f32.mrb[0].mxu0
      %v1837 = vadd.f32 %v1694, %v1836
      %v1838 = vpop.f32.mrb[0].mxu0
      %v1839 = vadd.f32 %v1698, %v1838
      %v1840 = vpop.f32.mrb[0].mxu0
      %v1841 = vadd.f32 %v1694, %v1840
      %v1842 = vpop.f32.mrb[0].mxu0
      %v1843 = vadd.f32 %v1698, %v1842
      %1844 = vmatprep.mubr.bf16.mxu0 0
      %1845 = vmatmul.mubr.bf16.gmra.mrb[0].mxu0 %v1780
      %v1846 = vpop.f32.mrb[0].mxu0
      %v1847 = vadd.f32 %v1694, %v1846
      %v1848 = vpop.f32.mrb[0].mxu0
      %v1849 = vadd.f32 %v1698, %v1848
      %v1850 = vpop.f32.mrb[0].mxu0
      %v1851 = vadd.f32 %v1694, %v1850
      %v1852 = vpop.f32.mrb[0].mxu0
      %v1853 = vadd.f32 %v1698, %v1852
      %1854 = vdwg.mxu0
      %1855 = vmatprep.subr.bf16.mxu0 0
      %1856 = vmatpush1.bf16.msra.mxu0 %v1748
      %1857 = vmatprep.subr.bf16.mxu0 0
      %1858 = vmatpush1.bf16.msra.mxu0 %v1751
      %1859 = vmatprep.subr.bf16.mxu0 0
      %1860 = vmatpush1.bf16.msra.mxu0 %v1754
      %1861 = vmatprep.subr.bf16.mxu0 0
      %1862 = vmatpush1.bf16.msra.mxu0 %v1757
      %1863 = vmatprep.subr.bf16.mxu0 0
      %1864 = vmatpush1.bf16.msra.mxu0 0
      %1865 = vmatprep.subr.bf16.mxu0 0
      %1866 = vmatpush1.bf16.msra.mxu0 0
      %1867 = vmatprep.subr.bf16.mxu0 0
      %1868 = vmatpush1.bf16.msra.mxu0 0
      %1869 = vmatprep.subr.bf16.mxu0 0
      %1870 = vmatpush1.bf16.msra.mxu0 0
      %1871 = vmatprep.subr.bf16.mxu0 0
      %1872 = vmatpush1.bf16.msra.mxu0 0
      %1873 = vmatprep.subr.bf16.mxu0 0
      %1874 = vmatpush1.bf16.msra.mxu0 0
      %1875 = vmatprep.subr.bf16.mxu0 0
      %1876 = vmatpush1.bf16.msra.mxu0 0
      %1877 = vmatprep.subr.bf16.mxu0 0
      %1878 = vmatpush1.bf16.msra.mxu0 0
      %1879 = vmatprep.subr.bf16.mxu0 0
      %1880 = vmatpush1.bf16.msra.mxu0 0
      %1881 = vmatprep.subr.bf16.mxu0 0
      %1882 = vmatpush1.bf16.msra.mxu0 0
      %1883 = vmatprep.subr.bf16.mxu0 0
      %1884 = vmatpush1.bf16.msra.mxu0 0
      %1885 = vmatprep.subr.bf16.mxu0 0
      %1886 = vmatpush1.bf16.msra.mxu0 0
      %1887 = vmatprep.mubr.bf16.mxu0 0
      %1888 = vmatmul.mubr.bf16.gmra.mrb[0].mxu0 %v1771
      %v1889 = vpop.f32.mrb[0].mxu0
      %v1890 = vadd.f32 %v1702, %v1889
      %v1891 = vpop.f32.mrb[0].mxu0
      %v1892 = vpop.f32.mrb[0].mxu0
      %v1893 = vadd.f32 %v1702, %v1892
      %v1894 = vpop.f32.mrb[0].mxu0
      %1895 = vmatprep.mubr.bf16.mxu0 0
      %1896 = vmatmul.mubr.bf16.gmra.mrb[0].mxu0 %v1774
      %v1897 = vpop.f32.mrb[0].mxu0
      %v1898 = vadd.f32 %v1702, %v1897
      %v1899 = vpop.f32.mrb[0].mxu0
      %v1900 = vpop.f32.mrb[0].mxu0
      %v1901 = vadd.f32 %v1702, %v1900
      %v1902 = vpop.f32.mrb[0].mxu0
      %1903 = vmatprep.mubr.bf16.mxu0 0
      %1904 = vmatmul.mubr.bf16.gmra.mrb[0].mxu0 %v1777
      %v1905 = vpop.f32.mrb[0].mxu0
      %v1906 = vadd.f32 %v1702, %v1905
      %v1907 = vpop.f32.mrb[0].mxu0
      %v1908 = vpop.f32.mrb[0].mxu0
      %v1909 = vadd.f32 %v1702, %v1908
      %v1910 = vpop.f32.mrb[0].mxu0
      %1911 = vmatprep.mubr.bf16.mxu0 0
      %1912 = vmatmul.mubr.bf16.gmra.mrb[0].mxu0 %v1780
      %v1913 = vpop.f32.mrb[0].mxu0
      %v1914 = vadd.f32 %v1702, %v1913
      %v1915 = vpop.f32.mrb[0].mxu0
      %v1916 = vpop.f32.mrb[0].mxu0
      %v1917 = vadd.f32 %v1702, %v1916
      %v1918 = vpop.f32.mrb[0].mxu0
      %1919 = vdwg.mxu0
      %s1920 = scalar_lea.vmem %s9, 96
      %v1921 = vld [vmem:[%s1920] sm:$0xff]
      %v1922 = vld [vmem:[%s1920 + $0x8] sm:$0xf]
      %v1923 = vld [vmem:[%s1920 + $0xc] sm:$0xff]
      %v1924 = vld [vmem:[%s1920 + $0x14] sm:$0xf]
      %v1925 = vld [vmem:[%s1920 + $0x18] sm:$0xff]
      %v1926 = vld [vmem:[%s1920 + $0x20] sm:$0xf]
      %v1927 = vld [vmem:[%s1920 + $0x24] sm:$0xff]
      %v1928 = vld [vmem:[%s1920 + $0x2c] sm:$0xf]
      %v1929 = vld [vmem:[%s1920 + $0x30] sm:$0xff]
      %v1930 = vld [vmem:[%s1920 + $0x38] sm:$0xf]
      %v1931 = vld [vmem:[%s1920 + $0x3c] sm:$0xff]
      %v1932 = vld [vmem:[%s1920 + $0x44] sm:$0xf]
      %v1933 = vld [vmem:[%s1920 + $0x48] sm:$0xff]
      %v1934 = vld [vmem:[%s1920 + $0x50] sm:$0xf]
      %v1935 = vld [vmem:[%s1920 + $0x54] sm:$0xff]
      %v1936 = vld [vmem:[%s1920 + $0x5c] sm:$0xf]
      %s1937 = scalar_lea.vmem %s10, 3
      %v1938 = vld [vmem:[%s1937] sm:$0x7]
      %v1939 = vpack.c.bf16 %v1668, %v1668
      %v1941 = vlaneseq
      %v1942 = vshrl.u32 %v1941, 7
      %v1943 = vsub.s32 0, %v1942
      %v1944 = vrot.slane %v1938, %v1943
      %v1945 = vlaneseq
      %v1946 = vshrl.u32 %v1945, 7
      %v1947 = vsub.s32 1, %v1946
      %v1948 = vrot.slane %v1938, %v1947
      %v1949 = vlaneseq
      %v1950 = vshrl.u32 %v1949, 7
      %v1951 = vsub.s32 2, %v1950
      %v1952 = vrot.slane %v1938, %v1951
      %v1972 = vunpack.c.l.b16 %v1921
      %v1973 = vunpack.c.h.b16 %v1921
      %v1974 = vunpack.c.l.b16 %v1922
      %v1975 = vunpack.c.l.b16 %v1923
      %v1976 = vunpack.c.h.b16 %v1923
      %v1977 = vunpack.c.l.b16 %v1924
      %v1978 = vunpack.c.l.b16 %v1925
      %v1979 = vunpack.c.h.b16 %v1925
      %v1980 = vunpack.c.l.b16 %v1926
      %v1981 = vunpack.c.l.b16 %v1927
      %v1982 = vunpack.c.h.b16 %v1927
      %v1983 = vunpack.c.l.b16 %v1928
      %v1984 = vunpack.c.l.b16 %v1929
      %v1985 = vunpack.c.h.b16 %v1929
      %v1986 = vunpack.c.l.b16 %v1930
      %v1987 = vunpack.c.l.b16 %v1931
      %v1988 = vunpack.c.h.b16 %v1931
      %v1989 = vunpack.c.l.b16 %v1932
      %v1990 = vunpack.c.l.b16 %v1933
      %v1991 = vunpack.c.h.b16 %v1933
      %v1992 = vunpack.c.l.b16 %v1934
      %v1993 = vunpack.c.l.b16 %v1935
      %v1994 = vunpack.c.h.b16 %v1935
      %v1995 = vunpack.c.l.b16 %v1936
      %v1996 = vpack.c.b16 %v1975, %v1972
      %v1997 = vpack.c.b16 %v1976, %v1973
      %v1998 = vpack.c.b16 %v1977, %v1974
      %v1999 = vpack.c.b16 %v1981, %v1978
      %v2000 = vpack.c.b16 %v1982, %v1979
      %v2001 = vpack.c.b16 %v1983, %v1980
      %v2002 = vpack.c.b16 %v1987, %v1984
      %v2003 = vpack.c.b16 %v1988, %v1985
      %v2004 = vpack.c.b16 %v1989, %v1986
      %v2005 = vpack.c.b16 %v1993, %v1990
      %v2006 = vpack.c.b16 %v1994, %v1991
      %v2007 = vpack.c.b16 %v1995, %v1992
      %v2021 = vsel %vm1265, %v1939, 0
      %2023 = vmatprep.subr.bf16.mxu0 %v1997
      %2024 = vmatpush1.bf16.msra.mxu0 %v1996
      %2025 = vmatprep.subr.bf16.mxu0 %v2000
      %2026 = vmatpush1.bf16.msra.mxu0 %v1999
      %2027 = vmatprep.subr.bf16.mxu0 %v2003
      %2028 = vmatpush1.bf16.msra.mxu0 %v2002
      %2029 = vmatprep.subr.bf16.mxu0 %v2006
      %2030 = vmatpush1.bf16.msra.mxu0 %v2005
      %2031 = vmatprep.subr.bf16.mxu0 0
      %2032 = vmatpush1.bf16.msra.mxu0 0
      %2033 = vmatprep.subr.bf16.mxu0 0
      %2034 = vmatpush1.bf16.msra.mxu0 0
      %2035 = vmatprep.subr.bf16.mxu0 0
      %2036 = vmatpush1.bf16.msra.mxu0 0
      %2037 = vmatprep.subr.bf16.mxu0 0
      %2038 = vmatpush1.bf16.msra.mxu0 0
      %2039 = vmatprep.subr.bf16.mxu0 0
      %2040 = vmatpush1.bf16.msra.mxu0 0
      %2041 = vmatprep.subr.bf16.mxu0 0
      %2042 = vmatpush1.bf16.msra.mxu0 0
      %2043 = vmatprep.subr.bf16.mxu0 0
      %2044 = vmatpush1.bf16.msra.mxu0 0
      %2045 = vmatprep.subr.bf16.mxu0 0
      %2046 = vmatpush1.bf16.msra.mxu0 0
      %2047 = vmatprep.subr.bf16.mxu0 0
      %2048 = vmatpush1.bf16.msra.mxu0 0
      %2049 = vmatprep.subr.bf16.mxu0 0
      %2050 = vmatpush1.bf16.msra.mxu0 0
      %2051 = vmatprep.subr.bf16.mxu0 0
      %2052 = vmatpush1.bf16.msra.mxu0 0
      %2053 = vmatprep.subr.bf16.mxu0 0
      %2054 = vmatpush1.bf16.msra.mxu0 0
      %2055 = vmatprep.mubr.bf16.mxu0 0
      %2056 = vmatmul.mubr.bf16.gmra.mrb[0].mxu0 %v2021
      %v2057 = vpop.f32.mrb[0].mxu0
      %v2058 = vadd.f32 %v1944, %v2057
      %v2059 = vpop.f32.mrb[0].mxu0
      %v2060 = vadd.f32 %v1948, %v2059
      %v2061 = vpop.f32.mrb[0].mxu0
      %v2062 = vpop.f32.mrb[0].mxu0
      %2063 = vdwg.mxu0
      %2064 = vmatprep.subr.bf16.mxu0 0
      %2065 = vmatpush1.bf16.msra.mxu0 %v1998
      %2066 = vmatprep.subr.bf16.mxu0 0
      %2067 = vmatpush1.bf16.msra.mxu0 %v2001
      %2068 = vmatprep.subr.bf16.mxu0 0
      %2069 = vmatpush1.bf16.msra.mxu0 %v2004
      %2070 = vmatprep.subr.bf16.mxu0 0
      %2071 = vmatpush1.bf16.msra.mxu0 %v2007
      %2072 = vmatprep.subr.bf16.mxu0 0
      %2073 = vmatpush1.bf16.msra.mxu0 0
      %2074 = vmatprep.subr.bf16.mxu0 0
      %2075 = vmatpush1.bf16.msra.mxu0 0
      %2076 = vmatprep.subr.bf16.mxu0 0
      %2077 = vmatpush1.bf16.msra.mxu0 0
      %2078 = vmatprep.subr.bf16.mxu0 0
      %2079 = vmatpush1.bf16.msra.mxu0 0
      %2080 = vmatprep.subr.bf16.mxu0 0
      %2081 = vmatpush1.bf16.msra.mxu0 0
      %2082 = vmatprep.subr.bf16.mxu0 0
      %2083 = vmatpush1.bf16.msra.mxu0 0
      %2084 = vmatprep.subr.bf16.mxu0 0
      %2085 = vmatpush1.bf16.msra.mxu0 0
      %2086 = vmatprep.subr.bf16.mxu0 0
      %2087 = vmatpush1.bf16.msra.mxu0 0
      %2088 = vmatprep.subr.bf16.mxu0 0
      %2089 = vmatpush1.bf16.msra.mxu0 0
      %2090 = vmatprep.subr.bf16.mxu0 0
      %2091 = vmatpush1.bf16.msra.mxu0 0
      %2092 = vmatprep.subr.bf16.mxu0 0
      %2093 = vmatpush1.bf16.msra.mxu0 0
      %2094 = vmatprep.subr.bf16.mxu0 0
      %2095 = vmatpush1.bf16.msra.mxu0 0
      %2096 = vmatprep.mubr.bf16.mxu0 0
      %2097 = vmatmul.mubr.bf16.gmra.mrb[0].mxu0 %v2021
      %v2098 = vpop.f32.mrb[0].mxu0
      %v2099 = vadd.f32 %v1952, %v2098
      %v2100 = vpop.f32.mrb[0].mxu0
      %v2101 = vpop.f32.mrb[0].mxu0
      %v2102 = vpop.f32.mrb[0].mxu0
      %2103 = vdwg.mxu0
      %v2104 = vld [vmem:[%s11] sm:$0x1]
      %s2105 = scalar_lea.vmem %s11, 1
      %v2106 = vld [vmem:[%s2105] sm:$0x1]
      %v2107 = vmul.f32 %v1817, %v896
      %v2108 = vmul.f32 %v1821, %v896
      %v2109 = vmul.f32 %v1827, %v896
      %v2110 = vmul.f32 %v1831, %v896
      %v2111 = vmul.f32 %v1837, %v896
      %v2112 = vmul.f32 %v1841, %v896
      %v2113 = vmul.f32 %v1847, %v896
      %v2114 = vmul.f32 %v1851, %v896
      %v2115 = vmul.f32 %v2058, %v896
      %v2116 = vmul.f32 %v1819, %v896
      %v2117 = vmul.f32 %v1823, %v896
      %v2118 = vmul.f32 %v1829, %v896
      %v2119 = vmul.f32 %v1833, %v896
      %v2120 = vmul.f32 %v1839, %v896
      %v2121 = vmul.f32 %v1843, %v896
      %v2122 = vmul.f32 %v1849, %v896
      %v2123 = vmul.f32 %v1853, %v896
      %v2124 = vmul.f32 %v2060, %v896
      %v2125 = vmul.f32 %v1890, %v896
      %v2126 = vmul.f32 %v1893, %v896
      %v2127 = vmul.f32 %v1898, %v896
      %v2128 = vmul.f32 %v1901, %v896
      %v2129 = vmul.f32 %v1906, %v896
      %v2130 = vmul.f32 %v1909, %v896
      %v2131 = vmul.f32 %v1914, %v896
      %v2132 = vmul.f32 %v1917, %v896
      %v2133 = vmul.f32 %v2099, %v896
      %v2134 = vmul.f32 %v2107, %v2107
      %v2135 = vmul.f32 %v2108, %v2108
      %v2136 = vmul.f32 %v2109, %v2109
      %v2137 = vmul.f32 %v2110, %v2110
      %v2138 = vmul.f32 %v2111, %v2111
      %v2139 = vmul.f32 %v2112, %v2112
      %v2140 = vmul.f32 %v2113, %v2113
      %v2141 = vmul.f32 %v2114, %v2114
      %v2142 = vmul.f32 %v2115, %v2115
      %v2143 = vsel %vm1265, %v2134, 0.0
      %2144 = vadd.xlane.f32.xlu0 %v2143
      %v2145 = vpop.xlane.xlu0 %2144
      %v2146 = vsel %vm1265, %v2135, 0.0
      %2147 = vadd.xlane.f32.xlu0 %v2146
      %v2148 = vpop.xlane.xlu0 %2147
      %v2149 = vsel %vm1265, %v2136, 0.0
      %2150 = vadd.xlane.f32.xlu0 %v2149
      %v2151 = vpop.xlane.xlu0 %2150
      %v2152 = vsel %vm1265, %v2137, 0.0
      %2153 = vadd.xlane.f32.xlu0 %v2152
      %v2154 = vpop.xlane.xlu0 %2153
      %v2155 = vsel %vm1265, %v2138, 0.0
      %2156 = vadd.xlane.f32.xlu0 %v2155
      %v2157 = vpop.xlane.xlu0 %2156
      %v2158 = vsel %vm1265, %v2139, 0.0
      %2159 = vadd.xlane.f32.xlu0 %v2158
      %v2160 = vpop.xlane.xlu0 %2159
      %v2161 = vsel %vm1265, %v2140, 0.0
      %2162 = vadd.xlane.f32.xlu0 %v2161
      %v2163 = vpop.xlane.xlu0 %2162
      %v2164 = vsel %vm1265, %v2141, 0.0
      %2165 = vadd.xlane.f32.xlu0 %v2164
      %v2166 = vpop.xlane.xlu0 %2165
      %v2167 = vsel %vm1265, %v2142, 0.0
      %2168 = vadd.xlane.f32.xlu0 %v2167
      %v2169 = vpop.xlane.xlu0 %2168
      %v2170 = vmul.f32 %v2145, 0.0625
      %v2171 = vmul.f32 %v2148, 0.0625
      %v2172 = vmul.f32 %v2151, 0.0625
      %v2173 = vmul.f32 %v2154, 0.0625
      %v2174 = vmul.f32 %v2157, 0.0625
      %v2175 = vmul.f32 %v2160, 0.0625
      %v2176 = vmul.f32 %v2163, 0.0625
      %v2177 = vmul.f32 %v2166, 0.0625
      %v2178 = vmul.f32 %v2169, 0.0625
      %v2179 = vadd.f32 %v2170, 1e-06
      %v2180 = vadd.f32 %v2171, 1e-06
      %v2181 = vadd.f32 %v2172, 1e-06
      %v2182 = vadd.f32 %v2173, 1e-06
      %v2183 = vadd.f32 %v2174, 1e-06
      %v2184 = vadd.f32 %v2175, 1e-06
      %v2185 = vadd.f32 %v2176, 1e-06
      %v2186 = vadd.f32 %v2177, 1e-06
      %v2187 = vadd.f32 %v2178, 1e-06
      %v2188 = vrsqrt.pop %v2179
      %v2189 = vrsqrt.pop %v2180
      %v2190 = vrsqrt.pop %v2181
      %v2191 = vrsqrt.pop %v2182
      %v2192 = vrsqrt.pop %v2183
      %v2193 = vrsqrt.pop %v2184
      %v2194 = vrsqrt.pop %v2185
      %v2195 = vrsqrt.pop %v2186
      %v2196 = vrsqrt.pop %v2187
      %v2197 = vmul.f32 %v2107, %v2188
      %v2198 = vmul.f32 %v2108, %v2189
      %v2199 = vmul.f32 %v2109, %v2190
      %v2200 = vmul.f32 %v2110, %v2191
      %v2201 = vmul.f32 %v2111, %v2192
      %v2202 = vmul.f32 %v2112, %v2193
      %v2203 = vmul.f32 %v2113, %v2194
      %v2204 = vmul.f32 %v2114, %v2195
      %v2205 = vmul.f32 %v2115, %v2196
      %v2207 = vlaneseq
      %v2208 = vshrl.u32 %v2207, 7
      %v2209 = vsub.s32 0, %v2208
      %v2210 = vrot.slane %v2104, %v2209
      %v2212 = vmul.f32 %v2197, %v2210
      %v2213 = vmul.f32 %v2198, %v2210
      %v2214 = vmul.f32 %v2199, %v2210
      %v2215 = vmul.f32 %v2200, %v2210
      %v2216 = vmul.f32 %v2201, %v2210
      %v2217 = vmul.f32 %v2202, %v2210
      %v2218 = vmul.f32 %v2203, %v2210
      %v2219 = vmul.f32 %v2204, %v2210
      %v2220 = vmul.f32 %v2205, %v2210
      %v2221 = vmul.f32 %v2116, %v2116
      %v2222 = vmul.f32 %v2117, %v2117
      %v2223 = vmul.f32 %v2118, %v2118
      %v2224 = vmul.f32 %v2119, %v2119
      %v2225 = vmul.f32 %v2120, %v2120
      %v2226 = vmul.f32 %v2121, %v2121
      %v2227 = vmul.f32 %v2122, %v2122
      %v2228 = vmul.f32 %v2123, %v2123
      %v2229 = vmul.f32 %v2124, %v2124
      %v2230 = vsel %vm1265, %v2221, 0.0
      %2231 = vadd.xlane.f32.xlu0 %v2230
      %v2232 = vpop.xlane.xlu0 %2231
      %v2233 = vsel %vm1265, %v2222, 0.0
      %2234 = vadd.xlane.f32.xlu0 %v2233
      %v2235 = vpop.xlane.xlu0 %2234
      %v2236 = vsel %vm1265, %v2223, 0.0
      %2237 = vadd.xlane.f32.xlu0 %v2236
      %v2238 = vpop.xlane.xlu0 %2237
      %v2239 = vsel %vm1265, %v2224, 0.0
      %2240 = vadd.xlane.f32.xlu0 %v2239
      %v2241 = vpop.xlane.xlu0 %2240
      %v2242 = vsel %vm1265, %v2225, 0.0
      %2243 = vadd.xlane.f32.xlu0 %v2242
      %v2244 = vpop.xlane.xlu0 %2243
      %v2245 = vsel %vm1265, %v2226, 0.0
      %2246 = vadd.xlane.f32.xlu0 %v2245
      %v2247 = vpop.xlane.xlu0 %2246
      %v2248 = vsel %vm1265, %v2227, 0.0
      %2249 = vadd.xlane.f32.xlu0 %v2248
      %v2250 = vpop.xlane.xlu0 %2249
      %v2251 = vsel %vm1265, %v2228, 0.0
      %2252 = vadd.xlane.f32.xlu0 %v2251
      %v2253 = vpop.xlane.xlu0 %2252
      %v2254 = vsel %vm1265, %v2229, 0.0
      %2255 = vadd.xlane.f32.xlu0 %v2254
      %v2256 = vpop.xlane.xlu0 %2255
      %v2257 = vmul.f32 %v2232, 0.0625
      %v2258 = vmul.f32 %v2235, 0.0625
      %v2259 = vmul.f32 %v2238, 0.0625
      %v2260 = vmul.f32 %v2241, 0.0625
      %v2261 = vmul.f32 %v2244, 0.0625
      %v2262 = vmul.f32 %v2247, 0.0625
      %v2263 = vmul.f32 %v2250, 0.0625
      %v2264 = vmul.f32 %v2253, 0.0625
      %v2265 = vmul.f32 %v2256, 0.0625
      %v2266 = vadd.f32 %v2257, 1e-06
      %v2267 = vadd.f32 %v2258, 1e-06
      %v2268 = vadd.f32 %v2259, 1e-06
      %v2269 = vadd.f32 %v2260, 1e-06
      %v2270 = vadd.f32 %v2261, 1e-06
      %v2271 = vadd.f32 %v2262, 1e-06
      %v2272 = vadd.f32 %v2263, 1e-06
      %v2273 = vadd.f32 %v2264, 1e-06
      %v2274 = vadd.f32 %v2265, 1e-06
      %v2275 = vrsqrt.pop %v2266
      %v2276 = vrsqrt.pop %v2267
      %v2277 = vrsqrt.pop %v2268
      %v2278 = vrsqrt.pop %v2269
      %v2279 = vrsqrt.pop %v2270
      %v2280 = vrsqrt.pop %v2271
      %v2281 = vrsqrt.pop %v2272
      %v2282 = vrsqrt.pop %v2273
      %v2283 = vrsqrt.pop %v2274
      %v2284 = vmul.f32 %v2116, %v2275
      %v2285 = vmul.f32 %v2117, %v2276
      %v2286 = vmul.f32 %v2118, %v2277
      %v2287 = vmul.f32 %v2119, %v2278
      %v2288 = vmul.f32 %v2120, %v2279
      %v2289 = vmul.f32 %v2121, %v2280
      %v2290 = vmul.f32 %v2122, %v2281
      %v2291 = vmul.f32 %v2123, %v2282
      %v2292 = vmul.f32 %v2124, %v2283
      %v2294 = vlaneseq
      %v2295 = vshrl.u32 %v2294, 7
      %v2296 = vsub.s32 0, %v2295
      %v2297 = vrot.slane %v2106, %v2296
      %v2299 = vmul.f32 %v2284, %v2297
      %v2300 = vmul.f32 %v2285, %v2297
      %v2301 = vmul.f32 %v2286, %v2297
      %v2302 = vmul.f32 %v2287, %v2297
      %v2303 = vmul.f32 %v2288, %v2297
      %v2304 = vmul.f32 %v2289, %v2297
      %v2305 = vmul.f32 %v2290, %v2297
      %v2306 = vmul.f32 %v2291, %v2297
      %v2307 = vmul.f32 %v2292, %v2297
      %v2308 = vpack.c.bf16 %v2213, %v2212
      %v2309 = vpack.c.bf16 %v2215, %v2214
      %v2310 = vpack.c.bf16 %v2217, %v2216
      %v2311 = vpack.c.bf16 %v2219, %v2218
      %v2312 = vpack.c.bf16 %v2220, %v2220
      %v2313 = vpack.c.bf16 %v2300, %v2299
      %v2314 = vpack.c.bf16 %v2302, %v2301
      %v2315 = vpack.c.bf16 %v2304, %v2303
      %v2316 = vpack.c.bf16 %v2306, %v2305
      %v2317 = vpack.c.bf16 %v2307, %v2307
      %v2319 = vsel %vm1265, %v2308, 0
      %v2322 = vsel %vm1265, %v2309, 0
      %v2325 = vsel %vm1265, %v2310, 0
      %v2328 = vsel %vm1265, %v2311, 0
      %v2331 = vsel %vm1265, %v2312, 0
      %v2334 = vsel %vm1265, %v2313, 0
      %v2337 = vsel %vm1265, %v2314, 0
      %v2340 = vsel %vm1265, %v2315, 0
      %v2343 = vsel %vm1265, %v2316, 0
      %v2346 = vsel %vm1265, %v2317, 0
      %2348 = vmatprep.subr.bf16.mxu0 0
      %2349 = vmatpush1.bf16.xpose.msra.mxu0 %v2334
      %2350 = vmatprep.subr.bf16.mxu0 0
      %2351 = vmatpush1.bf16.xpose.msra.mxu0 %v2337
      %2352 = vmatprep.subr.bf16.mxu0 0
      %2353 = vmatpush1.bf16.xpose.msra.mxu0 %v2340
      %2354 = vmatprep.subr.bf16.mxu0 0
      %2355 = vmatpush1.bf16.xpose.msra.mxu0 %v2343
      %2356 = vmatprep.subr.bf16.mxu0 0
      %2357 = vmatpush1.bf16.xpose.msra.mxu0 %v2346
      %2358 = vmatprep.subr.bf16.mxu0 0
      %2359 = vmatpush1.bf16.xpose.msra.mxu0 0
      %2360 = vmatprep.subr.bf16.mxu0 0
      %2361 = vmatpush1.bf16.xpose.msra.mxu0 0
      %2362 = vmatprep.subr.bf16.mxu0 0
      %2363 = vmatpush1.bf16.xpose.msra.mxu0 0
      %2364 = vmatprep.subr.bf16.mxu0 0
      %2365 = vmatpush1.bf16.xpose.msra.mxu0 0
      %2366 = vmatprep.subr.bf16.mxu0 0
      %2367 = vmatpush1.bf16.xpose.msra.mxu0 0
      %2368 = vmatprep.subr.bf16.mxu0 0
      %2369 = vmatpush1.bf16.xpose.msra.mxu0 0
      %2370 = vmatprep.subr.bf16.mxu0 0
      %2371 = vmatpush1.bf16.xpose.msra.mxu0 0
      %2372 = vmatprep.subr.bf16.mxu0 0
      %2373 = vmatpush1.bf16.xpose.msra.mxu0 0
      %2374 = vmatprep.subr.bf16.mxu0 0
      %2375 = vmatpush1.bf16.xpose.msra.mxu0 0
      %2376 = vmatprep.subr.bf16.mxu0 0
      %2377 = vmatpush1.bf16.xpose.msra.mxu0 0
      %2378 = vmatprep.subr.bf16.mxu0 0
      %2379 = vmatpush1.bf16.xpose.msra.mxu0 0
      %2380 = vmatprep.mubr.bf16.mxu0 0
      %2381 = vmatmul.mubr.bf16.gmra.mrb[0].mxu0 %v2319
      %v2382 = vpop.f32.mrb[0].mxu0
      %v2383 = vadd.f32 0.0, %v2382
      %v2384 = vpop.f32.mrb[0].mxu0
      %v2385 = vpop.f32.mrb[0].mxu0
      %v2386 = vadd.f32 0.0, %v2385
      %v2387 = vpop.f32.mrb[0].mxu0
      %2388 = vmatprep.mubr.bf16.mxu0 0
      %2389 = vmatmul.mubr.bf16.gmra.mrb[0].mxu0 %v2322
      %v2390 = vpop.f32.mrb[0].mxu0
      %v2391 = vadd.f32 0.0, %v2390
      %v2392 = vpop.f32.mrb[0].mxu0
      %v2393 = vpop.f32.mrb[0].mxu0
      %v2394 = vadd.f32 0.0, %v2393
      %v2395 = vpop.f32.mrb[0].mxu0
      %2396 = vmatprep.mubr.bf16.mxu0 0
      %2397 = vmatmul.mubr.bf16.gmra.mrb[0].mxu0 %v2325
      %v2398 = vpop.f32.mrb[0].mxu0
      %v2399 = vadd.f32 0.0, %v2398
      %v2400 = vpop.f32.mrb[0].mxu0
      %v2401 = vpop.f32.mrb[0].mxu0
      %v2402 = vadd.f32 0.0, %v2401
      %v2403 = vpop.f32.mrb[0].mxu0
      %2404 = vmatprep.mubr.bf16.mxu0 0
      %2405 = vmatmul.mubr.bf16.gmra.mrb[0].mxu0 %v2328
      %v2406 = vpop.f32.mrb[0].mxu0
      %v2407 = vadd.f32 0.0, %v2406
      %v2408 = vpop.f32.mrb[0].mxu0
      %v2409 = vpop.f32.mrb[0].mxu0
      %v2410 = vadd.f32 0.0, %v2409
      %v2411 = vpop.f32.mrb[0].mxu0
      %2412 = vmatprep.mubr.bf16.mxu0 0
      %2413 = vmatmul.mubr.bf16.gmra.mrb[0].mxu0 %v2331
      %v2414 = vpop.f32.mrb[0].mxu0
      %v2415 = vadd.f32 0.0, %v2414
      %v2416 = vpop.f32.mrb[0].mxu0
      %v2417 = vpop.f32.mrb[0].mxu0
      %v2418 = vpop.f32.mrb[0].mxu0
      %2419 = vdwg.mxu0
      %v2420 = vmul.f32 %v2383, 0.25
      %v2421 = vmul.f32 %v2386, 0.25
      %v2422 = vmul.f32 %v2391, 0.25
      %v2423 = vmul.f32 %v2394, 0.25
      %v2424 = vmul.f32 %v2399, 0.25
      %v2425 = vmul.f32 %v2402, 0.25
      %v2426 = vmul.f32 %v2407, 0.25
      %v2427 = vmul.f32 %v2410, 0.25
      %v2428 = vmul.f32 %v2415, 0.25
      %vm2429 = vcmask 588800
      %v2430 = vsel %vm2429, %v2420, -inf
      %2431 = vmax.xlane.f32.xlu0 %v2430
      %v2432 = vpop.xlane.xlu0 %2431
      %v2433 = vsel %vm2429, %v2421, -inf
      %2434 = vmax.xlane.f32.xlu0 %v2433
      %v2435 = vpop.xlane.xlu0 %2434
      %v2436 = vsel %vm2429, %v2422, -inf
      %2437 = vmax.xlane.f32.xlu0 %v2436
      %v2438 = vpop.xlane.xlu0 %2437
      %v2439 = vsel %vm2429, %v2423, -inf
      %2440 = vmax.xlane.f32.xlu0 %v2439
      %v2441 = vpop.xlane.xlu0 %2440
      %v2442 = vsel %vm2429, %v2424, -inf
      %2443 = vmax.xlane.f32.xlu0 %v2442
      %v2444 = vpop.xlane.xlu0 %2443
      %v2445 = vsel %vm2429, %v2425, -inf
      %2446 = vmax.xlane.f32.xlu0 %v2445
      %v2447 = vpop.xlane.xlu0 %2446
      %v2448 = vsel %vm2429, %v2426, -inf
      %2449 = vmax.xlane.f32.xlu0 %v2448
      %v2450 = vpop.xlane.xlu0 %2449
      %v2451 = vsel %vm2429, %v2427, -inf
      %2452 = vmax.xlane.f32.xlu0 %v2451
      %v2453 = vpop.xlane.xlu0 %2452
      %v2454 = vsel %vm2429, %v2428, -inf
      %2455 = vmax.xlane.f32.xlu0 %v2454
      %v2456 = vpop.xlane.xlu0 %2455
      %v2457 = vsub.f32 %v2420, %v2432
      %v2458 = vsub.f32 %v2421, %v2435
      %v2459 = vsub.f32 %v2422, %v2438
      %v2460 = vsub.f32 %v2423, %v2441
      %v2461 = vsub.f32 %v2424, %v2444
      %v2462 = vsub.f32 %v2425, %v2447
      %v2463 = vsub.f32 %v2426, %v2450
      %v2464 = vsub.f32 %v2427, %v2453
      %v2465 = vsub.f32 %v2428, %v2456
      %v2466 = vmul.f32 %v2457, 1.442695
      %v2467 = vpow.pop %v2466
      %v2468 = vmul.f32 %v2458, 1.442695
      %v2469 = vpow.pop %v2468
      %v2470 = vmul.f32 %v2459, 1.442695
      %v2471 = vpow.pop %v2470
      %v2472 = vmul.f32 %v2460, 1.442695
      %v2473 = vpow.pop %v2472
      %v2474 = vmul.f32 %v2461, 1.442695
      %v2475 = vpow.pop %v2474
      %v2476 = vmul.f32 %v2462, 1.442695
      %v2477 = vpow.pop %v2476
      %v2478 = vmul.f32 %v2463, 1.442695
      %v2479 = vpow.pop %v2478
      %v2480 = vmul.f32 %v2464, 1.442695
      %v2481 = vpow.pop %v2480
      %v2482 = vmul.f32 %v2465, 1.442695
      %v2483 = vpow.pop %v2482
      %v2484 = vsel %vm2429, %v2467, 0.0
      %2485 = vadd.xlane.f32.xlu0 %v2484
      %v2486 = vpop.xlane.xlu0 %2485
      %v2487 = vsel %vm2429, %v2469, 0.0
      %2488 = vadd.xlane.f32.xlu0 %v2487
      %v2489 = vpop.xlane.xlu0 %2488
      %v2490 = vsel %vm2429, %v2471, 0.0
      %2491 = vadd.xlane.f32.xlu0 %v2490
      %v2492 = vpop.xlane.xlu0 %2491
      %v2493 = vsel %vm2429, %v2473, 0.0
      %2494 = vadd.xlane.f32.xlu0 %v2493
      %v2495 = vpop.xlane.xlu0 %2494
      %v2496 = vsel %vm2429, %v2475, 0.0
      %2497 = vadd.xlane.f32.xlu0 %v2496
      %v2498 = vpop.xlane.xlu0 %2497
      %v2499 = vsel %vm2429, %v2477, 0.0
      %2500 = vadd.xlane.f32.xlu0 %v2499
      %v2501 = vpop.xlane.xlu0 %2500
      %v2502 = vsel %vm2429, %v2479, 0.0
      %2503 = vadd.xlane.f32.xlu0 %v2502
      %v2504 = vpop.xlane.xlu0 %2503
      %v2505 = vsel %vm2429, %v2481, 0.0
      %2506 = vadd.xlane.f32.xlu0 %v2505
      %v2507 = vpop.xlane.xlu0 %2506
      %v2508 = vsel %vm2429, %v2483, 0.0
      %2509 = vadd.xlane.f32.xlu0 %v2508
      %v2510 = vpop.xlane.xlu0 %2509
      %v2511 = vrcp.pop %v2486
      %v2512 = vrcp.pop %v2489
      %v2513 = vrcp.pop %v2492
      %v2514 = vrcp.pop %v2495
      %v2515 = vrcp.pop %v2498
      %v2516 = vrcp.pop %v2501
      %v2517 = vrcp.pop %v2504
      %v2518 = vrcp.pop %v2507
      %v2519 = vrcp.pop %v2510
      %v2520 = vmul.f32 %v2467, %v2511
      %v2521 = vmul.f32 %v2469, %v2512
      %v2522 = vmul.f32 %v2471, %v2513
      %v2523 = vmul.f32 %v2473, %v2514
      %v2524 = vmul.f32 %v2475, %v2515
      %v2525 = vmul.f32 %v2477, %v2516
      %v2526 = vmul.f32 %v2479, %v2517
      %v2527 = vmul.f32 %v2481, %v2518
      %v2528 = vmul.f32 %v2483, %v2519
      %v2529 = vpack.c.bf16 %v2521, %v2520
      %v2530 = vpack.c.bf16 %v2523, %v2522
      %v2531 = vpack.c.bf16 %v2525, %v2524
      %v2532 = vpack.c.bf16 %v2527, %v2526
      %v2533 = vpack.c.bf16 %v2528, %v2528
      %v2534 = vpack.c.bf16 %v2126, %v2125
      %v2535 = vpack.c.bf16 %v2128, %v2127
      %v2536 = vpack.c.bf16 %v2130, %v2129
      %v2537 = vpack.c.bf16 %v2132, %v2131
      %v2538 = vpack.c.bf16 %v2133, %v2133
      %v2539 = vmul.f32 %v1817, %v901
      %v2540 = vmul.f32 %v1821, %v901
      %v2541 = vmul.f32 %v1827, %v901
      %v2542 = vmul.f32 %v1831, %v901
      %v2543 = vmul.f32 %v1837, %v901
      %v2544 = vmul.f32 %v1841, %v901
      %v2545 = vmul.f32 %v1847, %v901
      %v2546 = vmul.f32 %v1851, %v901
      %v2547 = vmul.f32 %v2058, %v901
      %v2548 = vmul.f32 %v1819, %v901
      %v2549 = vmul.f32 %v1823, %v901
      %v2550 = vmul.f32 %v1829, %v901
      %v2551 = vmul.f32 %v1833, %v901
      %v2552 = vmul.f32 %v1839, %v901
      %v2553 = vmul.f32 %v1843, %v901
      %v2554 = vmul.f32 %v1849, %v901
      %v2555 = vmul.f32 %v1853, %v901
      %v2556 = vmul.f32 %v2060, %v901
      %v2557 = vmul.f32 %v1890, %v901
      %v2558 = vmul.f32 %v1893, %v901
      %v2559 = vmul.f32 %v1898, %v901
      %v2560 = vmul.f32 %v1901, %v901
      %v2561 = vmul.f32 %v1906, %v901
      %v2562 = vmul.f32 %v1909, %v901
      %v2563 = vmul.f32 %v1914, %v901
      %v2564 = vmul.f32 %v1917, %v901
      %v2565 = vmul.f32 %v2099, %v901
      %v2566 = vmul.f32 %v2539, %v2539
      %v2567 = vmul.f32 %v2540, %v2540
      %v2568 = vmul.f32 %v2541, %v2541
      %v2569 = vmul.f32 %v2542, %v2542
      %v2570 = vmul.f32 %v2543, %v2543
      %v2571 = vmul.f32 %v2544, %v2544
      %v2572 = vmul.f32 %v2545, %v2545
      %v2573 = vmul.f32 %v2546, %v2546
      %v2574 = vmul.f32 %v2547, %v2547
      %v2575 = vsel %vm1265, %v2566, 0.0
      %2576 = vadd.xlane.f32.xlu0 %v2575
      %v2577 = vpop.xlane.xlu0 %2576
      %v2578 = vsel %vm1265, %v2567, 0.0
      %2579 = vadd.xlane.f32.xlu0 %v2578
      %v2580 = vpop.xlane.xlu0 %2579
      %v2581 = vsel %vm1265, %v2568, 0.0
      %2582 = vadd.xlane.f32.xlu0 %v2581
      %v2583 = vpop.xlane.xlu0 %2582
      %v2584 = vsel %vm1265, %v2569, 0.0
      %2585 = vadd.xlane.f32.xlu0 %v2584
      %v2586 = vpop.xlane.xlu0 %2585
      %v2587 = vsel %vm1265, %v2570, 0.0
      %2588 = vadd.xlane.f32.xlu0 %v2587
      %v2589 = vpop.xlane.xlu0 %2588
      %v2590 = vsel %vm1265, %v2571, 0.0
      %2591 = vadd.xlane.f32.xlu0 %v2590
      %v2592 = vpop.xlane.xlu0 %2591
      %v2593 = vsel %vm1265, %v2572, 0.0
      %2594 = vadd.xlane.f32.xlu0 %v2593
      %v2595 = vpop.xlane.xlu0 %2594
      %v2596 = vsel %vm1265, %v2573, 0.0
      %2597 = vadd.xlane.f32.xlu0 %v2596
      %v2598 = vpop.xlane.xlu0 %2597
      %v2599 = vsel %vm1265, %v2574, 0.0
      %2600 = vadd.xlane.f32.xlu0 %v2599
      %v2601 = vpop.xlane.xlu0 %2600
      %v2602 = vmul.f32 %v2577, 0.0625
      %v2603 = vmul.f32 %v2580, 0.0625
      %v2604 = vmul.f32 %v2583, 0.0625
      %v2605 = vmul.f32 %v2586, 0.0625
      %v2606 = vmul.f32 %v2589, 0.0625
      %v2607 = vmul.f32 %v2592, 0.0625
      %v2608 = vmul.f32 %v2595, 0.0625
      %v2609 = vmul.f32 %v2598, 0.0625
      %v2610 = vmul.f32 %v2601, 0.0625
      %v2611 = vadd.f32 %v2602, 1e-06
      %v2612 = vadd.f32 %v2603, 1e-06
      %v2613 = vadd.f32 %v2604, 1e-06
      %v2614 = vadd.f32 %v2605, 1e-06
      %v2615 = vadd.f32 %v2606, 1e-06
      %v2616 = vadd.f32 %v2607, 1e-06
      %v2617 = vadd.f32 %v2608, 1e-06
      %v2618 = vadd.f32 %v2609, 1e-06
      %v2619 = vadd.f32 %v2610, 1e-06
      %v2620 = vrsqrt.pop %v2611
      %v2621 = vrsqrt.pop %v2612
      %v2622 = vrsqrt.pop %v2613
      %v2623 = vrsqrt.pop %v2614
      %v2624 = vrsqrt.pop %v2615
      %v2625 = vrsqrt.pop %v2616
      %v2626 = vrsqrt.pop %v2617
      %v2627 = vrsqrt.pop %v2618
      %v2628 = vrsqrt.pop %v2619
      %v2629 = vmul.f32 %v2539, %v2620
      %v2630 = vmul.f32 %v2540, %v2621
      %v2631 = vmul.f32 %v2541, %v2622
      %v2632 = vmul.f32 %v2542, %v2623
      %v2633 = vmul.f32 %v2543, %v2624
      %v2634 = vmul.f32 %v2544, %v2625
      %v2635 = vmul.f32 %v2545, %v2626
      %v2636 = vmul.f32 %v2546, %v2627
      %v2637 = vmul.f32 %v2547, %v2628
      %v2638 = vmul.f32 %v2629, %v2210
      %v2639 = vmul.f32 %v2630, %v2210
      %v2640 = vmul.f32 %v2631, %v2210
      %v2641 = vmul.f32 %v2632, %v2210
      %v2642 = vmul.f32 %v2633, %v2210
      %v2643 = vmul.f32 %v2634, %v2210
      %v2644 = vmul.f32 %v2635, %v2210
      %v2645 = vmul.f32 %v2636, %v2210
      %v2646 = vmul.f32 %v2637, %v2210
      %v2647 = vmul.f32 %v2548, %v2548
      %v2648 = vmul.f32 %v2549, %v2549
      %v2649 = vmul.f32 %v2550, %v2550
      %v2650 = vmul.f32 %v2551, %v2551
      %v2651 = vmul.f32 %v2552, %v2552
      %v2652 = vmul.f32 %v2553, %v2553
      %v2653 = vmul.f32 %v2554, %v2554
      %v2654 = vmul.f32 %v2555, %v2555
      %v2655 = vmul.f32 %v2556, %v2556
      %v2656 = vsel %vm1265, %v2647, 0.0
      %2657 = vadd.xlane.f32.xlu0 %v2656
      %v2658 = vpop.xlane.xlu0 %2657
      %v2659 = vsel %vm1265, %v2648, 0.0
      %2660 = vadd.xlane.f32.xlu0 %v2659
      %v2661 = vpop.xlane.xlu0 %2660
      %v2662 = vsel %vm1265, %v2649, 0.0
      %2663 = vadd.xlane.f32.xlu0 %v2662
      %v2664 = vpop.xlane.xlu0 %2663
      %v2665 = vsel %vm1265, %v2650, 0.0
      %2666 = vadd.xlane.f32.xlu0 %v2665
      %v2667 = vpop.xlane.xlu0 %2666
      %v2668 = vsel %vm1265, %v2651, 0.0
      %2669 = vadd.xlane.f32.xlu0 %v2668
      %v2670 = vpop.xlane.xlu0 %2669
      %v2671 = vsel %vm1265, %v2652, 0.0
      %2672 = vadd.xlane.f32.xlu0 %v2671
      %v2673 = vpop.xlane.xlu0 %2672
      %v2674 = vsel %vm1265, %v2653, 0.0
      %2675 = vadd.xlane.f32.xlu0 %v2674
      %v2676 = vpop.xlane.xlu0 %2675
      %v2677 = vsel %vm1265, %v2654, 0.0
      %2678 = vadd.xlane.f32.xlu0 %v2677
      %v2679 = vpop.xlane.xlu0 %2678
      %v2680 = vsel %vm1265, %v2655, 0.0
      %2681 = vadd.xlane.f32.xlu0 %v2680
      %v2682 = vpop.xlane.xlu0 %2681
      %v2683 = vmul.f32 %v2658, 0.0625
      %v2684 = vmul.f32 %v2661, 0.0625
      %v2685 = vmul.f32 %v2664, 0.0625
      %v2686 = vmul.f32 %v2667, 0.0625
      %v2687 = vmul.f32 %v2670, 0.0625
      %v2688 = vmul.f32 %v2673, 0.0625
      %v2689 = vmul.f32 %v2676, 0.0625
      %v2690 = vmul.f32 %v2679, 0.0625
      %v2691 = vmul.f32 %v2682, 0.0625
      %v2692 = vadd.f32 %v2683, 1e-06
      %v2693 = vadd.f32 %v2684, 1e-06
      %v2694 = vadd.f32 %v2685, 1e-06
      %v2695 = vadd.f32 %v2686, 1e-06
      %v2696 = vadd.f32 %v2687, 1e-06
      %v2697 = vadd.f32 %v2688, 1e-06
      %v2698 = vadd.f32 %v2689, 1e-06
      %v2699 = vadd.f32 %v2690, 1e-06
      %v2700 = vadd.f32 %v2691, 1e-06
      %v2701 = vrsqrt.pop %v2692
      %v2702 = vrsqrt.pop %v2693
      %v2703 = vrsqrt.pop %v2694
      %v2704 = vrsqrt.pop %v2695
      %v2705 = vrsqrt.pop %v2696
      %v2706 = vrsqrt.pop %v2697
      %v2707 = vrsqrt.pop %v2698
      %v2708 = vrsqrt.pop %v2699
      %v2709 = vrsqrt.pop %v2700
      %v2710 = vmul.f32 %v2548, %v2701
      %v2711 = vmul.f32 %v2549, %v2702
      %v2712 = vmul.f32 %v2550, %v2703
      %v2713 = vmul.f32 %v2551, %v2704
      %v2714 = vmul.f32 %v2552, %v2705
      %v2715 = vmul.f32 %v2553, %v2706
      %v2716 = vmul.f32 %v2554, %v2707
      %v2717 = vmul.f32 %v2555, %v2708
      %v2718 = vmul.f32 %v2556, %v2709
      %v2719 = vmul.f32 %v2710, %v2297
      %v2720 = vmul.f32 %v2711, %v2297
      %v2721 = vmul.f32 %v2712, %v2297
      %v2722 = vmul.f32 %v2713, %v2297
      %v2723 = vmul.f32 %v2714, %v2297
      %v2724 = vmul.f32 %v2715, %v2297
      %v2725 = vmul.f32 %v2716, %v2297
      %v2726 = vmul.f32 %v2717, %v2297
      %v2727 = vmul.f32 %v2718, %v2297
      %v2728 = vpack.c.bf16 %v2639, %v2638
      %v2729 = vpack.c.bf16 %v2641, %v2640
      %v2730 = vpack.c.bf16 %v2643, %v2642
      %v2731 = vpack.c.bf16 %v2645, %v2644
      %v2732 = vpack.c.bf16 %v2646, %v2646
      %v2733 = vpack.c.bf16 %v2720, %v2719
      %v2734 = vpack.c.bf16 %v2722, %v2721
      %v2735 = vpack.c.bf16 %v2724, %v2723
      %v2736 = vpack.c.bf16 %v2726, %v2725
      %v2737 = vpack.c.bf16 %v2727, %v2727
      %v2739 = vsel %vm1265, %v2728, 0
      %v2742 = vsel %vm1265, %v2729, 0
      %v2745 = vsel %vm1265, %v2730, 0
      %v2748 = vsel %vm1265, %v2731, 0
      %v2751 = vsel %vm1265, %v2732, 0
      %v2754 = vsel %vm1265, %v2733, 0
      %v2757 = vsel %vm1265, %v2734, 0
      %v2760 = vsel %vm1265, %v2735, 0
      %v2763 = vsel %vm1265, %v2736, 0
      %v2766 = vsel %vm1265, %v2737, 0
      %2768 = vmatprep.subr.bf16.mxu0 0
      %2769 = vmatpush1.bf16.xpose.msra.mxu0 %v2754
      %2770 = vmatprep.subr.bf16.mxu0 0
      %2771 = vmatpush1.bf16.xpose.msra.mxu0 %v2757
      %2772 = vmatprep.subr.bf16.mxu0 0
      %2773 = vmatpush1.bf16.xpose.msra.mxu0 %v2760
      %2774 = vmatprep.subr.bf16.mxu0 0
      %2775 = vmatpush1.bf16.xpose.msra.mxu0 %v2763
      %2776 = vmatprep.subr.bf16.mxu0 0
      %2777 = vmatpush1.bf16.xpose.msra.mxu0 %v2766
      %2778 = vmatprep.subr.bf16.mxu0 0
      %2779 = vmatpush1.bf16.xpose.msra.mxu0 0
      %2780 = vmatprep.subr.bf16.mxu0 0
      %2781 = vmatpush1.bf16.xpose.msra.mxu0 0
      %2782 = vmatprep.subr.bf16.mxu0 0
      %2783 = vmatpush1.bf16.xpose.msra.mxu0 0
      %2784 = vmatprep.subr.bf16.mxu0 0
      %2785 = vmatpush1.bf16.xpose.msra.mxu0 0
      %2786 = vmatprep.subr.bf16.mxu0 0
      %2787 = vmatpush1.bf16.xpose.msra.mxu0 0
      %2788 = vmatprep.subr.bf16.mxu0 0
      %2789 = vmatpush1.bf16.xpose.msra.mxu0 0
      %2790 = vmatprep.subr.bf16.mxu0 0
      %2791 = vmatpush1.bf16.xpose.msra.mxu0 0
      %2792 = vmatprep.subr.bf16.mxu0 0
      %2793 = vmatpush1.bf16.xpose.msra.mxu0 0
      %2794 = vmatprep.subr.bf16.mxu0 0
      %2795 = vmatpush1.bf16.xpose.msra.mxu0 0
      %2796 = vmatprep.subr.bf16.mxu0 0
      %2797 = vmatpush1.bf16.xpose.msra.mxu0 0
      %2798 = vmatprep.subr.bf16.mxu0 0
      %2799 = vmatpush1.bf16.xpose.msra.mxu0 0
      %2800 = vmatprep.mubr.bf16.mxu0 0
      %2801 = vmatmul.mubr.bf16.gmra.mrb[0].mxu0 %v2739
      %v2802 = vpop.f32.mrb[0].mxu0
      %v2803 = vadd.f32 0.0, %v2802
      %v2804 = vpop.f32.mrb[0].mxu0
      %v2805 = vpop.f32.mrb[0].mxu0
      %v2806 = vadd.f32 0.0, %v2805
      %v2807 = vpop.f32.mrb[0].mxu0
      %2808 = vmatprep.mubr.bf16.mxu0 0
      %2809 = vmatmul.mubr.bf16.gmra.mrb[0].mxu0 %v2742
      %v2810 = vpop.f32.mrb[0].mxu0
      %v2811 = vadd.f32 0.0, %v2810
      %v2812 = vpop.f32.mrb[0].mxu0
      %v2813 = vpop.f32.mrb[0].mxu0
      %v2814 = vadd.f32 0.0, %v2813
      %v2815 = vpop.f32.mrb[0].mxu0
      %2816 = vmatprep.mubr.bf16.mxu0 0
      %2817 = vmatmul.mubr.bf16.gmra.mrb[0].mxu0 %v2745
      %v2818 = vpop.f32.mrb[0].mxu0
      %v2819 = vadd.f32 0.0, %v2818
      %v2820 = vpop.f32.mrb[0].mxu0
      %v2821 = vpop.f32.mrb[0].mxu0
      %v2822 = vadd.f32 0.0, %v2821
      %v2823 = vpop.f32.mrb[0].mxu0
      %2824 = vmatprep.mubr.bf16.mxu0 0
      %2825 = vmatmul.mubr.bf16.gmra.mrb[0].mxu0 %v2748
      %v2826 = vpop.f32.mrb[0].mxu0
      %v2827 = vadd.f32 0.0, %v2826
      %v2828 = vpop.f32.mrb[0].mxu0
      %v2829 = vpop.f32.mrb[0].mxu0
      %v2830 = vadd.f32 0.0, %v2829
      %v2831 = vpop.f32.mrb[0].mxu0
      %2832 = vmatprep.mubr.bf16.mxu0 0
      %2833 = vmatmul.mubr.bf16.gmra.mrb[0].mxu0 %v2751
      %v2834 = vpop.f32.mrb[0].mxu0
      %v2835 = vadd.f32 0.0, %v2834
      %v2836 = vpop.f32.mrb[0].mxu0
      %v2837 = vpop.f32.mrb[0].mxu0
      %v2838 = vpop.f32.mrb[0].mxu0
      %2839 = vdwg.mxu0
      %v2840 = vmul.f32 %v2803, 0.25
      %v2841 = vmul.f32 %v2806, 0.25
      %v2842 = vmul.f32 %v2811, 0.25
      %v2843 = vmul.f32 %v2814, 0.25
      %v2844 = vmul.f32 %v2819, 0.25
      %v2845 = vmul.f32 %v2822, 0.25
      %v2846 = vmul.f32 %v2827, 0.25
      %v2847 = vmul.f32 %v2830, 0.25
      %v2848 = vmul.f32 %v2835, 0.25
      %v2849 = vsel %vm2429, %v2840, -inf
      %2850 = vmax.xlane.f32.xlu0 %v2849
      %v2851 = vpop.xlane.xlu0 %2850
      %v2852 = vsel %vm2429, %v2841, -inf
      %2853 = vmax.xlane.f32.xlu0 %v2852
      %v2854 = vpop.xlane.xlu0 %2853
      %v2855 = vsel %vm2429, %v2842, -inf
      %2856 = vmax.xlane.f32.xlu0 %v2855
      %v2857 = vpop.xlane.xlu0 %2856
      %v2858 = vsel %vm2429, %v2843, -inf
      %2859 = vmax.xlane.f32.xlu0 %v2858
      %v2860 = vpop.xlane.xlu0 %2859
      %v2861 = vsel %vm2429, %v2844, -inf
      %2862 = vmax.xlane.f32.xlu0 %v2861
      %v2863 = vpop.xlane.xlu0 %2862
      %v2864 = vsel %vm2429, %v2845, -inf
      %2865 = vmax.xlane.f32.xlu0 %v2864
      %v2866 = vpop.xlane.xlu0 %2865
      %v2867 = vsel %vm2429, %v2846, -inf
      %2868 = vmax.xlane.f32.xlu0 %v2867
      %v2869 = vpop.xlane.xlu0 %2868
      %v2870 = vsel %vm2429, %v2847, -inf
      %2871 = vmax.xlane.f32.xlu0 %v2870
      %v2872 = vpop.xlane.xlu0 %2871
      %v2873 = vsel %vm2429, %v2848, -inf
      %2874 = vmax.xlane.f32.xlu0 %v2873
      %v2875 = vpop.xlane.xlu0 %2874
      %v2876 = vsub.f32 %v2840, %v2851
      %v2877 = vsub.f32 %v2841, %v2854
      %v2878 = vsub.f32 %v2842, %v2857
      %v2879 = vsub.f32 %v2843, %v2860
      %v2880 = vsub.f32 %v2844, %v2863
      %v2881 = vsub.f32 %v2845, %v2866
      %v2882 = vsub.f32 %v2846, %v2869
      %v2883 = vsub.f32 %v2847, %v2872
      %v2884 = vsub.f32 %v2848, %v2875
      %v2885 = vmul.f32 %v2876, 1.442695
      %v2886 = vpow.pop %v2885
      %v2887 = vmul.f32 %v2877, 1.442695
      %v2888 = vpow.pop %v2887
      %v2889 = vmul.f32 %v2878, 1.442695
      %v2890 = vpow.pop %v2889
      %v2891 = vmul.f32 %v2879, 1.442695
      %v2892 = vpow.pop %v2891
      %v2893 = vmul.f32 %v2880, 1.442695
      %v2894 = vpow.pop %v2893
      %v2895 = vmul.f32 %v2881, 1.442695
      %v2896 = vpow.pop %v2895
      %v2897 = vmul.f32 %v2882, 1.442695
      %v2898 = vpow.pop %v2897
      %v2899 = vmul.f32 %v2883, 1.442695
      %v2900 = vpow.pop %v2899
      %v2901 = vmul.f32 %v2884, 1.442695
      %v2902 = vpow.pop %v2901
      %v2903 = vsel %vm2429, %v2886, 0.0
      %2904 = vadd.xlane.f32.xlu0 %v2903
      %v2905 = vpop.xlane.xlu0 %2904
      %v2906 = vsel %vm2429, %v2888, 0.0
      %2907 = vadd.xlane.f32.xlu0 %v2906
      %v2908 = vpop.xlane.xlu0 %2907
      %v2909 = vsel %vm2429, %v2890, 0.0
      %2910 = vadd.xlane.f32.xlu0 %v2909
      %v2911 = vpop.xlane.xlu0 %2910
      %v2912 = vsel %vm2429, %v2892, 0.0
      %2913 = vadd.xlane.f32.xlu0 %v2912
      %v2914 = vpop.xlane.xlu0 %2913
      %v2915 = vsel %vm2429, %v2894, 0.0
      %2916 = vadd.xlane.f32.xlu0 %v2915
      %v2917 = vpop.xlane.xlu0 %2916
      %v2918 = vsel %vm2429, %v2896, 0.0
      %2919 = vadd.xlane.f32.xlu0 %v2918
      %v2920 = vpop.xlane.xlu0 %2919
      %v2921 = vsel %vm2429, %v2898, 0.0
      %2922 = vadd.xlane.f32.xlu0 %v2921
      %v2923 = vpop.xlane.xlu0 %2922
      %v2924 = vsel %vm2429, %v2900, 0.0
      %2925 = vadd.xlane.f32.xlu0 %v2924
      %v2926 = vpop.xlane.xlu0 %2925
      %v2927 = vsel %vm2429, %v2902, 0.0
      %2928 = vadd.xlane.f32.xlu0 %v2927
      %v2929 = vpop.xlane.xlu0 %2928
      %v2930 = vrcp.pop %v2905
      %v2931 = vrcp.pop %v2908
      %v2932 = vrcp.pop %v2911
      %v2933 = vrcp.pop %v2914
      %v2934 = vrcp.pop %v2917
      %v2935 = vrcp.pop %v2920
      %v2936 = vrcp.pop %v2923
      %v2937 = vrcp.pop %v2926
      %v2938 = vrcp.pop %v2929
      %v2939 = vmul.f32 %v2886, %v2930
      %v2940 = vmul.f32 %v2888, %v2931
      %v2941 = vmul.f32 %v2890, %v2932
      %v2942 = vmul.f32 %v2892, %v2933
      %v2943 = vmul.f32 %v2894, %v2934
      %v2944 = vmul.f32 %v2896, %v2935
      %v2945 = vmul.f32 %v2898, %v2936
      %v2946 = vmul.f32 %v2900, %v2937
      %v2947 = vmul.f32 %v2902, %v2938
      %v2948 = vpack.c.bf16 %v2940, %v2939
      %v2949 = vpack.c.bf16 %v2942, %v2941
      %v2950 = vpack.c.bf16 %v2944, %v2943
      %v2951 = vpack.c.bf16 %v2946, %v2945
      %v2952 = vpack.c.bf16 %v2947, %v2947
      %v2953 = vpack.c.bf16 %v2558, %v2557
      %v2954 = vpack.c.bf16 %v2560, %v2559
      %v2955 = vpack.c.bf16 %v2562, %v2561
      %v2956 = vpack.c.bf16 %v2564, %v2563
      %v2957 = vpack.c.bf16 %v2565, %v2565
      %v2959 = vsel %vm2429, %v2948, 0
      %v2962 = vsel %vm2429, %v2949, 0
      %v2965 = vsel %vm2429, %v2950, 0
      %v2968 = vsel %vm2429, %v2951, 0
      %v2971 = vsel %vm2429, %v2952, 0
      %vm2973 = vcmask 1043456
      %v2975 = vsel %vm2973, %v2957, 0
      %2977 = vmatprep.subr.bf16.mxu0 0
      %2978 = vmatpush1.bf16.msra.mxu0 %v2953
      %2979 = vmatprep.subr.bf16.mxu0 0
      %2980 = vmatpush1.bf16.msra.mxu0 %v2954
      %2981 = vmatprep.subr.bf16.mxu0 0
      %2982 = vmatpush1.bf16.msra.mxu0 %v2955
      %2983 = vmatprep.subr.bf16.mxu0 0
      %2984 = vmatpush1.bf16.msra.mxu0 %v2956
      %2985 = vmatprep.subr.bf16.mxu0 0
      %2986 = vmatpush1.bf16.msra.mxu0 %v2975
      %2987 = vmatprep.subr.bf16.mxu0 0
      %2988 = vmatpush1.bf16.msra.mxu0 0
      %2989 = vmatprep.subr.bf16.mxu0 0
      %2990 = vmatpush1.bf16.msra.mxu0 0
      %2991 = vmatprep.subr.bf16.mxu0 0
      %2992 = vmatpush1.bf16.msra.mxu0 0
      %2993 = vmatprep.subr.bf16.mxu0 0
      %2994 = vmatpush1.bf16.msra.mxu0 0
      %2995 = vmatprep.subr.bf16.mxu0 0
      %2996 = vmatpush1.bf16.msra.mxu0 0
      %2997 = vmatprep.subr.bf16.mxu0 0
      %2998 = vmatpush1.bf16.msra.mxu0 0
      %2999 = vmatprep.subr.bf16.mxu0 0
      %3000 = vmatpush1.bf16.msra.mxu0 0
      %3001 = vmatprep.subr.bf16.mxu0 0
      %3002 = vmatpush1.bf16.msra.mxu0 0
      %3003 = vmatprep.subr.bf16.mxu0 0
      %3004 = vmatpush1.bf16.msra.mxu0 0
      %3005 = vmatprep.subr.bf16.mxu0 0
      %3006 = vmatpush1.bf16.msra.mxu0 0
      %3007 = vmatprep.subr.bf16.mxu0 0
      %3008 = vmatpush1.bf16.msra.mxu0 0
      %3009 = vmatprep.mubr.bf16.mxu0 0
      %3010 = vmatmul.mubr.bf16.gmra.mrb[0].mxu0 %v2959
      %v3011 = vpop.f32.mrb[0].mxu0
      %v3012 = vadd.f32 0.0, %v3011
      %v3013 = vpop.f32.mrb[0].mxu0
      %v3014 = vpop.f32.mrb[0].mxu0
      %v3015 = vadd.f32 0.0, %v3014
      %v3016 = vpop.f32.mrb[0].mxu0
      %3017 = vmatprep.mubr.bf16.mxu0 0
      %3018 = vmatmul.mubr.bf16.gmra.mrb[0].mxu0 %v2962
      %v3019 = vpop.f32.mrb[0].mxu0
      %v3020 = vadd.f32 0.0, %v3019
      %v3021 = vpop.f32.mrb[0].mxu0
      %v3022 = vpop.f32.mrb[0].mxu0
      %v3023 = vadd.f32 0.0, %v3022
      %v3024 = vpop.f32.mrb[0].mxu0
      %3025 = vmatprep.mubr.bf16.mxu0 0
      %3026 = vmatmul.mubr.bf16.gmra.mrb[0].mxu0 %v2965
      %v3027 = vpop.f32.mrb[0].mxu0
      %v3028 = vadd.f32 0.0, %v3027
      %v3029 = vpop.f32.mrb[0].mxu0
      %v3030 = vpop.f32.mrb[0].mxu0
      %v3031 = vadd.f32 0.0, %v3030
      %v3032 = vpop.f32.mrb[0].mxu0
      %3033 = vmatprep.mubr.bf16.mxu0 0
      %3034 = vmatmul.mubr.bf16.gmra.mrb[0].mxu0 %v2968
      %v3035 = vpop.f32.mrb[0].mxu0
      %v3036 = vadd.f32 0.0, %v3035
      %v3037 = vpop.f32.mrb[0].mxu0
      %v3038 = vpop.f32.mrb[0].mxu0
      %v3039 = vadd.f32 0.0, %v3038
      %v3040 = vpop.f32.mrb[0].mxu0
      %3041 = vmatprep.mubr.bf16.mxu0 0
      %3042 = vmatmul.mubr.bf16.gmra.mrb[0].mxu0 %v2971
      %v3043 = vpop.f32.mrb[0].mxu0
      %v3044 = vadd.f32 0.0, %v3043
      %v3045 = vpop.f32.mrb[0].mxu0
      %v3046 = vpop.f32.mrb[0].mxu0
      %v3047 = vpop.f32.mrb[0].mxu0
      %3048 = vdwg.mxu0
      %v3050 = vsel %vm2429, %v2529, 0
      %v3053 = vsel %vm2429, %v2530, 0
      %v3056 = vsel %vm2429, %v2531, 0
      %v3059 = vsel %vm2429, %v2532, 0
      %v3062 = vsel %vm2429, %v2533, 0
      %v3065 = vsel %vm2973, %v2538, 0
      %3067 = vmatprep.subr.bf16.mxu0 0
      %3068 = vmatpush1.bf16.msra.mxu0 %v2534
      %3069 = vmatprep.subr.bf16.mxu0 0
      %3070 = vmatpush1.bf16.msra.mxu0 %v2535
      %3071 = vmatprep.subr.bf16.mxu0 0
      %3072 = vmatpush1.bf16.msra.mxu0 %v2536
      %3073 = vmatprep.subr.bf16.mxu0 0
      %3074 = vmatpush1.bf16.msra.mxu0 %v2537
      %3075 = vmatprep.subr.bf16.mxu0 0
      %3076 = vmatpush1.bf16.msra.mxu0 %v3065
      %3077 = vmatprep.subr.bf16.mxu0 0
      %3078 = vmatpush1.bf16.msra.mxu0 0
      %3079 = vmatprep.subr.bf16.mxu0 0
      %3080 = vmatpush1.bf16.msra.mxu0 0
      %3081 = vmatprep.subr.bf16.mxu0 0
      %3082 = vmatpush1.bf16.msra.mxu0 0
      %3083 = vmatprep.subr.bf16.mxu0 0
      %3084 = vmatpush1.bf16.msra.mxu0 0
      %3085 = vmatprep.subr.bf16.mxu0 0
      %3086 = vmatpush1.bf16.msra.mxu0 0
      %3087 = vmatprep.subr.bf16.mxu0 0
      %3088 = vmatpush1.bf16.msra.mxu0 0
      %3089 = vmatprep.subr.bf16.mxu0 0
      %3090 = vmatpush1.bf16.msra.mxu0 0
      %3091 = vmatprep.subr.bf16.mxu0 0
      %3092 = vmatpush1.bf16.msra.mxu0 0
      %3093 = vmatprep.subr.bf16.mxu0 0
      %3094 = vmatpush1.bf16.msra.mxu0 0
      %3095 = vmatprep.subr.bf16.mxu0 0
      %3096 = vmatpush1.bf16.msra.mxu0 0
      %3097 = vmatprep.subr.bf16.mxu0 0
      %3098 = vmatpush1.bf16.msra.mxu0 0
      %3099 = vmatprep.mubr.bf16.mxu0 0
      %3100 = vmatmul.mubr.bf16.gmra.mrb[0].mxu0 %v3050
      %v3101 = vpop.f32.mrb[0].mxu0
      %v3102 = vadd.f32 %v3012, %v3101
      %v3103 = vpop.f32.mrb[0].mxu0
      %v3104 = vpop.f32.mrb[0].mxu0
      %v3105 = vadd.f32 %v3015, %v3104
      %v3106 = vpop.f32.mrb[0].mxu0
      %3107 = vmatprep.mubr.bf16.mxu0 0
      %3108 = vmatmul.mubr.bf16.gmra.mrb[0].mxu0 %v3053
      %v3109 = vpop.f32.mrb[0].mxu0
      %v3110 = vadd.f32 %v3020, %v3109
      %v3111 = vpop.f32.mrb[0].mxu0
      %v3112 = vpop.f32.mrb[0].mxu0
      %v3113 = vadd.f32 %v3023, %v3112
      %v3114 = vpop.f32.mrb[0].mxu0
      %3115 = vmatprep.mubr.bf16.mxu0 0
      %3116 = vmatmul.mubr.bf16.gmra.mrb[0].mxu0 %v3056
      %v3117 = vpop.f32.mrb[0].mxu0
      %v3118 = vadd.f32 %v3028, %v3117
      %v3119 = vpop.f32.mrb[0].mxu0
      %v3120 = vpop.f32.mrb[0].mxu0
      %v3121 = vadd.f32 %v3031, %v3120
      %v3122 = vpop.f32.mrb[0].mxu0
      %3123 = vmatprep.mubr.bf16.mxu0 0
      %3124 = vmatmul.mubr.bf16.gmra.mrb[0].mxu0 %v3059
      %v3125 = vpop.f32.mrb[0].mxu0
      %v3126 = vadd.f32 %v3036, %v3125
      %v3127 = vpop.f32.mrb[0].mxu0
      %v3128 = vpop.f32.mrb[0].mxu0
      %v3129 = vadd.f32 %v3039, %v3128
      %v3130 = vpop.f32.mrb[0].mxu0
      %3131 = vmatprep.mubr.bf16.mxu0 0
      %3132 = vmatmul.mubr.bf16.gmra.mrb[0].mxu0 %v3062
      %v3133 = vpop.f32.mrb[0].mxu0
      %v3134 = vadd.f32 %v3044, %v3133
      %v3135 = vpop.f32.mrb[0].mxu0
      %v3136 = vpop.f32.mrb[0].mxu0
      %v3137 = vpop.f32.mrb[0].mxu0
      %3138 = vdwg.mxu0
      %v3139 = vmul.f32 %v1817, %v906
      %v3140 = vmul.f32 %v1821, %v906
      %v3141 = vmul.f32 %v1827, %v906
      %v3142 = vmul.f32 %v1831, %v906
      %v3143 = vmul.f32 %v1837, %v906
      %v3144 = vmul.f32 %v1841, %v906
      %v3145 = vmul.f32 %v1847, %v906
      %v3146 = vmul.f32 %v1851, %v906
      %v3147 = vmul.f32 %v2058, %v906
      %v3148 = vmul.f32 %v1819, %v906
      %v3149 = vmul.f32 %v1823, %v906
      %v3150 = vmul.f32 %v1829, %v906
      %v3151 = vmul.f32 %v1833, %v906
      %v3152 = vmul.f32 %v1839, %v906
      %v3153 = vmul.f32 %v1843, %v906
      %v3154 = vmul.f32 %v1849, %v906
      %v3155 = vmul.f32 %v1853, %v906
      %v3156 = vmul.f32 %v2060, %v906
      %v3157 = vmul.f32 %v1890, %v906
      %v3158 = vmul.f32 %v1893, %v906
      %v3159 = vmul.f32 %v1898, %v906
      %v3160 = vmul.f32 %v1901, %v906
      %v3161 = vmul.f32 %v1906, %v906
      %v3162 = vmul.f32 %v1909, %v906
      %v3163 = vmul.f32 %v1914, %v906
      %v3164 = vmul.f32 %v1917, %v906
      %v3165 = vmul.f32 %v2099, %v906
      %v3166 = vmul.f32 %v3139, %v3139
      %v3167 = vmul.f32 %v3140, %v3140
      %v3168 = vmul.f32 %v3141, %v3141
      %v3169 = vmul.f32 %v3142, %v3142
      %v3170 = vmul.f32 %v3143, %v3143
      %v3171 = vmul.f32 %v3144, %v3144
      %v3172 = vmul.f32 %v3145, %v3145
      %v3173 = vmul.f32 %v3146, %v3146
      %v3174 = vmul.f32 %v3147, %v3147
      %v3175 = vsel %vm1265, %v3166, 0.0
      %3176 = vadd.xlane.f32.xlu0 %v3175
      %v3177 = vpop.xlane.xlu0 %3176
      %v3178 = vsel %vm1265, %v3167, 0.0
      %3179 = vadd.xlane.f32.xlu0 %v3178
      %v3180 = vpop.xlane.xlu0 %3179
      %v3181 = vsel %vm1265, %v3168, 0.0
      %3182 = vadd.xlane.f32.xlu0 %v3181
      %v3183 = vpop.xlane.xlu0 %3182
      %v3184 = vsel %vm1265, %v3169, 0.0
      %3185 = vadd.xlane.f32.xlu0 %v3184
      %v3186 = vpop.xlane.xlu0 %3185
      %v3187 = vsel %vm1265, %v3170, 0.0
      %3188 = vadd.xlane.f32.xlu0 %v3187
      %v3189 = vpop.xlane.xlu0 %3188
      %v3190 = vsel %vm1265, %v3171, 0.0
      %3191 = vadd.xlane.f32.xlu0 %v3190
      %v3192 = vpop.xlane.xlu0 %3191
      %v3193 = vsel %vm1265, %v3172, 0.0
      %3194 = vadd.xlane.f32.xlu0 %v3193
      %v3195 = vpop.xlane.xlu0 %3194
      %v3196 = vsel %vm1265, %v3173, 0.0
      %3197 = vadd.xlane.f32.xlu0 %v3196
      %v3198 = vpop.xlane.xlu0 %3197
      %v3199 = vsel %vm1265, %v3174, 0.0
      %3200 = vadd.xlane.f32.xlu0 %v3199
      %v3201 = vpop.xlane.xlu0 %3200
      %v3202 = vmul.f32 %v3177, 0.0625
      %v3203 = vmul.f32 %v3180, 0.0625
      %v3204 = vmul.f32 %v3183, 0.0625
      %v3205 = vmul.f32 %v3186, 0.0625
      %v3206 = vmul.f32 %v3189, 0.0625
      %v3207 = vmul.f32 %v3192, 0.0625
      %v3208 = vmul.f32 %v3195, 0.0625
      %v3209 = vmul.f32 %v3198, 0.0625
      %v3210 = vmul.f32 %v3201, 0.0625
      %v3211 = vadd.f32 %v3202, 1e-06
      %v3212 = vadd.f32 %v3203, 1e-06
      %v3213 = vadd.f32 %v3204, 1e-06
      %v3214 = vadd.f32 %v3205, 1e-06
      %v3215 = vadd.f32 %v3206, 1e-06
      %v3216 = vadd.f32 %v3207, 1e-06
      %v3217 = vadd.f32 %v3208, 1e-06
      %v3218 = vadd.f32 %v3209, 1e-06
      %v3219 = vadd.f32 %v3210, 1e-06
      %v3220 = vrsqrt.pop %v3211
      %v3221 = vrsqrt.pop %v3212
      %v3222 = vrsqrt.pop %v3213
      %v3223 = vrsqrt.pop %v3214
      %v3224 = vrsqrt.pop %v3215
      %v3225 = vrsqrt.pop %v3216
      %v3226 = vrsqrt.pop %v3217
      %v3227 = vrsqrt.pop %v3218
      %v3228 = vrsqrt.pop %v3219
      %v3229 = vmul.f32 %v3139, %v3220
      %v3230 = vmul.f32 %v3140, %v3221
      %v3231 = vmul.f32 %v3141, %v3222
      %v3232 = vmul.f32 %v3142, %v3223
      %v3233 = vmul.f32 %v3143, %v3224
      %v3234 = vmul.f32 %v3144, %v3225
      %v3235 = vmul.f32 %v3145, %v3226
      %v3236 = vmul.f32 %v3146, %v3227
      %v3237 = vmul.f32 %v3147, %v3228
      %v3238 = vmul.f32 %v3229, %v2210
      %v3239 = vmul.f32 %v3230, %v2210
      %v3240 = vmul.f32 %v3231, %v2210
      %v3241 = vmul.f32 %v3232, %v2210
      %v3242 = vmul.f32 %v3233, %v2210
      %v3243 = vmul.f32 %v3234, %v2210
      %v3244 = vmul.f32 %v3235, %v2210
      %v3245 = vmul.f32 %v3236, %v2210
      %v3246 = vmul.f32 %v3237, %v2210
      %v3247 = vmul.f32 %v3148, %v3148
      %v3248 = vmul.f32 %v3149, %v3149
      %v3249 = vmul.f32 %v3150, %v3150
      %v3250 = vmul.f32 %v3151, %v3151
      %v3251 = vmul.f32 %v3152, %v3152
      %v3252 = vmul.f32 %v3153, %v3153
      %v3253 = vmul.f32 %v3154, %v3154
      %v3254 = vmul.f32 %v3155, %v3155
      %v3255 = vmul.f32 %v3156, %v3156
      %v3256 = vsel %vm1265, %v3247, 0.0
      %3257 = vadd.xlane.f32.xlu0 %v3256
      %v3258 = vpop.xlane.xlu0 %3257
      %v3259 = vsel %vm1265, %v3248, 0.0
      %3260 = vadd.xlane.f32.xlu0 %v3259
      %v3261 = vpop.xlane.xlu0 %3260
      %v3262 = vsel %vm1265, %v3249, 0.0
      %3263 = vadd.xlane.f32.xlu0 %v3262
      %v3264 = vpop.xlane.xlu0 %3263
      %v3265 = vsel %vm1265, %v3250, 0.0
      %3266 = vadd.xlane.f32.xlu0 %v3265
      %v3267 = vpop.xlane.xlu0 %3266
      %v3268 = vsel %vm1265, %v3251, 0.0
      %3269 = vadd.xlane.f32.xlu0 %v3268
      %v3270 = vpop.xlane.xlu0 %3269
      %v3271 = vsel %vm1265, %v3252, 0.0
      %3272 = vadd.xlane.f32.xlu0 %v3271
      %v3273 = vpop.xlane.xlu0 %3272
      %v3274 = vsel %vm1265, %v3253, 0.0
      %3275 = vadd.xlane.f32.xlu0 %v3274
      %v3276 = vpop.xlane.xlu0 %3275
      %v3277 = vsel %vm1265, %v3254, 0.0
      %3278 = vadd.xlane.f32.xlu0 %v3277
      %v3279 = vpop.xlane.xlu0 %3278
      %v3280 = vsel %vm1265, %v3255, 0.0
      %3281 = vadd.xlane.f32.xlu0 %v3280
      %v3282 = vpop.xlane.xlu0 %3281
      %v3283 = vmul.f32 %v3258, 0.0625
      %v3284 = vmul.f32 %v3261, 0.0625
      %v3285 = vmul.f32 %v3264, 0.0625
      %v3286 = vmul.f32 %v3267, 0.0625
      %v3287 = vmul.f32 %v3270, 0.0625
      %v3288 = vmul.f32 %v3273, 0.0625
      %v3289 = vmul.f32 %v3276, 0.0625
      %v3290 = vmul.f32 %v3279, 0.0625
      %v3291 = vmul.f32 %v3282, 0.0625
      %v3292 = vadd.f32 %v3283, 1e-06
      %v3293 = vadd.f32 %v3284, 1e-06
      %v3294 = vadd.f32 %v3285, 1e-06
      %v3295 = vadd.f32 %v3286, 1e-06
      %v3296 = vadd.f32 %v3287, 1e-06
      %v3297 = vadd.f32 %v3288, 1e-06
      %v3298 = vadd.f32 %v3289, 1e-06
      %v3299 = vadd.f32 %v3290, 1e-06
      %v3300 = vadd.f32 %v3291, 1e-06
      %v3301 = vrsqrt.pop %v3292
      %v3302 = vrsqrt.pop %v3293
      %v3303 = vrsqrt.pop %v3294
      %v3304 = vrsqrt.pop %v3295
      %v3305 = vrsqrt.pop %v3296
      %v3306 = vrsqrt.pop %v3297
      %v3307 = vrsqrt.pop %v3298
      %v3308 = vrsqrt.pop %v3299
      %v3309 = vrsqrt.pop %v3300
      %v3310 = vmul.f32 %v3148, %v3301
      %v3311 = vmul.f32 %v3149, %v3302
      %v3312 = vmul.f32 %v3150, %v3303
      %v3313 = vmul.f32 %v3151, %v3304
      %v3314 = vmul.f32 %v3152, %v3305
      %v3315 = vmul.f32 %v3153, %v3306
      %v3316 = vmul.f32 %v3154, %v3307
      %v3317 = vmul.f32 %v3155, %v3308
      %v3318 = vmul.f32 %v3156, %v3309
      %v3319 = vmul.f32 %v3310, %v2297
      %v3320 = vmul.f32 %v3311, %v2297
      %v3321 = vmul.f32 %v3312, %v2297
      %v3322 = vmul.f32 %v3313, %v2297
      %v3323 = vmul.f32 %v3314, %v2297
      %v3324 = vmul.f32 %v3315, %v2297
      %v3325 = vmul.f32 %v3316, %v2297
      %v3326 = vmul.f32 %v3317, %v2297
      %v3327 = vmul.f32 %v3318, %v2297
      %v3328 = vpack.c.bf16 %v3239, %v3238
      %v3329 = vpack.c.bf16 %v3241, %v3240
      %v3330 = vpack.c.bf16 %v3243, %v3242
      %v3331 = vpack.c.bf16 %v3245, %v3244
      %v3332 = vpack.c.bf16 %v3246, %v3246
      %v3333 = vpack.c.bf16 %v3320, %v3319
      %v3334 = vpack.c.bf16 %v3322, %v3321
      %v3335 = vpack.c.bf16 %v3324, %v3323
      %v3336 = vpack.c.bf16 %v3326, %v3325
      %v3337 = vpack.c.bf16 %v3327, %v3327
      %v3339 = vsel %vm1265, %v3328, 0
      %v3342 = vsel %vm1265, %v3329, 0
      %v3345 = vsel %vm1265, %v3330, 0
      %v3348 = vsel %vm1265, %v3331, 0
      %v3351 = vsel %vm1265, %v3332, 0
      %v3354 = vsel %vm1265, %v3333, 0
      %v3357 = vsel %vm1265, %v3334, 0
      %v3360 = vsel %vm1265, %v3335, 0
      %v3363 = vsel %vm1265, %v3336, 0
      %v3366 = vsel %vm1265, %v3337, 0
      %3368 = vmatprep.subr.bf16.mxu0 0
      %3369 = vmatpush1.bf16.xpose.msra.mxu0 %v3354
      %3370 = vmatprep.subr.bf16.mxu0 0
      %3371 = vmatpush1.bf16.xpose.msra.mxu0 %v3357
      %3372 = vmatprep.subr.bf16.mxu0 0
      %3373 = vmatpush1.bf16.xpose.msra.mxu0 %v3360
      %3374 = vmatprep.subr.bf16.mxu0 0
      %3375 = vmatpush1.bf16.xpose.msra.mxu0 %v3363
      %3376 = vmatprep.subr.bf16.mxu0 0
      %3377 = vmatpush1.bf16.xpose.msra.mxu0 %v3366
      %3378 = vmatprep.subr.bf16.mxu0 0
      %3379 = vmatpush1.bf16.xpose.msra.mxu0 0
      %3380 = vmatprep.subr.bf16.mxu0 0
      %3381 = vmatpush1.bf16.xpose.msra.mxu0 0
      %3382 = vmatprep.subr.bf16.mxu0 0
      %3383 = vmatpush1.bf16.xpose.msra.mxu0 0
      %3384 = vmatprep.subr.bf16.mxu0 0
      %3385 = vmatpush1.bf16.xpose.msra.mxu0 0
      %3386 = vmatprep.subr.bf16.mxu0 0
      %3387 = vmatpush1.bf16.xpose.msra.mxu0 0
      %3388 = vmatprep.subr.bf16.mxu0 0
      %3389 = vmatpush1.bf16.xpose.msra.mxu0 0
      %3390 = vmatprep.subr.bf16.mxu0 0
      %3391 = vmatpush1.bf16.xpose.msra.mxu0 0
      %3392 = vmatprep.subr.bf16.mxu0 0
      %3393 = vmatpush1.bf16.xpose.msra.mxu0 0
      %3394 = vmatprep.subr.bf16.mxu0 0
      %3395 = vmatpush1.bf16.xpose.msra.mxu0 0
      %3396 = vmatprep.subr.bf16.mxu0 0
      %3397 = vmatpush1.bf16.xpose.msra.mxu0 0
      %3398 = vmatprep.subr.bf16.mxu0 0
      %3399 = vmatpush1.bf16.xpose.msra.mxu0 0
      %3400 = vmatprep.mubr.bf16.mxu0 0
      %3401 = vmatmul.mubr.bf16.gmra.mrb[0].mxu0 %v3339
      %v3402 = vpop.f32.mrb[0].mxu0
      %v3403 = vadd.f32 0.0, %v3402
      %v3404 = vpop.f32.mrb[0].mxu0
      %v3405 = vpop.f32.mrb[0].mxu0
      %v3406 = vadd.f32 0.0, %v3405
      %v3407 = vpop.f32.mrb[0].mxu0
      %3408 = vmatprep.mubr.bf16.mxu0 0
      %3409 = vmatmul.mubr.bf16.gmra.mrb[0].mxu0 %v3342
      %v3410 = vpop.f32.mrb[0].mxu0
      %v3411 = vadd.f32 0.0, %v3410
      %v3412 = vpop.f32.mrb[0].mxu0
      %v3413 = vpop.f32.mrb[0].mxu0
      %v3414 = vadd.f32 0.0, %v3413
      %v3415 = vpop.f32.mrb[0].mxu0
      %3416 = vmatprep.mubr.bf16.mxu0 0
      %3417 = vmatmul.mubr.bf16.gmra.mrb[0].mxu0 %v3345
      %v3418 = vpop.f32.mrb[0].mxu0
      %v3419 = vadd.f32 0.0, %v3418
      %v3420 = vpop.f32.mrb[0].mxu0
      %v3421 = vpop.f32.mrb[0].mxu0
      %v3422 = vadd.f32 0.0, %v3421
      %v3423 = vpop.f32.mrb[0].mxu0
      %3424 = vmatprep.mubr.bf16.mxu0 0
      %3425 = vmatmul.mubr.bf16.gmra.mrb[0].mxu0 %v3348
      %v3426 = vpop.f32.mrb[0].mxu0
      %v3427 = vadd.f32 0.0, %v3426
      %v3428 = vpop.f32.mrb[0].mxu0
      %v3429 = vpop.f32.mrb[0].mxu0
      %v3430 = vadd.f32 0.0, %v3429
      %v3431 = vpop.f32.mrb[0].mxu0
      %3432 = vmatprep.mubr.bf16.mxu0 0
      %3433 = vmatmul.mubr.bf16.gmra.mrb[0].mxu0 %v3351
      %v3434 = vpop.f32.mrb[0].mxu0
      %v3435 = vadd.f32 0.0, %v3434
      %v3436 = vpop.f32.mrb[0].mxu0
      %v3437 = vpop.f32.mrb[0].mxu0
      %v3438 = vpop.f32.mrb[0].mxu0
      %3439 = vdwg.mxu0
      %v3440 = vmul.f32 %v3403, 0.25
      %v3441 = vmul.f32 %v3406, 0.25
      %v3442 = vmul.f32 %v3411, 0.25
      %v3443 = vmul.f32 %v3414, 0.25
      %v3444 = vmul.f32 %v3419, 0.25
      %v3445 = vmul.f32 %v3422, 0.25
      %v3446 = vmul.f32 %v3427, 0.25
      %v3447 = vmul.f32 %v3430, 0.25
      %v3448 = vmul.f32 %v3435, 0.25
      %v3449 = vsel %vm2429, %v3440, -inf
      %3450 = vmax.xlane.f32.xlu0 %v3449
      %v3451 = vpop.xlane.xlu0 %3450
      %v3452 = vsel %vm2429, %v3441, -inf
      %3453 = vmax.xlane.f32.xlu0 %v3452
      %v3454 = vpop.xlane.xlu0 %3453
      %v3455 = vsel %vm2429, %v3442, -inf
      %3456 = vmax.xlane.f32.xlu0 %v3455
      %v3457 = vpop.xlane.xlu0 %3456
      %v3458 = vsel %vm2429, %v3443, -inf
      %3459 = vmax.xlane.f32.xlu0 %v3458
      %v3460 = vpop.xlane.xlu0 %3459
      %v3461 = vsel %vm2429, %v3444, -inf
      %3462 = vmax.xlane.f32.xlu0 %v3461
      %v3463 = vpop.xlane.xlu0 %3462
      %v3464 = vsel %vm2429, %v3445, -inf
      %3465 = vmax.xlane.f32.xlu0 %v3464
      %v3466 = vpop.xlane.xlu0 %3465
      %v3467 = vsel %vm2429, %v3446, -inf
      %3468 = vmax.xlane.f32.xlu0 %v3467
      %v3469 = vpop.xlane.xlu0 %3468
      %v3470 = vsel %vm2429, %v3447, -inf
      %3471 = vmax.xlane.f32.xlu0 %v3470
      %v3472 = vpop.xlane.xlu0 %3471
      %v3473 = vsel %vm2429, %v3448, -inf
      %3474 = vmax.xlane.f32.xlu0 %v3473
      %v3475 = vpop.xlane.xlu0 %3474
      %v3476 = vsub.f32 %v3440, %v3451
      %v3477 = vsub.f32 %v3441, %v3454
      %v3478 = vsub.f32 %v3442, %v3457
      %v3479 = vsub.f32 %v3443, %v3460
      %v3480 = vsub.f32 %v3444, %v3463
      %v3481 = vsub.f32 %v3445, %v3466
      %v3482 = vsub.f32 %v3446, %v3469
      %v3483 = vsub.f32 %v3447, %v3472
      %v3484 = vsub.f32 %v3448, %v3475
      %v3485 = vmul.f32 %v3476, 1.442695
      %v3486 = vpow.pop %v3485
      %v3487 = vmul.f32 %v3477, 1.442695
      %v3488 = vpow.pop %v3487
      %v3489 = vmul.f32 %v3478, 1.442695
      %v3490 = vpow.pop %v3489
      %v3491 = vmul.f32 %v3479, 1.442695
      %v3492 = vpow.pop %v3491
      %v3493 = vmul.f32 %v3480, 1.442695
      %v3494 = vpow.pop %v3493
      %v3495 = vmul.f32 %v3481, 1.442695
      %v3496 = vpow.pop %v3495
      %v3497 = vmul.f32 %v3482, 1.442695
      %v3498 = vpow.pop %v3497
      %v3499 = vmul.f32 %v3483, 1.442695
      %v3500 = vpow.pop %v3499
      %v3501 = vmul.f32 %v3484, 1.442695
      %v3502 = vpow.pop %v3501
      %v3503 = vsel %vm2429, %v3486, 0.0
      %3504 = vadd.xlane.f32.xlu0 %v3503
      %v3505 = vpop.xlane.xlu0 %3504
      %v3506 = vsel %vm2429, %v3488, 0.0
      %3507 = vadd.xlane.f32.xlu0 %v3506
      %v3508 = vpop.xlane.xlu0 %3507
      %v3509 = vsel %vm2429, %v3490, 0.0
      %3510 = vadd.xlane.f32.xlu0 %v3509
      %v3511 = vpop.xlane.xlu0 %3510
      %v3512 = vsel %vm2429, %v3492, 0.0
      %3513 = vadd.xlane.f32.xlu0 %v3512
      %v3514 = vpop.xlane.xlu0 %3513
      %v3515 = vsel %vm2429, %v3494, 0.0
      %3516 = vadd.xlane.f32.xlu0 %v3515
      %v3517 = vpop.xlane.xlu0 %3516
      %v3518 = vsel %vm2429, %v3496, 0.0
      %3519 = vadd.xlane.f32.xlu0 %v3518
      %v3520 = vpop.xlane.xlu0 %3519
      %v3521 = vsel %vm2429, %v3498, 0.0
      %3522 = vadd.xlane.f32.xlu0 %v3521
      %v3523 = vpop.xlane.xlu0 %3522
      %v3524 = vsel %vm2429, %v3500, 0.0
      %3525 = vadd.xlane.f32.xlu0 %v3524
      %v3526 = vpop.xlane.xlu0 %3525
      %v3527 = vsel %vm2429, %v3502, 0.0
      %3528 = vadd.xlane.f32.xlu0 %v3527
      %v3529 = vpop.xlane.xlu0 %3528
      %v3530 = vrcp.pop %v3505
      %v3531 = vrcp.pop %v3508
      %v3532 = vrcp.pop %v3511
      %v3533 = vrcp.pop %v3514
      %v3534 = vrcp.pop %v3517
      %v3535 = vrcp.pop %v3520
      %v3536 = vrcp.pop %v3523
      %v3537 = vrcp.pop %v3526
      %v3538 = vrcp.pop %v3529
      %v3539 = vmul.f32 %v3486, %v3530
      %v3540 = vmul.f32 %v3488, %v3531
      %v3541 = vmul.f32 %v3490, %v3532
      %v3542 = vmul.f32 %v3492, %v3533
      %v3543 = vmul.f32 %v3494, %v3534
      %v3544 = vmul.f32 %v3496, %v3535
      %v3545 = vmul.f32 %v3498, %v3536
      %v3546 = vmul.f32 %v3500, %v3537
      %v3547 = vmul.f32 %v3502, %v3538
      %v3548 = vpack.c.bf16 %v3540, %v3539
      %v3549 = vpack.c.bf16 %v3542, %v3541
      %v3550 = vpack.c.bf16 %v3544, %v3543
      %v3551 = vpack.c.bf16 %v3546, %v3545
      %v3552 = vpack.c.bf16 %v3547, %v3547
      %v3553 = vpack.c.bf16 %v3158, %v3157
      %v3554 = vpack.c.bf16 %v3160, %v3159
      %v3555 = vpack.c.bf16 %v3162, %v3161
      %v3556 = vpack.c.bf16 %v3164, %v3163
      %v3557 = vpack.c.bf16 %v3165, %v3165
      %v3559 = vsel %vm2429, %v3548, 0
      %v3562 = vsel %vm2429, %v3549, 0
      %v3565 = vsel %vm2429, %v3550, 0
      %v3568 = vsel %vm2429, %v3551, 0
      %v3571 = vsel %vm2429, %v3552, 0
      %v3574 = vsel %vm2973, %v3557, 0
      %3576 = vmatprep.subr.bf16.mxu0 0
      %3577 = vmatpush1.bf16.msra.mxu0 %v3553
      %3578 = vmatprep.subr.bf16.mxu0 0
      %3579 = vmatpush1.bf16.msra.mxu0 %v3554
      %3580 = vmatprep.subr.bf16.mxu0 0
      %3581 = vmatpush1.bf16.msra.mxu0 %v3555
      %3582 = vmatprep.subr.bf16.mxu0 0
      %3583 = vmatpush1.bf16.msra.mxu0 %v3556
      %3584 = vmatprep.subr.bf16.mxu0 0
      %3585 = vmatpush1.bf16.msra.mxu0 %v3574
      %3586 = vmatprep.subr.bf16.mxu0 0
      %3587 = vmatpush1.bf16.msra.mxu0 0
      %3588 = vmatprep.subr.bf16.mxu0 0
      %3589 = vmatpush1.bf16.msra.mxu0 0
      %3590 = vmatprep.subr.bf16.mxu0 0
      %3591 = vmatpush1.bf16.msra.mxu0 0
      %3592 = vmatprep.subr.bf16.mxu0 0
      %3593 = vmatpush1.bf16.msra.mxu0 0
      %3594 = vmatprep.subr.bf16.mxu0 0
      %3595 = vmatpush1.bf16.msra.mxu0 0
      %3596 = vmatprep.subr.bf16.mxu0 0
      %3597 = vmatpush1.bf16.msra.mxu0 0
      %3598 = vmatprep.subr.bf16.mxu0 0
      %3599 = vmatpush1.bf16.msra.mxu0 0
      %3600 = vmatprep.subr.bf16.mxu0 0
      %3601 = vmatpush1.bf16.msra.mxu0 0
      %3602 = vmatprep.subr.bf16.mxu0 0
      %3603 = vmatpush1.bf16.msra.mxu0 0
      %3604 = vmatprep.subr.bf16.mxu0 0
      %3605 = vmatpush1.bf16.msra.mxu0 0
      %3606 = vmatprep.subr.bf16.mxu0 0
      %3607 = vmatpush1.bf16.msra.mxu0 0
      %3608 = vmatprep.mubr.bf16.mxu0 0
      %3609 = vmatmul.mubr.bf16.gmra.mrb[0].mxu0 %v3559
      %v3610 = vpop.f32.mrb[0].mxu0
      %v3611 = vadd.f32 0.0, %v3610
      %v3612 = vpop.f32.mrb[0].mxu0
      %v3613 = vpop.f32.mrb[0].mxu0
      %v3614 = vadd.f32 0.0, %v3613
      %v3615 = vpop.f32.mrb[0].mxu0
      %3616 = vmatprep.mubr.bf16.mxu0 0
      %3617 = vmatmul.mubr.bf16.gmra.mrb[0].mxu0 %v3562
      %v3618 = vpop.f32.mrb[0].mxu0
      %v3619 = vadd.f32 0.0, %v3618
      %v3620 = vpop.f32.mrb[0].mxu0
      %v3621 = vpop.f32.mrb[0].mxu0
      %v3622 = vadd.f32 0.0, %v3621
      %v3623 = vpop.f32.mrb[0].mxu0
      %3624 = vmatprep.mubr.bf16.mxu0 0
      %3625 = vmatmul.mubr.bf16.gmra.mrb[0].mxu0 %v3565
      %v3626 = vpop.f32.mrb[0].mxu0
      %v3627 = vadd.f32 0.0, %v3626
      %v3628 = vpop.f32.mrb[0].mxu0
      %v3629 = vpop.f32.mrb[0].mxu0
      %v3630 = vadd.f32 0.0, %v3629
      %v3631 = vpop.f32.mrb[0].mxu0
      %3632 = vmatprep.mubr.bf16.mxu0 0
      %3633 = vmatmul.mubr.bf16.gmra.mrb[0].mxu0 %v3568
      %v3634 = vpop.f32.mrb[0].mxu0
      %v3635 = vadd.f32 0.0, %v3634
      %v3636 = vpop.f32.mrb[0].mxu0
      %v3637 = vpop.f32.mrb[0].mxu0
      %v3638 = vadd.f32 0.0, %v3637
      %v3639 = vpop.f32.mrb[0].mxu0
      %3640 = vmatprep.mubr.bf16.mxu0 0
      %3641 = vmatmul.mubr.bf16.gmra.mrb[0].mxu0 %v3571
      %v3642 = vpop.f32.mrb[0].mxu0
      %v3643 = vadd.f32 0.0, %v3642
      %v3644 = vpop.f32.mrb[0].mxu0
      %v3645 = vpop.f32.mrb[0].mxu0
      %v3646 = vpop.f32.mrb[0].mxu0
      %3647 = vdwg.mxu0
      %v3648 = vadd.f32 %v3102, %v3611
      %v3649 = vadd.f32 %v3105, %v3614
      %v3650 = vadd.f32 %v3110, %v3619
      %v3651 = vadd.f32 %v3113, %v3622
      %v3652 = vadd.f32 %v3118, %v3627
      %v3653 = vadd.f32 %v3121, %v3630
      %v3654 = vadd.f32 %v3126, %v3635
      %v3655 = vadd.f32 %v3129, %v3638
      %v3656 = vadd.f32 %v3134, %v3643
      %v3657 = vmul.f32 %v1817, %v911
      %v3658 = vmul.f32 %v1821, %v911
      %v3659 = vmul.f32 %v1827, %v911
      %v3660 = vmul.f32 %v1831, %v911
      %v3661 = vmul.f32 %v1837, %v911
      %v3662 = vmul.f32 %v1841, %v911
      %v3663 = vmul.f32 %v1847, %v911
      %v3664 = vmul.f32 %v1851, %v911
      %v3665 = vmul.f32 %v2058, %v911
      %v3666 = vmul.f32 %v1819, %v911
      %v3667 = vmul.f32 %v1823, %v911
      %v3668 = vmul.f32 %v1829, %v911
      %v3669 = vmul.f32 %v1833, %v911
      %v3670 = vmul.f32 %v1839, %v911
      %v3671 = vmul.f32 %v1843, %v911
      %v3672 = vmul.f32 %v1849, %v911
      %v3673 = vmul.f32 %v1853, %v911
      %v3674 = vmul.f32 %v2060, %v911
      %v3675 = vmul.f32 %v1890, %v911
      %v3676 = vmul.f32 %v1893, %v911
      %v3677 = vmul.f32 %v1898, %v911
      %v3678 = vmul.f32 %v1901, %v911
      %v3679 = vmul.f32 %v1906, %v911
      %v3680 = vmul.f32 %v1909, %v911
      %v3681 = vmul.f32 %v1914, %v911
      %v3682 = vmul.f32 %v1917, %v911
      %v3683 = vmul.f32 %v2099, %v911
      %v3684 = vmul.f32 %v3657, %v3657
      %v3685 = vmul.f32 %v3658, %v3658
      %v3686 = vmul.f32 %v3659, %v3659
      %v3687 = vmul.f32 %v3660, %v3660
      %v3688 = vmul.f32 %v3661, %v3661
      %v3689 = vmul.f32 %v3662, %v3662
      %v3690 = vmul.f32 %v3663, %v3663
      %v3691 = vmul.f32 %v3664, %v3664
      %v3692 = vmul.f32 %v3665, %v3665
      %v3693 = vsel %vm1265, %v3684, 0.0
      %3694 = vadd.xlane.f32.xlu0 %v3693
      %v3695 = vpop.xlane.xlu0 %3694
      %v3696 = vsel %vm1265, %v3685, 0.0
      %3697 = vadd.xlane.f32.xlu0 %v3696
      %v3698 = vpop.xlane.xlu0 %3697
      %v3699 = vsel %vm1265, %v3686, 0.0
      %3700 = vadd.xlane.f32.xlu0 %v3699
      %v3701 = vpop.xlane.xlu0 %3700
      %v3702 = vsel %vm1265, %v3687, 0.0
      %3703 = vadd.xlane.f32.xlu0 %v3702
      %v3704 = vpop.xlane.xlu0 %3703
      %v3705 = vsel %vm1265, %v3688, 0.0
      %3706 = vadd.xlane.f32.xlu0 %v3705
      %v3707 = vpop.xlane.xlu0 %3706
      %v3708 = vsel %vm1265, %v3689, 0.0
      %3709 = vadd.xlane.f32.xlu0 %v3708
      %v3710 = vpop.xlane.xlu0 %3709
      %v3711 = vsel %vm1265, %v3690, 0.0
      %3712 = vadd.xlane.f32.xlu0 %v3711
      %v3713 = vpop.xlane.xlu0 %3712
      %v3714 = vsel %vm1265, %v3691, 0.0
      %3715 = vadd.xlane.f32.xlu0 %v3714
      %v3716 = vpop.xlane.xlu0 %3715
      %v3717 = vsel %vm1265, %v3692, 0.0
      %3718 = vadd.xlane.f32.xlu0 %v3717
      %v3719 = vpop.xlane.xlu0 %3718
      %v3720 = vmul.f32 %v3695, 0.0625
      %v3721 = vmul.f32 %v3698, 0.0625
      %v3722 = vmul.f32 %v3701, 0.0625
      %v3723 = vmul.f32 %v3704, 0.0625
      %v3724 = vmul.f32 %v3707, 0.0625
      %v3725 = vmul.f32 %v3710, 0.0625
      %v3726 = vmul.f32 %v3713, 0.0625
      %v3727 = vmul.f32 %v3716, 0.0625
      %v3728 = vmul.f32 %v3719, 0.0625
      %v3729 = vadd.f32 %v3720, 1e-06
      %v3730 = vadd.f32 %v3721, 1e-06
      %v3731 = vadd.f32 %v3722, 1e-06
      %v3732 = vadd.f32 %v3723, 1e-06
      %v3733 = vadd.f32 %v3724, 1e-06
      %v3734 = vadd.f32 %v3725, 1e-06
      %v3735 = vadd.f32 %v3726, 1e-06
      %v3736 = vadd.f32 %v3727, 1e-06
      %v3737 = vadd.f32 %v3728, 1e-06
      %v3738 = vrsqrt.pop %v3729
      %v3739 = vrsqrt.pop %v3730
      %v3740 = vrsqrt.pop %v3731
      %v3741 = vrsqrt.pop %v3732
      %v3742 = vrsqrt.pop %v3733
      %v3743 = vrsqrt.pop %v3734
      %v3744 = vrsqrt.pop %v3735
      %v3745 = vrsqrt.pop %v3736
      %v3746 = vrsqrt.pop %v3737
      %v3747 = vmul.f32 %v3657, %v3738
      %v3748 = vmul.f32 %v3658, %v3739
      %v3749 = vmul.f32 %v3659, %v3740
      %v3750 = vmul.f32 %v3660, %v3741
      %v3751 = vmul.f32 %v3661, %v3742
      %v3752 = vmul.f32 %v3662, %v3743
      %v3753 = vmul.f32 %v3663, %v3744
      %v3754 = vmul.f32 %v3664, %v3745
      %v3755 = vmul.f32 %v3665, %v3746
      %v3756 = vmul.f32 %v3747, %v2210
      %v3757 = vmul.f32 %v3748, %v2210
      %v3758 = vmul.f32 %v3749, %v2210
      %v3759 = vmul.f32 %v3750, %v2210
      %v3760 = vmul.f32 %v3751, %v2210
      %v3761 = vmul.f32 %v3752, %v2210
      %v3762 = vmul.f32 %v3753, %v2210
      %v3763 = vmul.f32 %v3754, %v2210
      %v3764 = vmul.f32 %v3755, %v2210
      %v3765 = vmul.f32 %v3666, %v3666
      %v3766 = vmul.f32 %v3667, %v3667
      %v3767 = vmul.f32 %v3668, %v3668
      %v3768 = vmul.f32 %v3669, %v3669
      %v3769 = vmul.f32 %v3670, %v3670
      %v3770 = vmul.f32 %v3671, %v3671
      %v3771 = vmul.f32 %v3672, %v3672
      %v3772 = vmul.f32 %v3673, %v3673
      %v3773 = vmul.f32 %v3674, %v3674
      %v3774 = vsel %vm1265, %v3765, 0.0
      %3775 = vadd.xlane.f32.xlu0 %v3774
      %v3776 = vpop.xlane.xlu0 %3775
      %v3777 = vsel %vm1265, %v3766, 0.0
      %3778 = vadd.xlane.f32.xlu0 %v3777
      %v3779 = vpop.xlane.xlu0 %3778
      %v3780 = vsel %vm1265, %v3767, 0.0
      %3781 = vadd.xlane.f32.xlu0 %v3780
      %v3782 = vpop.xlane.xlu0 %3781
      %v3783 = vsel %vm1265, %v3768, 0.0
      %3784 = vadd.xlane.f32.xlu0 %v3783
      %v3785 = vpop.xlane.xlu0 %3784
      %v3786 = vsel %vm1265, %v3769, 0.0
      %3787 = vadd.xlane.f32.xlu0 %v3786
      %v3788 = vpop.xlane.xlu0 %3787
      %v3789 = vsel %vm1265, %v3770, 0.0
      %3790 = vadd.xlane.f32.xlu0 %v3789
      %v3791 = vpop.xlane.xlu0 %3790
      %v3792 = vsel %vm1265, %v3771, 0.0
      %3793 = vadd.xlane.f32.xlu0 %v3792
      %v3794 = vpop.xlane.xlu0 %3793
      %v3795 = vsel %vm1265, %v3772, 0.0
      %3796 = vadd.xlane.f32.xlu0 %v3795
      %v3797 = vpop.xlane.xlu0 %3796
      %v3798 = vsel %vm1265, %v3773, 0.0
      %3799 = vadd.xlane.f32.xlu0 %v3798
      %v3800 = vpop.xlane.xlu0 %3799
      %v3801 = vmul.f32 %v3776, 0.0625
      %v3802 = vmul.f32 %v3779, 0.0625
      %v3803 = vmul.f32 %v3782, 0.0625
      %v3804 = vmul.f32 %v3785, 0.0625
      %v3805 = vmul.f32 %v3788, 0.0625
      %v3806 = vmul.f32 %v3791, 0.0625
      %v3807 = vmul.f32 %v3794, 0.0625
      %v3808 = vmul.f32 %v3797, 0.0625
      %v3809 = vmul.f32 %v3800, 0.0625
      %v3810 = vadd.f32 %v3801, 1e-06
      %v3811 = vadd.f32 %v3802, 1e-06
      %v3812 = vadd.f32 %v3803, 1e-06
      %v3813 = vadd.f32 %v3804, 1e-06
      %v3814 = vadd.f32 %v3805, 1e-06
      %v3815 = vadd.f32 %v3806, 1e-06
      %v3816 = vadd.f32 %v3807, 1e-06
      %v3817 = vadd.f32 %v3808, 1e-06
      %v3818 = vadd.f32 %v3809, 1e-06
      %v3819 = vrsqrt.pop %v3810
      %v3820 = vrsqrt.pop %v3811
      %v3821 = vrsqrt.pop %v3812
      %v3822 = vrsqrt.pop %v3813
      %v3823 = vrsqrt.pop %v3814
      %v3824 = vrsqrt.pop %v3815
      %v3825 = vrsqrt.pop %v3816
      %v3826 = vrsqrt.pop %v3817
      %v3827 = vrsqrt.pop %v3818
      %v3828 = vmul.f32 %v3666, %v3819
      %v3829 = vmul.f32 %v3667, %v3820
      %v3830 = vmul.f32 %v3668, %v3821
      %v3831 = vmul.f32 %v3669, %v3822
      %v3832 = vmul.f32 %v3670, %v3823
      %v3833 = vmul.f32 %v3671, %v3824
      %v3834 = vmul.f32 %v3672, %v3825
      %v3835 = vmul.f32 %v3673, %v3826
      %v3836 = vmul.f32 %v3674, %v3827
      %v3837 = vmul.f32 %v3828, %v2297
      %v3838 = vmul.f32 %v3829, %v2297
      %v3839 = vmul.f32 %v3830, %v2297
      %v3840 = vmul.f32 %v3831, %v2297
      %v3841 = vmul.f32 %v3832, %v2297
      %v3842 = vmul.f32 %v3833, %v2297
      %v3843 = vmul.f32 %v3834, %v2297
      %v3844 = vmul.f32 %v3835, %v2297
      %v3845 = vmul.f32 %v3836, %v2297
      %v3846 = vpack.c.bf16 %v3757, %v3756
      %v3847 = vpack.c.bf16 %v3759, %v3758
      %v3848 = vpack.c.bf16 %v3761, %v3760
      %v3849 = vpack.c.bf16 %v3763, %v3762
      %v3850 = vpack.c.bf16 %v3764, %v3764
      %v3851 = vpack.c.bf16 %v3838, %v3837
      %v3852 = vpack.c.bf16 %v3840, %v3839
      %v3853 = vpack.c.bf16 %v3842, %v3841
      %v3854 = vpack.c.bf16 %v3844, %v3843
      %v3855 = vpack.c.bf16 %v3845, %v3845
      %v3857 = vsel %vm1265, %v3846, 0
      %v3860 = vsel %vm1265, %v3847, 0
      %v3863 = vsel %vm1265, %v3848, 0
      %v3866 = vsel %vm1265, %v3849, 0
      %v3869 = vsel %vm1265, %v3850, 0
      %v3872 = vsel %vm1265, %v3851, 0
      %v3875 = vsel %vm1265, %v3852, 0
      %v3878 = vsel %vm1265, %v3853, 0
      %v3881 = vsel %vm1265, %v3854, 0
      %v3884 = vsel %vm1265, %v3855, 0
      %3886 = vmatprep.subr.bf16.mxu0 0
      %3887 = vmatpush1.bf16.xpose.msra.mxu0 %v3872
      %3888 = vmatprep.subr.bf16.mxu0 0
      %3889 = vmatpush1.bf16.xpose.msra.mxu0 %v3875
      %3890 = vmatprep.subr.bf16.mxu0 0
      %3891 = vmatpush1.bf16.xpose.msra.mxu0 %v3878
      %3892 = vmatprep.subr.bf16.mxu0 0
      %3893 = vmatpush1.bf16.xpose.msra.mxu0 %v3881
      %3894 = vmatprep.subr.bf16.mxu0 0
      %3895 = vmatpush1.bf16.xpose.msra.mxu0 %v3884
      %3896 = vmatprep.subr.bf16.mxu0 0
      %3897 = vmatpush1.bf16.xpose.msra.mxu0 0
      %3898 = vmatprep.subr.bf16.mxu0 0
      %3899 = vmatpush1.bf16.xpose.msra.mxu0 0
      %3900 = vmatprep.subr.bf16.mxu0 0
      %3901 = vmatpush1.bf16.xpose.msra.mxu0 0
      %3902 = vmatprep.subr.bf16.mxu0 0
      %3903 = vmatpush1.bf16.xpose.msra.mxu0 0
      %3904 = vmatprep.subr.bf16.mxu0 0
      %3905 = vmatpush1.bf16.xpose.msra.mxu0 0
      %3906 = vmatprep.subr.bf16.mxu0 0
      %3907 = vmatpush1.bf16.xpose.msra.mxu0 0
      %3908 = vmatprep.subr.bf16.mxu0 0
      %3909 = vmatpush1.bf16.xpose.msra.mxu0 0
      %3910 = vmatprep.subr.bf16.mxu0 0
      %3911 = vmatpush1.bf16.xpose.msra.mxu0 0
      %3912 = vmatprep.subr.bf16.mxu0 0
      %3913 = vmatpush1.bf16.xpose.msra.mxu0 0
      %3914 = vmatprep.subr.bf16.mxu0 0
      %3915 = vmatpush1.bf16.xpose.msra.mxu0 0
      %3916 = vmatprep.subr.bf16.mxu0 0
      %3917 = vmatpush1.bf16.xpose.msra.mxu0 0
      %3918 = vmatprep.mubr.bf16.mxu0 0
      %3919 = vmatmul.mubr.bf16.gmra.mrb[0].mxu0 %v3857
      %v3920 = vpop.f32.mrb[0].mxu0
      %v3921 = vadd.f32 0.0, %v3920
      %v3922 = vpop.f32.mrb[0].mxu0
      %v3923 = vpop.f32.mrb[0].mxu0
      %v3924 = vadd.f32 0.0, %v3923
      %v3925 = vpop.f32.mrb[0].mxu0
      %3926 = vmatprep.mubr.bf16.mxu0 0
      %3927 = vmatmul.mubr.bf16.gmra.mrb[0].mxu0 %v3860
      %v3928 = vpop.f32.mrb[0].mxu0
      %v3929 = vadd.f32 0.0, %v3928
      %v3930 = vpop.f32.mrb[0].mxu0
      %v3931 = vpop.f32.mrb[0].mxu0
      %v3932 = vadd.f32 0.0, %v3931
      %v3933 = vpop.f32.mrb[0].mxu0
      %3934 = vmatprep.mubr.bf16.mxu0 0
      %3935 = vmatmul.mubr.bf16.gmra.mrb[0].mxu0 %v3863
      %v3936 = vpop.f32.mrb[0].mxu0
      %v3937 = vadd.f32 0.0, %v3936
      %v3938 = vpop.f32.mrb[0].mxu0
      %v3939 = vpop.f32.mrb[0].mxu0
      %v3940 = vadd.f32 0.0, %v3939
      %v3941 = vpop.f32.mrb[0].mxu0
      %3942 = vmatprep.mubr.bf16.mxu0 0
      %3943 = vmatmul.mubr.bf16.gmra.mrb[0].mxu0 %v3866
      %v3944 = vpop.f32.mrb[0].mxu0
      %v3945 = vadd.f32 0.0, %v3944
      %v3946 = vpop.f32.mrb[0].mxu0
      %v3947 = vpop.f32.mrb[0].mxu0
      %v3948 = vadd.f32 0.0, %v3947
      %v3949 = vpop.f32.mrb[0].mxu0
      %3950 = vmatprep.mubr.bf16.mxu0 0
      %3951 = vmatmul.mubr.bf16.gmra.mrb[0].mxu0 %v3869
      %v3952 = vpop.f32.mrb[0].mxu0
      %v3953 = vadd.f32 0.0, %v3952
      %v3954 = vpop.f32.mrb[0].mxu0
      %v3955 = vpop.f32.mrb[0].mxu0
      %v3956 = vpop.f32.mrb[0].mxu0
      %3957 = vdwg.mxu0
      %v3958 = vmul.f32 %v3921, 0.25
      %v3959 = vmul.f32 %v3924, 0.25
      %v3960 = vmul.f32 %v3929, 0.25
      %v3961 = vmul.f32 %v3932, 0.25
      %v3962 = vmul.f32 %v3937, 0.25
      %v3963 = vmul.f32 %v3940, 0.25
      %v3964 = vmul.f32 %v3945, 0.25
      %v3965 = vmul.f32 %v3948, 0.25
      %v3966 = vmul.f32 %v3953, 0.25
      %v3967 = vsel %vm2429, %v3958, -inf
      %3968 = vmax.xlane.f32.xlu0 %v3967
      %v3969 = vpop.xlane.xlu0 %3968
      %v3970 = vsel %vm2429, %v3959, -inf
      %3971 = vmax.xlane.f32.xlu0 %v3970
      %v3972 = vpop.xlane.xlu0 %3971
      %v3973 = vsel %vm2429, %v3960, -inf
      %3974 = vmax.xlane.f32.xlu0 %v3973
      %v3975 = vpop.xlane.xlu0 %3974
      %v3976 = vsel %vm2429, %v3961, -inf
      %3977 = vmax.xlane.f32.xlu0 %v3976
      %v3978 = vpop.xlane.xlu0 %3977
      %v3979 = vsel %vm2429, %v3962, -inf
      %3980 = vmax.xlane.f32.xlu0 %v3979
      %v3981 = vpop.xlane.xlu0 %3980
      %v3982 = vsel %vm2429, %v3963, -inf
      %3983 = vmax.xlane.f32.xlu0 %v3982
      %v3984 = vpop.xlane.xlu0 %3983
      %v3985 = vsel %vm2429, %v3964, -inf
      %3986 = vmax.xlane.f32.xlu0 %v3985
      %v3987 = vpop.xlane.xlu0 %3986
      %v3988 = vsel %vm2429, %v3965, -inf
      %3989 = vmax.xlane.f32.xlu0 %v3988
      %v3990 = vpop.xlane.xlu0 %3989
      %v3991 = vsel %vm2429, %v3966, -inf
      %3992 = vmax.xlane.f32.xlu0 %v3991
      %v3993 = vpop.xlane.xlu0 %3992
      %v3994 = vsub.f32 %v3958, %v3969
      %v3995 = vsub.f32 %v3959, %v3972
      %v3996 = vsub.f32 %v3960, %v3975
      %v3997 = vsub.f32 %v3961, %v3978
      %v3998 = vsub.f32 %v3962, %v3981
      %v3999 = vsub.f32 %v3963, %v3984
      %v4000 = vsub.f32 %v3964, %v3987
      %v4001 = vsub.f32 %v3965, %v3990
      %v4002 = vsub.f32 %v3966, %v3993
      %v4003 = vmul.f32 %v3994, 1.442695
      %v4004 = vpow.pop %v4003
      %v4005 = vmul.f32 %v3995, 1.442695
      %v4006 = vpow.pop %v4005
      %v4007 = vmul.f32 %v3996, 1.442695
      %v4008 = vpow.pop %v4007
      %v4009 = vmul.f32 %v3997, 1.442695
      %v4010 = vpow.pop %v4009
      %v4011 = vmul.f32 %v3998, 1.442695
      %v4012 = vpow.pop %v4011
      %v4013 = vmul.f32 %v3999, 1.442695
      %v4014 = vpow.pop %v4013
      %v4015 = vmul.f32 %v4000, 1.442695
      %v4016 = vpow.pop %v4015
      %v4017 = vmul.f32 %v4001, 1.442695
      %v4018 = vpow.pop %v4017
      %v4019 = vmul.f32 %v4002, 1.442695
      %v4020 = vpow.pop %v4019
      %v4021 = vsel %vm2429, %v4004, 0.0
      %4022 = vadd.xlane.f32.xlu0 %v4021
      %v4023 = vpop.xlane.xlu0 %4022
      %v4024 = vsel %vm2429, %v4006, 0.0
      %4025 = vadd.xlane.f32.xlu0 %v4024
      %v4026 = vpop.xlane.xlu0 %4025
      %v4027 = vsel %vm2429, %v4008, 0.0
      %4028 = vadd.xlane.f32.xlu0 %v4027
      %v4029 = vpop.xlane.xlu0 %4028
      %v4030 = vsel %vm2429, %v4010, 0.0
      %4031 = vadd.xlane.f32.xlu0 %v4030
      %v4032 = vpop.xlane.xlu0 %4031
      %v4033 = vsel %vm2429, %v4012, 0.0
      %4034 = vadd.xlane.f32.xlu0 %v4033
      %v4035 = vpop.xlane.xlu0 %4034
      %v4036 = vsel %vm2429, %v4014, 0.0
      %4037 = vadd.xlane.f32.xlu0 %v4036
      %v4038 = vpop.xlane.xlu0 %4037
      %v4039 = vsel %vm2429, %v4016, 0.0
      %4040 = vadd.xlane.f32.xlu0 %v4039
      %v4041 = vpop.xlane.xlu0 %4040
      %v4042 = vsel %vm2429, %v4018, 0.0
      %4043 = vadd.xlane.f32.xlu0 %v4042
      %v4044 = vpop.xlane.xlu0 %4043
      %v4045 = vsel %vm2429, %v4020, 0.0
      %4046 = vadd.xlane.f32.xlu0 %v4045
      %v4047 = vpop.xlane.xlu0 %4046
      %v4048 = vrcp.pop %v4023
      %v4049 = vrcp.pop %v4026
      %v4050 = vrcp.pop %v4029
      %v4051 = vrcp.pop %v4032
      %v4052 = vrcp.pop %v4035
      %v4053 = vrcp.pop %v4038
      %v4054 = vrcp.pop %v4041
      %v4055 = vrcp.pop %v4044
      %v4056 = vrcp.pop %v4047
      %v4057 = vmul.f32 %v4004, %v4048
      %v4058 = vmul.f32 %v4006, %v4049
      %v4059 = vmul.f32 %v4008, %v4050
      %v4060 = vmul.f32 %v4010, %v4051
      %v4061 = vmul.f32 %v4012, %v4052
      %v4062 = vmul.f32 %v4014, %v4053
      %v4063 = vmul.f32 %v4016, %v4054
      %v4064 = vmul.f32 %v4018, %v4055
      %v4065 = vmul.f32 %v4020, %v4056
      %v4066 = vpack.c.bf16 %v4058, %v4057
      %v4067 = vpack.c.bf16 %v4060, %v4059
      %v4068 = vpack.c.bf16 %v4062, %v4061
      %v4069 = vpack.c.bf16 %v4064, %v4063
      %v4070 = vpack.c.bf16 %v4065, %v4065
      %v4071 = vpack.c.bf16 %v3676, %v3675
      %v4072 = vpack.c.bf16 %v3678, %v3677
      %v4073 = vpack.c.bf16 %v3680, %v3679
      %v4074 = vpack.c.bf16 %v3682, %v3681
      %v4075 = vpack.c.bf16 %v3683, %v3683
      %v4077 = vsel %vm2429, %v4066, 0
      %v4080 = vsel %vm2429, %v4067, 0
      %v4083 = vsel %vm2429, %v4068, 0
      %v4086 = vsel %vm2429, %v4069, 0
      %v4089 = vsel %vm2429, %v4070, 0
      %v4092 = vsel %vm2973, %v4075, 0
      %4094 = vmatprep.subr.bf16.mxu0 0
      %4095 = vmatpush1.bf16.msra.mxu0 %v4071
      %4096 = vmatprep.subr.bf16.mxu0 0
      %4097 = vmatpush1.bf16.msra.mxu0 %v4072
      %4098 = vmatprep.subr.bf16.mxu0 0
      %4099 = vmatpush1.bf16.msra.mxu0 %v4073
      %4100 = vmatprep.subr.bf16.mxu0 0
      %4101 = vmatpush1.bf16.msra.mxu0 %v4074
      %4102 = vmatprep.subr.bf16.mxu0 0
      %4103 = vmatpush1.bf16.msra.mxu0 %v4092
      %4104 = vmatprep.subr.bf16.mxu0 0
      %4105 = vmatpush1.bf16.msra.mxu0 0
      %4106 = vmatprep.subr.bf16.mxu0 0
      %4107 = vmatpush1.bf16.msra.mxu0 0
      %4108 = vmatprep.subr.bf16.mxu0 0
      %4109 = vmatpush1.bf16.msra.mxu0 0
      %4110 = vmatprep.subr.bf16.mxu0 0
      %4111 = vmatpush1.bf16.msra.mxu0 0
      %4112 = vmatprep.subr.bf16.mxu0 0
      %4113 = vmatpush1.bf16.msra.mxu0 0
      %4114 = vmatprep.subr.bf16.mxu0 0
      %4115 = vmatpush1.bf16.msra.mxu0 0
      %4116 = vmatprep.subr.bf16.mxu0 0
      %4117 = vmatpush1.bf16.msra.mxu0 0
      %4118 = vmatprep.subr.bf16.mxu0 0
      %4119 = vmatpush1.bf16.msra.mxu0 0
      %4120 = vmatprep.subr.bf16.mxu0 0
      %4121 = vmatpush1.bf16.msra.mxu0 0
      %4122 = vmatprep.subr.bf16.mxu0 0
      %4123 = vmatpush1.bf16.msra.mxu0 0
      %4124 = vmatprep.subr.bf16.mxu0 0
      %4125 = vmatpush1.bf16.msra.mxu0 0
      %4126 = vmatprep.mubr.bf16.mxu0 0
      %4127 = vmatmul.mubr.bf16.gmra.mrb[0].mxu0 %v4077
      %v4128 = vpop.f32.mrb[0].mxu0
      %v4129 = vadd.f32 0.0, %v4128
      %v4130 = vpop.f32.mrb[0].mxu0
      %v4131 = vpop.f32.mrb[0].mxu0
      %v4132 = vadd.f32 0.0, %v4131
      %v4133 = vpop.f32.mrb[0].mxu0
      %4134 = vmatprep.mubr.bf16.mxu0 0
      %4135 = vmatmul.mubr.bf16.gmra.mrb[0].mxu0 %v4080
      %v4136 = vpop.f32.mrb[0].mxu0
      %v4137 = vadd.f32 0.0, %v4136
      %v4138 = vpop.f32.mrb[0].mxu0
      %v4139 = vpop.f32.mrb[0].mxu0
      %v4140 = vadd.f32 0.0, %v4139
      %v4141 = vpop.f32.mrb[0].mxu0
      %4142 = vmatprep.mubr.bf16.mxu0 0
      %4143 = vmatmul.mubr.bf16.gmra.mrb[0].mxu0 %v4083
      %v4144 = vpop.f32.mrb[0].mxu0
      %v4145 = vadd.f32 0.0, %v4144
      %v4146 = vpop.f32.mrb[0].mxu0
      %v4147 = vpop.f32.mrb[0].mxu0
      %v4148 = vadd.f32 0.0, %v4147
      %v4149 = vpop.f32.mrb[0].mxu0
      %4150 = vmatprep.mubr.bf16.mxu0 0
      %4151 = vmatmul.mubr.bf16.gmra.mrb[0].mxu0 %v4086
      %v4152 = vpop.f32.mrb[0].mxu0
      %v4153 = vadd.f32 0.0, %v4152
      %v4154 = vpop.f32.mrb[0].mxu0
      %v4155 = vpop.f32.mrb[0].mxu0
      %v4156 = vadd.f32 0.0, %v4155
      %v4157 = vpop.f32.mrb[0].mxu0
      %4158 = vmatprep.mubr.bf16.mxu0 0
      %4159 = vmatmul.mubr.bf16.gmra.mrb[0].mxu0 %v4089
      %v4160 = vpop.f32.mrb[0].mxu0
      %v4161 = vadd.f32 0.0, %v4160
      %v4162 = vpop.f32.mrb[0].mxu0
      %v4163 = vpop.f32.mrb[0].mxu0
      %v4164 = vpop.f32.mrb[0].mxu0
      %4165 = vdwg.mxu0
      %v4166 = vadd.f32 %v3648, %v4129
      %v4167 = vadd.f32 %v3649, %v4132
      %v4168 = vadd.f32 %v3650, %v4137
      %v4169 = vadd.f32 %v3651, %v4140
      %v4170 = vadd.f32 %v3652, %v4145
      %v4171 = vadd.f32 %v3653, %v4148
      %v4172 = vadd.f32 %v3654, %v4153
      %v4173 = vadd.f32 %v3655, %v4156
      %v4174 = vadd.f32 %v3656, %v4161
      %v4175 = vld [vmem:[%s12] sm:$0xf]
      %v4176 = vld [vmem:[%s12 + $0x4] sm:$0xf]
      %v4177 = vld [vmem:[%s12 + $0x8] sm:$0xf]
      %v4178 = vld [vmem:[%s12 + $0xc] sm:$0xf]
      %v4179 = vld [vmem:[%s12 + $0x10] sm:$0xf]
      %v4180 = vld [vmem:[%s12 + $0x14] sm:$0xf]
      %v4181 = vld [vmem:[%s12 + $0x18] sm:$0xf]
      %v4182 = vld [vmem:[%s12 + $0x1c] sm:$0xf]
      %v4183 = vld [vmem:[%s13] sm:$0x1]
      %v4184 = vpack.c.bf16 %v4167, %v4166
      %v4185 = vpack.c.bf16 %v4169, %v4168
      %v4186 = vpack.c.bf16 %v4171, %v4170
      %v4187 = vpack.c.bf16 %v4173, %v4172
      %v4189 = vlaneseq
      %v4190 = vshrl.u32 %v4189, 7
      %v4191 = vsub.s32 0, %v4190
      %v4192 = vrot.slane %v4183, %v4191
      %v4202 = vunpack.c.l.b16 %v4175
      %v4203 = vunpack.c.l.b16 %v4176
      %v4204 = vunpack.c.l.b16 %v4177
      %v4205 = vunpack.c.l.b16 %v4178
      %v4206 = vunpack.c.l.b16 %v4179
      %v4207 = vunpack.c.l.b16 %v4180
      %v4208 = vunpack.c.l.b16 %v4181
      %v4209 = vunpack.c.l.b16 %v4182
      %v4210 = vpack.c.b16 %v4203, %v4202
      %v4211 = vpack.c.b16 %v4205, %v4204
      %v4212 = vpack.c.b16 %v4207, %v4206
      %v4213 = vpack.c.b16 %v4209, %v4208
      %v4219 = vsel %vm1265, %v4184, 0
      %v4222 = vsel %vm1265, %v4185, 0
      %v4225 = vsel %vm1265, %v4186, 0
      %v4228 = vsel %vm1265, %v4187, 0
      %4230 = vmatprep.subr.bf16.mxu0 0
      %4231 = vmatpush1.bf16.msra.mxu0 %v4210
      %4232 = vmatprep.subr.bf16.mxu0 0
      %4233 = vmatpush1.bf16.msra.mxu0 %v4211
      %4234 = vmatprep.subr.bf16.mxu0 0
      %4235 = vmatpush1.bf16.msra.mxu0 %v4212
      %4236 = vmatprep.subr.bf16.mxu0 0
      %4237 = vmatpush1.bf16.msra.mxu0 %v4213
      %4238 = vmatprep.subr.bf16.mxu0 0
      %4239 = vmatpush1.bf16.msra.mxu0 0
      %4240 = vmatprep.subr.bf16.mxu0 0
      %4241 = vmatpush1.bf16.msra.mxu0 0
      %4242 = vmatprep.subr.bf16.mxu0 0
      %4243 = vmatpush1.bf16.msra.mxu0 0
      %4244 = vmatprep.subr.bf16.mxu0 0
      %4245 = vmatpush1.bf16.msra.mxu0 0
      %4246 = vmatprep.subr.bf16.mxu0 0
      %4247 = vmatpush1.bf16.msra.mxu0 0
      %4248 = vmatprep.subr.bf16.mxu0 0
      %4249 = vmatpush1.bf16.msra.mxu0 0
      %4250 = vmatprep.subr.bf16.mxu0 0
      %4251 = vmatpush1.bf16.msra.mxu0 0
      %4252 = vmatprep.subr.bf16.mxu0 0
      %4253 = vmatpush1.bf16.msra.mxu0 0
      %4254 = vmatprep.subr.bf16.mxu0 0
      %4255 = vmatpush1.bf16.msra.mxu0 0
      %4256 = vmatprep.subr.bf16.mxu0 0
      %4257 = vmatpush1.bf16.msra.mxu0 0
      %4258 = vmatprep.subr.bf16.mxu0 0
      %4259 = vmatpush1.bf16.msra.mxu0 0
      %4260 = vmatprep.subr.bf16.mxu0 0
      %4261 = vmatpush1.bf16.msra.mxu0 0
      %4262 = vmatprep.mubr.bf16.mxu0 0
      %4263 = vmatmul.mubr.bf16.gmra.mrb[0].mxu0 %v4219
      %v4264 = vpop.f32.mrb[0].mxu0
      %v4265 = vadd.f32 %v4192, %v4264
      %v4266 = vpop.f32.mrb[0].mxu0
      %v4267 = vpop.f32.mrb[0].mxu0
      %v4268 = vadd.f32 %v4192, %v4267
      %v4269 = vpop.f32.mrb[0].mxu0
      %4270 = vmatprep.mubr.bf16.mxu0 0
      %4271 = vmatmul.mubr.bf16.gmra.mrb[0].mxu0 %v4222
      %v4272 = vpop.f32.mrb[0].mxu0
      %v4273 = vadd.f32 %v4192, %v4272
      %v4274 = vpop.f32.mrb[0].mxu0
      %v4275 = vpop.f32.mrb[0].mxu0
      %v4276 = vadd.f32 %v4192, %v4275
      %v4277 = vpop.f32.mrb[0].mxu0
      %4278 = vmatprep.mubr.bf16.mxu0 0
      %4279 = vmatmul.mubr.bf16.gmra.mrb[0].mxu0 %v4225
      %v4280 = vpop.f32.mrb[0].mxu0
      %v4281 = vadd.f32 %v4192, %v4280
      %v4282 = vpop.f32.mrb[0].mxu0
      %v4283 = vpop.f32.mrb[0].mxu0
      %v4284 = vadd.f32 %v4192, %v4283
      %v4285 = vpop.f32.mrb[0].mxu0
      %4286 = vmatprep.mubr.bf16.mxu0 0
      %4287 = vmatmul.mubr.bf16.gmra.mrb[0].mxu0 %v4228
      %v4288 = vpop.f32.mrb[0].mxu0
      %v4289 = vadd.f32 %v4192, %v4288
      %v4290 = vpop.f32.mrb[0].mxu0
      %v4291 = vpop.f32.mrb[0].mxu0
      %v4292 = vadd.f32 %v4192, %v4291
      %v4293 = vpop.f32.mrb[0].mxu0
      %4294 = vdwg.mxu0
      %s4295 = scalar_lea.vmem %s12, 32
      %v4296 = vld [vmem:[%s4295] sm:$0xf]
      %v4297 = vld [vmem:[%s4295 + $0x4] sm:$0xf]
      %v4298 = vld [vmem:[%s4295 + $0x8] sm:$0xf]
      %v4299 = vld [vmem:[%s4295 + $0xc] sm:$0xf]
      %v4300 = vld [vmem:[%s4295 + $0x10] sm:$0xf]
      %v4301 = vld [vmem:[%s4295 + $0x14] sm:$0xf]
      %v4302 = vld [vmem:[%s4295 + $0x18] sm:$0xf]
      %v4303 = vld [vmem:[%s4295 + $0x1c] sm:$0xf]
      %s4304 = scalar_lea.vmem %s13, 1
      %v4305 = vld [vmem:[%s4304] sm:$0x1]
      %v4306 = vpack.c.bf16 %v4174, %v4174
      %v4308 = vlaneseq
      %v4309 = vshrl.u32 %v4308, 7
      %v4310 = vsub.s32 0, %v4309
      %v4311 = vrot.slane %v4305, %v4310
      %v4321 = vunpack.c.l.b16 %v4296
      %v4322 = vunpack.c.l.b16 %v4297
      %v4323 = vunpack.c.l.b16 %v4298
      %v4324 = vunpack.c.l.b16 %v4299
      %v4325 = vunpack.c.l.b16 %v4300
      %v4326 = vunpack.c.l.b16 %v4301
      %v4327 = vunpack.c.l.b16 %v4302
      %v4328 = vunpack.c.l.b16 %v4303
      %v4329 = vpack.c.b16 %v4322, %v4321
      %v4330 = vpack.c.b16 %v4324, %v4323
      %v4331 = vpack.c.b16 %v4326, %v4325
      %v4332 = vpack.c.b16 %v4328, %v4327
      %v4338 = vsel %vm1265, %v4306, 0
      %4340 = vmatprep.subr.bf16.mxu0 0
      %4341 = vmatpush1.bf16.msra.mxu0 %v4329
      %4342 = vmatprep.subr.bf16.mxu0 0
      %4343 = vmatpush1.bf16.msra.mxu0 %v4330
      %4344 = vmatprep.subr.bf16.mxu0 0
      %4345 = vmatpush1.bf16.msra.mxu0 %v4331
      %4346 = vmatprep.subr.bf16.mxu0 0
      %4347 = vmatpush1.bf16.msra.mxu0 %v4332
      %4348 = vmatprep.subr.bf16.mxu0 0
      %4349 = vmatpush1.bf16.msra.mxu0 0
      %4350 = vmatprep.subr.bf16.mxu0 0
      %4351 = vmatpush1.bf16.msra.mxu0 0
      %4352 = vmatprep.subr.bf16.mxu0 0
      %4353 = vmatpush1.bf16.msra.mxu0 0
      %4354 = vmatprep.subr.bf16.mxu0 0
      %4355 = vmatpush1.bf16.msra.mxu0 0
      %4356 = vmatprep.subr.bf16.mxu0 0
      %4357 = vmatpush1.bf16.msra.mxu0 0
      %4358 = vmatprep.subr.bf16.mxu0 0
      %4359 = vmatpush1.bf16.msra.mxu0 0
      %4360 = vmatprep.subr.bf16.mxu0 0
      %4361 = vmatpush1.bf16.msra.mxu0 0
      %4362 = vmatprep.subr.bf16.mxu0 0
      %4363 = vmatpush1.bf16.msra.mxu0 0
      %4364 = vmatprep.subr.bf16.mxu0 0
      %4365 = vmatpush1.bf16.msra.mxu0 0
      %4366 = vmatprep.subr.bf16.mxu0 0
      %4367 = vmatpush1.bf16.msra.mxu0 0
      %4368 = vmatprep.subr.bf16.mxu0 0
      %4369 = vmatpush1.bf16.msra.mxu0 0
      %4370 = vmatprep.subr.bf16.mxu0 0
      %4371 = vmatpush1.bf16.msra.mxu0 0
      %4372 = vmatprep.mubr.bf16.mxu0 0
      %4373 = vmatmul.mubr.bf16.gmra.mrb[0].mxu0 %v4338
      %v4374 = vpop.f32.mrb[0].mxu0
      %v4375 = vadd.f32 %v4311, %v4374
      %v4376 = vpop.f32.mrb[0].mxu0
      %v4377 = vpop.f32.mrb[0].mxu0
      %v4378 = vpop.f32.mrb[0].mxu0
      %4379 = vdwg.mxu0
      %v4380 = vlaneseq
      %v4381 = vshrl.u32 %v4380, 7
      %v4382 = vsub.s32 0, %v4381
      %v4383 = vrot.slane %v1345, %v4382
      %v4384 = vmul.f32 %v4383, %v4265
      %v4385 = vmul.f32 %v4383, %v4268
      %v4386 = vmul.f32 %v4383, %v4273
      %v4387 = vmul.f32 %v4383, %v4276
      %v4388 = vmul.f32 %v4383, %v4281
      %v4389 = vmul.f32 %v4383, %v4284
      %v4390 = vmul.f32 %v4383, %v4289
      %v4391 = vmul.f32 %v4383, %v4292
      %v4392 = vadd.f32 %v792, %v4384
      %v4393 = vadd.f32 %v795, %v4385
      %v4394 = vadd.f32 %v800, %v4386
      %v4395 = vadd.f32 %v803, %v4387
      %v4396 = vadd.f32 %v808, %v4388
      %v4397 = vadd.f32 %v811, %v4389
      %v4398 = vadd.f32 %v816, %v4390
      %v4399 = vadd.f32 %v819, %v4391
      %v4400 = vsel %vm1265, %v4392, 0.0
      %4401 = vadd.xlane.f32.xlu0 %v4400
      %v4402 = vpop.xlane.xlu0 %4401
      %v4403 = vsel %vm1265, %v4393, 0.0
      %4404 = vadd.xlane.f32.xlu0 %v4403
      %v4405 = vpop.xlane.xlu0 %4404
      %v4406 = vsel %vm1265, %v4394, 0.0
      %4407 = vadd.xlane.f32.xlu0 %v4406
      %v4408 = vpop.xlane.xlu0 %4407
      %v4409 = vsel %vm1265, %v4395, 0.0
      %4410 = vadd.xlane.f32.xlu0 %v4409
      %v4411 = vpop.xlane.xlu0 %4410
      %v4412 = vsel %vm1265, %v4396, 0.0
      %4413 = vadd.xlane.f32.xlu0 %v4412
      %v4414 = vpop.xlane.xlu0 %4413
      %v4415 = vsel %vm1265, %v4397, 0.0
      %4416 = vadd.xlane.f32.xlu0 %v4415
      %v4417 = vpop.xlane.xlu0 %4416
      %v4418 = vsel %vm1265, %v4398, 0.0
      %4419 = vadd.xlane.f32.xlu0 %v4418
      %v4420 = vpop.xlane.xlu0 %4419
      %v4421 = vsel %vm1265, %v4399, 0.0
      %4422 = vadd.xlane.f32.xlu0 %v4421
      %v4423 = vpop.xlane.xlu0 %4422
      %v4424 = vmul.f32 %v4402, %v1539
      %v4425 = vmul.f32 %v4405, %v1539
      %v4426 = vmul.f32 %v4408, %v1539
      %v4427 = vmul.f32 %v4411, %v1539
      %v4428 = vmul.f32 %v4414, %v1539
      %v4429 = vmul.f32 %v4417, %v1539
      %v4430 = vmul.f32 %v4420, %v1539
      %v4431 = vmul.f32 %v4423, %v1539
      %v4432 = vsub.f32 %v4392, %v4424
      %v4433 = vsub.f32 %v4393, %v4425
      %v4434 = vsub.f32 %v4394, %v4426
      %v4435 = vsub.f32 %v4395, %v4427
      %v4436 = vsub.f32 %v4396, %v4428
      %v4437 = vsub.f32 %v4397, %v4429
      %v4438 = vsub.f32 %v4398, %v4430
      %v4439 = vsub.f32 %v4399, %v4431
      %v4440 = vmul.f32 %v4432, %v4432
      %v4441 = vmul.f32 %v4433, %v4433
      %v4442 = vmul.f32 %v4434, %v4434
      %v4443 = vmul.f32 %v4435, %v4435
      %v4444 = vmul.f32 %v4436, %v4436
      %v4445 = vmul.f32 %v4437, %v4437
      %v4446 = vmul.f32 %v4438, %v4438
      %v4447 = vmul.f32 %v4439, %v4439
      %v4448 = vsel %vm1265, %v4440, 0.0
      %4449 = vadd.xlane.f32.xlu0 %v4448
      %v4450 = vpop.xlane.xlu0 %4449
      %v4451 = vsel %vm1265, %v4441, 0.0
      %4452 = vadd.xlane.f32.xlu0 %v4451
      %v4453 = vpop.xlane.xlu0 %4452
      %v4454 = vsel %vm1265, %v4442, 0.0
      %4455 = vadd.xlane.f32.xlu0 %v4454
      %v4456 = vpop.xlane.xlu0 %4455
      %v4457 = vsel %vm1265, %v4443, 0.0
      %4458 = vadd.xlane.f32.xlu0 %v4457
      %v4459 = vpop.xlane.xlu0 %4458
      %v4460 = vsel %vm1265, %v4444, 0.0
      %4461 = vadd.xlane.f32.xlu0 %v4460
      %v4462 = vpop.xlane.xlu0 %4461
      %v4463 = vsel %vm1265, %v4445, 0.0
      %4464 = vadd.xlane.f32.xlu0 %v4463
      %v4465 = vpop.xlane.xlu0 %4464
      %v4466 = vsel %vm1265, %v4446, 0.0
      %4467 = vadd.xlane.f32.xlu0 %v4466
      %v4468 = vpop.xlane.xlu0 %4467
      %v4469 = vsel %vm1265, %v4447, 0.0
      %4470 = vadd.xlane.f32.xlu0 %v4469
      %v4471 = vpop.xlane.xlu0 %4470
      %v4472 = vmul.f32 %v4450, %v1539
      %v4473 = vmul.f32 %v4453, %v1539
      %v4474 = vmul.f32 %v4456, %v1539
      %v4475 = vmul.f32 %v4459, %v1539
      %v4476 = vmul.f32 %v4462, %v1539
      %v4477 = vmul.f32 %v4465, %v1539
      %v4478 = vmul.f32 %v4468, %v1539
      %v4479 = vmul.f32 %v4471, %v1539
      %v4480 = vadd.f32 %v4472, 1e-06
      %v4481 = vadd.f32 %v4473, 1e-06
      %v4482 = vadd.f32 %v4474, 1e-06
      %v4483 = vadd.f32 %v4475, 1e-06
      %v4484 = vadd.f32 %v4476, 1e-06
      %v4485 = vadd.f32 %v4477, 1e-06
      %v4486 = vadd.f32 %v4478, 1e-06
      %v4487 = vadd.f32 %v4479, 1e-06
      %v4488 = vrsqrt.pop %v4480
      %v4489 = vrsqrt.pop %v4481
      %v4490 = vrsqrt.pop %v4482
      %v4491 = vrsqrt.pop %v4483
      %v4492 = vrsqrt.pop %v4484
      %v4493 = vrsqrt.pop %v4485
      %v4494 = vrsqrt.pop %v4486
      %v4495 = vrsqrt.pop %v4487
      %v4496 = vmul.f32 %v4432, %v4488
      %v4497 = vmul.f32 %v4433, %v4489
      %v4498 = vmul.f32 %v4434, %v4490
      %v4499 = vmul.f32 %v4435, %v4491
      %v4500 = vmul.f32 %v4436, %v4492
      %v4501 = vmul.f32 %v4437, %v4493
      %v4502 = vmul.f32 %v4438, %v4494
      %v4503 = vmul.f32 %v4439, %v4495
      %v4504 = vadd.f32 %v1386, 1.0
      %v4505 = vlaneseq
      %v4506 = vshrl.u32 %v4505, 7
      %v4507 = vsub.s32 0, %v4506
      %v4508 = vrot.slane %v4504, %v4507
      %v4509 = vmul.f32 %v4496, %v4508
      %v4510 = vmul.f32 %v4497, %v4508
      %v4511 = vmul.f32 %v4498, %v4508
      %v4512 = vmul.f32 %v4499, %v4508
      %v4513 = vmul.f32 %v4500, %v4508
      %v4514 = vmul.f32 %v4501, %v4508
      %v4515 = vmul.f32 %v4502, %v4508
      %v4516 = vmul.f32 %v4503, %v4508
      %v4517 = vlaneseq
      %v4518 = vshrl.u32 %v4517, 7
      %v4519 = vsub.s32 0, %v4518
      %v4520 = vrot.slane %v1347, %v4519
      %v4521 = vadd.f32 %v4509, %v4520
      %v4522 = vadd.f32 %v4510, %v4520
      %v4523 = vadd.f32 %v4511, %v4520
      %v4524 = vadd.f32 %v4512, %v4520
      %v4525 = vadd.f32 %v4513, %v4520
      %v4526 = vadd.f32 %v4514, %v4520
      %v4527 = vadd.f32 %v4515, %v4520
      %v4528 = vadd.f32 %v4516, %v4520
      %v4529 = vld [vmem:[%s14] sm:$0xff]
      %v4530 = vld [vmem:[%s14 + $0x8] sm:$0xff]
      %v4531 = vld [vmem:[%s14 + $0x10] sm:$0xff]
      %v4532 = vld [vmem:[%s14 + $0x18] sm:$0xff]
      %v4533 = vld [vmem:[%s14 + $0x20] sm:$0xff]
      %v4534 = vld [vmem:[%s14 + $0x28] sm:$0xff]
      %v4535 = vld [vmem:[%s14 + $0x30] sm:$0xff]
      %v4536 = vld [vmem:[%s14 + $0x38] sm:$0xff]
      %v4537 = vld [vmem:[%s15] sm:$0x3]
      %v4538 = vpack.c.bf16 %v4522, %v4521
      %v4539 = vpack.c.bf16 %v4524, %v4523
      %v4540 = vpack.c.bf16 %v4526, %v4525
      %v4541 = vpack.c.bf16 %v4528, %v4527
      %v4543 = vlaneseq
      %v4544 = vshrl.u32 %v4543, 7
      %v4545 = vsub.s32 0, %v4544
      %v4546 = vrot.slane %v4537, %v4545
      %v4547 = vlaneseq
      %v4548 = vshrl.u32 %v4547, 7
      %v4549 = vsub.s32 1, %v4548
      %v4550 = vrot.slane %v4537, %v4549
      %v4561 = vunpack.c.l.b16 %v4529
      %v4562 = vunpack.c.h.b16 %v4529
      %v4563 = vunpack.c.l.b16 %v4530
      %v4564 = vunpack.c.h.b16 %v4530
      %v4565 = vunpack.c.l.b16 %v4531
      %v4566 = vunpack.c.h.b16 %v4531
      %v4567 = vunpack.c.l.b16 %v4532
      %v4568 = vunpack.c.h.b16 %v4532
      %v4569 = vunpack.c.l.b16 %v4533
      %v4570 = vunpack.c.h.b16 %v4533
      %v4571 = vunpack.c.l.b16 %v4534
      %v4572 = vunpack.c.h.b16 %v4534
      %v4573 = vunpack.c.l.b16 %v4535
      %v4574 = vunpack.c.h.b16 %v4535
      %v4575 = vunpack.c.l.b16 %v4536
      %v4576 = vunpack.c.h.b16 %v4536
      %v4577 = vpack.c.b16 %v4563, %v4561
      %v4578 = vpack.c.b16 %v4564, %v4562
      %v4579 = vpack.c.b16 %v4567, %v4565
      %v4580 = vpack.c.b16 %v4568, %v4566
      %v4581 = vpack.c.b16 %v4571, %v4569
      %v4582 = vpack.c.b16 %v4572, %v4570
      %v4583 = vpack.c.b16 %v4575, %v4573
      %v4584 = vpack.c.b16 %v4576, %v4574
      %v4594 = vsel %vm1265, %v4538, 0
      %v4597 = vsel %vm1265, %v4539, 0
      %v4600 = vsel %vm1265, %v4540, 0
      %v4603 = vsel %vm1265, %v4541, 0
      %4605 = vmatprep.subr.bf16.mxu0 %v4578
      %4606 = vmatpush1.bf16.msra.mxu0 %v4577
      %4607 = vmatprep.subr.bf16.mxu0 %v4580
      %4608 = vmatpush1.bf16.msra.mxu0 %v4579
      %4609 = vmatprep.subr.bf16.mxu0 %v4582
      %4610 = vmatpush1.bf16.msra.mxu0 %v4581
      %4611 = vmatprep.subr.bf16.mxu0 %v4584
      %4612 = vmatpush1.bf16.msra.mxu0 %v4583
      %4613 = vmatprep.subr.bf16.mxu0 0
      %4614 = vmatpush1.bf16.msra.mxu0 0
      %4615 = vmatprep.subr.bf16.mxu0 0
      %4616 = vmatpush1.bf16.msra.mxu0 0
      %4617 = vmatprep.subr.bf16.mxu0 0
      %4618 = vmatpush1.bf16.msra.mxu0 0
      %4619 = vmatprep.subr.bf16.mxu0 0
      %4620 = vmatpush1.bf16.msra.mxu0 0
      %4621 = vmatprep.subr.bf16.mxu0 0
      %4622 = vmatpush1.bf16.msra.mxu0 0
      %4623 = vmatprep.subr.bf16.mxu0 0
      %4624 = vmatpush1.bf16.msra.mxu0 0
      %4625 = vmatprep.subr.bf16.mxu0 0
      %4626 = vmatpush1.bf16.msra.mxu0 0
      %4627 = vmatprep.subr.bf16.mxu0 0
      %4628 = vmatpush1.bf16.msra.mxu0 0
      %4629 = vmatprep.subr.bf16.mxu0 0
      %4630 = vmatpush1.bf16.msra.mxu0 0
      %4631 = vmatprep.subr.bf16.mxu0 0
      %4632 = vmatpush1.bf16.msra.mxu0 0
      %4633 = vmatprep.subr.bf16.mxu0 0
      %4634 = vmatpush1.bf16.msra.mxu0 0
      %4635 = vmatprep.subr.bf16.mxu0 0
      %4636 = vmatpush1.bf16.msra.mxu0 0
      %4637 = vmatprep.mubr.bf16.mxu0 0
      %4638 = vmatmul.mubr.bf16.gmra.mrb[0].mxu0 %v4594
      %v4639 = vpop.f32.mrb[0].mxu0
      %v4640 = vadd.f32 %v4546, %v4639
      %v4641 = vpop.f32.mrb[0].mxu0
      %v4642 = vadd.f32 %v4550, %v4641
      %v4643 = vpop.f32.mrb[0].mxu0
      %v4644 = vadd.f32 %v4546, %v4643
      %v4645 = vpop.f32.mrb[0].mxu0
      %v4646 = vadd.f32 %v4550, %v4645
      %4647 = vmatprep.mubr.bf16.mxu0 0
      %4648 = vmatmul.mubr.bf16.gmra.mrb[0].mxu0 %v4597
      %v4649 = vpop.f32.mrb[0].mxu0
      %v4650 = vadd.f32 %v4546, %v4649
      %v4651 = vpop.f32.mrb[0].mxu0
      %v4652 = vadd.f32 %v4550, %v4651
      %v4653 = vpop.f32.mrb[0].mxu0
      %v4654 = vadd.f32 %v4546, %v4653
      %v4655 = vpop.f32.mrb[0].mxu0
      %v4656 = vadd.f32 %v4550, %v4655
      %4657 = vmatprep.mubr.bf16.mxu0 0
      %4658 = vmatmul.mubr.bf16.gmra.mrb[0].mxu0 %v4600
      %v4659 = vpop.f32.mrb[0].mxu0
      %v4660 = vadd.f32 %v4546, %v4659
      %v4661 = vpop.f32.mrb[0].mxu0
      %v4662 = vadd.f32 %v4550, %v4661
      %v4663 = vpop.f32.mrb[0].mxu0
      %v4664 = vadd.f32 %v4546, %v4663
      %v4665 = vpop.f32.mrb[0].mxu0
      %v4666 = vadd.f32 %v4550, %v4665
      %4667 = vmatprep.mubr.bf16.mxu0 0
      %4668 = vmatmul.mubr.bf16.gmra.mrb[0].mxu0 %v4603
      %v4669 = vpop.f32.mrb[0].mxu0
      %v4670 = vadd.f32 %v4546, %v4669
      %v4671 = vpop.f32.mrb[0].mxu0
      %v4672 = vadd.f32 %v4550, %v4671
      %v4673 = vpop.f32.mrb[0].mxu0
      %v4674 = vadd.f32 %v4546, %v4673
      %v4675 = vpop.f32.mrb[0].mxu0
      %v4676 = vadd.f32 %v4550, %v4675
      %4677 = vdwg.mxu0
      %v4678 = vmul.f32 %v4640, %v4640
      %v4679 = vmul.f32 %v4642, %v4642
      %v4680 = vmul.f32 %v4644, %v4644
      %v4681 = vmul.f32 %v4646, %v4646
      %v4682 = vmul.f32 %v4650, %v4650
      %v4683 = vmul.f32 %v4652, %v4652
      %v4684 = vmul.f32 %v4654, %v4654
      %v4685 = vmul.f32 %v4656, %v4656
      %v4686 = vmul.f32 %v4660, %v4660
      %v4687 = vmul.f32 %v4662, %v4662
      %v4688 = vmul.f32 %v4664, %v4664
      %v4689 = vmul.f32 %v4666, %v4666
      %v4690 = vmul.f32 %v4670, %v4670
      %v4691 = vmul.f32 %v4672, %v4672
      %v4692 = vmul.f32 %v4674, %v4674
      %v4693 = vmul.f32 %v4676, %v4676
      %v4694 = vmul.f32 %v4640, %v4678
      %v4695 = vmul.f32 %v4642, %v4679
      %v4696 = vmul.f32 %v4644, %v4680
      %v4697 = vmul.f32 %v4646, %v4681
      %v4698 = vmul.f32 %v4650, %v4682
      %v4699 = vmul.f32 %v4652, %v4683
      %v4700 = vmul.f32 %v4654, %v4684
      %v4701 = vmul.f32 %v4656, %v4685
      %v4702 = vmul.f32 %v4660, %v4686
      %v4703 = vmul.f32 %v4662, %v4687
      %v4704 = vmul.f32 %v4664, %v4688
      %v4705 = vmul.f32 %v4666, %v4689
      %v4706 = vmul.f32 %v4670, %v4690
      %v4707 = vmul.f32 %v4672, %v4691
      %v4708 = vmul.f32 %v4674, %v4692
      %v4709 = vmul.f32 %v4676, %v4693
      %v4710 = vmul.f32 %v4694, 0.044715
      %v4711 = vmul.f32 %v4695, 0.044715
      %v4712 = vmul.f32 %v4696, 0.044715
      %v4713 = vmul.f32 %v4697, 0.044715
      %v4714 = vmul.f32 %v4698, 0.044715
      %v4715 = vmul.f32 %v4699, 0.044715
      %v4716 = vmul.f32 %v4700, 0.044715
      %v4717 = vmul.f32 %v4701, 0.044715
      %v4718 = vmul.f32 %v4702, 0.044715
      %v4719 = vmul.f32 %v4703, 0.044715
      %v4720 = vmul.f32 %v4704, 0.044715
      %v4721 = vmul.f32 %v4705, 0.044715
      %v4722 = vmul.f32 %v4706, 0.044715
      %v4723 = vmul.f32 %v4707, 0.044715
      %v4724 = vmul.f32 %v4708, 0.044715
      %v4725 = vmul.f32 %v4709, 0.044715
      %v4726 = vadd.f32 %v4640, %v4710
      %v4727 = vadd.f32 %v4642, %v4711
      %v4728 = vadd.f32 %v4644, %v4712
      %v4729 = vadd.f32 %v4646, %v4713
      %v4730 = vadd.f32 %v4650, %v4714
      %v4731 = vadd.f32 %v4652, %v4715
      %v4732 = vadd.f32 %v4654, %v4716
      %v4733 = vadd.f32 %v4656, %v4717
      %v4734 = vadd.f32 %v4660, %v4718
      %v4735 = vadd.f32 %v4662, %v4719
      %v4736 = vadd.f32 %v4664, %v4720
      %v4737 = vadd.f32 %v4666, %v4721
      %v4738 = vadd.f32 %v4670, %v4722
      %v4739 = vadd.f32 %v4672, %v4723
      %v4740 = vadd.f32 %v4674, %v4724
      %v4741 = vadd.f32 %v4676, %v4725
      %v4742 = vmul.f32 %v4726, 0.7978846
      %v4743 = vmul.f32 %v4727, 0.7978846
      %v4744 = vmul.f32 %v4728, 0.7978846
      %v4745 = vmul.f32 %v4729, 0.7978846
      %v4746 = vmul.f32 %v4730, 0.7978846
      %v4747 = vmul.f32 %v4731, 0.7978846
      %v4748 = vmul.f32 %v4732, 0.7978846
      %v4749 = vmul.f32 %v4733, 0.7978846
      %v4750 = vmul.f32 %v4734, 0.7978846
      %v4751 = vmul.f32 %v4735, 0.7978846
      %v4752 = vmul.f32 %v4736, 0.7978846
      %v4753 = vmul.f32 %v4737, 0.7978846
      %v4754 = vmul.f32 %v4738, 0.7978846
      %v4755 = vmul.f32 %v4739, 0.7978846
      %v4756 = vmul.f32 %v4740, 0.7978846
      %v4757 = vmul.f32 %v4741, 0.7978846
      %v4758 = vtanh.pop %v4742
      %v4759 = vtanh.pop %v4743
      %v4760 = vtanh.pop %v4744
      %v4761 = vtanh.pop %v4745
      %v4762 = vtanh.pop %v4746
      %v4763 = vtanh.pop %v4747
      %v4764 = vtanh.pop %v4748
      %v4765 = vtanh.pop %v4749
      %v4766 = vtanh.pop %v4750
      %v4767 = vtanh.pop %v4751
      %v4768 = vtanh.pop %v4752
      %v4769 = vtanh.pop %v4753
      %v4770 = vtanh.pop %v4754
      %v4771 = vtanh.pop %v4755
      %v4772 = vtanh.pop %v4756
      %v4773 = vtanh.pop %v4757
      %v4774 = vadd.f32 %v4758, 1.0
      %v4775 = vadd.f32 %v4759, 1.0
      %v4776 = vadd.f32 %v4760, 1.0
      %v4777 = vadd.f32 %v4761, 1.0
      %v4778 = vadd.f32 %v4762, 1.0
      %v4779 = vadd.f32 %v4763, 1.0
      %v4780 = vadd.f32 %v4764, 1.0
      %v4781 = vadd.f32 %v4765, 1.0
      %v4782 = vadd.f32 %v4766, 1.0
      %v4783 = vadd.f32 %v4767, 1.0
      %v4784 = vadd.f32 %v4768, 1.0
      %v4785 = vadd.f32 %v4769, 1.0
      %v4786 = vadd.f32 %v4770, 1.0
      %v4787 = vadd.f32 %v4771, 1.0
      %v4788 = vadd.f32 %v4772, 1.0
      %v4789 = vadd.f32 %v4773, 1.0
      %v4790 = vmul.f32 %v4774, 0.5
      %v4791 = vmul.f32 %v4775, 0.5
      %v4792 = vmul.f32 %v4776, 0.5
      %v4793 = vmul.f32 %v4777, 0.5
      %v4794 = vmul.f32 %v4778, 0.5
      %v4795 = vmul.f32 %v4779, 0.5
      %v4796 = vmul.f32 %v4780, 0.5
      %v4797 = vmul.f32 %v4781, 0.5
      %v4798 = vmul.f32 %v4782, 0.5
      %v4799 = vmul.f32 %v4783, 0.5
      %v4800 = vmul.f32 %v4784, 0.5
      %v4801 = vmul.f32 %v4785, 0.5
      %v4802 = vmul.f32 %v4786, 0.5
      %v4803 = vmul.f32 %v4787, 0.5
      %v4804 = vmul.f32 %v4788, 0.5
      %v4805 = vmul.f32 %v4789, 0.5
      %v4806 = vmul.f32 %v4640, %v4790
      %v4807 = vmul.f32 %v4642, %v4791
      %v4808 = vmul.f32 %v4644, %v4792
      %v4809 = vmul.f32 %v4646, %v4793
      %v4810 = vmul.f32 %v4650, %v4794
      %v4811 = vmul.f32 %v4652, %v4795
      %v4812 = vmul.f32 %v4654, %v4796
      %v4813 = vmul.f32 %v4656, %v4797
      %v4814 = vmul.f32 %v4660, %v4798
      %v4815 = vmul.f32 %v4662, %v4799
      %v4816 = vmul.f32 %v4664, %v4800
      %v4817 = vmul.f32 %v4666, %v4801
      %v4818 = vmul.f32 %v4670, %v4802
      %v4819 = vmul.f32 %v4672, %v4803
      %v4820 = vmul.f32 %v4674, %v4804
      %v4821 = vmul.f32 %v4676, %v4805
      %v4822 = vld [vmem:[%s16] sm:$0xf]
      %v4823 = vld [vmem:[%s16 + $0x4] sm:$0xf]
      %v4824 = vld [vmem:[%s16 + $0x8] sm:$0xf]
      %v4825 = vld [vmem:[%s16 + $0xc] sm:$0xf]
      %v4826 = vld [vmem:[%s16 + $0x10] sm:$0xf]
      %v4827 = vld [vmem:[%s16 + $0x14] sm:$0xf]
      %v4828 = vld [vmem:[%s16 + $0x18] sm:$0xf]
      %v4829 = vld [vmem:[%s16 + $0x1c] sm:$0xf]
      %v4830 = vld [vmem:[%s16 + $0x20] sm:$0xf]
      %v4831 = vld [vmem:[%s16 + $0x24] sm:$0xf]
      %v4832 = vld [vmem:[%s16 + $0x28] sm:$0xf]
      %v4833 = vld [vmem:[%s16 + $0x2c] sm:$0xf]
      %v4834 = vld [vmem:[%s16 + $0x30] sm:$0xf]
      %v4835 = vld [vmem:[%s16 + $0x34] sm:$0xf]
      %v4836 = vld [vmem:[%s16 + $0x38] sm:$0xf]
      %v4837 = vld [vmem:[%s16 + $0x3c] sm:$0xf]
      %v4838 = vld [vmem:[%s16 + $0x40] sm:$0xf]
      %v4839 = vld [vmem:[%s16 + $0x44] sm:$0xf]
      %v4840 = vld [vmem:[%s16 + $0x48] sm:$0xf]
      %v4841 = vld [vmem:[%s16 + $0x4c] sm:$0xf]
      %v4842 = vld [vmem:[%s16 + $0x50] sm:$0xf]
      %v4843 = vld [vmem:[%s16 + $0x54] sm:$0xf]
      %v4844 = vld [vmem:[%s16 + $0x58] sm:$0xf]
      %v4845 = vld [vmem:[%s16 + $0x5c] sm:$0xf]
      %v4846 = vld [vmem:[%s16 + $0x60] sm:$0xf]
      %v4847 = vld [vmem:[%s16 + $0x64] sm:$0xf]
      %v4848 = vld [vmem:[%s16 + $0x68] sm:$0xf]
      %v4849 = vld [vmem:[%s16 + $0x6c] sm:$0xf]
      %v4850 = vld [vmem:[%s16 + $0x70] sm:$0xf]
      %v4851 = vld [vmem:[%s16 + $0x74] sm:$0xf]
      %v4852 = vld [vmem:[%s16 + $0x78] sm:$0xf]
      %v4853 = vld [vmem:[%s16 + $0x7c] sm:$0xf]
      %v4854 = vld [vmem:[%s17] sm:$0x1]
      %v4855 = vpack.c.bf16 %v4808, %v4806
      %v4856 = vpack.c.bf16 %v4809, %v4807
      %v4857 = vpack.c.bf16 %v4812, %v4810
      %v4858 = vpack.c.bf16 %v4813, %v4811
      %v4859 = vpack.c.bf16 %v4816, %v4814
      %v4860 = vpack.c.bf16 %v4817, %v4815
      %v4861 = vpack.c.bf16 %v4820, %v4818
      %v4862 = vpack.c.bf16 %v4821, %v4819
      %v4864 = vlaneseq
      %v4865 = vshrl.u32 %v4864, 7
      %v4866 = vsub.s32 0, %v4865
      %v4867 = vrot.slane %v4854, %v4866
      %v4901 = vunpack.c.l.b16 %v4822
      %v4902 = vunpack.c.l.b16 %v4823
      %v4903 = vunpack.c.l.b16 %v4824
      %v4904 = vunpack.c.l.b16 %v4825
      %v4905 = vunpack.c.l.b16 %v4826
      %v4906 = vunpack.c.l.b16 %v4827
      %v4907 = vunpack.c.l.b16 %v4828
      %v4908 = vunpack.c.l.b16 %v4829
      %v4909 = vunpack.c.l.b16 %v4830
      %v4910 = vunpack.c.l.b16 %v4831
      %v4911 = vunpack.c.l.b16 %v4832
      %v4912 = vunpack.c.l.b16 %v4833
      %v4913 = vunpack.c.l.b16 %v4834
      %v4914 = vunpack.c.l.b16 %v4835
      %v4915 = vunpack.c.l.b16 %v4836
      %v4916 = vunpack.c.l.b16 %v4837
      %v4917 = vunpack.c.l.b16 %v4838
      %v4918 = vunpack.c.l.b16 %v4839
      %v4919 = vunpack.c.l.b16 %v4840
      %v4920 = vunpack.c.l.b16 %v4841
      %v4921 = vunpack.c.l.b16 %v4842
      %v4922 = vunpack.c.l.b16 %v4843
      %v4923 = vunpack.c.l.b16 %v4844
      %v4924 = vunpack.c.l.b16 %v4845
      %v4925 = vunpack.c.l.b16 %v4846
      %v4926 = vunpack.c.l.b16 %v4847
      %v4927 = vunpack.c.l.b16 %v4848
      %v4928 = vunpack.c.l.b16 %v4849
      %v4929 = vunpack.c.l.b16 %v4850
      %v4930 = vunpack.c.l.b16 %v4851
      %v4931 = vunpack.c.l.b16 %v4852
      %v4932 = vunpack.c.l.b16 %v4853
      %v4933 = vpack.c.b16 %v4902, %v4901
      %v4934 = vpack.c.b16 %v4904, %v4903
      %v4935 = vpack.c.b16 %v4906, %v4905
      %v4936 = vpack.c.b16 %v4908, %v4907
      %v4937 = vpack.c.b16 %v4910, %v4909
      %v4938 = vpack.c.b16 %v4912, %v4911
      %v4939 = vpack.c.b16 %v4914, %v4913
      %v4940 = vpack.c.b16 %v4916, %v4915
      %v4941 = vpack.c.b16 %v4918, %v4917
      %v4942 = vpack.c.b16 %v4920, %v4919
      %v4943 = vpack.c.b16 %v4922, %v4921
      %v4944 = vpack.c.b16 %v4924, %v4923
      %v4945 = vpack.c.b16 %v4926, %v4925
      %v4946 = vpack.c.b16 %v4928, %v4927
      %v4947 = vpack.c.b16 %v4930, %v4929
      %v4948 = vpack.c.b16 %v4932, %v4931
      %4965 = vmatprep.subr.bf16.mxu0 0
      %4966 = vmatpush1.bf16.msra.mxu0 %v4933
      %4967 = vmatprep.subr.bf16.mxu0 0
      %4968 = vmatpush1.bf16.msra.mxu0 %v4934
      %4969 = vmatprep.subr.bf16.mxu0 0
      %4970 = vmatpush1.bf16.msra.mxu0 %v4935
      %4971 = vmatprep.subr.bf16.mxu0 0
      %4972 = vmatpush1.bf16.msra.mxu0 %v4936
      %4973 = vmatprep.subr.bf16.mxu0 0
      %4974 = vmatpush1.bf16.msra.mxu0 %v4937
      %4975 = vmatprep.subr.bf16.mxu0 0
      %4976 = vmatpush1.bf16.msra.mxu0 %v4938
      %4977 = vmatprep.subr.bf16.mxu0 0
      %4978 = vmatpush1.bf16.msra.mxu0 %v4939
      %4979 = vmatprep.subr.bf16.mxu0 0
      %4980 = vmatpush1.bf16.msra.mxu0 %v4940
      %4981 = vmatprep.subr.bf16.mxu0 0
      %4982 = vmatpush1.bf16.msra.mxu0 %v4941
      %4983 = vmatprep.subr.bf16.mxu0 0
      %4984 = vmatpush1.bf16.msra.mxu0 %v4942
      %4985 = vmatprep.subr.bf16.mxu0 0
      %4986 = vmatpush1.bf16.msra.mxu0 %v4943
      %4987 = vmatprep.subr.bf16.mxu0 0
      %4988 = vmatpush1.bf16.msra.mxu0 %v4944
      %4989 = vmatprep.subr.bf16.mxu0 0
      %4990 = vmatpush1.bf16.msra.mxu0 %v4945
      %4991 = vmatprep.subr.bf16.mxu0 0
      %4992 = vmatpush1.bf16.msra.mxu0 %v4946
      %4993 = vmatprep.subr.bf16.mxu0 0
      %4994 = vmatpush1.bf16.msra.mxu0 %v4947
      %4995 = vmatprep.subr.bf16.mxu0 0
      %4996 = vmatpush1.bf16.msra.mxu0 %v4948
      %4997 = vmatprep.mubr.bf16.mxu0 %v4856
      %4998 = vmatmul.mubr.bf16.gmra.mrb[0].mxu0 %v4855
      %v4999 = vpop.f32.mrb[0].mxu0
      %v5000 = vadd.f32 %v4867, %v4999
      %v5001 = vpop.f32.mrb[0].mxu0
      %v5002 = vpop.f32.mrb[0].mxu0
      %v5003 = vadd.f32 %v4867, %v5002
      %v5004 = vpop.f32.mrb[0].mxu0
      %5005 = vmatprep.mubr.bf16.mxu0 %v4858
      %5006 = vmatmul.mubr.bf16.gmra.mrb[0].mxu0 %v4857
      %v5007 = vpop.f32.mrb[0].mxu0
      %v5008 = vadd.f32 %v4867, %v5007
      %v5009 = vpop.f32.mrb[0].mxu0
      %v5010 = vpop.f32.mrb[0].mxu0
      %v5011 = vadd.f32 %v4867, %v5010
      %v5012 = vpop.f32.mrb[0].mxu0
      %5013 = vmatprep.mubr.bf16.mxu0 %v4860
      %5014 = vmatmul.mubr.bf16.gmra.mrb[0].mxu0 %v4859
      %v5015 = vpop.f32.mrb[0].mxu0
      %v5016 = vadd.f32 %v4867, %v5015
      %v5017 = vpop.f32.mrb[0].mxu0
      %v5018 = vpop.f32.mrb[0].mxu0
      %v5019 = vadd.f32 %v4867, %v5018
      %v5020 = vpop.f32.mrb[0].mxu0
      %5021 = vmatprep.mubr.bf16.mxu0 %v4862
      %5022 = vmatmul.mubr.bf16.gmra.mrb[0].mxu0 %v4861
      %v5023 = vpop.f32.mrb[0].mxu0
      %v5024 = vadd.f32 %v4867, %v5023
      %v5025 = vpop.f32.mrb[0].mxu0
      %v5026 = vpop.f32.mrb[0].mxu0
      %v5027 = vadd.f32 %v4867, %v5026
      %v5028 = vpop.f32.mrb[0].mxu0
      %5029 = vdwg.mxu0
      %v5030 = vlaneseq
      %v5031 = vshrl.u32 %v5030, 7
      %v5032 = vsub.s32 0, %v5031
      %v5033 = vrot.slane %v1388, %v5032
      %v5034 = vmul.f32 %v5033, %v5000
      %v5035 = vmul.f32 %v5033, %v5003
      %v5036 = vmul.f32 %v5033, %v5008
      %v5037 = vmul.f32 %v5033, %v5011
      %v5038 = vmul.f32 %v5033, %v5016
      %v5039 = vmul.f32 %v5033, %v5019
      %v5040 = vmul.f32 %v5033, %v5024
      %v5041 = vmul.f32 %v5033, %v5027
      %v5042 = vadd.f32 %v4392, %v5034
      %v5043 = vadd.f32 %v4393, %v5035
      %v5044 = vadd.f32 %v4394, %v5036
      %v5045 = vadd.f32 %v4395, %v5037
      %v5046 = vadd.f32 %v4396, %v5038
      %v5047 = vadd.f32 %v4397, %v5039
      %v5048 = vadd.f32 %v4398, %v5040
      %v5049 = vadd.f32 %v4399, %v5041
      %v5050 = vlaneseq
      %v5051 = vshrl.u32 %v5050, 7
      %v5052 = vsub.s32 0, %v5051
      %v5053 = vrot.slane %v1468, %v5052
      %v5054 = vmul.f32 %v5053, %v4375
      %v5055 = vadd.f32 %v885, %v5054
      %v5056 = vsel %vm1265, %v5055, 0.0
      %5057 = vadd.xlane.f32.xlu0 %v5056
      %v5058 = vpop.xlane.xlu0 %5057
      %v5059 = vmul.f32 %v5058, %v1539
      %v5060 = vsub.f32 %v5055, %v5059
      %v5061 = vmul.f32 %v5060, %v5060
      %v5062 = vsel %vm1265, %v5061, 0.0
      %5063 = vadd.xlane.f32.xlu0 %v5062
      %v5064 = vpop.xlane.xlu0 %5063
      %v5065 = vmul.f32 %v5064, %v1539
      %v5066 = vadd.f32 %v5065, 1e-06
      %v5067 = vrsqrt.pop %v5066
      %v5068 = vmul.f32 %v5060, %v5067
      %v5069 = vadd.f32 %v1509, 1.0
      %v5070 = vlaneseq
      %v5071 = vshrl.u32 %v5070, 7
      %v5072 = vsub.s32 0, %v5071
      %v5073 = vrot.slane %v5069, %v5072
      %v5074 = vmul.f32 %v5068, %v5073
      %v5075 = vlaneseq
      %v5076 = vshrl.u32 %v5075, 7
      %v5077 = vsub.s32 0, %v5076
      %v5078 = vrot.slane %v1470, %v5077
      %v5079 = vadd.f32 %v5074, %v5078
      %s5080 = scalar_lea.vmem %s14, 64
      %v5081 = vld [vmem:[%s5080] sm:$0xff]
      %v5082 = vld [vmem:[%s5080 + $0x8] sm:$0xff]
      %v5083 = vld [vmem:[%s5080 + $0x10] sm:$0xff]
      %v5084 = vld [vmem:[%s5080 + $0x18] sm:$0xff]
      %v5085 = vld [vmem:[%s5080 + $0x20] sm:$0xff]
      %v5086 = vld [vmem:[%s5080 + $0x28] sm:$0xff]
      %v5087 = vld [vmem:[%s5080 + $0x30] sm:$0xff]
      %v5088 = vld [vmem:[%s5080 + $0x38] sm:$0xff]
      %s5089 = scalar_lea.vmem %s15, 2
      %v5090 = vld [vmem:[%s5089] sm:$0x3]
      %v5091 = vpack.c.bf16 %v5079, %v5079
      %v5093 = vlaneseq
      %v5094 = vshrl.u32 %v5093, 7
      %v5095 = vsub.s32 0, %v5094
      %v5096 = vrot.slane %v5090, %v5095
      %v5097 = vlaneseq
      %v5098 = vshrl.u32 %v5097, 7
      %v5099 = vsub.s32 1, %v5098
      %v5100 = vrot.slane %v5090, %v5099
      %v5111 = vunpack.c.l.b16 %v5081
      %v5112 = vunpack.c.h.b16 %v5081
      %v5113 = vunpack.c.l.b16 %v5082
      %v5114 = vunpack.c.h.b16 %v5082
      %v5115 = vunpack.c.l.b16 %v5083
      %v5116 = vunpack.c.h.b16 %v5083
      %v5117 = vunpack.c.l.b16 %v5084
      %v5118 = vunpack.c.h.b16 %v5084
      %v5119 = vunpack.c.l.b16 %v5085
      %v5120 = vunpack.c.h.b16 %v5085
      %v5121 = vunpack.c.l.b16 %v5086
      %v5122 = vunpack.c.h.b16 %v5086
      %v5123 = vunpack.c.l.b16 %v5087
      %v5124 = vunpack.c.h.b16 %v5087
      %v5125 = vunpack.c.l.b16 %v5088
      %v5126 = vunpack.c.h.b16 %v5088
      %v5127 = vpack.c.b16 %v5113, %v5111
      %v5128 = vpack.c.b16 %v5114, %v5112
      %v5129 = vpack.c.b16 %v5117, %v5115
      %v5130 = vpack.c.b16 %v5118, %v5116
      %v5131 = vpack.c.b16 %v5121, %v5119
      %v5132 = vpack.c.b16 %v5122, %v5120
      %v5133 = vpack.c.b16 %v5125, %v5123
      %v5134 = vpack.c.b16 %v5126, %v5124
      %v5144 = vsel %vm1265, %v5091, 0
      %5146 = vmatprep.subr.bf16.mxu0 %v5128
      %5147 = vmatpush1.bf16.msra.mxu0 %v5127
      %5148 = vmatprep.subr.bf16.mxu0 %v5130
      %5149 = vmatpush1.bf16.msra.mxu0 %v5129
      %5150 = vmatprep.subr.bf16.mxu0 %v5132
      %5151 = vmatpush1.bf16.msra.mxu0 %v5131
      %5152 = vmatprep.subr.bf16.mxu0 %v5134
      %5153 = vmatpush1.bf16.msra.mxu0 %v5133
      %5154 = vmatprep.subr.bf16.mxu0 0
      %5155 = vmatpush1.bf16.msra.mxu0 0
      %5156 = vmatprep.subr.bf16.mxu0 0
      %5157 = vmatpush1.bf16.msra.mxu0 0
      %5158 = vmatprep.subr.bf16.mxu0 0
      %5159 = vmatpush1.bf16.msra.mxu0 0
      %5160 = vmatprep.subr.bf16.mxu0 0
      %5161 = vmatpush1.bf16.msra.mxu0 0
      %5162 = vmatprep.subr.bf16.mxu0 0
      %5163 = vmatpush1.bf16.msra.mxu0 0
      %5164 = vmatprep.subr.bf16.mxu0 0
      %5165 = vmatpush1.bf16.msra.mxu0 0
      %5166 = vmatprep.subr.bf16.mxu0 0
      %5167 = vmatpush1.bf16.msra.mxu0 0
      %5168 = vmatprep.subr.bf16.mxu0 0
      %5169 = vmatpush1.bf16.msra.mxu0 0
      %5170 = vmatprep.subr.bf16.mxu0 0
      %5171 = vmatpush1.bf16.msra.mxu0 0
      %5172 = vmatprep.subr.bf16.mxu0 0
      %5173 = vmatpush1.bf16.msra.mxu0 0
      %5174 = vmatprep.subr.bf16.mxu0 0
      %5175 = vmatpush1.bf16.msra.mxu0 0
      %5176 = vmatprep.subr.bf16.mxu0 0
      %5177 = vmatpush1.bf16.msra.mxu0 0
      %5178 = vmatprep.mubr.bf16.mxu0 0
      %5179 = vmatmul.mubr.bf16.gmra.mrb[0].mxu0 %v5144
      %v5180 = vpop.f32.mrb[0].mxu0
      %v5181 = vadd.f32 %v5096, %v5180
      %v5182 = vpop.f32.mrb[0].mxu0
      %v5183 = vadd.f32 %v5100, %v5182
      %v5184 = vpop.f32.mrb[0].mxu0
      %v5185 = vpop.f32.mrb[0].mxu0
      %5186 = vdwg.mxu0
      %v5187 = vmul.f32 %v5181, %v5181
      %v5188 = vmul.f32 %v5183, %v5183
      %v5189 = vmul.f32 %v5181, %v5187
      %v5190 = vmul.f32 %v5183, %v5188
      %v5191 = vmul.f32 %v5189, 0.044715
      %v5192 = vmul.f32 %v5190, 0.044715
      %v5193 = vadd.f32 %v5181, %v5191
      %v5194 = vadd.f32 %v5183, %v5192
      %v5195 = vmul.f32 %v5193, 0.7978846
      %v5196 = vmul.f32 %v5194, 0.7978846
      %v5197 = vtanh.pop %v5195
      %v5198 = vtanh.pop %v5196
      %v5199 = vadd.f32 %v5197, 1.0
      %v5200 = vadd.f32 %v5198, 1.0
      %v5201 = vmul.f32 %v5199, 0.5
      %v5202 = vmul.f32 %v5200, 0.5
      %v5203 = vmul.f32 %v5181, %v5201
      %v5204 = vmul.f32 %v5183, %v5202
      %s5205 = scalar_lea.vmem %s16, 128
      %v5206 = vld [vmem:[%s5205] sm:$0xf]
      %v5207 = vld [vmem:[%s5205 + $0x4] sm:$0xf]
      %v5208 = vld [vmem:[%s5205 + $0x8] sm:$0xf]
      %v5209 = vld [vmem:[%s5205 + $0xc] sm:$0xf]
      %v5210 = vld [vmem:[%s5205 + $0x10] sm:$0xf]
      %v5211 = vld [vmem:[%s5205 + $0x14] sm:$0xf]
      %v5212 = vld [vmem:[%s5205 + $0x18] sm:$0xf]
      %v5213 = vld [vmem:[%s5205 + $0x1c] sm:$0xf]
      %v5214 = vld [vmem:[%s5205 + $0x20] sm:$0xf]
      %v5215 = vld [vmem:[%s5205 + $0x24] sm:$0xf]
      %v5216 = vld [vmem:[%s5205 + $0x28] sm:$0xf]
      %v5217 = vld [vmem:[%s5205 + $0x2c] sm:$0xf]
      %v5218 = vld [vmem:[%s5205 + $0x30] sm:$0xf]
      %v5219 = vld [vmem:[%s5205 + $0x34] sm:$0xf]
      %v5220 = vld [vmem:[%s5205 + $0x38] sm:$0xf]
      %v5221 = vld [vmem:[%s5205 + $0x3c] sm:$0xf]
      %v5222 = vld [vmem:[%s5205 + $0x40] sm:$0xf]
      %v5223 = vld [vmem:[%s5205 + $0x44] sm:$0xf]
      %v5224 = vld [vmem:[%s5205 + $0x48] sm:$0xf]
      %v5225 = vld [vmem:[%s5205 + $0x4c] sm:$0xf]
      %v5226 = vld [vmem:[%s5205 + $0x50] sm:$0xf]
      %v5227 = vld [vmem:[%s5205 + $0x54] sm:$0xf]
      %v5228 = vld [vmem:[%s5205 + $0x58] sm:$0xf]
      %v5229 = vld [vmem:[%s5205 + $0x5c] sm:$0xf]
      %v5230 = vld [vmem:[%s5205 + $0x60] sm:$0xf]
      %v5231 = vld [vmem:[%s5205 + $0x64] sm:$0xf]
      %v5232 = vld [vmem:[%s5205 + $0x68] sm:$0xf]
      %v5233 = vld [vmem:[%s5205 + $0x6c] sm:$0xf]
      %v5234 = vld [vmem:[%s5205 + $0x70] sm:$0xf]
      %v5235 = vld [vmem:[%s5205 + $0x74] sm:$0xf]
      %v5236 = vld [vmem:[%s5205 + $0x78] sm:$0xf]
      %v5237 = vld [vmem:[%s5205 + $0x7c] sm:$0xf]
      %s5238 = scalar_lea.vmem %s17, 1
      %v5239 = vld [vmem:[%s5238] sm:$0x1]
      %v5240 = vpack.c.bf16 %v5203, %v5203
      %v5241 = vpack.c.bf16 %v5204, %v5204
      %v5243 = vlaneseq
      %v5244 = vshrl.u32 %v5243, 7
      %v5245 = vsub.s32 0, %v5244
      %v5246 = vrot.slane %v5239, %v5245
      %v5280 = vunpack.c.l.b16 %v5206
      %v5281 = vunpack.c.l.b16 %v5207
      %v5282 = vunpack.c.l.b16 %v5208
      %v5283 = vunpack.c.l.b16 %v5209
      %v5284 = vunpack.c.l.b16 %v5210
      %v5285 = vunpack.c.l.b16 %v5211
      %v5286 = vunpack.c.l.b16 %v5212
      %v5287 = vunpack.c.l.b16 %v5213
      %v5288 = vunpack.c.l.b16 %v5214
      %v5289 = vunpack.c.l.b16 %v5215
      %v5290 = vunpack.c.l.b16 %v5216
      %v5291 = vunpack.c.l.b16 %v5217
      %v5292 = vunpack.c.l.b16 %v5218
      %v5293 = vunpack.c.l.b16 %v5219
      %v5294 = vunpack.c.l.b16 %v5220
      %v5295 = vunpack.c.l.b16 %v5221
      %v5296 = vunpack.c.l.b16 %v5222
      %v5297 = vunpack.c.l.b16 %v5223
      %v5298 = vunpack.c.l.b16 %v5224
      %v5299 = vunpack.c.l.b16 %v5225
      %v5300 = vunpack.c.l.b16 %v5226
      %v5301 = vunpack.c.l.b16 %v5227
      %v5302 = vunpack.c.l.b16 %v5228
      %v5303 = vunpack.c.l.b16 %v5229
      %v5304 = vunpack.c.l.b16 %v5230
      %v5305 = vunpack.c.l.b16 %v5231
      %v5306 = vunpack.c.l.b16 %v5232
      %v5307 = vunpack.c.l.b16 %v5233
      %v5308 = vunpack.c.l.b16 %v5234
      %v5309 = vunpack.c.l.b16 %v5235
      %v5310 = vunpack.c.l.b16 %v5236
      %v5311 = vunpack.c.l.b16 %v5237
      %v5312 = vpack.c.b16 %v5281, %v5280
      %v5313 = vpack.c.b16 %v5283, %v5282
      %v5314 = vpack.c.b16 %v5285, %v5284
      %v5315 = vpack.c.b16 %v5287, %v5286
      %v5316 = vpack.c.b16 %v5289, %v5288
      %v5317 = vpack.c.b16 %v5291, %v5290
      %v5318 = vpack.c.b16 %v5293, %v5292
      %v5319 = vpack.c.b16 %v5295, %v5294
      %v5320 = vpack.c.b16 %v5297, %v5296
      %v5321 = vpack.c.b16 %v5299, %v5298
      %v5322 = vpack.c.b16 %v5301, %v5300
      %v5323 = vpack.c.b16 %v5303, %v5302
      %v5324 = vpack.c.b16 %v5305, %v5304
      %v5325 = vpack.c.b16 %v5307, %v5306
      %v5326 = vpack.c.b16 %v5309, %v5308
      %v5327 = vpack.c.b16 %v5311, %v5310
      %5344 = vmatprep.subr.bf16.mxu0 0
      %5345 = vmatpush1.bf16.msra.mxu0 %v5312
      %5346 = vmatprep.subr.bf16.mxu0 0
      %5347 = vmatpush1.bf16.msra.mxu0 %v5313
      %5348 = vmatprep.subr.bf16.mxu0 0
      %5349 = vmatpush1.bf16.msra.mxu0 %v5314
      %5350 = vmatprep.subr.bf16.mxu0 0
      %5351 = vmatpush1.bf16.msra.mxu0 %v5315
      %5352 = vmatprep.subr.bf16.mxu0 0
      %5353 = vmatpush1.bf16.msra.mxu0 %v5316
      %5354 = vmatprep.subr.bf16.mxu0 0
      %5355 = vmatpush1.bf16.msra.mxu0 %v5317
      %5356 = vmatprep.subr.bf16.mxu0 0
      %5357 = vmatpush1.bf16.msra.mxu0 %v5318
      %5358 = vmatprep.subr.bf16.mxu0 0
      %5359 = vmatpush1.bf16.msra.mxu0 %v5319
      %5360 = vmatprep.subr.bf16.mxu0 0
      %5361 = vmatpush1.bf16.msra.mxu0 %v5320
      %5362 = vmatprep.subr.bf16.mxu0 0
      %5363 = vmatpush1.bf16.msra.mxu0 %v5321
      %5364 = vmatprep.subr.bf16.mxu0 0
      %5365 = vmatpush1.bf16.msra.mxu0 %v5322
      %5366 = vmatprep.subr.bf16.mxu0 0
      %5367 = vmatpush1.bf16.msra.mxu0 %v5323
      %5368 = vmatprep.subr.bf16.mxu0 0
      %5369 = vmatpush1.bf16.msra.mxu0 %v5324
      %5370 = vmatprep.subr.bf16.mxu0 0
      %5371 = vmatpush1.bf16.msra.mxu0 %v5325
      %5372 = vmatprep.subr.bf16.mxu0 0
      %5373 = vmatpush1.bf16.msra.mxu0 %v5326
      %5374 = vmatprep.subr.bf16.mxu0 0
      %5375 = vmatpush1.bf16.msra.mxu0 %v5327
      %5376 = vmatprep.mubr.bf16.mxu0 %v5241
      %5377 = vmatmul.mubr.bf16.gmra.mrb[0].mxu0 %v5240
      %v5378 = vpop.f32.mrb[0].mxu0
      %v5379 = vadd.f32 %v5246, %v5378
      %v5380 = vpop.f32.mrb[0].mxu0
      %v5381 = vpop.f32.mrb[0].mxu0
      %v5382 = vpop.f32.mrb[0].mxu0
      %5383 = vdwg.mxu0
      %v5384 = vlaneseq
      %v5385 = vshrl.u32 %v5384, 7
      %v5386 = vsub.s32 0, %v5385
      %v5387 = vrot.slane %v1511, %v5386
      %v5388 = vmul.f32 %v5387, %v5379
      %v5389 = vadd.f32 %v5055, %v5388
      %s5390 = scalar_lea.vmem %s7, 384
      %v5391 = vld [vmem:[%s5390] sm:$0xff]
      %v5392 = vld [vmem:[%s5390 + $0x8] sm:$0xff]
      %v5393 = vld [vmem:[%s5390 + $0x10] sm:$0xff]
      %v5394 = vld [vmem:[%s5390 + $0x18] sm:$0xff]
      %v5395 = vld [vmem:[%s5390 + $0x30] sm:$0xff]
      %v5396 = vld [vmem:[%s5390 + $0x38] sm:$0xff]
      %v5397 = vld [vmem:[%s5390 + $0x40] sm:$0xff]
      %v5398 = vld [vmem:[%s5390 + $0x48] sm:$0xff]
      %v5399 = vld [vmem:[%s5390 + $0x60] sm:$0xff]
      %v5400 = vld [vmem:[%s5390 + $0x68] sm:$0xff]
      %v5401 = vld [vmem:[%s5390 + $0x70] sm:$0xff]
      %v5402 = vld [vmem:[%s5390 + $0x78] sm:$0xff]
      %v5403 = vld [vmem:[%s5390 + $0x90] sm:$0xff]
      %v5404 = vld [vmem:[%s5390 + $0x98] sm:$0xff]
      %v5405 = vld [vmem:[%s5390 + $0xa0] sm:$0xff]
      %v5406 = vld [vmem:[%s5390 + $0xa8] sm:$0xff]
      %v5407 = vld [vmem:[%s5390 + $0xc0] sm:$0xff]
      %v5408 = vld [vmem:[%s5390 + $0xc8] sm:$0xff]
      %v5409 = vld [vmem:[%s5390 + $0xd0] sm:$0xff]
      %v5410 = vld [vmem:[%s5390 + $0xd8] sm:$0xff]
      %v5411 = vld [vmem:[%s5390 + $0xf0] sm:$0xff]
      %v5412 = vld [vmem:[%s5390 + $0xf8] sm:$0xff]
      %v5413 = vld [vmem:[%s5390 + $0x100] sm:$0xff]
      %v5414 = vld [vmem:[%s5390 + $0x108] sm:$0xff]
      %v5415 = vld [vmem:[%s5390 + $0x120] sm:$0xff]
      %v5416 = vld [vmem:[%s5390 + $0x128] sm:$0xff]
      %v5417 = vld [vmem:[%s5390 + $0x130] sm:$0xff]
      %v5418 = vld [vmem:[%s5390 + $0x138] sm:$0xff]
      %v5419 = vld [vmem:[%s5390 + $0x150] sm:$0xff]
      %v5420 = vld [vmem:[%s5390 + $0x158] sm:$0xff]
      %v5421 = vld [vmem:[%s5390 + $0x160] sm:$0xff]
      %v5422 = vld [vmem:[%s5390 + $0x168] sm:$0xff]
      %s5423 = scalar_lea.vmem %s8, 12
      %v5424 = vld [vmem:[%s5423] sm:$0xff]
      %v5457 = vunpack.c.l.b16 %v5391
      %v5458 = vunpack.c.h.b16 %v5391
      %v5459 = vunpack.c.l.b16 %v5392
      %v5460 = vunpack.c.h.b16 %v5392
      %v5461 = vunpack.c.l.b16 %v5393
      %v5462 = vunpack.c.h.b16 %v5393
      %v5463 = vunpack.c.l.b16 %v5394
      %v5464 = vunpack.c.h.b16 %v5394
      %v5465 = vunpack.c.l.b16 %v5395
      %v5466 = vunpack.c.h.b16 %v5395
      %v5467 = vunpack.c.l.b16 %v5396
      %v5468 = vunpack.c.h.b16 %v5396
      %v5469 = vunpack.c.l.b16 %v5397
      %v5470 = vunpack.c.h.b16 %v5397
      %v5471 = vunpack.c.l.b16 %v5398
      %v5472 = vunpack.c.h.b16 %v5398
      %v5473 = vunpack.c.l.b16 %v5399
      %v5474 = vunpack.c.h.b16 %v5399
      %v5475 = vunpack.c.l.b16 %v5400
      %v5476 = vunpack.c.h.b16 %v5400
      %v5477 = vunpack.c.l.b16 %v5401
      %v5478 = vunpack.c.h.b16 %v5401
      %v5479 = vunpack.c.l.b16 %v5402
      %v5480 = vunpack.c.h.b16 %v5402
      %v5481 = vunpack.c.l.b16 %v5403
      %v5482 = vunpack.c.h.b16 %v5403
      %v5483 = vunpack.c.l.b16 %v5404
      %v5484 = vunpack.c.h.b16 %v5404
      %v5485 = vunpack.c.l.b16 %v5405
      %v5486 = vunpack.c.h.b16 %v5405
      %v5487 = vunpack.c.l.b16 %v5406
      %v5488 = vunpack.c.h.b16 %v5406
      %v5489 = vunpack.c.l.b16 %v5407
      %v5490 = vunpack.c.h.b16 %v5407
      %v5491 = vunpack.c.l.b16 %v5408
      %v5492 = vunpack.c.h.b16 %v5408
      %v5493 = vunpack.c.l.b16 %v5409
      %v5494 = vunpack.c.h.b16 %v5409
      %v5495 = vunpack.c.l.b16 %v5410
      %v5496 = vunpack.c.h.b16 %v5410
      %v5497 = vunpack.c.l.b16 %v5411
      %v5498 = vunpack.c.h.b16 %v5411
      %v5499 = vunpack.c.l.b16 %v5412
      %v5500 = vunpack.c.h.b16 %v5412
      %v5501 = vunpack.c.l.b16 %v5413
      %v5502 = vunpack.c.h.b16 %v5413
      %v5503 = vunpack.c.l.b16 %v5414
      %v5504 = vunpack.c.h.b16 %v5414
      %v5505 = vunpack.c.l.b16 %v5415
      %v5506 = vunpack.c.h.b16 %v5415
      %v5507 = vunpack.c.l.b16 %v5416
      %v5508 = vunpack.c.h.b16 %v5416
      %v5509 = vunpack.c.l.b16 %v5417
      %v5510 = vunpack.c.h.b16 %v5417
      %v5511 = vunpack.c.l.b16 %v5418
      %v5512 = vunpack.c.h.b16 %v5418
      %v5513 = vunpack.c.l.b16 %v5419
      %v5514 = vunpack.c.h.b16 %v5419
      %v5515 = vunpack.c.l.b16 %v5420
      %v5516 = vunpack.c.h.b16 %v5420
      %v5517 = vunpack.c.l.b16 %v5421
      %v5518 = vunpack.c.h.b16 %v5421
      %v5519 = vunpack.c.l.b16 %v5422
      %v5520 = vunpack.c.h.b16 %v5422
      %v5521 = vpack.c.b16 %v5465, %v5457
      %v5522 = vpack.c.b16 %v5466, %v5458
      %v5523 = vpack.c.b16 %v5467, %v5459
      %v5524 = vpack.c.b16 %v5468, %v5460
      %v5525 = vpack.c.b16 %v5469, %v5461
      %v5526 = vpack.c.b16 %v5470, %v5462
      %v5527 = vpack.c.b16 %v5471, %v5463
      %v5528 = vpack.c.b16 %v5472, %v5464
      %v5529 = vpack.c.b16 %v5481, %v5473
      %v5530 = vpack.c.b16 %v5482, %v5474
      %v5531 = vpack.c.b16 %v5483, %v5475
      %v5532 = vpack.c.b16 %v5484, %v5476
      %v5533 = vpack.c.b16 %v5485, %v5477
      %v5534 = vpack.c.b16 %v5486, %v5478
      %v5535 = vpack.c.b16 %v5487, %v5479
      %v5536 = vpack.c.b16 %v5488, %v5480
      %v5537 = vpack.c.b16 %v5497, %v5489
      %v5538 = vpack.c.b16 %v5498, %v5490
      %v5539 = vpack.c.b16 %v5499, %v5491
      %v5540 = vpack.c.b16 %v5500, %v5492
      %v5541 = vpack.c.b16 %v5501, %v5493
      %v5542 = vpack.c.b16 %v5502, %v5494
      %v5543 = vpack.c.b16 %v5503, %v5495
      %v5544 = vpack.c.b16 %v5504, %v5496
      %v5545 = vpack.c.b16 %v5513, %v5505
      %v5546 = vpack.c.b16 %v5514, %v5506
      %v5547 = vpack.c.b16 %v5515, %v5507
      %v5548 = vpack.c.b16 %v5516, %v5508
      %v5549 = vpack.c.b16 %v5517, %v5509
      %v5550 = vpack.c.b16 %v5518, %v5510
      %v5551 = vpack.c.b16 %v5519, %v5511
      %v5552 = vpack.c.b16 %v5520, %v5512
      %v5586 = vlaneseq
      %v5587 = vshrl.u32 %v5586, 7
      %v5588 = vsub.s32 0, %v5587
      %v5589 = vrot.slane %v5424, %v5588
      %v5590 = vlaneseq
      %v5591 = vshrl.u32 %v5590, 7
      %v5592 = vsub.s32 1, %v5591
      %v5593 = vrot.slane %v5424, %v5592
      %v5594 = vlaneseq
      %v5595 = vshrl.u32 %v5594, 7
      %v5596 = vsub.s32 2, %v5595
      %v5597 = vrot.slane %v5424, %v5596
      %v5598 = vlaneseq
      %v5599 = vshrl.u32 %v5598, 7
      %v5600 = vsub.s32 3, %v5599
      %v5601 = vrot.slane %v5424, %v5600
      %v5602 = vlaneseq
      %v5603 = vshrl.u32 %v5602, 7
      %v5604 = vsub.s32 4, %v5603
      %v5605 = vrot.slane %v5424, %v5604
      %v5606 = vlaneseq
      %v5607 = vshrl.u32 %v5606, 7
      %v5608 = vsub.s32 5, %v5607
      %v5609 = vrot.slane %v5424, %v5608
      %v5610 = vlaneseq
      %v5611 = vshrl.u32 %v5610, 7
      %v5612 = vsub.s32 6, %v5611
      %v5613 = vrot.slane %v5424, %v5612
      %v5614 = vlaneseq
      %v5615 = vshrl.u32 %v5614, 7
      %v5616 = vsub.s32 7, %v5615
      %v5617 = vrot.slane %v5424, %v5616
      %5626 = vmatprep.subr.bf16.mxu0 %v5522
      %5627 = vmatpush1.bf16.msra.mxu0 %v5521
      %5628 = vmatprep.subr.bf16.mxu0 %v5530
      %5629 = vmatpush1.bf16.msra.mxu0 %v5529
      %5630 = vmatprep.subr.bf16.mxu0 %v5538
      %5631 = vmatpush1.bf16.msra.mxu0 %v5537
      %5632 = vmatprep.subr.bf16.mxu0 %v5546
      %5633 = vmatpush1.bf16.msra.mxu0 %v5545
      %5634 = vmatprep.subr.bf16.mxu0 0
      %5635 = vmatpush1.bf16.msra.mxu0 0
      %5636 = vmatprep.subr.bf16.mxu0 0
      %5637 = vmatpush1.bf16.msra.mxu0 0
      %5638 = vmatprep.subr.bf16.mxu0 0
      %5639 = vmatpush1.bf16.msra.mxu0 0
      %5640 = vmatprep.subr.bf16.mxu0 0
      %5641 = vmatpush1.bf16.msra.mxu0 0
      %5642 = vmatprep.subr.bf16.mxu0 0
      %5643 = vmatpush1.bf16.msra.mxu0 0
      %5644 = vmatprep.subr.bf16.mxu0 0
      %5645 = vmatpush1.bf16.msra.mxu0 0
      %5646 = vmatprep.subr.bf16.mxu0 0
      %5647 = vmatpush1.bf16.msra.mxu0 0
      %5648 = vmatprep.subr.bf16.mxu0 0
      %5649 = vmatpush1.bf16.msra.mxu0 0
      %5650 = vmatprep.subr.bf16.mxu0 0
      %5651 = vmatpush1.bf16.msra.mxu0 0
      %5652 = vmatprep.subr.bf16.mxu0 0
      %5653 = vmatpush1.bf16.msra.mxu0 0
      %5654 = vmatprep.subr.bf16.mxu0 0
      %5655 = vmatpush1.bf16.msra.mxu0 0
      %5656 = vmatprep.subr.bf16.mxu0 0
      %5657 = vmatpush1.bf16.msra.mxu0 0
      %5658 = vmatprep.mubr.bf16.mxu0 0
      %5659 = vmatmul.mubr.bf16.gmra.mrb[0].mxu0 %v1267
      %v5660 = vpop.f32.mrb[0].mxu0
      %v5661 = vadd.f32 %v5589, %v5660
      %v5662 = vpop.f32.mrb[0].mxu0
      %v5663 = vadd.f32 %v5593, %v5662
      %v5664 = vpop.f32.mrb[0].mxu0
      %v5665 = vpop.f32.mrb[0].mxu0
      %5666 = vdwg.mxu0
      %5667 = vmatprep.subr.bf16.mxu0 %v5524
      %5668 = vmatpush1.bf16.msra.mxu0 %v5523
      %5669 = vmatprep.subr.bf16.mxu0 %v5532
      %5670 = vmatpush1.bf16.msra.mxu0 %v5531
      %5671 = vmatprep.subr.bf16.mxu0 %v5540
      %5672 = vmatpush1.bf16.msra.mxu0 %v5539
      %5673 = vmatprep.subr.bf16.mxu0 %v5548
      %5674 = vmatpush1.bf16.msra.mxu0 %v5547
      %5675 = vmatprep.subr.bf16.mxu0 0
      %5676 = vmatpush1.bf16.msra.mxu0 0
      %5677 = vmatprep.subr.bf16.mxu0 0
      %5678 = vmatpush1.bf16.msra.mxu0 0
      %5679 = vmatprep.subr.bf16.mxu0 0
      %5680 = vmatpush1.bf16.msra.mxu0 0
      %5681 = vmatprep.subr.bf16.mxu0 0
      %5682 = vmatpush1.bf16.msra.mxu0 0
      %5683 = vmatprep.subr.bf16.mxu0 0
      %5684 = vmatpush1.bf16.msra.mxu0 0
      %5685 = vmatprep.subr.bf16.mxu0 0
      %5686 = vmatpush1.bf16.msra.mxu0 0
      %5687 = vmatprep.subr.bf16.mxu0 0
      %5688 = vmatpush1.bf16.msra.mxu0 0
      %5689 = vmatprep.subr.bf16.mxu0 0
      %5690 = vmatpush1.bf16.msra.mxu0 0
      %5691 = vmatprep.subr.bf16.mxu0 0
      %5692 = vmatpush1.bf16.msra.mxu0 0
      %5693 = vmatprep.subr.bf16.mxu0 0
      %5694 = vmatpush1.bf16.msra.mxu0 0
      %5695 = vmatprep.subr.bf16.mxu0 0
      %5696 = vmatpush1.bf16.msra.mxu0 0
      %5697 = vmatprep.subr.bf16.mxu0 0
      %5698 = vmatpush1.bf16.msra.mxu0 0
      %5699 = vmatprep.mubr.bf16.mxu0 0
      %5700 = vmatmul.mubr.bf16.gmra.mrb[0].mxu0 %v1267
      %v5701 = vpop.f32.mrb[0].mxu0
      %v5702 = vadd.f32 %v5597, %v5701
      %v5703 = vpop.f32.mrb[0].mxu0
      %v5704 = vadd.f32 %v5601, %v5703
      %v5705 = vpop.f32.mrb[0].mxu0
      %v5706 = vpop.f32.mrb[0].mxu0
      %5707 = vdwg.mxu0
      %5708 = vmatprep.subr.bf16.mxu0 %v5526
      %5709 = vmatpush1.bf16.msra.mxu0 %v5525
      %5710 = vmatprep.subr.bf16.mxu0 %v5534
      %5711 = vmatpush1.bf16.msra.mxu0 %v5533
      %5712 = vmatprep.subr.bf16.mxu0 %v5542
      %5713 = vmatpush1.bf16.msra.mxu0 %v5541
      %5714 = vmatprep.subr.bf16.mxu0 %v5550
      %5715 = vmatpush1.bf16.msra.mxu0 %v5549
      %5716 = vmatprep.subr.bf16.mxu0 0
      %5717 = vmatpush1.bf16.msra.mxu0 0
      %5718 = vmatprep.subr.bf16.mxu0 0
      %5719 = vmatpush1.bf16.msra.mxu0 0
      %5720 = vmatprep.subr.bf16.mxu0 0
      %5721 = vmatpush1.bf16.msra.mxu0 0
      %5722 = vmatprep.subr.bf16.mxu0 0
      %5723 = vmatpush1.bf16.msra.mxu0 0
      %5724 = vmatprep.subr.bf16.mxu0 0
      %5725 = vmatpush1.bf16.msra.mxu0 0
      %5726 = vmatprep.subr.bf16.mxu0 0
      %5727 = vmatpush1.bf16.msra.mxu0 0
      %5728 = vmatprep.subr.bf16.mxu0 0
      %5729 = vmatpush1.bf16.msra.mxu0 0
      %5730 = vmatprep.subr.bf16.mxu0 0
      %5731 = vmatpush1.bf16.msra.mxu0 0
      %5732 = vmatprep.subr.bf16.mxu0 0
      %5733 = vmatpush1.bf16.msra.mxu0 0
      %5734 = vmatprep.subr.bf16.mxu0 0
      %5735 = vmatpush1.bf16.msra.mxu0 0
      %5736 = vmatprep.subr.bf16.mxu0 0
      %5737 = vmatpush1.bf16.msra.mxu0 0
      %5738 = vmatprep.subr.bf16.mxu0 0
      %5739 = vmatpush1.bf16.msra.mxu0 0
      %5740 = vmatprep.mubr.bf16.mxu0 0
      %5741 = vmatmul.mubr.bf16.gmra.mrb[0].mxu0 %v1267
      %v5742 = vpop.f32.mrb[0].mxu0
      %v5743 = vadd.f32 %v5605, %v5742
      %v5744 = vpop.f32.mrb[0].mxu0
      %v5745 = vadd.f32 %v5609, %v5744
      %v5746 = vpop.f32.mrb[0].mxu0
      %v5747 = vpop.f32.mrb[0].mxu0
      %5748 = vdwg.mxu0
      %5749 = vmatprep.subr.bf16.mxu0 %v5528
      %5750 = vmatpush1.bf16.msra.mxu0 %v5527
      %5751 = vmatprep.subr.bf16.mxu0 %v5536
      %5752 = vmatpush1.bf16.msra.mxu0 %v5535
      %5753 = vmatprep.subr.bf16.mxu0 %v5544
      %5754 = vmatpush1.bf16.msra.mxu0 %v5543
      %5755 = vmatprep.subr.bf16.mxu0 %v5552
      %5756 = vmatpush1.bf16.msra.mxu0 %v5551
      %5757 = vmatprep.subr.bf16.mxu0 0
      %5758 = vmatpush1.bf16.msra.mxu0 0
      %5759 = vmatprep.subr.bf16.mxu0 0
      %5760 = vmatpush1.bf16.msra.mxu0 0
      %5761 = vmatprep.subr.bf16.mxu0 0
      %5762 = vmatpush1.bf16.msra.mxu0 0
      %5763 = vmatprep.subr.bf16.mxu0 0
      %5764 = vmatpush1.bf16.msra.mxu0 0
      %5765 = vmatprep.subr.bf16.mxu0 0
      %5766 = vmatpush1.bf16.msra.mxu0 0
      %5767 = vmatprep.subr.bf16.mxu0 0
      %5768 = vmatpush1.bf16.msra.mxu0 0
      %5769 = vmatprep.subr.bf16.mxu0 0
      %5770 = vmatpush1.bf16.msra.mxu0 0
      %5771 = vmatprep.subr.bf16.mxu0 0
      %5772 = vmatpush1.bf16.msra.mxu0 0
      %5773 = vmatprep.subr.bf16.mxu0 0
      %5774 = vmatpush1.bf16.msra.mxu0 0
      %5775 = vmatprep.subr.bf16.mxu0 0
      %5776 = vmatpush1.bf16.msra.mxu0 0
      %5777 = vmatprep.subr.bf16.mxu0 0
      %5778 = vmatpush1.bf16.msra.mxu0 0
      %5779 = vmatprep.subr.bf16.mxu0 0
      %5780 = vmatpush1.bf16.msra.mxu0 0
      %5781 = vmatprep.mubr.bf16.mxu0 0
      %5782 = vmatmul.mubr.bf16.gmra.mrb[0].mxu0 %v1267
      %v5783 = vpop.f32.mrb[0].mxu0
      %v5784 = vadd.f32 %v5613, %v5783
      %v5785 = vpop.f32.mrb[0].mxu0
      %v5786 = vadd.f32 %v5617, %v5785
      %v5787 = vpop.f32.mrb[0].mxu0
      %v5788 = vpop.f32.mrb[0].mxu0
      %5789 = vdwg.mxu0
      %v5790 = vsel %vm1265, %v5042, 0.0
      %5791 = vadd.xlane.f32.xlu0 %v5790
      %v5792 = vpop.xlane.xlu0 %5791
      %v5793 = vsel %vm1265, %v5043, 0.0
      %5794 = vadd.xlane.f32.xlu0 %v5793
      %v5795 = vpop.xlane.xlu0 %5794
      %v5796 = vsel %vm1265, %v5044, 0.0
      %5797 = vadd.xlane.f32.xlu0 %v5796
      %v5798 = vpop.xlane.xlu0 %5797
      %v5799 = vsel %vm1265, %v5045, 0.0
      %5800 = vadd.xlane.f32.xlu0 %v5799
      %v5801 = vpop.xlane.xlu0 %5800
      %v5802 = vsel %vm1265, %v5046, 0.0
      %5803 = vadd.xlane.f32.xlu0 %v5802
      %v5804 = vpop.xlane.xlu0 %5803
      %v5805 = vsel %vm1265, %v5047, 0.0
      %5806 = vadd.xlane.f32.xlu0 %v5805
      %v5807 = vpop.xlane.xlu0 %5806
      %v5808 = vsel %vm1265, %v5048, 0.0
      %5809 = vadd.xlane.f32.xlu0 %v5808
      %v5810 = vpop.xlane.xlu0 %5809
      %v5811 = vsel %vm1265, %v5049, 0.0
      %5812 = vadd.xlane.f32.xlu0 %v5811
      %v5813 = vpop.xlane.xlu0 %5812
      %v5814 = vmul.f32 %v5792, %v1539
      %v5815 = vmul.f32 %v5795, %v1539
      %v5816 = vmul.f32 %v5798, %v1539
      %v5817 = vmul.f32 %v5801, %v1539
      %v5818 = vmul.f32 %v5804, %v1539
      %v5819 = vmul.f32 %v5807, %v1539
      %v5820 = vmul.f32 %v5810, %v1539
      %v5821 = vmul.f32 %v5813, %v1539
      %v5822 = vsub.f32 %v5042, %v5814
      %v5823 = vsub.f32 %v5043, %v5815
      %v5824 = vsub.f32 %v5044, %v5816
      %v5825 = vsub.f32 %v5045, %v5817
      %v5826 = vsub.f32 %v5046, %v5818
      %v5827 = vsub.f32 %v5047, %v5819
      %v5828 = vsub.f32 %v5048, %v5820
      %v5829 = vsub.f32 %v5049, %v5821
      %v5830 = vmul.f32 %v5822, %v5822
      %v5831 = vmul.f32 %v5823, %v5823
      %v5832 = vmul.f32 %v5824, %v5824
      %v5833 = vmul.f32 %v5825, %v5825
      %v5834 = vmul.f32 %v5826, %v5826
      %v5835 = vmul.f32 %v5827, %v5827
      %v5836 = vmul.f32 %v5828, %v5828
      %v5837 = vmul.f32 %v5829, %v5829
      %v5838 = vsel %vm1265, %v5830, 0.0
      %5839 = vadd.xlane.f32.xlu0 %v5838
      %v5840 = vpop.xlane.xlu0 %5839
      %v5841 = vsel %vm1265, %v5831, 0.0
      %5842 = vadd.xlane.f32.xlu0 %v5841
      %v5843 = vpop.xlane.xlu0 %5842
      %v5844 = vsel %vm1265, %v5832, 0.0
      %5845 = vadd.xlane.f32.xlu0 %v5844
      %v5846 = vpop.xlane.xlu0 %5845
      %v5847 = vsel %vm1265, %v5833, 0.0
      %5848 = vadd.xlane.f32.xlu0 %v5847
      %v5849 = vpop.xlane.xlu0 %5848
      %v5850 = vsel %vm1265, %v5834, 0.0
      %5851 = vadd.xlane.f32.xlu0 %v5850
      %v5852 = vpop.xlane.xlu0 %5851
      %v5853 = vsel %vm1265, %v5835, 0.0
      %5854 = vadd.xlane.f32.xlu0 %v5853
      %v5855 = vpop.xlane.xlu0 %5854
      %v5856 = vsel %vm1265, %v5836, 0.0
      %5857 = vadd.xlane.f32.xlu0 %v5856
      %v5858 = vpop.xlane.xlu0 %5857
      %v5859 = vsel %vm1265, %v5837, 0.0
      %5860 = vadd.xlane.f32.xlu0 %v5859
      %v5861 = vpop.xlane.xlu0 %5860
      %v5862 = vmul.f32 %v5840, %v1539
      %v5863 = vmul.f32 %v5843, %v1539
      %v5864 = vmul.f32 %v5846, %v1539
      %v5865 = vmul.f32 %v5849, %v1539
      %v5866 = vmul.f32 %v5852, %v1539
      %v5867 = vmul.f32 %v5855, %v1539
      %v5868 = vmul.f32 %v5858, %v1539
      %v5869 = vmul.f32 %v5861, %v1539
      %v5870 = vadd.f32 %v5862, 1e-06
      %v5871 = vadd.f32 %v5863, 1e-06
      %v5872 = vadd.f32 %v5864, 1e-06
      %v5873 = vadd.f32 %v5865, 1e-06
      %v5874 = vadd.f32 %v5866, 1e-06
      %v5875 = vadd.f32 %v5867, 1e-06
      %v5876 = vadd.f32 %v5868, 1e-06
      %v5877 = vadd.f32 %v5869, 1e-06
      %v5878 = vrsqrt.pop %v5870
      %v5879 = vrsqrt.pop %v5871
      %v5880 = vrsqrt.pop %v5872
      %v5881 = vrsqrt.pop %v5873
      %v5882 = vrsqrt.pop %v5874
      %v5883 = vrsqrt.pop %v5875
      %v5884 = vrsqrt.pop %v5876
      %v5885 = vrsqrt.pop %v5877
      %v5886 = vmul.f32 %v5822, %v5878
      %v5887 = vmul.f32 %v5823, %v5879
      %v5888 = vmul.f32 %v5824, %v5880
      %v5889 = vmul.f32 %v5825, %v5881
      %v5890 = vmul.f32 %v5826, %v5882
      %v5891 = vmul.f32 %v5827, %v5883
      %v5892 = vmul.f32 %v5828, %v5884
      %v5893 = vmul.f32 %v5829, %v5885
      %v5894 = vadd.f32 %v5663, 1.0
      %v5895 = vlaneseq
      %v5896 = vshrl.u32 %v5895, 7
      %v5897 = vsub.s32 0, %v5896
      %v5898 = vrot.slane %v5894, %v5897
      %v5899 = vmul.f32 %v5886, %v5898
      %v5900 = vmul.f32 %v5887, %v5898
      %v5901 = vmul.f32 %v5888, %v5898
      %v5902 = vmul.f32 %v5889, %v5898
      %v5903 = vmul.f32 %v5890, %v5898
      %v5904 = vmul.f32 %v5891, %v5898
      %v5905 = vmul.f32 %v5892, %v5898
      %v5906 = vmul.f32 %v5893, %v5898
      %v5907 = vlaneseq
      %v5908 = vshrl.u32 %v5907, 7
      %v5909 = vsub.s32 0, %v5908
      %v5910 = vrot.slane %v5661, %v5909
      %v5911 = vadd.f32 %v5899, %v5910
      %v5912 = vadd.f32 %v5900, %v5910
      %v5913 = vadd.f32 %v5901, %v5910
      %v5914 = vadd.f32 %v5902, %v5910
      %v5915 = vadd.f32 %v5903, %v5910
      %v5916 = vadd.f32 %v5904, %v5910
      %v5917 = vadd.f32 %v5905, %v5910
      %v5918 = vadd.f32 %v5906, %v5910
      %v5919 = vsel %vm1265, %v5389, 0.0
      %5920 = vadd.xlane.f32.xlu0 %v5919
      %v5921 = vpop.xlane.xlu0 %5920
      %v5922 = vmul.f32 %v5921, %v1539
      %v5923 = vsub.f32 %v5389, %v5922
      %v5924 = vmul.f32 %v5923, %v5923
      %v5925 = vsel %vm1265, %v5924, 0.0
      %5926 = vadd.xlane.f32.xlu0 %v5925
      %v5927 = vpop.xlane.xlu0 %5926
      %v5928 = vmul.f32 %v5927, %v1539
      %v5929 = vadd.f32 %v5928, 1e-06
      %v5930 = vrsqrt.pop %v5929
      %v5931 = vmul.f32 %v5923, %v5930
      %v5932 = vadd.f32 %v5786, 1.0
      %v5933 = vlaneseq
      %v5934 = vshrl.u32 %v5933, 7
      %v5935 = vsub.s32 0, %v5934
      %v5936 = vrot.slane %v5932, %v5935
      %v5937 = vmul.f32 %v5931, %v5936
      %v5938 = vlaneseq
      %v5939 = vshrl.u32 %v5938, 7
      %v5940 = vsub.s32 0, %v5939
      %v5941 = vrot.slane %v5784, %v5940
      %v5942 = vadd.f32 %v5937, %v5941
      %s5943 = scalar_lea.vmem %s9, 192
      %v5944 = vld [vmem:[%s5943] sm:$0xff]
      %v5945 = vld [vmem:[%s5943 + $0x8] sm:$0xf]
      %v5946 = vld [vmem:[%s5943 + $0xc] sm:$0xff]
      %v5947 = vld [vmem:[%s5943 + $0x14] sm:$0xf]
      %v5948 = vld [vmem:[%s5943 + $0x18] sm:$0xff]
      %v5949 = vld [vmem:[%s5943 + $0x20] sm:$0xf]
      %v5950 = vld [vmem:[%s5943 + $0x24] sm:$0xff]
      %v5951 = vld [vmem:[%s5943 + $0x2c] sm:$0xf]
      %v5952 = vld [vmem:[%s5943 + $0x30] sm:$0xff]
      %v5953 = vld [vmem:[%s5943 + $0x38] sm:$0xf]
      %v5954 = vld [vmem:[%s5943 + $0x3c] sm:$0xff]
      %v5955 = vld [vmem:[%s5943 + $0x44] sm:$0xf]
      %v5956 = vld [vmem:[%s5943 + $0x48] sm:$0xff]
      %v5957 = vld [vmem:[%s5943 + $0x50] sm:$0xf]
      %v5958 = vld [vmem:[%s5943 + $0x54] sm:$0xff]
      %v5959 = vld [vmem:[%s5943 + $0x5c] sm:$0xf]
      %s5960 = scalar_lea.vmem %s10, 6
      %v5961 = vld [vmem:[%s5960] sm:$0x7]
      %v5962 = vpack.c.bf16 %v5912, %v5911
      %v5963 = vpack.c.bf16 %v5914, %v5913
      %v5964 = vpack.c.bf16 %v5916, %v5915
      %v5965 = vpack.c.bf16 %v5918, %v5917
      %v5967 = vlaneseq
      %v5968 = vshrl.u32 %v5967, 7
      %v5969 = vsub.s32 0, %v5968
      %v5970 = vrot.slane %v5961, %v5969
      %v5971 = vlaneseq
      %v5972 = vshrl.u32 %v5971, 7
      %v5973 = vsub.s32 1, %v5972
      %v5974 = vrot.slane %v5961, %v5973
      %v5975 = vlaneseq
      %v5976 = vshrl.u32 %v5975, 7
      %v5977 = vsub.s32 2, %v5976
      %v5978 = vrot.slane %v5961, %v5977
      %v5998 = vunpack.c.l.b16 %v5944
      %v5999 = vunpack.c.h.b16 %v5944
      %v6000 = vunpack.c.l.b16 %v5945
      %v6001 = vunpack.c.l.b16 %v5946
      %v6002 = vunpack.c.h.b16 %v5946
      %v6003 = vunpack.c.l.b16 %v5947
      %v6004 = vunpack.c.l.b16 %v5948
      %v6005 = vunpack.c.h.b16 %v5948
      %v6006 = vunpack.c.l.b16 %v5949
      %v6007 = vunpack.c.l.b16 %v5950
      %v6008 = vunpack.c.h.b16 %v5950
      %v6009 = vunpack.c.l.b16 %v5951
      %v6010 = vunpack.c.l.b16 %v5952
      %v6011 = vunpack.c.h.b16 %v5952
      %v6012 = vunpack.c.l.b16 %v5953
      %v6013 = vunpack.c.l.b16 %v5954
      %v6014 = vunpack.c.h.b16 %v5954
      %v6015 = vunpack.c.l.b16 %v5955
      %v6016 = vunpack.c.l.b16 %v5956
      %v6017 = vunpack.c.h.b16 %v5956
      %v6018 = vunpack.c.l.b16 %v5957
      %v6019 = vunpack.c.l.b16 %v5958
      %v6020 = vunpack.c.h.b16 %v5958
      %v6021 = vunpack.c.l.b16 %v5959
      %v6022 = vpack.c.b16 %v6001, %v5998
      %v6023 = vpack.c.b16 %v6002, %v5999
      %v6024 = vpack.c.b16 %v6003, %v6000
      %v6025 = vpack.c.b16 %v6007, %v6004
      %v6026 = vpack.c.b16 %v6008, %v6005
      %v6027 = vpack.c.b16 %v6009, %v6006
      %v6028 = vpack.c.b16 %v6013, %v6010
      %v6029 = vpack.c.b16 %v6014, %v6011
      %v6030 = vpack.c.b16 %v6015, %v6012
      %v6031 = vpack.c.b16 %v6019, %v6016
      %v6032 = vpack.c.b16 %v6020, %v6017
      %v6033 = vpack.c.b16 %v6021, %v6018
      %v6047 = vsel %vm1265, %v5962, 0
      %v6050 = vsel %vm1265, %v5963, 0
      %v6053 = vsel %vm1265, %v5964, 0
      %v6056 = vsel %vm1265, %v5965, 0
      %6058 = vmatprep.subr.bf16.mxu0 %v6023
      %6059 = vmatpush1.bf16.msra.mxu0 %v6022
      %6060 = vmatprep.subr.bf16.mxu0 %v6026
      %6061 = vmatpush1.bf16.msra.mxu0 %v6025
      %6062 = vmatprep.subr.bf16.mxu0 %v6029
      %6063 = vmatpush1.bf16.msra.mxu0 %v6028
      %6064 = vmatprep.subr.bf16.mxu0 %v6032
      %6065 = vmatpush1.bf16.msra.mxu0 %v6031
      %6066 = vmatprep.subr.bf16.mxu0 0
      %6067 = vmatpush1.bf16.msra.mxu0 0
      %6068 = vmatprep.subr.bf16.mxu0 0
      %6069 = vmatpush1.bf16.msra.mxu0 0
      %6070 = vmatprep.subr.bf16.mxu0 0
      %6071 = vmatpush1.bf16.msra.mxu0 0
      %6072 = vmatprep.subr.bf16.mxu0 0
      %6073 = vmatpush1.bf16.msra.mxu0 0
      %6074 = vmatprep.subr.bf16.mxu0 0
      %6075 = vmatpush1.bf16.msra.mxu0 0
      %6076 = vmatprep.subr.bf16.mxu0 0
      %6077 = vmatpush1.bf16.msra.mxu0 0
      %6078 = vmatprep.subr.bf16.mxu0 0
      %6079 = vmatpush1.bf16.msra.mxu0 0
      %6080 = vmatprep.subr.bf16.mxu0 0
      %6081 = vmatpush1.bf16.msra.mxu0 0
      %6082 = vmatprep.subr.bf16.mxu0 0
      %6083 = vmatpush1.bf16.msra.mxu0 0
      %6084 = vmatprep.subr.bf16.mxu0 0
      %6085 = vmatpush1.bf16.msra.mxu0 0
      %6086 = vmatprep.subr.bf16.mxu0 0
      %6087 = vmatpush1.bf16.msra.mxu0 0
      %6088 = vmatprep.subr.bf16.mxu0 0
      %6089 = vmatpush1.bf16.msra.mxu0 0
      %6090 = vmatprep.mubr.bf16.mxu0 0
      %6091 = vmatmul.mubr.bf16.gmra.mrb[0].mxu0 %v6047
      %v6092 = vpop.f32.mrb[0].mxu0
      %v6093 = vadd.f32 %v5970, %v6092
      %v6094 = vpop.f32.mrb[0].mxu0
      %v6095 = vadd.f32 %v5974, %v6094
      %v6096 = vpop.f32.mrb[0].mxu0
      %v6097 = vadd.f32 %v5970, %v6096
      %v6098 = vpop.f32.mrb[0].mxu0
      %v6099 = vadd.f32 %v5974, %v6098
      %6100 = vmatprep.mubr.bf16.mxu0 0
      %6101 = vmatmul.mubr.bf16.gmra.mrb[0].mxu0 %v6050
      %v6102 = vpop.f32.mrb[0].mxu0
      %v6103 = vadd.f32 %v5970, %v6102
      %v6104 = vpop.f32.mrb[0].mxu0
      %v6105 = vadd.f32 %v5974, %v6104
      %v6106 = vpop.f32.mrb[0].mxu0
      %v6107 = vadd.f32 %v5970, %v6106
      %v6108 = vpop.f32.mrb[0].mxu0
      %v6109 = vadd.f32 %v5974, %v6108
      %6110 = vmatprep.mubr.bf16.mxu0 0
      %6111 = vmatmul.mubr.bf16.gmra.mrb[0].mxu0 %v6053
      %v6112 = vpop.f32.mrb[0].mxu0
      %v6113 = vadd.f32 %v5970, %v6112
      %v6114 = vpop.f32.mrb[0].mxu0
      %v6115 = vadd.f32 %v5974, %v6114
      %v6116 = vpop.f32.mrb[0].mxu0
      %v6117 = vadd.f32 %v5970, %v6116
      %v6118 = vpop.f32.mrb[0].mxu0
      %v6119 = vadd.f32 %v5974, %v6118
      %6120 = vmatprep.mubr.bf16.mxu0 0
      %6121 = vmatmul.mubr.bf16.gmra.mrb[0].mxu0 %v6056
      %v6122 = vpop.f32.mrb[0].mxu0
      %v6123 = vadd.f32 %v5970, %v6122
      %v6124 = vpop.f32.mrb[0].mxu0
      %v6125 = vadd.f32 %v5974, %v6124
      %v6126 = vpop.f32.mrb[0].mxu0
      %v6127 = vadd.f32 %v5970, %v6126
      %v6128 = vpop.f32.mrb[0].mxu0
      %v6129 = vadd.f32 %v5974, %v6128
      %6130 = vdwg.mxu0
      %6131 = vmatprep.subr.bf16.mxu0 0
      %6132 = vmatpush1.bf16.msra.mxu0 %v6024
      %6133 = vmatprep.subr.bf16.mxu0 0
      %6134 = vmatpush1.bf16.msra.mxu0 %v6027
      %6135 = vmatprep.subr.bf16.mxu0 0
      %6136 = vmatpush1.bf16.msra.mxu0 %v6030
      %6137 = vmatprep.subr.bf16.mxu0 0
      %6138 = vmatpush1.bf16.msra.mxu0 %v6033
      %6139 = vmatprep.subr.bf16.mxu0 0
      %6140 = vmatpush1.bf16.msra.mxu0 0
      %6141 = vmatprep.subr.bf16.mxu0 0
      %6142 = vmatpush1.bf16.msra.mxu0 0
      %6143 = vmatprep.subr.bf16.mxu0 0
      %6144 = vmatpush1.bf16.msra.mxu0 0
      %6145 = vmatprep.subr.bf16.mxu0 0
      %6146 = vmatpush1.bf16.msra.mxu0 0
      %6147 = vmatprep.subr.bf16.mxu0 0
      %6148 = vmatpush1.bf16.msra.mxu0 0
      %6149 = vmatprep.subr.bf16.mxu0 0
      %6150 = vmatpush1.bf16.msra.mxu0 0
      %6151 = vmatprep.subr.bf16.mxu0 0
      %6152 = vmatpush1.bf16.msra.mxu0 0
      %6153 = vmatprep.subr.bf16.mxu0 0
      %6154 = vmatpush1.bf16.msra.mxu0 0
      %6155 = vmatprep.subr.bf16.mxu0 0
      %6156 = vmatpush1.bf16.msra.mxu0 0
      %6157 = vmatprep.subr.bf16.mxu0 0
      %6158 = vmatpush1.bf16.msra.mxu0 0
      %6159 = vmatprep.subr.bf16.mxu0 0
      %6160 = vmatpush1.bf16.msra.mxu0 0
      %6161 = vmatprep.subr.bf16.mxu0 0
      %6162 = vmatpush1.bf16.msra.mxu0 0
      %6163 = vmatprep.mubr.bf16.mxu0 0
      %6164 = vmatmul.mubr.bf16.gmra.mrb[0].mxu0 %v6047
      %v6165 = vpop.f32.mrb[0].mxu0
      %v6166 = vadd.f32 %v5978, %v6165
      %v6167 = vpop.f32.mrb[0].mxu0
      %v6168 = vpop.f32.mrb[0].mxu0
      %v6169 = vadd.f32 %v5978, %v6168
      %v6170 = vpop.f32.mrb[0].mxu0
      %6171 = vmatprep.mubr.bf16.mxu0 0
      %6172 = vmatmul.mubr.bf16.gmra.mrb[0].mxu0 %v6050
      %v6173 = vpop.f32.mrb[0].mxu0
      %v6174 = vadd.f32 %v5978, %v6173
      %v6175 = vpop.f32.mrb[0].mxu0
      %v6176 = vpop.f32.mrb[0].mxu0
      %v6177 = vadd.f32 %v5978, %v6176
      %v6178 = vpop.f32.mrb[0].mxu0
      %6179 = vmatprep.mubr.bf16.mxu0 0
      %6180 = vmatmul.mubr.bf16.gmra.mrb[0].mxu0 %v6053
      %v6181 = vpop.f32.mrb[0].mxu0
      %v6182 = vadd.f32 %v5978, %v6181
      %v6183 = vpop.f32.mrb[0].mxu0
      %v6184 = vpop.f32.mrb[0].mxu0
      %v6185 = vadd.f32 %v5978, %v6184
      %v6186 = vpop.f32.mrb[0].mxu0
      %6187 = vmatprep.mubr.bf16.mxu0 0
      %6188 = vmatmul.mubr.bf16.gmra.mrb[0].mxu0 %v6056
      %v6189 = vpop.f32.mrb[0].mxu0
      %v6190 = vadd.f32 %v5978, %v6189
      %v6191 = vpop.f32.mrb[0].mxu0
      %v6192 = vpop.f32.mrb[0].mxu0
      %v6193 = vadd.f32 %v5978, %v6192
      %v6194 = vpop.f32.mrb[0].mxu0
      %6195 = vdwg.mxu0
      %s6196 = scalar_lea.vmem %s9, 288
      %v6197 = vld [vmem:[%s6196] sm:$0xff]
      %v6198 = vld [vmem:[%s6196 + $0x8] sm:$0xf]
      %v6199 = vld [vmem:[%s6196 + $0xc] sm:$0xff]
      %v6200 = vld [vmem:[%s6196 + $0x14] sm:$0xf]
      %v6201 = vld [vmem:[%s6196 + $0x18] sm:$0xff]
      %v6202 = vld [vmem:[%s6196 + $0x20] sm:$0xf]
      %v6203 = vld [vmem:[%s6196 + $0x24] sm:$0xff]
      %v6204 = vld [vmem:[%s6196 + $0x2c] sm:$0xf]
      %v6205 = vld [vmem:[%s6196 + $0x30] sm:$0xff]
      %v6206 = vld [vmem:[%s6196 + $0x38] sm:$0xf]
      %v6207 = vld [vmem:[%s6196 + $0x3c] sm:$0xff]
      %v6208 = vld [vmem:[%s6196 + $0x44] sm:$0xf]
      %v6209 = vld [vmem:[%s6196 + $0x48] sm:$0xff]
      %v6210 = vld [vmem:[%s6196 + $0x50] sm:$0xf]
      %v6211 = vld [vmem:[%s6196 + $0x54] sm:$0xff]
      %v6212 = vld [vmem:[%s6196 + $0x5c] sm:$0xf]
      %s6213 = scalar_lea.vmem %s10, 9
      %v6214 = vld [vmem:[%s6213] sm:$0x7]
      %v6215 = vpack.c.bf16 %v5942, %v5942
      %v6217 = vlaneseq
      %v6218 = vshrl.u32 %v6217, 7
      %v6219 = vsub.s32 0, %v6218
      %v6220 = vrot.slane %v6214, %v6219
      %v6221 = vlaneseq
      %v6222 = vshrl.u32 %v6221, 7
      %v6223 = vsub.s32 1, %v6222
      %v6224 = vrot.slane %v6214, %v6223
      %v6225 = vlaneseq
      %v6226 = vshrl.u32 %v6225, 7
      %v6227 = vsub.s32 2, %v6226
      %v6228 = vrot.slane %v6214, %v6227
      %v6248 = vunpack.c.l.b16 %v6197
      %v6249 = vunpack.c.h.b16 %v6197
      %v6250 = vunpack.c.l.b16 %v6198
      %v6251 = vunpack.c.l.b16 %v6199
      %v6252 = vunpack.c.h.b16 %v6199
      %v6253 = vunpack.c.l.b16 %v6200
      %v6254 = vunpack.c.l.b16 %v6201
      %v6255 = vunpack.c.h.b16 %v6201
      %v6256 = vunpack.c.l.b16 %v6202
      %v6257 = vunpack.c.l.b16 %v6203
      %v6258 = vunpack.c.h.b16 %v6203
      %v6259 = vunpack.c.l.b16 %v6204
      %v6260 = vunpack.c.l.b16 %v6205
      %v6261 = vunpack.c.h.b16 %v6205
      %v6262 = vunpack.c.l.b16 %v6206
      %v6263 = vunpack.c.l.b16 %v6207
      %v6264 = vunpack.c.h.b16 %v6207
      %v6265 = vunpack.c.l.b16 %v6208
      %v6266 = vunpack.c.l.b16 %v6209
      %v6267 = vunpack.c.h.b16 %v6209
      %v6268 = vunpack.c.l.b16 %v6210
      %v6269 = vunpack.c.l.b16 %v6211
      %v6270 = vunpack.c.h.b16 %v6211
      %v6271 = vunpack.c.l.b16 %v6212
      %v6272 = vpack.c.b16 %v6251, %v6248
      %v6273 = vpack.c.b16 %v6252, %v6249
      %v6274 = vpack.c.b16 %v6253, %v6250
      %v6275 = vpack.c.b16 %v6257, %v6254
      %v6276 = vpack.c.b16 %v6258, %v6255
      %v6277 = vpack.c.b16 %v6259, %v6256
      %v6278 = vpack.c.b16 %v6263, %v6260
      %v6279 = vpack.c.b16 %v6264, %v6261
      %v6280 = vpack.c.b16 %v6265, %v6262
      %v6281 = vpack.c.b16 %v6269, %v6266
      %v6282 = vpack.c.b16 %v6270, %v6267
      %v6283 = vpack.c.b16 %v6271, %v6268
      %v6297 = vsel %vm1265, %v6215, 0
      %6299 = vmatprep.subr.bf16.mxu0 %v6273
      %6300 = vmatpush1.bf16.msra.mxu0 %v6272
      %6301 = vmatprep.subr.bf16.mxu0 %v6276
      %6302 = vmatpush1.bf16.msra.mxu0 %v6275
      %6303 = vmatprep.subr.bf16.mxu0 %v6279
      %6304 = vmatpush1.bf16.msra.mxu0 %v6278
      %6305 = vmatprep.subr.bf16.mxu0 %v6282
      %6306 = vmatpush1.bf16.msra.mxu0 %v6281
      %6307 = vmatprep.subr.bf16.mxu0 0
      %6308 = vmatpush1.bf16.msra.mxu0 0
      %6309 = vmatprep.subr.bf16.mxu0 0
      %6310 = vmatpush1.bf16.msra.mxu0 0
      %6311 = vmatprep.subr.bf16.mxu0 0
      %6312 = vmatpush1.bf16.msra.mxu0 0
      %6313 = vmatprep.subr.bf16.mxu0 0
      %6314 = vmatpush1.bf16.msra.mxu0 0
      %6315 = vmatprep.subr.bf16.mxu0 0
      %6316 = vmatpush1.bf16.msra.mxu0 0
      %6317 = vmatprep.subr.bf16.mxu0 0
      %6318 = vmatpush1.bf16.msra.mxu0 0
      %6319 = vmatprep.subr.bf16.mxu0 0
      %6320 = vmatpush1.bf16.msra.mxu0 0
      %6321 = vmatprep.subr.bf16.mxu0 0
      %6322 = vmatpush1.bf16.msra.mxu0 0
      %6323 = vmatprep.subr.bf16.mxu0 0
      %6324 = vmatpush1.bf16.msra.mxu0 0
      %6325 = vmatprep.subr.bf16.mxu0 0
      %6326 = vmatpush1.bf16.msra.mxu0 0
      %6327 = vmatprep.subr.bf16.mxu0 0
      %6328 = vmatpush1.bf16.msra.mxu0 0
      %6329 = vmatprep.subr.bf16.mxu0 0
      %6330 = vmatpush1.bf16.msra.mxu0 0
      %6331 = vmatprep.mubr.bf16.mxu0 0
      %6332 = vmatmul.mubr.bf16.gmra.mrb[0].mxu0 %v6297
      %v6333 = vpop.f32.mrb[0].mxu0
      %v6334 = vadd.f32 %v6220, %v6333
      %v6335 = vpop.f32.mrb[0].mxu0
      %v6336 = vadd.f32 %v6224, %v6335
      %v6337 = vpop.f32.mrb[0].mxu0
      %v6338 = vpop.f32.mrb[0].mxu0
      %6339 = vdwg.mxu0
      %6340 = vmatprep.subr.bf16.mxu0 0
      %6341 = vmatpush1.bf16.msra.mxu0 %v6274
      %6342 = vmatprep.subr.bf16.mxu0 0
      %6343 = vmatpush1.bf16.msra.mxu0 %v6277
      %6344 = vmatprep.subr.bf16.mxu0 0
      %6345 = vmatpush1.bf16.msra.mxu0 %v6280
      %6346 = vmatprep.subr.bf16.mxu0 0
      %6347 = vmatpush1.bf16.msra.mxu0 %v6283
      %6348 = vmatprep.subr.bf16.mxu0 0
      %6349 = vmatpush1.bf16.msra.mxu0 0
      %6350 = vmatprep.subr.bf16.mxu0 0
      %6351 = vmatpush1.bf16.msra.mxu0 0
      %6352 = vmatprep.subr.bf16.mxu0 0
      %6353 = vmatpush1.bf16.msra.mxu0 0
      %6354 = vmatprep.subr.bf16.mxu0 0
      %6355 = vmatpush1.bf16.msra.mxu0 0
      %6356 = vmatprep.subr.bf16.mxu0 0
      %6357 = vmatpush1.bf16.msra.mxu0 0
      %6358 = vmatprep.subr.bf16.mxu0 0
      %6359 = vmatpush1.bf16.msra.mxu0 0
      %6360 = vmatprep.subr.bf16.mxu0 0
      %6361 = vmatpush1.bf16.msra.mxu0 0
      %6362 = vmatprep.subr.bf16.mxu0 0
      %6363 = vmatpush1.bf16.msra.mxu0 0
      %6364 = vmatprep.subr.bf16.mxu0 0
      %6365 = vmatpush1.bf16.msra.mxu0 0
      %6366 = vmatprep.subr.bf16.mxu0 0
      %6367 = vmatpush1.bf16.msra.mxu0 0
      %6368 = vmatprep.subr.bf16.mxu0 0
      %6369 = vmatpush1.bf16.msra.mxu0 0
      %6370 = vmatprep.subr.bf16.mxu0 0
      %6371 = vmatpush1.bf16.msra.mxu0 0
      %6372 = vmatprep.mubr.bf16.mxu0 0
      %6373 = vmatmul.mubr.bf16.gmra.mrb[0].mxu0 %v6297
      %v6374 = vpop.f32.mrb[0].mxu0
      %v6375 = vadd.f32 %v6228, %v6374
      %v6376 = vpop.f32.mrb[0].mxu0
      %v6377 = vpop.f32.mrb[0].mxu0
      %v6378 = vpop.f32.mrb[0].mxu0
      %6379 = vdwg.mxu0
      %s6380 = scalar_lea.vmem %s11, 2
      %v6381 = vld [vmem:[%s6380] sm:$0x1]
      %s6382 = scalar_lea.vmem %s11, 3
      %v6383 = vld [vmem:[%s6382] sm:$0x1]
      %v6384 = vmul.f32 %v6093, %v896
      %v6385 = vmul.f32 %v6097, %v896
      %v6386 = vmul.f32 %v6103, %v896
      %v6387 = vmul.f32 %v6107, %v896
      %v6388 = vmul.f32 %v6113, %v896
      %v6389 = vmul.f32 %v6117, %v896
      %v6390 = vmul.f32 %v6123, %v896
      %v6391 = vmul.f32 %v6127, %v896
      %v6392 = vmul.f32 %v6334, %v896
      %v6393 = vmul.f32 %v6095, %v896
      %v6394 = vmul.f32 %v6099, %v896
      %v6395 = vmul.f32 %v6105, %v896
      %v6396 = vmul.f32 %v6109, %v896
      %v6397 = vmul.f32 %v6115, %v896
      %v6398 = vmul.f32 %v6119, %v896
      %v6399 = vmul.f32 %v6125, %v896
      %v6400 = vmul.f32 %v6129, %v896
      %v6401 = vmul.f32 %v6336, %v896
      %v6402 = vmul.f32 %v6166, %v896
      %v6403 = vmul.f32 %v6169, %v896
      %v6404 = vmul.f32 %v6174, %v896
      %v6405 = vmul.f32 %v6177, %v896
      %v6406 = vmul.f32 %v6182, %v896
      %v6407 = vmul.f32 %v6185, %v896
      %v6408 = vmul.f32 %v6190, %v896
      %v6409 = vmul.f32 %v6193, %v896
      %v6410 = vmul.f32 %v6375, %v896
      %v6411 = vmul.f32 %v6384, %v6384
      %v6412 = vmul.f32 %v6385, %v6385
      %v6413 = vmul.f32 %v6386, %v6386
      %v6414 = vmul.f32 %v6387, %v6387
      %v6415 = vmul.f32 %v6388, %v6388
      %v6416 = vmul.f32 %v6389, %v6389
      %v6417 = vmul.f32 %v6390, %v6390
      %v6418 = vmul.f32 %v6391, %v6391
      %v6419 = vmul.f32 %v6392, %v6392
      %v6420 = vsel %vm1265, %v6411, 0.0
      %6421 = vadd.xlane.f32.xlu0 %v6420
      %v6422 = vpop.xlane.xlu0 %6421
      %v6423 = vsel %vm1265, %v6412, 0.0
      %6424 = vadd.xlane.f32.xlu0 %v6423
      %v6425 = vpop.xlane.xlu0 %6424
      %v6426 = vsel %vm1265, %v6413, 0.0
      %6427 = vadd.xlane.f32.xlu0 %v6426
      %v6428 = vpop.xlane.xlu0 %6427
      %v6429 = vsel %vm1265, %v6414, 0.0
      %6430 = vadd.xlane.f32.xlu0 %v6429
      %v6431 = vpop.xlane.xlu0 %6430
      %v6432 = vsel %vm1265, %v6415, 0.0
      %6433 = vadd.xlane.f32.xlu0 %v6432
      %v6434 = vpop.xlane.xlu0 %6433
      %v6435 = vsel %vm1265, %v6416, 0.0
      %6436 = vadd.xlane.f32.xlu0 %v6435
      %v6437 = vpop.xlane.xlu0 %6436
      %v6438 = vsel %vm1265, %v6417, 0.0
      %6439 = vadd.xlane.f32.xlu0 %v6438
      %v6440 = vpop.xlane.xlu0 %6439
      %v6441 = vsel %vm1265, %v6418, 0.0
      %6442 = vadd.xlane.f32.xlu0 %v6441
      %v6443 = vpop.xlane.xlu0 %6442
      %v6444 = vsel %vm1265, %v6419, 0.0
      %6445 = vadd.xlane.f32.xlu0 %v6444
      %v6446 = vpop.xlane.xlu0 %6445
      %v6447 = vmul.f32 %v6422, 0.0625
      %v6448 = vmul.f32 %v6425, 0.0625
      %v6449 = vmul.f32 %v6428, 0.0625
      %v6450 = vmul.f32 %v6431, 0.0625
      %v6451 = vmul.f32 %v6434, 0.0625
      %v6452 = vmul.f32 %v6437, 0.0625
      %v6453 = vmul.f32 %v6440, 0.0625
      %v6454 = vmul.f32 %v6443, 0.0625
      %v6455 = vmul.f32 %v6446, 0.0625
      %v6456 = vadd.f32 %v6447, 1e-06
      %v6457 = vadd.f32 %v6448, 1e-06
      %v6458 = vadd.f32 %v6449, 1e-06
      %v6459 = vadd.f32 %v6450, 1e-06
      %v6460 = vadd.f32 %v6451, 1e-06
      %v6461 = vadd.f32 %v6452, 1e-06
      %v6462 = vadd.f32 %v6453, 1e-06
      %v6463 = vadd.f32 %v6454, 1e-06
      %v6464 = vadd.f32 %v6455, 1e-06
      %v6465 = vrsqrt.pop %v6456
      %v6466 = vrsqrt.pop %v6457
      %v6467 = vrsqrt.pop %v6458
      %v6468 = vrsqrt.pop %v6459
      %v6469 = vrsqrt.pop %v6460
      %v6470 = vrsqrt.pop %v6461
      %v6471 = vrsqrt.pop %v6462
      %v6472 = vrsqrt.pop %v6463
      %v6473 = vrsqrt.pop %v6464
      %v6474 = vmul.f32 %v6384, %v6465
      %v6475 = vmul.f32 %v6385, %v6466
      %v6476 = vmul.f32 %v6386, %v6467
      %v6477 = vmul.f32 %v6387, %v6468
      %v6478 = vmul.f32 %v6388, %v6469
      %v6479 = vmul.f32 %v6389, %v6470
      %v6480 = vmul.f32 %v6390, %v6471
      %v6481 = vmul.f32 %v6391, %v6472
      %v6482 = vmul.f32 %v6392, %v6473
      %v6484 = vlaneseq
      %v6485 = vshrl.u32 %v6484, 7
      %v6486 = vsub.s32 0, %v6485
      %v6487 = vrot.slane %v6381, %v6486
      %v6489 = vmul.f32 %v6474, %v6487
      %v6490 = vmul.f32 %v6475, %v6487
      %v6491 = vmul.f32 %v6476, %v6487
      %v6492 = vmul.f32 %v6477, %v6487
      %v6493 = vmul.f32 %v6478, %v6487
      %v6494 = vmul.f32 %v6479, %v6487
      %v6495 = vmul.f32 %v6480, %v6487
      %v6496 = vmul.f32 %v6481, %v6487
      %v6497 = vmul.f32 %v6482, %v6487
      %v6498 = vmul.f32 %v6393, %v6393
      %v6499 = vmul.f32 %v6394, %v6394
      %v6500 = vmul.f32 %v6395, %v6395
      %v6501 = vmul.f32 %v6396, %v6396
      %v6502 = vmul.f32 %v6397, %v6397
      %v6503 = vmul.f32 %v6398, %v6398
      %v6504 = vmul.f32 %v6399, %v6399
      %v6505 = vmul.f32 %v6400, %v6400
      %v6506 = vmul.f32 %v6401, %v6401
      %v6507 = vsel %vm1265, %v6498, 0.0
      %6508 = vadd.xlane.f32.xlu0 %v6507
      %v6509 = vpop.xlane.xlu0 %6508
      %v6510 = vsel %vm1265, %v6499, 0.0
      %6511 = vadd.xlane.f32.xlu0 %v6510
      %v6512 = vpop.xlane.xlu0 %6511
      %v6513 = vsel %vm1265, %v6500, 0.0
      %6514 = vadd.xlane.f32.xlu0 %v6513
      %v6515 = vpop.xlane.xlu0 %6514
      %v6516 = vsel %vm1265, %v6501, 0.0
      %6517 = vadd.xlane.f32.xlu0 %v6516
      %v6518 = vpop.xlane.xlu0 %6517
      %v6519 = vsel %vm1265, %v6502, 0.0
      %6520 = vadd.xlane.f32.xlu0 %v6519
      %v6521 = vpop.xlane.xlu0 %6520
      %v6522 = vsel %vm1265, %v6503, 0.0
      %6523 = vadd.xlane.f32.xlu0 %v6522
      %v6524 = vpop.xlane.xlu0 %6523
      %v6525 = vsel %vm1265, %v6504, 0.0
      %6526 = vadd.xlane.f32.xlu0 %v6525
      %v6527 = vpop.xlane.xlu0 %6526
      %v6528 = vsel %vm1265, %v6505, 0.0
      %6529 = vadd.xlane.f32.xlu0 %v6528
      %v6530 = vpop.xlane.xlu0 %6529
      %v6531 = vsel %vm1265, %v6506, 0.0
      %6532 = vadd.xlane.f32.xlu0 %v6531
      %v6533 = vpop.xlane.xlu0 %6532
      %v6534 = vmul.f32 %v6509, 0.0625
      %v6535 = vmul.f32 %v6512, 0.0625
      %v6536 = vmul.f32 %v6515, 0.0625
      %v6537 = vmul.f32 %v6518, 0.0625
      %v6538 = vmul.f32 %v6521, 0.0625
      %v6539 = vmul.f32 %v6524, 0.0625
      %v6540 = vmul.f32 %v6527, 0.0625
      %v6541 = vmul.f32 %v6530, 0.0625
      %v6542 = vmul.f32 %v6533, 0.0625
      %v6543 = vadd.f32 %v6534, 1e-06
      %v6544 = vadd.f32 %v6535, 1e-06
      %v6545 = vadd.f32 %v6536, 1e-06
      %v6546 = vadd.f32 %v6537, 1e-06
      %v6547 = vadd.f32 %v6538, 1e-06
      %v6548 = vadd.f32 %v6539, 1e-06
      %v6549 = vadd.f32 %v6540, 1e-06
      %v6550 = vadd.f32 %v6541, 1e-06
      %v6551 = vadd.f32 %v6542, 1e-06
      %v6552 = vrsqrt.pop %v6543
      %v6553 = vrsqrt.pop %v6544
      %v6554 = vrsqrt.pop %v6545
      %v6555 = vrsqrt.pop %v6546
      %v6556 = vrsqrt.pop %v6547
      %v6557 = vrsqrt.pop %v6548
      %v6558 = vrsqrt.pop %v6549
      %v6559 = vrsqrt.pop %v6550
      %v6560 = vrsqrt.pop %v6551
      %v6561 = vmul.f32 %v6393, %v6552
      %v6562 = vmul.f32 %v6394, %v6553
      %v6563 = vmul.f32 %v6395, %v6554
      %v6564 = vmul.f32 %v6396, %v6555
      %v6565 = vmul.f32 %v6397, %v6556
      %v6566 = vmul.f32 %v6398, %v6557
      %v6567 = vmul.f32 %v6399, %v6558
      %v6568 = vmul.f32 %v6400, %v6559
      %v6569 = vmul.f32 %v6401, %v6560
      %v6571 = vlaneseq
      %v6572 = vshrl.u32 %v6571, 7
      %v6573 = vsub.s32 0, %v6572
      %v6574 = vrot.slane %v6383, %v6573
      %v6576 = vmul.f32 %v6561, %v6574
      %v6577 = vmul.f32 %v6562, %v6574
      %v6578 = vmul.f32 %v6563, %v6574
      %v6579 = vmul.f32 %v6564, %v6574
      %v6580 = vmul.f32 %v6565, %v6574
      %v6581 = vmul.f32 %v6566, %v6574
      %v6582 = vmul.f32 %v6567, %v6574
      %v6583 = vmul.f32 %v6568, %v6574
      %v6584 = vmul.f32 %v6569, %v6574
      %v6585 = vpack.c.bf16 %v6490, %v6489
      %v6586 = vpack.c.bf16 %v6492, %v6491
      %v6587 = vpack.c.bf16 %v6494, %v6493
      %v6588 = vpack.c.bf16 %v6496, %v6495
      %v6589 = vpack.c.bf16 %v6497, %v6497
      %v6590 = vpack.c.bf16 %v6577, %v6576
      %v6591 = vpack.c.bf16 %v6579, %v6578
      %v6592 = vpack.c.bf16 %v6581, %v6580
      %v6593 = vpack.c.bf16 %v6583, %v6582
      %v6594 = vpack.c.bf16 %v6584, %v6584
      %v6596 = vsel %vm1265, %v6585, 0
      %v6599 = vsel %vm1265, %v6586, 0
      %v6602 = vsel %vm1265, %v6587, 0
      %v6605 = vsel %vm1265, %v6588, 0
      %v6608 = vsel %vm1265, %v6589, 0
      %v6611 = vsel %vm1265, %v6590, 0
      %v6614 = vsel %vm1265, %v6591, 0
      %v6617 = vsel %vm1265, %v6592, 0
      %v6620 = vsel %vm1265, %v6593, 0
      %v6623 = vsel %vm1265, %v6594, 0
      %6625 = vmatprep.subr.bf16.mxu0 0
      %6626 = vmatpush1.bf16.xpose.msra.mxu0 %v6611
      %6627 = vmatprep.subr.bf16.mxu0 0
      %6628 = vmatpush1.bf16.xpose.msra.mxu0 %v6614
      %6629 = vmatprep.subr.bf16.mxu0 0
      %6630 = vmatpush1.bf16.xpose.msra.mxu0 %v6617
      %6631 = vmatprep.subr.bf16.mxu0 0
      %6632 = vmatpush1.bf16.xpose.msra.mxu0 %v6620
      %6633 = vmatprep.subr.bf16.mxu0 0
      %6634 = vmatpush1.bf16.xpose.msra.mxu0 %v6623
      %6635 = vmatprep.subr.bf16.mxu0 0
      %6636 = vmatpush1.bf16.xpose.msra.mxu0 0
      %6637 = vmatprep.subr.bf16.mxu0 0
      %6638 = vmatpush1.bf16.xpose.msra.mxu0 0
      %6639 = vmatprep.subr.bf16.mxu0 0
      %6640 = vmatpush1.bf16.xpose.msra.mxu0 0
      %6641 = vmatprep.subr.bf16.mxu0 0
      %6642 = vmatpush1.bf16.xpose.msra.mxu0 0
      %6643 = vmatprep.subr.bf16.mxu0 0
      %6644 = vmatpush1.bf16.xpose.msra.mxu0 0
      %6645 = vmatprep.subr.bf16.mxu0 0
      %6646 = vmatpush1.bf16.xpose.msra.mxu0 0
      %6647 = vmatprep.subr.bf16.mxu0 0
      %6648 = vmatpush1.bf16.xpose.msra.mxu0 0
      %6649 = vmatprep.subr.bf16.mxu0 0
      %6650 = vmatpush1.bf16.xpose.msra.mxu0 0
      %6651 = vmatprep.subr.bf16.mxu0 0
      %6652 = vmatpush1.bf16.xpose.msra.mxu0 0
      %6653 = vmatprep.subr.bf16.mxu0 0
      %6654 = vmatpush1.bf16.xpose.msra.mxu0 0
      %6655 = vmatprep.subr.bf16.mxu0 0
      %6656 = vmatpush1.bf16.xpose.msra.mxu0 0
      %6657 = vmatprep.mubr.bf16.mxu0 0
      %6658 = vmatmul.mubr.bf16.gmra.mrb[0].mxu0 %v6596
      %v6659 = vpop.f32.mrb[0].mxu0
      %v6660 = vadd.f32 0.0, %v6659
      %v6661 = vpop.f32.mrb[0].mxu0
      %v6662 = vpop.f32.mrb[0].mxu0
      %v6663 = vadd.f32 0.0, %v6662
      %v6664 = vpop.f32.mrb[0].mxu0
      %6665 = vmatprep.mubr.bf16.mxu0 0
      %6666 = vmatmul.mubr.bf16.gmra.mrb[0].mxu0 %v6599
      %v6667 = vpop.f32.mrb[0].mxu0
      %v6668 = vadd.f32 0.0, %v6667
      %v6669 = vpop.f32.mrb[0].mxu0
      %v6670 = vpop.f32.mrb[0].mxu0
      %v6671 = vadd.f32 0.0, %v6670
      %v6672 = vpop.f32.mrb[0].mxu0
      %6673 = vmatprep.mubr.bf16.mxu0 0
      %6674 = vmatmul.mubr.bf16.gmra.mrb[0].mxu0 %v6602
      %v6675 = vpop.f32.mrb[0].mxu0
      %v6676 = vadd.f32 0.0, %v6675
      %v6677 = vpop.f32.mrb[0].mxu0
      %v6678 = vpop.f32.mrb[0].mxu0
      %v6679 = vadd.f32 0.0, %v6678
      %v6680 = vpop.f32.mrb[0].mxu0
      %6681 = vmatprep.mubr.bf16.mxu0 0
      %6682 = vmatmul.mubr.bf16.gmra.mrb[0].mxu0 %v6605
      %v6683 = vpop.f32.mrb[0].mxu0
      %v6684 = vadd.f32 0.0, %v6683
      %v6685 = vpop.f32.mrb[0].mxu0
      %v6686 = vpop.f32.mrb[0].mxu0
      %v6687 = vadd.f32 0.0, %v6686
      %v6688 = vpop.f32.mrb[0].mxu0
      %6689 = vmatprep.mubr.bf16.mxu0 0
      %6690 = vmatmul.mubr.bf16.gmra.mrb[0].mxu0 %v6608
      %v6691 = vpop.f32.mrb[0].mxu0
      %v6692 = vadd.f32 0.0, %v6691
      %v6693 = vpop.f32.mrb[0].mxu0
      %v6694 = vpop.f32.mrb[0].mxu0
      %v6695 = vpop.f32.mrb[0].mxu0
      %6696 = vdwg.mxu0
      %v6697 = vmul.f32 %v6660, 0.25
      %v6698 = vmul.f32 %v6663, 0.25
      %v6699 = vmul.f32 %v6668, 0.25
      %v6700 = vmul.f32 %v6671, 0.25
      %v6701 = vmul.f32 %v6676, 0.25
      %v6702 = vmul.f32 %v6679, 0.25
      %v6703 = vmul.f32 %v6684, 0.25
      %v6704 = vmul.f32 %v6687, 0.25
      %v6705 = vmul.f32 %v6692, 0.25
      %v6706 = vsel %vm2429, %v6697, -inf
      %6707 = vmax.xlane.f32.xlu0 %v6706
      %v6708 = vpop.xlane.xlu0 %6707
      %v6709 = vsel %vm2429, %v6698, -inf
      %6710 = vmax.xlane.f32.xlu0 %v6709
      %v6711 = vpop.xlane.xlu0 %6710
      %v6712 = vsel %vm2429, %v6699, -inf
      %6713 = vmax.xlane.f32.xlu0 %v6712
      %v6714 = vpop.xlane.xlu0 %6713
      %v6715 = vsel %vm2429, %v6700, -inf
      %6716 = vmax.xlane.f32.xlu0 %v6715
      %v6717 = vpop.xlane.xlu0 %6716
      %v6718 = vsel %vm2429, %v6701, -inf
      %6719 = vmax.xlane.f32.xlu0 %v6718
      %v6720 = vpop.xlane.xlu0 %6719
      %v6721 = vsel %vm2429, %v6702, -inf
      %6722 = vmax.xlane.f32.xlu0 %v6721
      %v6723 = vpop.xlane.xlu0 %6722
      %v6724 = vsel %vm2429, %v6703, -inf
      %6725 = vmax.xlane.f32.xlu0 %v6724
      %v6726 = vpop.xlane.xlu0 %6725
      %v6727 = vsel %vm2429, %v6704, -inf
      %6728 = vmax.xlane.f32.xlu0 %v6727
      %v6729 = vpop.xlane.xlu0 %6728
      %v6730 = vsel %vm2429, %v6705, -inf
      %6731 = vmax.xlane.f32.xlu0 %v6730
      %v6732 = vpop.xlane.xlu0 %6731
      %v6733 = vsub.f32 %v6697, %v6708
      %v6734 = vsub.f32 %v6698, %v6711
      %v6735 = vsub.f32 %v6699, %v6714
      %v6736 = vsub.f32 %v6700, %v6717
      %v6737 = vsub.f32 %v6701, %v6720
      %v6738 = vsub.f32 %v6702, %v6723
      %v6739 = vsub.f32 %v6703, %v6726
      %v6740 = vsub.f32 %v6704, %v6729
      %v6741 = vsub.f32 %v6705, %v6732
      %v6742 = vmul.f32 %v6733, 1.442695
      %v6743 = vpow.pop %v6742
      %v6744 = vmul.f32 %v6734, 1.442695
      %v6745 = vpow.pop %v6744
      %v6746 = vmul.f32 %v6735, 1.442695
      %v6747 = vpow.pop %v6746
      %v6748 = vmul.f32 %v6736, 1.442695
      %v6749 = vpow.pop %v6748
      %v6750 = vmul.f32 %v6737, 1.442695
      %v6751 = vpow.pop %v6750
      %v6752 = vmul.f32 %v6738, 1.442695
      %v6753 = vpow.pop %v6752
      %v6754 = vmul.f32 %v6739, 1.442695
      %v6755 = vpow.pop %v6754
      %v6756 = vmul.f32 %v6740, 1.442695
      %v6757 = vpow.pop %v6756
      %v6758 = vmul.f32 %v6741, 1.442695
      %v6759 = vpow.pop %v6758
      %v6760 = vsel %vm2429, %v6743, 0.0
      %6761 = vadd.xlane.f32.xlu0 %v6760
      %v6762 = vpop.xlane.xlu0 %6761
      %v6763 = vsel %vm2429, %v6745, 0.0
      %6764 = vadd.xlane.f32.xlu0 %v6763
      %v6765 = vpop.xlane.xlu0 %6764
      %v6766 = vsel %vm2429, %v6747, 0.0
      %6767 = vadd.xlane.f32.xlu0 %v6766
      %v6768 = vpop.xlane.xlu0 %6767
      %v6769 = vsel %vm2429, %v6749, 0.0
      %6770 = vadd.xlane.f32.xlu0 %v6769
      %v6771 = vpop.xlane.xlu0 %6770
      %v6772 = vsel %vm2429, %v6751, 0.0
      %6773 = vadd.xlane.f32.xlu0 %v6772
      %v6774 = vpop.xlane.xlu0 %6773
      %v6775 = vsel %vm2429, %v6753, 0.0
      %6776 = vadd.xlane.f32.xlu0 %v6775
      %v6777 = vpop.xlane.xlu0 %6776
      %v6778 = vsel %vm2429, %v6755, 0.0
      %6779 = vadd.xlane.f32.xlu0 %v6778
      %v6780 = vpop.xlane.xlu0 %6779
      %v6781 = vsel %vm2429, %v6757, 0.0
      %6782 = vadd.xlane.f32.xlu0 %v6781
      %v6783 = vpop.xlane.xlu0 %6782
      %v6784 = vsel %vm2429, %v6759, 0.0
      %6785 = vadd.xlane.f32.xlu0 %v6784
      %v6786 = vpop.xlane.xlu0 %6785
      %v6787 = vrcp.pop %v6762
      %v6788 = vrcp.pop %v6765
      %v6789 = vrcp.pop %v6768
      %v6790 = vrcp.pop %v6771
      %v6791 = vrcp.pop %v6774
      %v6792 = vrcp.pop %v6777
      %v6793 = vrcp.pop %v6780
      %v6794 = vrcp.pop %v6783
      %v6795 = vrcp.pop %v6786
      %v6796 = vmul.f32 %v6743, %v6787
      %v6797 = vmul.f32 %v6745, %v6788
      %v6798 = vmul.f32 %v6747, %v6789
      %v6799 = vmul.f32 %v6749, %v6790
      %v6800 = vmul.f32 %v6751, %v6791
      %v6801 = vmul.f32 %v6753, %v6792
      %v6802 = vmul.f32 %v6755, %v6793
      %v6803 = vmul.f32 %v6757, %v6794
      %v6804 = vmul.f32 %v6759, %v6795
      %v6805 = vpack.c.bf16 %v6797, %v6796
      %v6806 = vpack.c.bf16 %v6799, %v6798
      %v6807 = vpack.c.bf16 %v6801, %v6800
      %v6808 = vpack.c.bf16 %v6803, %v6802
      %v6809 = vpack.c.bf16 %v6804, %v6804
      %v6810 = vpack.c.bf16 %v6403, %v6402
      %v6811 = vpack.c.bf16 %v6405, %v6404
      %v6812 = vpack.c.bf16 %v6407, %v6406
      %v6813 = vpack.c.bf16 %v6409, %v6408
      %v6814 = vpack.c.bf16 %v6410, %v6410
      %v6815 = vmul.f32 %v6093, %v901
      %v6816 = vmul.f32 %v6097, %v901
      %v6817 = vmul.f32 %v6103, %v901
      %v6818 = vmul.f32 %v6107, %v901
      %v6819 = vmul.f32 %v6113, %v901
      %v6820 = vmul.f32 %v6117, %v901
      %v6821 = vmul.f32 %v6123, %v901
      %v6822 = vmul.f32 %v6127, %v901
      %v6823 = vmul.f32 %v6334, %v901
      %v6824 = vmul.f32 %v6095, %v901
      %v6825 = vmul.f32 %v6099, %v901
      %v6826 = vmul.f32 %v6105, %v901
      %v6827 = vmul.f32 %v6109, %v901
      %v6828 = vmul.f32 %v6115, %v901
      %v6829 = vmul.f32 %v6119, %v901
      %v6830 = vmul.f32 %v6125, %v901
      %v6831 = vmul.f32 %v6129, %v901
      %v6832 = vmul.f32 %v6336, %v901
      %v6833 = vmul.f32 %v6166, %v901
      %v6834 = vmul.f32 %v6169, %v901
      %v6835 = vmul.f32 %v6174, %v901
      %v6836 = vmul.f32 %v6177, %v901
      %v6837 = vmul.f32 %v6182, %v901
      %v6838 = vmul.f32 %v6185, %v901
      %v6839 = vmul.f32 %v6190, %v901
      %v6840 = vmul.f32 %v6193, %v901
      %v6841 = vmul.f32 %v6375, %v901
      %v6842 = vmul.f32 %v6815, %v6815
      %v6843 = vmul.f32 %v6816, %v6816
      %v6844 = vmul.f32 %v6817, %v6817
      %v6845 = vmul.f32 %v6818, %v6818
      %v6846 = vmul.f32 %v6819, %v6819
      %v6847 = vmul.f32 %v6820, %v6820
      %v6848 = vmul.f32 %v6821, %v6821
      %v6849 = vmul.f32 %v6822, %v6822
      %v6850 = vmul.f32 %v6823, %v6823
      %v6851 = vsel %vm1265, %v6842, 0.0
      %6852 = vadd.xlane.f32.xlu0 %v6851
      %v6853 = vpop.xlane.xlu0 %6852
      %v6854 = vsel %vm1265, %v6843, 0.0
      %6855 = vadd.xlane.f32.xlu0 %v6854
      %v6856 = vpop.xlane.xlu0 %6855
      %v6857 = vsel %vm1265, %v6844, 0.0
      %6858 = vadd.xlane.f32.xlu0 %v6857
      %v6859 = vpop.xlane.xlu0 %6858
      %v6860 = vsel %vm1265, %v6845, 0.0
      %6861 = vadd.xlane.f32.xlu0 %v6860
      %v6862 = vpop.xlane.xlu0 %6861
      %v6863 = vsel %vm1265, %v6846, 0.0
      %6864 = vadd.xlane.f32.xlu0 %v6863
      %v6865 = vpop.xlane.xlu0 %6864
      %v6866 = vsel %vm1265, %v6847, 0.0
      %6867 = vadd.xlane.f32.xlu0 %v6866
      %v6868 = vpop.xlane.xlu0 %6867
      %v6869 = vsel %vm1265, %v6848, 0.0
      %6870 = vadd.xlane.f32.xlu0 %v6869
      %v6871 = vpop.xlane.xlu0 %6870
      %v6872 = vsel %vm1265, %v6849, 0.0
      %6873 = vadd.xlane.f32.xlu0 %v6872
      %v6874 = vpop.xlane.xlu0 %6873
      %v6875 = vsel %vm1265, %v6850, 0.0
      %6876 = vadd.xlane.f32.xlu0 %v6875
      %v6877 = vpop.xlane.xlu0 %6876
      %v6878 = vmul.f32 %v6853, 0.0625
      %v6879 = vmul.f32 %v6856, 0.0625
      %v6880 = vmul.f32 %v6859, 0.0625
      %v6881 = vmul.f32 %v6862, 0.0625
      %v6882 = vmul.f32 %v6865, 0.0625
      %v6883 = vmul.f32 %v6868, 0.0625
      %v6884 = vmul.f32 %v6871, 0.0625
      %v6885 = vmul.f32 %v6874, 0.0625
      %v6886 = vmul.f32 %v6877, 0.0625
      %v6887 = vadd.f32 %v6878, 1e-06
      %v6888 = vadd.f32 %v6879, 1e-06
      %v6889 = vadd.f32 %v6880, 1e-06
      %v6890 = vadd.f32 %v6881, 1e-06
      %v6891 = vadd.f32 %v6882, 1e-06
      %v6892 = vadd.f32 %v6883, 1e-06
      %v6893 = vadd.f32 %v6884, 1e-06
      %v6894 = vadd.f32 %v6885, 1e-06
      %v6895 = vadd.f32 %v6886, 1e-06
      %v6896 = vrsqrt.pop %v6887
      %v6897 = vrsqrt.pop %v6888
      %v6898 = vrsqrt.pop %v6889
      %v6899 = vrsqrt.pop %v6890
      %v6900 = vrsqrt.pop %v6891
      %v6901 = vrsqrt.pop %v6892
      %v6902 = vrsqrt.pop %v6893
      %v6903 = vrsqrt.pop %v6894
      %v6904 = vrsqrt.pop %v6895
      %v6905 = vmul.f32 %v6815, %v6896
      %v6906 = vmul.f32 %v6816, %v6897
      %v6907 = vmul.f32 %v6817, %v6898
      %v6908 = vmul.f32 %v6818, %v6899
      %v6909 = vmul.f32 %v6819, %v6900
      %v6910 = vmul.f32 %v6820, %v6901
      %v6911 = vmul.f32 %v6821, %v6902
      %v6912 = vmul.f32 %v6822, %v6903
      %v6913 = vmul.f32 %v6823, %v6904
      %v6914 = vmul.f32 %v6905, %v6487
      %v6915 = vmul.f32 %v6906, %v6487
      %v6916 = vmul.f32 %v6907, %v6487
      %v6917 = vmul.f32 %v6908, %v6487
      %v6918 = vmul.f32 %v6909, %v6487
      %v6919 = vmul.f32 %v6910, %v6487
      %v6920 = vmul.f32 %v6911, %v6487
      %v6921 = vmul.f32 %v6912, %v6487
      %v6922 = vmul.f32 %v6913, %v6487
      %v6923 = vmul.f32 %v6824, %v6824
      %v6924 = vmul.f32 %v6825, %v6825
      %v6925 = vmul.f32 %v6826, %v6826
      %v6926 = vmul.f32 %v6827, %v6827
      %v6927 = vmul.f32 %v6828, %v6828
      %v6928 = vmul.f32 %v6829, %v6829
      %v6929 = vmul.f32 %v6830, %v6830
      %v6930 = vmul.f32 %v6831, %v6831
      %v6931 = vmul.f32 %v6832, %v6832
      %v6932 = vsel %vm1265, %v6923, 0.0
      %6933 = vadd.xlane.f32.xlu0 %v6932
      %v6934 = vpop.xlane.xlu0 %6933
      %v6935 = vsel %vm1265, %v6924, 0.0
      %6936 = vadd.xlane.f32.xlu0 %v6935
      %v6937 = vpop.xlane.xlu0 %6936
      %v6938 = vsel %vm1265, %v6925, 0.0
      %6939 = vadd.xlane.f32.xlu0 %v6938
      %v6940 = vpop.xlane.xlu0 %6939
      %v6941 = vsel %vm1265, %v6926, 0.0
      %6942 = vadd.xlane.f32.xlu0 %v6941
      %v6943 = vpop.xlane.xlu0 %6942
      %v6944 = vsel %vm1265, %v6927, 0.0
      %6945 = vadd.xlane.f32.xlu0 %v6944
      %v6946 = vpop.xlane.xlu0 %6945
      %v6947 = vsel %vm1265, %v6928, 0.0
      %6948 = vadd.xlane.f32.xlu0 %v6947
      %v6949 = vpop.xlane.xlu0 %6948
      %v6950 = vsel %vm1265, %v6929, 0.0
      %6951 = vadd.xlane.f32.xlu0 %v6950
      %v6952 = vpop.xlane.xlu0 %6951
      %v6953 = vsel %vm1265, %v6930, 0.0
      %6954 = vadd.xlane.f32.xlu0 %v6953
      %v6955 = vpop.xlane.xlu0 %6954
      %v6956 = vsel %vm1265, %v6931, 0.0
      %6957 = vadd.xlane.f32.xlu0 %v6956
      %v6958 = vpop.xlane.xlu0 %6957
      %v6959 = vmul.f32 %v6934, 0.0625
      %v6960 = vmul.f32 %v6937, 0.0625
      %v6961 = vmul.f32 %v6940, 0.0625
      %v6962 = vmul.f32 %v6943, 0.0625
      %v6963 = vmul.f32 %v6946, 0.0625
      %v6964 = vmul.f32 %v6949, 0.0625
      %v6965 = vmul.f32 %v6952, 0.0625
      %v6966 = vmul.f32 %v6955, 0.0625
      %v6967 = vmul.f32 %v6958, 0.0625
      %v6968 = vadd.f32 %v6959, 1e-06
      %v6969 = vadd.f32 %v6960, 1e-06
      %v6970 = vadd.f32 %v6961, 1e-06
      %v6971 = vadd.f32 %v6962, 1e-06
      %v6972 = vadd.f32 %v6963, 1e-06
      %v6973 = vadd.f32 %v6964, 1e-06
      %v6974 = vadd.f32 %v6965, 1e-06
      %v6975 = vadd.f32 %v6966, 1e-06
      %v6976 = vadd.f32 %v6967, 1e-06
      %v6977 = vrsqrt.pop %v6968
      %v6978 = vrsqrt.pop %v6969
      %v6979 = vrsqrt.pop %v6970
      %v6980 = vrsqrt.pop %v6971
      %v6981 = vrsqrt.pop %v6972
      %v6982 = vrsqrt.pop %v6973
      %v6983 = vrsqrt.pop %v6974
      %v6984 = vrsqrt.pop %v6975
      %v6985 = vrsqrt.pop %v6976
      %v6986 = vmul.f32 %v6824, %v6977
      %v6987 = vmul.f32 %v6825, %v6978
      %v6988 = vmul.f32 %v6826, %v6979
      %v6989 = vmul.f32 %v6827, %v6980
      %v6990 = vmul.f32 %v6828, %v6981
      %v6991 = vmul.f32 %v6829, %v6982
      %v6992 = vmul.f32 %v6830, %v6983
      %v6993 = vmul.f32 %v6831, %v6984
      %v6994 = vmul.f32 %v6832, %v6985
      %v6995 = vmul.f32 %v6986, %v6574
      %v6996 = vmul.f32 %v6987, %v6574
      %v6997 = vmul.f32 %v6988, %v6574
      %v6998 = vmul.f32 %v6989, %v6574
      %v6999 = vmul.f32 %v6990, %v6574
      %v7000 = vmul.f32 %v6991, %v6574
      %v7001 = vmul.f32 %v6992, %v6574
      %v7002 = vmul.f32 %v6993, %v6574
      %v7003 = vmul.f32 %v6994, %v6574
      %v7004 = vpack.c.bf16 %v6915, %v6914
      %v7005 = vpack.c.bf16 %v6917, %v6916
      %v7006 = vpack.c.bf16 %v6919, %v6918
      %v7007 = vpack.c.bf16 %v6921, %v6920
      %v7008 = vpack.c.bf16 %v6922, %v6922
      %v7009 = vpack.c.bf16 %v6996, %v6995
      %v7010 = vpack.c.bf16 %v6998, %v6997
      %v7011 = vpack.c.bf16 %v7000, %v6999
      %v7012 = vpack.c.bf16 %v7002, %v7001
      %v7013 = vpack.c.bf16 %v7003, %v7003
      %v7015 = vsel %vm1265, %v7004, 0
      %v7018 = vsel %vm1265, %v7005, 0
      %v7021 = vsel %vm1265, %v7006, 0
      %v7024 = vsel %vm1265, %v7007, 0
      %v7027 = vsel %vm1265, %v7008, 0
      %v7030 = vsel %vm1265, %v7009, 0
      %v7033 = vsel %vm1265, %v7010, 0
      %v7036 = vsel %vm1265, %v7011, 0
      %v7039 = vsel %vm1265, %v7012, 0
      %v7042 = vsel %vm1265, %v7013, 0
      %7044 = vmatprep.subr.bf16.mxu0 0
      %7045 = vmatpush1.bf16.xpose.msra.mxu0 %v7030
      %7046 = vmatprep.subr.bf16.mxu0 0
      %7047 = vmatpush1.bf16.xpose.msra.mxu0 %v7033
      %7048 = vmatprep.subr.bf16.mxu0 0
      %7049 = vmatpush1.bf16.xpose.msra.mxu0 %v7036
      %7050 = vmatprep.subr.bf16.mxu0 0
      %7051 = vmatpush1.bf16.xpose.msra.mxu0 %v7039
      %7052 = vmatprep.subr.bf16.mxu0 0
      %7053 = vmatpush1.bf16.xpose.msra.mxu0 %v7042
      %7054 = vmatprep.subr.bf16.mxu0 0
      %7055 = vmatpush1.bf16.xpose.msra.mxu0 0
      %7056 = vmatprep.subr.bf16.mxu0 0
      %7057 = vmatpush1.bf16.xpose.msra.mxu0 0
      %7058 = vmatprep.subr.bf16.mxu0 0
      %7059 = vmatpush1.bf16.xpose.msra.mxu0 0
      %7060 = vmatprep.subr.bf16.mxu0 0
      %7061 = vmatpush1.bf16.xpose.msra.mxu0 0
      %7062 = vmatprep.subr.bf16.mxu0 0
      %7063 = vmatpush1.bf16.xpose.msra.mxu0 0
      %7064 = vmatprep.subr.bf16.mxu0 0
      %7065 = vmatpush1.bf16.xpose.msra.mxu0 0
      %7066 = vmatprep.subr.bf16.mxu0 0
      %7067 = vmatpush1.bf16.xpose.msra.mxu0 0
      %7068 = vmatprep.subr.bf16.mxu0 0
      %7069 = vmatpush1.bf16.xpose.msra.mxu0 0
      %7070 = vmatprep.subr.bf16.mxu0 0
      %7071 = vmatpush1.bf16.xpose.msra.mxu0 0
      %7072 = vmatprep.subr.bf16.mxu0 0
      %7073 = vmatpush1.bf16.xpose.msra.mxu0 0
      %7074 = vmatprep.subr.bf16.mxu0 0
      %7075 = vmatpush1.bf16.xpose.msra.mxu0 0
      %7076 = vmatprep.mubr.bf16.mxu0 0
      %7077 = vmatmul.mubr.bf16.gmra.mrb[0].mxu0 %v7015
      %v7078 = vpop.f32.mrb[0].mxu0
      %v7079 = vadd.f32 0.0, %v7078
      %v7080 = vpop.f32.mrb[0].mxu0
      %v7081 = vpop.f32.mrb[0].mxu0
      %v7082 = vadd.f32 0.0, %v7081
      %v7083 = vpop.f32.mrb[0].mxu0
      %7084 = vmatprep.mubr.bf16.mxu0 0
      %7085 = vmatmul.mubr.bf16.gmra.mrb[0].mxu0 %v7018
      %v7086 = vpop.f32.mrb[0].mxu0
      %v7087 = vadd.f32 0.0, %v7086
      %v7088 = vpop.f32.mrb[0].mxu0
      %v7089 = vpop.f32.mrb[0].mxu0
      %v7090 = vadd.f32 0.0, %v7089
      %v7091 = vpop.f32.mrb[0].mxu0
      %7092 = vmatprep.mubr.bf16.mxu0 0
      %7093 = vmatmul.mubr.bf16.gmra.mrb[0].mxu0 %v7021
      %v7094 = vpop.f32.mrb[0].mxu0
      %v7095 = vadd.f32 0.0, %v7094
      %v7096 = vpop.f32.mrb[0].mxu0
      %v7097 = vpop.f32.mrb[0].mxu0
      %v7098 = vadd.f32 0.0, %v7097
      %v7099 = vpop.f32.mrb[0].mxu0
      %7100 = vmatprep.mubr.bf16.mxu0 0
      %7101 = vmatmul.mubr.bf16.gmra.mrb[0].mxu0 %v7024
      %v7102 = vpop.f32.mrb[0].mxu0
      %v7103 = vadd.f32 0.0, %v7102
      %v7104 = vpop.f32.mrb[0].mxu0
      %v7105 = vpop.f32.mrb[0].mxu0
      %v7106 = vadd.f32 0.0, %v7105
      %v7107 = vpop.f32.mrb[0].mxu0
      %7108 = vmatprep.mubr.bf16.mxu0 0
      %7109 = vmatmul.mubr.bf16.gmra.mrb[0].mxu0 %v7027
      %v7110 = vpop.f32.mrb[0].mxu0
      %v7111 = vadd.f32 0.0, %v7110
      %v7112 = vpop.f32.mrb[0].mxu0
      %v7113 = vpop.f32.mrb[0].mxu0
      %v7114 = vpop.f32.mrb[0].mxu0
      %7115 = vdwg.mxu0
      %v7116 = vmul.f32 %v7079, 0.25
      %v7117 = vmul.f32 %v7082, 0.25
      %v7118 = vmul.f32 %v7087, 0.25
      %v7119 = vmul.f32 %v7090, 0.25
      %v7120 = vmul.f32 %v7095, 0.25
      %v7121 = vmul.f32 %v7098, 0.25
      %v7122 = vmul.f32 %v7103, 0.25
      %v7123 = vmul.f32 %v7106, 0.25
      %v7124 = vmul.f32 %v7111, 0.25
      %v7125 = vsel %vm2429, %v7116, -inf
      %7126 = vmax.xlane.f32.xlu0 %v7125
      %v7127 = vpop.xlane.xlu0 %7126
      %v7128 = vsel %vm2429, %v7117, -inf
      %7129 = vmax.xlane.f32.xlu0 %v7128
      %v7130 = vpop.xlane.xlu0 %7129
      %v7131 = vsel %vm2429, %v7118, -inf
      %7132 = vmax.xlane.f32.xlu0 %v7131
      %v7133 = vpop.xlane.xlu0 %7132
      %v7134 = vsel %vm2429, %v7119, -inf
      %7135 = vmax.xlane.f32.xlu0 %v7134
      %v7136 = vpop.xlane.xlu0 %7135
      %v7137 = vsel %vm2429, %v7120, -inf
      %7138 = vmax.xlane.f32.xlu0 %v7137
      %v7139 = vpop.xlane.xlu0 %7138
      %v7140 = vsel %vm2429, %v7121, -inf
      %7141 = vmax.xlane.f32.xlu0 %v7140
      %v7142 = vpop.xlane.xlu0 %7141
      %v7143 = vsel %vm2429, %v7122, -inf
      %7144 = vmax.xlane.f32.xlu0 %v7143
      %v7145 = vpop.xlane.xlu0 %7144
      %v7146 = vsel %vm2429, %v7123, -inf
      %7147 = vmax.xlane.f32.xlu0 %v7146
      %v7148 = vpop.xlane.xlu0 %7147
      %v7149 = vsel %vm2429, %v7124, -inf
      %7150 = vmax.xlane.f32.xlu0 %v7149
      %v7151 = vpop.xlane.xlu0 %7150
      %v7152 = vsub.f32 %v7116, %v7127
      %v7153 = vsub.f32 %v7117, %v7130
      %v7154 = vsub.f32 %v7118, %v7133
      %v7155 = vsub.f32 %v7119, %v7136
      %v7156 = vsub.f32 %v7120, %v7139
      %v7157 = vsub.f32 %v7121, %v7142
      %v7158 = vsub.f32 %v7122, %v7145
      %v7159 = vsub.f32 %v7123, %v7148
      %v7160 = vsub.f32 %v7124, %v7151
      %v7161 = vmul.f32 %v7152, 1.442695
      %v7162 = vpow.pop %v7161
      %v7163 = vmul.f32 %v7153, 1.442695
      %v7164 = vpow.pop %v7163
      %v7165 = vmul.f32 %v7154, 1.442695
      %v7166 = vpow.pop %v7165
      %v7167 = vmul.f32 %v7155, 1.442695
      %v7168 = vpow.pop %v7167
      %v7169 = vmul.f32 %v7156, 1.442695
      %v7170 = vpow.pop %v7169
      %v7171 = vmul.f32 %v7157, 1.442695
      %v7172 = vpow.pop %v7171
      %v7173 = vmul.f32 %v7158, 1.442695
      %v7174 = vpow.pop %v7173
      %v7175 = vmul.f32 %v7159, 1.442695
      %v7176 = vpow.pop %v7175
      %v7177 = vmul.f32 %v7160, 1.442695
      %v7178 = vpow.pop %v7177
      %v7179 = vsel %vm2429, %v7162, 0.0
      %7180 = vadd.xlane.f32.xlu0 %v7179
      %v7181 = vpop.xlane.xlu0 %7180
      %v7182 = vsel %vm2429, %v7164, 0.0
      %7183 = vadd.xlane.f32.xlu0 %v7182
      %v7184 = vpop.xlane.xlu0 %7183
      %v7185 = vsel %vm2429, %v7166, 0.0
      %7186 = vadd.xlane.f32.xlu0 %v7185
      %v7187 = vpop.xlane.xlu0 %7186
      %v7188 = vsel %vm2429, %v7168, 0.0
      %7189 = vadd.xlane.f32.xlu0 %v7188
      %v7190 = vpop.xlane.xlu0 %7189
      %v7191 = vsel %vm2429, %v7170, 0.0
      %7192 = vadd.xlane.f32.xlu0 %v7191
      %v7193 = vpop.xlane.xlu0 %7192
      %v7194 = vsel %vm2429, %v7172, 0.0
      %7195 = vadd.xlane.f32.xlu0 %v7194
      %v7196 = vpop.xlane.xlu0 %7195
      %v7197 = vsel %vm2429, %v7174, 0.0
      %7198 = vadd.xlane.f32.xlu0 %v7197
      %v7199 = vpop.xlane.xlu0 %7198
      %v7200 = vsel %vm2429, %v7176, 0.0
      %7201 = vadd.xlane.f32.xlu0 %v7200
      %v7202 = vpop.xlane.xlu0 %7201
      %v7203 = vsel %vm2429, %v7178, 0.0
      %7204 = vadd.xlane.f32.xlu0 %v7203
      %v7205 = vpop.xlane.xlu0 %7204
      %v7206 = vrcp.pop %v7181
      %v7207 = vrcp.pop %v7184
      %v7208 = vrcp.pop %v7187
      %v7209 = vrcp.pop %v7190
      %v7210 = vrcp.pop %v7193
      %v7211 = vrcp.pop %v7196
      %v7212 = vrcp.pop %v7199
      %v7213 = vrcp.pop %v7202
      %v7214 = vrcp.pop %v7205
      %v7215 = vmul.f32 %v7162, %v7206
      %v7216 = vmul.f32 %v7164, %v7207
      %v7217 = vmul.f32 %v7166, %v7208
      %v7218 = vmul.f32 %v7168, %v7209
      %v7219 = vmul.f32 %v7170, %v7210
      %v7220 = vmul.f32 %v7172, %v7211
      %v7221 = vmul.f32 %v7174, %v7212
      %v7222 = vmul.f32 %v7176, %v7213
      %v7223 = vmul.f32 %v7178, %v7214
      %v7224 = vpack.c.bf16 %v7216, %v7215
      %v7225 = vpack.c.bf16 %v7218, %v7217
      %v7226 = vpack.c.bf16 %v7220, %v7219
      %v7227 = vpack.c.bf16 %v7222, %v7221
      %v7228 = vpack.c.bf16 %v7223, %v7223
      %v7229 = vpack.c.bf16 %v6834, %v6833
      %v7230 = vpack.c.bf16 %v6836, %v6835
      %v7231 = vpack.c.bf16 %v6838, %v6837
      %v7232 = vpack.c.bf16 %v6840, %v6839
      %v7233 = vpack.c.bf16 %v6841, %v6841
      %v7235 = vsel %vm2429, %v7224, 0
      %v7238 = vsel %vm2429, %v7225, 0
      %v7241 = vsel %vm2429, %v7226, 0
      %v7244 = vsel %vm2429, %v7227, 0
      %v7247 = vsel %vm2429, %v7228, 0
      %v7250 = vsel %vm2973, %v7233, 0
      %7252 = vmatprep.subr.bf16.mxu0 0
      %7253 = vmatpush1.bf16.msra.mxu0 %v7229
      %7254 = vmatprep.subr.bf16.mxu0 0
      %7255 = vmatpush1.bf16.msra.mxu0 %v7230
      %7256 = vmatprep.subr.bf16.mxu0 0
      %7257 = vmatpush1.bf16.msra.mxu0 %v7231
      %7258 = vmatprep.subr.bf16.mxu0 0
      %7259 = vmatpush1.bf16.msra.mxu0 %v7232
      %7260 = vmatprep.subr.bf16.mxu0 0
      %7261 = vmatpush1.bf16.msra.mxu0 %v7250
      %7262 = vmatprep.subr.bf16.mxu0 0
      %7263 = vmatpush1.bf16.msra.mxu0 0
      %7264 = vmatprep.subr.bf16.mxu0 0
      %7265 = vmatpush1.bf16.msra.mxu0 0
      %7266 = vmatprep.subr.bf16.mxu0 0
      %7267 = vmatpush1.bf16.msra.mxu0 0
      %7268 = vmatprep.subr.bf16.mxu0 0
      %7269 = vmatpush1.bf16.msra.mxu0 0
      %7270 = vmatprep.subr.bf16.mxu0 0
      %7271 = vmatpush1.bf16.msra.mxu0 0
      %7272 = vmatprep.subr.bf16.mxu0 0
      %7273 = vmatpush1.bf16.msra.mxu0 0
      %7274 = vmatprep.subr.bf16.mxu0 0
      %7275 = vmatpush1.bf16.msra.mxu0 0
      %7276 = vmatprep.subr.bf16.mxu0 0
      %7277 = vmatpush1.bf16.msra.mxu0 0
      %7278 = vmatprep.subr.bf16.mxu0 0
      %7279 = vmatpush1.bf16.msra.mxu0 0
      %7280 = vmatprep.subr.bf16.mxu0 0
      %7281 = vmatpush1.bf16.msra.mxu0 0
      %7282 = vmatprep.subr.bf16.mxu0 0
      %7283 = vmatpush1.bf16.msra.mxu0 0
      %7284 = vmatprep.mubr.bf16.mxu0 0
      %7285 = vmatmul.mubr.bf16.gmra.mrb[0].mxu0 %v7235
      %v7286 = vpop.f32.mrb[0].mxu0
      %v7287 = vadd.f32 0.0, %v7286
      %v7288 = vpop.f32.mrb[0].mxu0
      %v7289 = vpop.f32.mrb[0].mxu0
      %v7290 = vadd.f32 0.0, %v7289
      %v7291 = vpop.f32.mrb[0].mxu0
      %7292 = vmatprep.mubr.bf16.mxu0 0
      %7293 = vmatmul.mubr.bf16.gmra.mrb[0].mxu0 %v7238
      %v7294 = vpop.f32.mrb[0].mxu0
      %v7295 = vadd.f32 0.0, %v7294
      %v7296 = vpop.f32.mrb[0].mxu0
      %v7297 = vpop.f32.mrb[0].mxu0
      %v7298 = vadd.f32 0.0, %v7297
      %v7299 = vpop.f32.mrb[0].mxu0
      %7300 = vmatprep.mubr.bf16.mxu0 0
      %7301 = vmatmul.mubr.bf16.gmra.mrb[0].mxu0 %v7241
      %v7302 = vpop.f32.mrb[0].mxu0
      %v7303 = vadd.f32 0.0, %v7302
      %v7304 = vpop.f32.mrb[0].mxu0
      %v7305 = vpop.f32.mrb[0].mxu0
      %v7306 = vadd.f32 0.0, %v7305
      %v7307 = vpop.f32.mrb[0].mxu0
      %7308 = vmatprep.mubr.bf16.mxu0 0
      %7309 = vmatmul.mubr.bf16.gmra.mrb[0].mxu0 %v7244
      %v7310 = vpop.f32.mrb[0].mxu0
      %v7311 = vadd.f32 0.0, %v7310
      %v7312 = vpop.f32.mrb[0].mxu0
      %v7313 = vpop.f32.mrb[0].mxu0
      %v7314 = vadd.f32 0.0, %v7313
      %v7315 = vpop.f32.mrb[0].mxu0
      %7316 = vmatprep.mubr.bf16.mxu0 0
      %7317 = vmatmul.mubr.bf16.gmra.mrb[0].mxu0 %v7247
      %v7318 = vpop.f32.mrb[0].mxu0
      %v7319 = vpop.f32.mrb[0].mxu0
      %v7320 = vpop.f32.mrb[0].mxu0
      %v7321 = vpop.f32.mrb[0].mxu0
      %7322 = vdwg.mxu0
      %v7324 = vsel %vm2429, %v6805, 0
      %v7327 = vsel %vm2429, %v6806, 0
      %v7330 = vsel %vm2429, %v6807, 0
      %v7333 = vsel %vm2429, %v6808, 0
      %v7336 = vsel %vm2429, %v6809, 0
      %v7339 = vsel %vm2973, %v6814, 0
      %7341 = vmatprep.subr.bf16.mxu0 0
      %7342 = vmatpush1.bf16.msra.mxu0 %v6810
      %7343 = vmatprep.subr.bf16.mxu0 0
      %7344 = vmatpush1.bf16.msra.mxu0 %v6811
      %7345 = vmatprep.subr.bf16.mxu0 0
      %7346 = vmatpush1.bf16.msra.mxu0 %v6812
      %7347 = vmatprep.subr.bf16.mxu0 0
      %7348 = vmatpush1.bf16.msra.mxu0 %v6813
      %7349 = vmatprep.subr.bf16.mxu0 0
      %7350 = vmatpush1.bf16.msra.mxu0 %v7339
      %7351 = vmatprep.subr.bf16.mxu0 0
      %7352 = vmatpush1.bf16.msra.mxu0 0
      %7353 = vmatprep.subr.bf16.mxu0 0
      %7354 = vmatpush1.bf16.msra.mxu0 0
      %7355 = vmatprep.subr.bf16.mxu0 0
      %7356 = vmatpush1.bf16.msra.mxu0 0
      %7357 = vmatprep.subr.bf16.mxu0 0
      %7358 = vmatpush1.bf16.msra.mxu0 0
      %7359 = vmatprep.subr.bf16.mxu0 0
      %7360 = vmatpush1.bf16.msra.mxu0 0
      %7361 = vmatprep.subr.bf16.mxu0 0
      %7362 = vmatpush1.bf16.msra.mxu0 0
      %7363 = vmatprep.subr.bf16.mxu0 0
      %7364 = vmatpush1.bf16.msra.mxu0 0
      %7365 = vmatprep.subr.bf16.mxu0 0
      %7366 = vmatpush1.bf16.msra.mxu0 0
      %7367 = vmatprep.subr.bf16.mxu0 0
      %7368 = vmatpush1.bf16.msra.mxu0 0
      %7369 = vmatprep.subr.bf16.mxu0 0
      %7370 = vmatpush1.bf16.msra.mxu0 0
      %7371 = vmatprep.subr.bf16.mxu0 0
      %7372 = vmatpush1.bf16.msra.mxu0 0
      %7373 = vmatprep.mubr.bf16.mxu0 0
      %7374 = vmatmul.mubr.bf16.gmra.mrb[0].mxu0 %v7324
      %v7375 = vpop.f32.mrb[0].mxu0
      %v7376 = vadd.f32 %v7287, %v7375
      %v7377 = vpop.f32.mrb[0].mxu0
      %v7378 = vpop.f32.mrb[0].mxu0
      %v7379 = vadd.f32 %v7290, %v7378
      %v7380 = vpop.f32.mrb[0].mxu0
      %7381 = vmatprep.mubr.bf16.mxu0 0
      %7382 = vmatmul.mubr.bf16.gmra.mrb[0].mxu0 %v7327
      %v7383 = vpop.f32.mrb[0].mxu0
      %v7384 = vadd.f32 %v7295, %v7383
      %v7385 = vpop.f32.mrb[0].mxu0
      %v7386 = vpop.f32.mrb[0].mxu0
      %v7387 = vadd.f32 %v7298, %v7386
      %v7388 = vpop.f32.mrb[0].mxu0
      %7389 = vmatprep.mubr.bf16.mxu0 0
      %7390 = vmatmul.mubr.bf16.gmra.mrb[0].mxu0 %v7330
      %v7391 = vpop.f32.mrb[0].mxu0
      %v7392 = vadd.f32 %v7303, %v7391
      %v7393 = vpop.f32.mrb[0].mxu0
      %v7394 = vpop.f32.mrb[0].mxu0
      %v7395 = vadd.f32 %v7306, %v7394
      %v7396 = vpop.f32.mrb[0].mxu0
      %7397 = vmatprep.mubr.bf16.mxu0 0
      %7398 = vmatmul.mubr.bf16.gmra.mrb[0].mxu0 %v7333
      %v7399 = vpop.f32.mrb[0].mxu0
      %v7400 = vadd.f32 %v7311, %v7399
      %v7401 = vpop.f32.mrb[0].mxu0
      %v7402 = vpop.f32.mrb[0].mxu0
      %v7403 = vadd.f32 %v7314, %v7402
      %v7404 = vpop.f32.mrb[0].mxu0
      %7405 = vmatprep.mubr.bf16.mxu0 0
      %7406 = vmatmul.mubr.bf16.gmra.mrb[0].mxu0 %v7336
      %v7407 = vpop.f32.mrb[0].mxu0
      %v7408 = vpop.f32.mrb[0].mxu0
      %v7409 = vpop.f32.mrb[0].mxu0
      %v7410 = vpop.f32.mrb[0].mxu0
      %7411 = vdwg.mxu0
      %v7412 = vmul.f32 %v6093, %v906
      %v7413 = vmul.f32 %v6097, %v906
      %v7414 = vmul.f32 %v6103, %v906
      %v7415 = vmul.f32 %v6107, %v906
      %v7416 = vmul.f32 %v6113, %v906
      %v7417 = vmul.f32 %v6117, %v906
      %v7418 = vmul.f32 %v6123, %v906
      %v7419 = vmul.f32 %v6127, %v906
      %v7420 = vmul.f32 %v6334, %v906
      %v7421 = vmul.f32 %v6095, %v906
      %v7422 = vmul.f32 %v6099, %v906
      %v7423 = vmul.f32 %v6105, %v906
      %v7424 = vmul.f32 %v6109, %v906
      %v7425 = vmul.f32 %v6115, %v906
      %v7426 = vmul.f32 %v6119, %v906
      %v7427 = vmul.f32 %v6125, %v906
      %v7428 = vmul.f32 %v6129, %v906
      %v7429 = vmul.f32 %v6336, %v906
      %v7430 = vmul.f32 %v6166, %v906
      %v7431 = vmul.f32 %v6169, %v906
      %v7432 = vmul.f32 %v6174, %v906
      %v7433 = vmul.f32 %v6177, %v906
      %v7434 = vmul.f32 %v6182, %v906
      %v7435 = vmul.f32 %v6185, %v906
      %v7436 = vmul.f32 %v6190, %v906
      %v7437 = vmul.f32 %v6193, %v906
      %v7438 = vmul.f32 %v6375, %v906
      %v7439 = vmul.f32 %v7412, %v7412
      %v7440 = vmul.f32 %v7413, %v7413
      %v7441 = vmul.f32 %v7414, %v7414
      %v7442 = vmul.f32 %v7415, %v7415
      %v7443 = vmul.f32 %v7416, %v7416
      %v7444 = vmul.f32 %v7417, %v7417
      %v7445 = vmul.f32 %v7418, %v7418
      %v7446 = vmul.f32 %v7419, %v7419
      %v7447 = vmul.f32 %v7420, %v7420
      %v7448 = vsel %vm1265, %v7439, 0.0
      %7449 = vadd.xlane.f32.xlu0 %v7448
      %v7450 = vpop.xlane.xlu0 %7449
      %v7451 = vsel %vm1265, %v7440, 0.0
      %7452 = vadd.xlane.f32.xlu0 %v7451
      %v7453 = vpop.xlane.xlu0 %7452
      %v7454 = vsel %vm1265, %v7441, 0.0
      %7455 = vadd.xlane.f32.xlu0 %v7454
      %v7456 = vpop.xlane.xlu0 %7455
      %v7457 = vsel %vm1265, %v7442, 0.0
      %7458 = vadd.xlane.f32.xlu0 %v7457
      %v7459 = vpop.xlane.xlu0 %7458
      %v7460 = vsel %vm1265, %v7443, 0.0
      %7461 = vadd.xlane.f32.xlu0 %v7460
      %v7462 = vpop.xlane.xlu0 %7461
      %v7463 = vsel %vm1265, %v7444, 0.0
      %7464 = vadd.xlane.f32.xlu0 %v7463
      %v7465 = vpop.xlane.xlu0 %7464
      %v7466 = vsel %vm1265, %v7445, 0.0
      %7467 = vadd.xlane.f32.xlu0 %v7466
      %v7468 = vpop.xlane.xlu0 %7467
      %v7469 = vsel %vm1265, %v7446, 0.0
      %7470 = vadd.xlane.f32.xlu0 %v7469
      %v7471 = vpop.xlane.xlu0 %7470
      %v7472 = vsel %vm1265, %v7447, 0.0
      %7473 = vadd.xlane.f32.xlu0 %v7472
      %v7474 = vpop.xlane.xlu0 %7473
      %v7475 = vmul.f32 %v7450, 0.0625
      %v7476 = vmul.f32 %v7453, 0.0625
      %v7477 = vmul.f32 %v7456, 0.0625
      %v7478 = vmul.f32 %v7459, 0.0625
      %v7479 = vmul.f32 %v7462, 0.0625
      %v7480 = vmul.f32 %v7465, 0.0625
      %v7481 = vmul.f32 %v7468, 0.0625
      %v7482 = vmul.f32 %v7471, 0.0625
      %v7483 = vmul.f32 %v7474, 0.0625
      %v7484 = vadd.f32 %v7475, 1e-06
      %v7485 = vadd.f32 %v7476, 1e-06
      %v7486 = vadd.f32 %v7477, 1e-06
      %v7487 = vadd.f32 %v7478, 1e-06
      %v7488 = vadd.f32 %v7479, 1e-06
      %v7489 = vadd.f32 %v7480, 1e-06
      %v7490 = vadd.f32 %v7481, 1e-06
      %v7491 = vadd.f32 %v7482, 1e-06
      %v7492 = vadd.f32 %v7483, 1e-06
      %v7493 = vrsqrt.pop %v7484
      %v7494 = vrsqrt.pop %v7485
      %v7495 = vrsqrt.pop %v7486
      %v7496 = vrsqrt.pop %v7487
      %v7497 = vrsqrt.pop %v7488
      %v7498 = vrsqrt.pop %v7489
      %v7499 = vrsqrt.pop %v7490
      %v7500 = vrsqrt.pop %v7491
      %v7501 = vrsqrt.pop %v7492
      %v7502 = vmul.f32 %v7412, %v7493
      %v7503 = vmul.f32 %v7413, %v7494
      %v7504 = vmul.f32 %v7414, %v7495
      %v7505 = vmul.f32 %v7415, %v7496
      %v7506 = vmul.f32 %v7416, %v7497
      %v7507 = vmul.f32 %v7417, %v7498
      %v7508 = vmul.f32 %v7418, %v7499
      %v7509 = vmul.f32 %v7419, %v7500
      %v7510 = vmul.f32 %v7420, %v7501
      %v7511 = vmul.f32 %v7502, %v6487
      %v7512 = vmul.f32 %v7503, %v6487
      %v7513 = vmul.f32 %v7504, %v6487
      %v7514 = vmul.f32 %v7505, %v6487
      %v7515 = vmul.f32 %v7506, %v6487
      %v7516 = vmul.f32 %v7507, %v6487
      %v7517 = vmul.f32 %v7508, %v6487
      %v7518 = vmul.f32 %v7509, %v6487
      %v7519 = vmul.f32 %v7510, %v6487
      %v7520 = vmul.f32 %v7421, %v7421
      %v7521 = vmul.f32 %v7422, %v7422
      %v7522 = vmul.f32 %v7423, %v7423
      %v7523 = vmul.f32 %v7424, %v7424
      %v7524 = vmul.f32 %v7425, %v7425
      %v7525 = vmul.f32 %v7426, %v7426
      %v7526 = vmul.f32 %v7427, %v7427
      %v7527 = vmul.f32 %v7428, %v7428
      %v7528 = vmul.f32 %v7429, %v7429
      %v7529 = vsel %vm1265, %v7520, 0.0
      %7530 = vadd.xlane.f32.xlu0 %v7529
      %v7531 = vpop.xlane.xlu0 %7530
      %v7532 = vsel %vm1265, %v7521, 0.0
      %7533 = vadd.xlane.f32.xlu0 %v7532
      %v7534 = vpop.xlane.xlu0 %7533
      %v7535 = vsel %vm1265, %v7522, 0.0
      %7536 = vadd.xlane.f32.xlu0 %v7535
      %v7537 = vpop.xlane.xlu0 %7536
      %v7538 = vsel %vm1265, %v7523, 0.0
      %7539 = vadd.xlane.f32.xlu0 %v7538
      %v7540 = vpop.xlane.xlu0 %7539
      %v7541 = vsel %vm1265, %v7524, 0.0
      %7542 = vadd.xlane.f32.xlu0 %v7541
      %v7543 = vpop.xlane.xlu0 %7542
      %v7544 = vsel %vm1265, %v7525, 0.0
      %7545 = vadd.xlane.f32.xlu0 %v7544
      %v7546 = vpop.xlane.xlu0 %7545
      %v7547 = vsel %vm1265, %v7526, 0.0
      %7548 = vadd.xlane.f32.xlu0 %v7547
      %v7549 = vpop.xlane.xlu0 %7548
      %v7550 = vsel %vm1265, %v7527, 0.0
      %7551 = vadd.xlane.f32.xlu0 %v7550
      %v7552 = vpop.xlane.xlu0 %7551
      %v7553 = vsel %vm1265, %v7528, 0.0
      %7554 = vadd.xlane.f32.xlu0 %v7553
      %v7555 = vpop.xlane.xlu0 %7554
      %v7556 = vmul.f32 %v7531, 0.0625
      %v7557 = vmul.f32 %v7534, 0.0625
      %v7558 = vmul.f32 %v7537, 0.0625
      %v7559 = vmul.f32 %v7540, 0.0625
      %v7560 = vmul.f32 %v7543, 0.0625
      %v7561 = vmul.f32 %v7546, 0.0625
      %v7562 = vmul.f32 %v7549, 0.0625
      %v7563 = vmul.f32 %v7552, 0.0625
      %v7564 = vmul.f32 %v7555, 0.0625
      %v7565 = vadd.f32 %v7556, 1e-06
      %v7566 = vadd.f32 %v7557, 1e-06
      %v7567 = vadd.f32 %v7558, 1e-06
      %v7568 = vadd.f32 %v7559, 1e-06
      %v7569 = vadd.f32 %v7560, 1e-06
      %v7570 = vadd.f32 %v7561, 1e-06
      %v7571 = vadd.f32 %v7562, 1e-06
      %v7572 = vadd.f32 %v7563, 1e-06
      %v7573 = vadd.f32 %v7564, 1e-06
      %v7574 = vrsqrt.pop %v7565
      %v7575 = vrsqrt.pop %v7566
      %v7576 = vrsqrt.pop %v7567
      %v7577 = vrsqrt.pop %v7568
      %v7578 = vrsqrt.pop %v7569
      %v7579 = vrsqrt.pop %v7570
      %v7580 = vrsqrt.pop %v7571
      %v7581 = vrsqrt.pop %v7572
      %v7582 = vrsqrt.pop %v7573
      %v7583 = vmul.f32 %v7421, %v7574
      %v7584 = vmul.f32 %v7422, %v7575
      %v7585 = vmul.f32 %v7423, %v7576
      %v7586 = vmul.f32 %v7424, %v7577
      %v7587 = vmul.f32 %v7425, %v7578
      %v7588 = vmul.f32 %v7426, %v7579
      %v7589 = vmul.f32 %v7427, %v7580
      %v7590 = vmul.f32 %v7428, %v7581
      %v7591 = vmul.f32 %v7429, %v7582
      %v7592 = vmul.f32 %v7583, %v6574
      %v7593 = vmul.f32 %v7584, %v6574
      %v7594 = vmul.f32 %v7585, %v6574
      %v7595 = vmul.f32 %v7586, %v6574
      %v7596 = vmul.f32 %v7587, %v6574
      %v7597 = vmul.f32 %v7588, %v6574
      %v7598 = vmul.f32 %v7589, %v6574
      %v7599 = vmul.f32 %v7590, %v6574
      %v7600 = vmul.f32 %v7591, %v6574
      %v7601 = vpack.c.bf16 %v7512, %v7511
      %v7602 = vpack.c.bf16 %v7514, %v7513
      %v7603 = vpack.c.bf16 %v7516, %v7515
      %v7604 = vpack.c.bf16 %v7518, %v7517
      %v7605 = vpack.c.bf16 %v7519, %v7519
      %v7606 = vpack.c.bf16 %v7593, %v7592
      %v7607 = vpack.c.bf16 %v7595, %v7594
      %v7608 = vpack.c.bf16 %v7597, %v7596
      %v7609 = vpack.c.bf16 %v7599, %v7598
      %v7610 = vpack.c.bf16 %v7600, %v7600
      %v7612 = vsel %vm1265, %v7601, 0
      %v7615 = vsel %vm1265, %v7602, 0
      %v7618 = vsel %vm1265, %v7603, 0
      %v7621 = vsel %vm1265, %v7604, 0
      %v7624 = vsel %vm1265, %v7605, 0
      %v7627 = vsel %vm1265, %v7606, 0
      %v7630 = vsel %vm1265, %v7607, 0
      %v7633 = vsel %vm1265, %v7608, 0
      %v7636 = vsel %vm1265, %v7609, 0
      %v7639 = vsel %vm1265, %v7610, 0
      %7641 = vmatprep.subr.bf16.mxu0 0
      %7642 = vmatpush1.bf16.xpose.msra.mxu0 %v7627
      %7643 = vmatprep.subr.bf16.mxu0 0
      %7644 = vmatpush1.bf16.xpose.msra.mxu0 %v7630
      %7645 = vmatprep.subr.bf16.mxu0 0
      %7646 = vmatpush1.bf16.xpose.msra.mxu0 %v7633
      %7647 = vmatprep.subr.bf16.mxu0 0
      %7648 = vmatpush1.bf16.xpose.msra.mxu0 %v7636
      %7649 = vmatprep.subr.bf16.mxu0 0
      %7650 = vmatpush1.bf16.xpose.msra.mxu0 %v7639
      %7651 = vmatprep.subr.bf16.mxu0 0
      %7652 = vmatpush1.bf16.xpose.msra.mxu0 0
      %7653 = vmatprep.subr.bf16.mxu0 0
      %7654 = vmatpush1.bf16.xpose.msra.mxu0 0
      %7655 = vmatprep.subr.bf16.mxu0 0
      %7656 = vmatpush1.bf16.xpose.msra.mxu0 0
      %7657 = vmatprep.subr.bf16.mxu0 0
      %7658 = vmatpush1.bf16.xpose.msra.mxu0 0
      %7659 = vmatprep.subr.bf16.mxu0 0
      %7660 = vmatpush1.bf16.xpose.msra.mxu0 0
      %7661 = vmatprep.subr.bf16.mxu0 0
      %7662 = vmatpush1.bf16.xpose.msra.mxu0 0
      %7663 = vmatprep.subr.bf16.mxu0 0
      %7664 = vmatpush1.bf16.xpose.msra.mxu0 0
      %7665 = vmatprep.subr.bf16.mxu0 0
      %7666 = vmatpush1.bf16.xpose.msra.mxu0 0
      %7667 = vmatprep.subr.bf16.mxu0 0
      %7668 = vmatpush1.bf16.xpose.msra.mxu0 0
      %7669 = vmatprep.subr.bf16.mxu0 0
      %7670 = vmatpush1.bf16.xpose.msra.mxu0 0
      %7671 = vmatprep.subr.bf16.mxu0 0
      %7672 = vmatpush1.bf16.xpose.msra.mxu0 0
      %7673 = vmatprep.mubr.bf16.mxu0 0
      %7674 = vmatmul.mubr.bf16.gmra.mrb[0].mxu0 %v7612
      %v7675 = vpop.f32.mrb[0].mxu0
      %v7676 = vadd.f32 0.0, %v7675
      %v7677 = vpop.f32.mrb[0].mxu0
      %v7678 = vpop.f32.mrb[0].mxu0
      %v7679 = vadd.f32 0.0, %v7678
      %v7680 = vpop.f32.mrb[0].mxu0
      %7681 = vmatprep.mubr.bf16.mxu0 0
      %7682 = vmatmul.mubr.bf16.gmra.mrb[0].mxu0 %v7615
      %v7683 = vpop.f32.mrb[0].mxu0
      %v7684 = vadd.f32 0.0, %v7683
      %v7685 = vpop.f32.mrb[0].mxu0
      %v7686 = vpop.f32.mrb[0].mxu0
      %v7687 = vadd.f32 0.0, %v7686
      %v7688 = vpop.f32.mrb[0].mxu0
      %7689 = vmatprep.mubr.bf16.mxu0 0
      %7690 = vmatmul.mubr.bf16.gmra.mrb[0].mxu0 %v7618
      %v7691 = vpop.f32.mrb[0].mxu0
      %v7692 = vadd.f32 0.0, %v7691
      %v7693 = vpop.f32.mrb[0].mxu0
      %v7694 = vpop.f32.mrb[0].mxu0
      %v7695 = vadd.f32 0.0, %v7694
      %v7696 = vpop.f32.mrb[0].mxu0
      %7697 = vmatprep.mubr.bf16.mxu0 0
      %7698 = vmatmul.mubr.bf16.gmra.mrb[0].mxu0 %v7621
      %v7699 = vpop.f32.mrb[0].mxu0
      %v7700 = vadd.f32 0.0, %v7699
      %v7701 = vpop.f32.mrb[0].mxu0
      %v7702 = vpop.f32.mrb[0].mxu0
      %v7703 = vadd.f32 0.0, %v7702
      %v7704 = vpop.f32.mrb[0].mxu0
      %7705 = vmatprep.mubr.bf16.mxu0 0
      %7706 = vmatmul.mubr.bf16.gmra.mrb[0].mxu0 %v7624
      %v7707 = vpop.f32.mrb[0].mxu0
      %v7708 = vadd.f32 0.0, %v7707
      %v7709 = vpop.f32.mrb[0].mxu0
      %v7710 = vpop.f32.mrb[0].mxu0
      %v7711 = vpop.f32.mrb[0].mxu0
      %7712 = vdwg.mxu0
      %v7713 = vmul.f32 %v7676, 0.25
      %v7714 = vmul.f32 %v7679, 0.25
      %v7715 = vmul.f32 %v7684, 0.25
      %v7716 = vmul.f32 %v7687, 0.25
      %v7717 = vmul.f32 %v7692, 0.25
      %v7718 = vmul.f32 %v7695, 0.25
      %v7719 = vmul.f32 %v7700, 0.25
      %v7720 = vmul.f32 %v7703, 0.25
      %v7721 = vmul.f32 %v7708, 0.25
      %v7722 = vsel %vm2429, %v7713, -inf
      %7723 = vmax.xlane.f32.xlu0 %v7722
      %v7724 = vpop.xlane.xlu0 %7723
      %v7725 = vsel %vm2429, %v7714, -inf
      %7726 = vmax.xlane.f32.xlu0 %v7725
      %v7727 = vpop.xlane.xlu0 %7726
      %v7728 = vsel %vm2429, %v7715, -inf
      %7729 = vmax.xlane.f32.xlu0 %v7728
      %v7730 = vpop.xlane.xlu0 %7729
      %v7731 = vsel %vm2429, %v7716, -inf
      %7732 = vmax.xlane.f32.xlu0 %v7731
      %v7733 = vpop.xlane.xlu0 %7732
      %v7734 = vsel %vm2429, %v7717, -inf
      %7735 = vmax.xlane.f32.xlu0 %v7734
      %v7736 = vpop.xlane.xlu0 %7735
      %v7737 = vsel %vm2429, %v7718, -inf
      %7738 = vmax.xlane.f32.xlu0 %v7737
      %v7739 = vpop.xlane.xlu0 %7738
      %v7740 = vsel %vm2429, %v7719, -inf
      %7741 = vmax.xlane.f32.xlu0 %v7740
      %v7742 = vpop.xlane.xlu0 %7741
      %v7743 = vsel %vm2429, %v7720, -inf
      %7744 = vmax.xlane.f32.xlu0 %v7743
      %v7745 = vpop.xlane.xlu0 %7744
      %v7746 = vsel %vm2429, %v7721, -inf
      %7747 = vmax.xlane.f32.xlu0 %v7746
      %v7748 = vpop.xlane.xlu0 %7747
      %v7749 = vsub.f32 %v7713, %v7724
      %v7750 = vsub.f32 %v7714, %v7727
      %v7751 = vsub.f32 %v7715, %v7730
      %v7752 = vsub.f32 %v7716, %v7733
      %v7753 = vsub.f32 %v7717, %v7736
      %v7754 = vsub.f32 %v7718, %v7739
      %v7755 = vsub.f32 %v7719, %v7742
      %v7756 = vsub.f32 %v7720, %v7745
      %v7757 = vsub.f32 %v7721, %v7748
      %v7758 = vmul.f32 %v7749, 1.442695
      %v7759 = vpow.pop %v7758
      %v7760 = vmul.f32 %v7750, 1.442695
      %v7761 = vpow.pop %v7760
      %v7762 = vmul.f32 %v7751, 1.442695
      %v7763 = vpow.pop %v7762
      %v7764 = vmul.f32 %v7752, 1.442695
      %v7765 = vpow.pop %v7764
      %v7766 = vmul.f32 %v7753, 1.442695
      %v7767 = vpow.pop %v7766
      %v7768 = vmul.f32 %v7754, 1.442695
      %v7769 = vpow.pop %v7768
      %v7770 = vmul.f32 %v7755, 1.442695
      %v7771 = vpow.pop %v7770
      %v7772 = vmul.f32 %v7756, 1.442695
      %v7773 = vpow.pop %v7772
      %v7774 = vmul.f32 %v7757, 1.442695
      %v7775 = vpow.pop %v7774
      %v7776 = vsel %vm2429, %v7759, 0.0
      %7777 = vadd.xlane.f32.xlu0 %v7776
      %v7778 = vpop.xlane.xlu0 %7777
      %v7779 = vsel %vm2429, %v7761, 0.0
      %7780 = vadd.xlane.f32.xlu0 %v7779
      %v7781 = vpop.xlane.xlu0 %7780
      %v7782 = vsel %vm2429, %v7763, 0.0
      %7783 = vadd.xlane.f32.xlu0 %v7782
      %v7784 = vpop.xlane.xlu0 %7783
      %v7785 = vsel %vm2429, %v7765, 0.0
      %7786 = vadd.xlane.f32.xlu0 %v7785
      %v7787 = vpop.xlane.xlu0 %7786
      %v7788 = vsel %vm2429, %v7767, 0.0
      %7789 = vadd.xlane.f32.xlu0 %v7788
      %v7790 = vpop.xlane.xlu0 %7789
      %v7791 = vsel %vm2429, %v7769, 0.0
      %7792 = vadd.xlane.f32.xlu0 %v7791
      %v7793 = vpop.xlane.xlu0 %7792
      %v7794 = vsel %vm2429, %v7771, 0.0
      %7795 = vadd.xlane.f32.xlu0 %v7794
      %v7796 = vpop.xlane.xlu0 %7795
      %v7797 = vsel %vm2429, %v7773, 0.0
      %7798 = vadd.xlane.f32.xlu0 %v7797
      %v7799 = vpop.xlane.xlu0 %7798
      %v7800 = vsel %vm2429, %v7775, 0.0
      %7801 = vadd.xlane.f32.xlu0 %v7800
      %v7802 = vpop.xlane.xlu0 %7801
      %v7803 = vrcp.pop %v7778
      %v7804 = vrcp.pop %v7781
      %v7805 = vrcp.pop %v7784
      %v7806 = vrcp.pop %v7787
      %v7807 = vrcp.pop %v7790
      %v7808 = vrcp.pop %v7793
      %v7809 = vrcp.pop %v7796
      %v7810 = vrcp.pop %v7799
      %v7811 = vrcp.pop %v7802
      %v7812 = vmul.f32 %v7759, %v7803
      %v7813 = vmul.f32 %v7761, %v7804
      %v7814 = vmul.f32 %v7763, %v7805
      %v7815 = vmul.f32 %v7765, %v7806
      %v7816 = vmul.f32 %v7767, %v7807
      %v7817 = vmul.f32 %v7769, %v7808
      %v7818 = vmul.f32 %v7771, %v7809
      %v7819 = vmul.f32 %v7773, %v7810
      %v7820 = vmul.f32 %v7775, %v7811
      %v7821 = vpack.c.bf16 %v7813, %v7812
      %v7822 = vpack.c.bf16 %v7815, %v7814
      %v7823 = vpack.c.bf16 %v7817, %v7816
      %v7824 = vpack.c.bf16 %v7819, %v7818
      %v7825 = vpack.c.bf16 %v7820, %v7820
      %v7826 = vpack.c.bf16 %v7431, %v7430
      %v7827 = vpack.c.bf16 %v7433, %v7432
      %v7828 = vpack.c.bf16 %v7435, %v7434
      %v7829 = vpack.c.bf16 %v7437, %v7436
      %v7830 = vpack.c.bf16 %v7438, %v7438
      %v7832 = vsel %vm2429, %v7821, 0
      %v7835 = vsel %vm2429, %v7822, 0
      %v7838 = vsel %vm2429, %v7823, 0
      %v7841 = vsel %vm2429, %v7824, 0
      %v7844 = vsel %vm2429, %v7825, 0
      %v7847 = vsel %vm2973, %v7830, 0
      %7849 = vmatprep.subr.bf16.mxu0 0
      %7850 = vmatpush1.bf16.msra.mxu0 %v7826
      %7851 = vmatprep.subr.bf16.mxu0 0
      %7852 = vmatpush1.bf16.msra.mxu0 %v7827
      %7853 = vmatprep.subr.bf16.mxu0 0
      %7854 = vmatpush1.bf16.msra.mxu0 %v7828
      %7855 = vmatprep.subr.bf16.mxu0 0
      %7856 = vmatpush1.bf16.msra.mxu0 %v7829
      %7857 = vmatprep.subr.bf16.mxu0 0
      %7858 = vmatpush1.bf16.msra.mxu0 %v7847
      %7859 = vmatprep.subr.bf16.mxu0 0
      %7860 = vmatpush1.bf16.msra.mxu0 0
      %7861 = vmatprep.subr.bf16.mxu0 0
      %7862 = vmatpush1.bf16.msra.mxu0 0
      %7863 = vmatprep.subr.bf16.mxu0 0
      %7864 = vmatpush1.bf16.msra.mxu0 0
      %7865 = vmatprep.subr.bf16.mxu0 0
      %7866 = vmatpush1.bf16.msra.mxu0 0
      %7867 = vmatprep.subr.bf16.mxu0 0
      %7868 = vmatpush1.bf16.msra.mxu0 0
      %7869 = vmatprep.subr.bf16.mxu0 0
      %7870 = vmatpush1.bf16.msra.mxu0 0
      %7871 = vmatprep.subr.bf16.mxu0 0
      %7872 = vmatpush1.bf16.msra.mxu0 0
      %7873 = vmatprep.subr.bf16.mxu0 0
      %7874 = vmatpush1.bf16.msra.mxu0 0
      %7875 = vmatprep.subr.bf16.mxu0 0
      %7876 = vmatpush1.bf16.msra.mxu0 0
      %7877 = vmatprep.subr.bf16.mxu0 0
      %7878 = vmatpush1.bf16.msra.mxu0 0
      %7879 = vmatprep.subr.bf16.mxu0 0
      %7880 = vmatpush1.bf16.msra.mxu0 0
      %7881 = vmatprep.mubr.bf16.mxu0 0
      %7882 = vmatmul.mubr.bf16.gmra.mrb[0].mxu0 %v7832
      %v7883 = vpop.f32.mrb[0].mxu0
      %v7884 = vadd.f32 0.0, %v7883
      %v7885 = vpop.f32.mrb[0].mxu0
      %v7886 = vpop.f32.mrb[0].mxu0
      %v7887 = vadd.f32 0.0, %v7886
      %v7888 = vpop.f32.mrb[0].mxu0
      %7889 = vmatprep.mubr.bf16.mxu0 0
      %7890 = vmatmul.mubr.bf16.gmra.mrb[0].mxu0 %v7835
      %v7891 = vpop.f32.mrb[0].mxu0
      %v7892 = vadd.f32 0.0, %v7891
      %v7893 = vpop.f32.mrb[0].mxu0
      %v7894 = vpop.f32.mrb[0].mxu0
      %v7895 = vadd.f32 0.0, %v7894
      %v7896 = vpop.f32.mrb[0].mxu0
      %7897 = vmatprep.mubr.bf16.mxu0 0
      %7898 = vmatmul.mubr.bf16.gmra.mrb[0].mxu0 %v7838
      %v7899 = vpop.f32.mrb[0].mxu0
      %v7900 = vadd.f32 0.0, %v7899
      %v7901 = vpop.f32.mrb[0].mxu0
      %v7902 = vpop.f32.mrb[0].mxu0
      %v7903 = vadd.f32 0.0, %v7902
      %v7904 = vpop.f32.mrb[0].mxu0
      %7905 = vmatprep.mubr.bf16.mxu0 0
      %7906 = vmatmul.mubr.bf16.gmra.mrb[0].mxu0 %v7841
      %v7907 = vpop.f32.mrb[0].mxu0
      %v7908 = vadd.f32 0.0, %v7907
      %v7909 = vpop.f32.mrb[0].mxu0
      %v7910 = vpop.f32.mrb[0].mxu0
      %v7911 = vadd.f32 0.0, %v7910
      %v7912 = vpop.f32.mrb[0].mxu0
      %7913 = vmatprep.mubr.bf16.mxu0 0
      %7914 = vmatmul.mubr.bf16.gmra.mrb[0].mxu0 %v7844
      %v7915 = vpop.f32.mrb[0].mxu0
      %v7916 = vpop.f32.mrb[0].mxu0
      %v7917 = vpop.f32.mrb[0].mxu0
      %v7918 = vpop.f32.mrb[0].mxu0
      %7919 = vdwg.mxu0
      %v7920 = vadd.f32 %v7376, %v7884
      %v7921 = vadd.f32 %v7379, %v7887
      %v7922 = vadd.f32 %v7384, %v7892
      %v7923 = vadd.f32 %v7387, %v7895
      %v7924 = vadd.f32 %v7392, %v7900
      %v7925 = vadd.f32 %v7395, %v7903
      %v7926 = vadd.f32 %v7400, %v7908
      %v7927 = vadd.f32 %v7403, %v7911
      %v7928 = vmul.f32 %v6093, %v911
      %v7929 = vmul.f32 %v6097, %v911
      %v7930 = vmul.f32 %v6103, %v911
      %v7931 = vmul.f32 %v6107, %v911
      %v7932 = vmul.f32 %v6113, %v911
      %v7933 = vmul.f32 %v6117, %v911
      %v7934 = vmul.f32 %v6123, %v911
      %v7935 = vmul.f32 %v6127, %v911
      %v7936 = vmul.f32 %v6334, %v911
      %v7937 = vmul.f32 %v6095, %v911
      %v7938 = vmul.f32 %v6099, %v911
      %v7939 = vmul.f32 %v6105, %v911
      %v7940 = vmul.f32 %v6109, %v911
      %v7941 = vmul.f32 %v6115, %v911
      %v7942 = vmul.f32 %v6119, %v911
      %v7943 = vmul.f32 %v6125, %v911
      %v7944 = vmul.f32 %v6129, %v911
      %v7945 = vmul.f32 %v6336, %v911
      %v7946 = vmul.f32 %v6166, %v911
      %v7947 = vmul.f32 %v6169, %v911
      %v7948 = vmul.f32 %v6174, %v911
      %v7949 = vmul.f32 %v6177, %v911
      %v7950 = vmul.f32 %v6182, %v911
      %v7951 = vmul.f32 %v6185, %v911
      %v7952 = vmul.f32 %v6190, %v911
      %v7953 = vmul.f32 %v6193, %v911
      %v7954 = vmul.f32 %v6375, %v911
      %v7955 = vmul.f32 %v7928, %v7928
      %v7956 = vmul.f32 %v7929, %v7929
      %v7957 = vmul.f32 %v7930, %v7930
      %v7958 = vmul.f32 %v7931, %v7931
      %v7959 = vmul.f32 %v7932, %v7932
      %v7960 = vmul.f32 %v7933, %v7933
      %v7961 = vmul.f32 %v7934, %v7934
      %v7962 = vmul.f32 %v7935, %v7935
      %v7963 = vmul.f32 %v7936, %v7936
      %v7964 = vsel %vm1265, %v7955, 0.0
      %7965 = vadd.xlane.f32.xlu0 %v7964
      %v7966 = vpop.xlane.xlu0 %7965
      %v7967 = vsel %vm1265, %v7956, 0.0
      %7968 = vadd.xlane.f32.xlu0 %v7967
      %v7969 = vpop.xlane.xlu0 %7968
      %v7970 = vsel %vm1265, %v7957, 0.0
      %7971 = vadd.xlane.f32.xlu0 %v7970
      %v7972 = vpop.xlane.xlu0 %7971
      %v7973 = vsel %vm1265, %v7958, 0.0
      %7974 = vadd.xlane.f32.xlu0 %v7973
      %v7975 = vpop.xlane.xlu0 %7974
      %v7976 = vsel %vm1265, %v7959, 0.0
      %7977 = vadd.xlane.f32.xlu0 %v7976
      %v7978 = vpop.xlane.xlu0 %7977
      %v7979 = vsel %vm1265, %v7960, 0.0
      %7980 = vadd.xlane.f32.xlu0 %v7979
      %v7981 = vpop.xlane.xlu0 %7980
      %v7982 = vsel %vm1265, %v7961, 0.0
      %7983 = vadd.xlane.f32.xlu0 %v7982
      %v7984 = vpop.xlane.xlu0 %7983
      %v7985 = vsel %vm1265, %v7962, 0.0
      %7986 = vadd.xlane.f32.xlu0 %v7985
      %v7987 = vpop.xlane.xlu0 %7986
      %v7988 = vsel %vm1265, %v7963, 0.0
      %7989 = vadd.xlane.f32.xlu0 %v7988
      %v7990 = vpop.xlane.xlu0 %7989
      %v7991 = vmul.f32 %v7966, 0.0625
      %v7992 = vmul.f32 %v7969, 0.0625
      %v7993 = vmul.f32 %v7972, 0.0625
      %v7994 = vmul.f32 %v7975, 0.0625
      %v7995 = vmul.f32 %v7978, 0.0625
      %v7996 = vmul.f32 %v7981, 0.0625
      %v7997 = vmul.f32 %v7984, 0.0625
      %v7998 = vmul.f32 %v7987, 0.0625
      %v7999 = vmul.f32 %v7990, 0.0625
      %v8000 = vadd.f32 %v7991, 1e-06
      %v8001 = vadd.f32 %v7992, 1e-06
      %v8002 = vadd.f32 %v7993, 1e-06
      %v8003 = vadd.f32 %v7994, 1e-06
      %v8004 = vadd.f32 %v7995, 1e-06
      %v8005 = vadd.f32 %v7996, 1e-06
      %v8006 = vadd.f32 %v7997, 1e-06
      %v8007 = vadd.f32 %v7998, 1e-06
      %v8008 = vadd.f32 %v7999, 1e-06
      %v8009 = vrsqrt.pop %v8000
      %v8010 = vrsqrt.pop %v8001
      %v8011 = vrsqrt.pop %v8002
      %v8012 = vrsqrt.pop %v8003
      %v8013 = vrsqrt.pop %v8004
      %v8014 = vrsqrt.pop %v8005
      %v8015 = vrsqrt.pop %v8006
      %v8016 = vrsqrt.pop %v8007
      %v8017 = vrsqrt.pop %v8008
      %v8018 = vmul.f32 %v7928, %v8009
      %v8019 = vmul.f32 %v7929, %v8010
      %v8020 = vmul.f32 %v7930, %v8011
      %v8021 = vmul.f32 %v7931, %v8012
      %v8022 = vmul.f32 %v7932, %v8013
      %v8023 = vmul.f32 %v7933, %v8014
      %v8024 = vmul.f32 %v7934, %v8015
      %v8025 = vmul.f32 %v7935, %v8016
      %v8026 = vmul.f32 %v7936, %v8017
      %v8027 = vmul.f32 %v8018, %v6487
      %v8028 = vmul.f32 %v8019, %v6487
      %v8029 = vmul.f32 %v8020, %v6487
      %v8030 = vmul.f32 %v8021, %v6487
      %v8031 = vmul.f32 %v8022, %v6487
      %v8032 = vmul.f32 %v8023, %v6487
      %v8033 = vmul.f32 %v8024, %v6487
      %v8034 = vmul.f32 %v8025, %v6487
      %v8035 = vmul.f32 %v8026, %v6487
      %v8036 = vmul.f32 %v7937, %v7937
      %v8037 = vmul.f32 %v7938, %v7938
      %v8038 = vmul.f32 %v7939, %v7939
      %v8039 = vmul.f32 %v7940, %v7940
      %v8040 = vmul.f32 %v7941, %v7941
      %v8041 = vmul.f32 %v7942, %v7942
      %v8042 = vmul.f32 %v7943, %v7943
      %v8043 = vmul.f32 %v7944, %v7944
      %v8044 = vmul.f32 %v7945, %v7945
      %v8045 = vsel %vm1265, %v8036, 0.0
      %8046 = vadd.xlane.f32.xlu0 %v8045
      %v8047 = vpop.xlane.xlu0 %8046
      %v8048 = vsel %vm1265, %v8037, 0.0
      %8049 = vadd.xlane.f32.xlu0 %v8048
      %v8050 = vpop.xlane.xlu0 %8049
      %v8051 = vsel %vm1265, %v8038, 0.0
      %8052 = vadd.xlane.f32.xlu0 %v8051
      %v8053 = vpop.xlane.xlu0 %8052
      %v8054 = vsel %vm1265, %v8039, 0.0
      %8055 = vadd.xlane.f32.xlu0 %v8054
      %v8056 = vpop.xlane.xlu0 %8055
      %v8057 = vsel %vm1265, %v8040, 0.0
      %8058 = vadd.xlane.f32.xlu0 %v8057
      %v8059 = vpop.xlane.xlu0 %8058
      %v8060 = vsel %vm1265, %v8041, 0.0
      %8061 = vadd.xlane.f32.xlu0 %v8060
      %v8062 = vpop.xlane.xlu0 %8061
      %v8063 = vsel %vm1265, %v8042, 0.0
      %8064 = vadd.xlane.f32.xlu0 %v8063
      %v8065 = vpop.xlane.xlu0 %8064
      %v8066 = vsel %vm1265, %v8043, 0.0
      %8067 = vadd.xlane.f32.xlu0 %v8066
      %v8068 = vpop.xlane.xlu0 %8067
      %v8069 = vsel %vm1265, %v8044, 0.0
      %8070 = vadd.xlane.f32.xlu0 %v8069
      %v8071 = vpop.xlane.xlu0 %8070
      %v8072 = vmul.f32 %v8047, 0.0625
      %v8073 = vmul.f32 %v8050, 0.0625
      %v8074 = vmul.f32 %v8053, 0.0625
      %v8075 = vmul.f32 %v8056, 0.0625
      %v8076 = vmul.f32 %v8059, 0.0625
      %v8077 = vmul.f32 %v8062, 0.0625
      %v8078 = vmul.f32 %v8065, 0.0625
      %v8079 = vmul.f32 %v8068, 0.0625
      %v8080 = vmul.f32 %v8071, 0.0625
      %v8081 = vadd.f32 %v8072, 1e-06
      %v8082 = vadd.f32 %v8073, 1e-06
      %v8083 = vadd.f32 %v8074, 1e-06
      %v8084 = vadd.f32 %v8075, 1e-06
      %v8085 = vadd.f32 %v8076, 1e-06
      %v8086 = vadd.f32 %v8077, 1e-06
      %v8087 = vadd.f32 %v8078, 1e-06
      %v8088 = vadd.f32 %v8079, 1e-06
      %v8089 = vadd.f32 %v8080, 1e-06
      %v8090 = vrsqrt.pop %v8081
      %v8091 = vrsqrt.pop %v8082
      %v8092 = vrsqrt.pop %v8083
      %v8093 = vrsqrt.pop %v8084
      %v8094 = vrsqrt.pop %v8085
      %v8095 = vrsqrt.pop %v8086
      %v8096 = vrsqrt.pop %v8087
      %v8097 = vrsqrt.pop %v8088
      %v8098 = vrsqrt.pop %v8089
      %v8099 = vmul.f32 %v7937, %v8090
      %v8100 = vmul.f32 %v7938, %v8091
      %v8101 = vmul.f32 %v7939, %v8092
      %v8102 = vmul.f32 %v7940, %v8093
      %v8103 = vmul.f32 %v7941, %v8094
      %v8104 = vmul.f32 %v7942, %v8095
      %v8105 = vmul.f32 %v7943, %v8096
      %v8106 = vmul.f32 %v7944, %v8097
      %v8107 = vmul.f32 %v7945, %v8098
      %v8108 = vmul.f32 %v8099, %v6574
      %v8109 = vmul.f32 %v8100, %v6574
      %v8110 = vmul.f32 %v8101, %v6574
      %v8111 = vmul.f32 %v8102, %v6574
      %v8112 = vmul.f32 %v8103, %v6574
      %v8113 = vmul.f32 %v8104, %v6574
      %v8114 = vmul.f32 %v8105, %v6574
      %v8115 = vmul.f32 %v8106, %v6574
      %v8116 = vmul.f32 %v8107, %v6574
      %v8117 = vpack.c.bf16 %v8028, %v8027
      %v8118 = vpack.c.bf16 %v8030, %v8029
      %v8119 = vpack.c.bf16 %v8032, %v8031
      %v8120 = vpack.c.bf16 %v8034, %v8033
      %v8121 = vpack.c.bf16 %v8035, %v8035
      %v8122 = vpack.c.bf16 %v8109, %v8108
      %v8123 = vpack.c.bf16 %v8111, %v8110
      %v8124 = vpack.c.bf16 %v8113, %v8112
      %v8125 = vpack.c.bf16 %v8115, %v8114
      %v8126 = vpack.c.bf16 %v8116, %v8116
      %v8128 = vsel %vm1265, %v8117, 0
      %v8131 = vsel %vm1265, %v8118, 0
      %v8134 = vsel %vm1265, %v8119, 0
      %v8137 = vsel %vm1265, %v8120, 0
      %v8140 = vsel %vm1265, %v8121, 0
      %v8143 = vsel %vm1265, %v8122, 0
      %v8146 = vsel %vm1265, %v8123, 0
      %v8149 = vsel %vm1265, %v8124, 0
      %v8152 = vsel %vm1265, %v8125, 0
      %v8155 = vsel %vm1265, %v8126, 0
      %8157 = vmatprep.subr.bf16.mxu0 0
      %8158 = vmatpush1.bf16.xpose.msra.mxu0 %v8143
      %8159 = vmatprep.subr.bf16.mxu0 0
      %8160 = vmatpush1.bf16.xpose.msra.mxu0 %v8146
      %8161 = vmatprep.subr.bf16.mxu0 0
      %8162 = vmatpush1.bf16.xpose.msra.mxu0 %v8149
      %8163 = vmatprep.subr.bf16.mxu0 0
      %8164 = vmatpush1.bf16.xpose.msra.mxu0 %v8152
      %8165 = vmatprep.subr.bf16.mxu0 0
      %8166 = vmatpush1.bf16.xpose.msra.mxu0 %v8155
      %8167 = vmatprep.subr.bf16.mxu0 0
      %8168 = vmatpush1.bf16.xpose.msra.mxu0 0
      %8169 = vmatprep.subr.bf16.mxu0 0
      %8170 = vmatpush1.bf16.xpose.msra.mxu0 0
      %8171 = vmatprep.subr.bf16.mxu0 0
      %8172 = vmatpush1.bf16.xpose.msra.mxu0 0
      %8173 = vmatprep.subr.bf16.mxu0 0
      %8174 = vmatpush1.bf16.xpose.msra.mxu0 0
      %8175 = vmatprep.subr.bf16.mxu0 0
      %8176 = vmatpush1.bf16.xpose.msra.mxu0 0
      %8177 = vmatprep.subr.bf16.mxu0 0
      %8178 = vmatpush1.bf16.xpose.msra.mxu0 0
      %8179 = vmatprep.subr.bf16.mxu0 0
      %8180 = vmatpush1.bf16.xpose.msra.mxu0 0
      %8181 = vmatprep.subr.bf16.mxu0 0
      %8182 = vmatpush1.bf16.xpose.msra.mxu0 0
      %8183 = vmatprep.subr.bf16.mxu0 0
      %8184 = vmatpush1.bf16.xpose.msra.mxu0 0
      %8185 = vmatprep.subr.bf16.mxu0 0
      %8186 = vmatpush1.bf16.xpose.msra.mxu0 0
      %8187 = vmatprep.subr.bf16.mxu0 0
      %8188 = vmatpush1.bf16.xpose.msra.mxu0 0
      %8189 = vmatprep.mubr.bf16.mxu0 0
      %8190 = vmatmul.mubr.bf16.gmra.mrb[0].mxu0 %v8128
      %v8191 = vpop.f32.mrb[0].mxu0
      %v8192 = vadd.f32 0.0, %v8191
      %v8193 = vpop.f32.mrb[0].mxu0
      %v8194 = vpop.f32.mrb[0].mxu0
      %v8195 = vadd.f32 0.0, %v8194
      %v8196 = vpop.f32.mrb[0].mxu0
      %8197 = vmatprep.mubr.bf16.mxu0 0
      %8198 = vmatmul.mubr.bf16.gmra.mrb[0].mxu0 %v8131
      %v8199 = vpop.f32.mrb[0].mxu0
      %v8200 = vadd.f32 0.0, %v8199
      %v8201 = vpop.f32.mrb[0].mxu0
      %v8202 = vpop.f32.mrb[0].mxu0
      %v8203 = vadd.f32 0.0, %v8202
      %v8204 = vpop.f32.mrb[0].mxu0
      %8205 = vmatprep.mubr.bf16.mxu0 0
      %8206 = vmatmul.mubr.bf16.gmra.mrb[0].mxu0 %v8134
      %v8207 = vpop.f32.mrb[0].mxu0
      %v8208 = vadd.f32 0.0, %v8207
      %v8209 = vpop.f32.mrb[0].mxu0
      %v8210 = vpop.f32.mrb[0].mxu0
      %v8211 = vadd.f32 0.0, %v8210
      %v8212 = vpop.f32.mrb[0].mxu0
      %8213 = vmatprep.mubr.bf16.mxu0 0
      %8214 = vmatmul.mubr.bf16.gmra.mrb[0].mxu0 %v8137
      %v8215 = vpop.f32.mrb[0].mxu0
      %v8216 = vadd.f32 0.0, %v8215
      %v8217 = vpop.f32.mrb[0].mxu0
      %v8218 = vpop.f32.mrb[0].mxu0
      %v8219 = vadd.f32 0.0, %v8218
      %v8220 = vpop.f32.mrb[0].mxu0
      %8221 = vmatprep.mubr.bf16.mxu0 0
      %8222 = vmatmul.mubr.bf16.gmra.mrb[0].mxu0 %v8140
      %v8223 = vpop.f32.mrb[0].mxu0
      %v8224 = vadd.f32 0.0, %v8223
      %v8225 = vpop.f32.mrb[0].mxu0
      %v8226 = vpop.f32.mrb[0].mxu0
      %v8227 = vpop.f32.mrb[0].mxu0
      %8228 = vdwg.mxu0
      %v8229 = vmul.f32 %v8192, 0.25
      %v8230 = vmul.f32 %v8195, 0.25
      %v8231 = vmul.f32 %v8200, 0.25
      %v8232 = vmul.f32 %v8203, 0.25
      %v8233 = vmul.f32 %v8208, 0.25
      %v8234 = vmul.f32 %v8211, 0.25
      %v8235 = vmul.f32 %v8216, 0.25
      %v8236 = vmul.f32 %v8219, 0.25
      %v8237 = vmul.f32 %v8224, 0.25
      %v8238 = vsel %vm2429, %v8229, -inf
      %8239 = vmax.xlane.f32.xlu0 %v8238
      %v8240 = vpop.xlane.xlu0 %8239
      %v8241 = vsel %vm2429, %v8230, -inf
      %8242 = vmax.xlane.f32.xlu0 %v8241
      %v8243 = vpop.xlane.xlu0 %8242
      %v8244 = vsel %vm2429, %v8231, -inf
      %8245 = vmax.xlane.f32.xlu0 %v8244
      %v8246 = vpop.xlane.xlu0 %8245
      %v8247 = vsel %vm2429, %v8232, -inf
      %8248 = vmax.xlane.f32.xlu0 %v8247
      %v8249 = vpop.xlane.xlu0 %8248
      %v8250 = vsel %vm2429, %v8233, -inf
      %8251 = vmax.xlane.f32.xlu0 %v8250
      %v8252 = vpop.xlane.xlu0 %8251
      %v8253 = vsel %vm2429, %v8234, -inf
      %8254 = vmax.xlane.f32.xlu0 %v8253
      %v8255 = vpop.xlane.xlu0 %8254
      %v8256 = vsel %vm2429, %v8235, -inf
      %8257 = vmax.xlane.f32.xlu0 %v8256
      %v8258 = vpop.xlane.xlu0 %8257
      %v8259 = vsel %vm2429, %v8236, -inf
      %8260 = vmax.xlane.f32.xlu0 %v8259
      %v8261 = vpop.xlane.xlu0 %8260
      %v8262 = vsel %vm2429, %v8237, -inf
      %8263 = vmax.xlane.f32.xlu0 %v8262
      %v8264 = vpop.xlane.xlu0 %8263
      %v8265 = vsub.f32 %v8229, %v8240
      %v8266 = vsub.f32 %v8230, %v8243
      %v8267 = vsub.f32 %v8231, %v8246
      %v8268 = vsub.f32 %v8232, %v8249
      %v8269 = vsub.f32 %v8233, %v8252
      %v8270 = vsub.f32 %v8234, %v8255
      %v8271 = vsub.f32 %v8235, %v8258
      %v8272 = vsub.f32 %v8236, %v8261
      %v8273 = vsub.f32 %v8237, %v8264
      %v8274 = vmul.f32 %v8265, 1.442695
      %v8275 = vpow.pop %v8274
      %v8276 = vmul.f32 %v8266, 1.442695
      %v8277 = vpow.pop %v8276
      %v8278 = vmul.f32 %v8267, 1.442695
      %v8279 = vpow.pop %v8278
      %v8280 = vmul.f32 %v8268, 1.442695
      %v8281 = vpow.pop %v8280
      %v8282 = vmul.f32 %v8269, 1.442695
      %v8283 = vpow.pop %v8282
      %v8284 = vmul.f32 %v8270, 1.442695
      %v8285 = vpow.pop %v8284
      %v8286 = vmul.f32 %v8271, 1.442695
      %v8287 = vpow.pop %v8286
      %v8288 = vmul.f32 %v8272, 1.442695
      %v8289 = vpow.pop %v8288
      %v8290 = vmul.f32 %v8273, 1.442695
      %v8291 = vpow.pop %v8290
      %v8292 = vsel %vm2429, %v8275, 0.0
      %8293 = vadd.xlane.f32.xlu0 %v8292
      %v8294 = vpop.xlane.xlu0 %8293
      %v8295 = vsel %vm2429, %v8277, 0.0
      %8296 = vadd.xlane.f32.xlu0 %v8295
      %v8297 = vpop.xlane.xlu0 %8296
      %v8298 = vsel %vm2429, %v8279, 0.0
      %8299 = vadd.xlane.f32.xlu0 %v8298
      %v8300 = vpop.xlane.xlu0 %8299
      %v8301 = vsel %vm2429, %v8281, 0.0
      %8302 = vadd.xlane.f32.xlu0 %v8301
      %v8303 = vpop.xlane.xlu0 %8302
      %v8304 = vsel %vm2429, %v8283, 0.0
      %8305 = vadd.xlane.f32.xlu0 %v8304
      %v8306 = vpop.xlane.xlu0 %8305
      %v8307 = vsel %vm2429, %v8285, 0.0
      %8308 = vadd.xlane.f32.xlu0 %v8307
      %v8309 = vpop.xlane.xlu0 %8308
      %v8310 = vsel %vm2429, %v8287, 0.0
      %8311 = vadd.xlane.f32.xlu0 %v8310
      %v8312 = vpop.xlane.xlu0 %8311
      %v8313 = vsel %vm2429, %v8289, 0.0
      %8314 = vadd.xlane.f32.xlu0 %v8313
      %v8315 = vpop.xlane.xlu0 %8314
      %v8316 = vsel %vm2429, %v8291, 0.0
      %8317 = vadd.xlane.f32.xlu0 %v8316
      %v8318 = vpop.xlane.xlu0 %8317
      %v8319 = vrcp.pop %v8294
      %v8320 = vrcp.pop %v8297
      %v8321 = vrcp.pop %v8300
      %v8322 = vrcp.pop %v8303
      %v8323 = vrcp.pop %v8306
      %v8324 = vrcp.pop %v8309
      %v8325 = vrcp.pop %v8312
      %v8326 = vrcp.pop %v8315
      %v8327 = vrcp.pop %v8318
      %v8328 = vmul.f32 %v8275, %v8319
      %v8329 = vmul.f32 %v8277, %v8320
      %v8330 = vmul.f32 %v8279, %v8321
      %v8331 = vmul.f32 %v8281, %v8322
      %v8332 = vmul.f32 %v8283, %v8323
      %v8333 = vmul.f32 %v8285, %v8324
      %v8334 = vmul.f32 %v8287, %v8325
      %v8335 = vmul.f32 %v8289, %v8326
      %v8336 = vmul.f32 %v8291, %v8327
      %v8337 = vpack.c.bf16 %v8329, %v8328
      %v8338 = vpack.c.bf16 %v8331, %v8330
      %v8339 = vpack.c.bf16 %v8333, %v8332
      %v8340 = vpack.c.bf16 %v8335, %v8334
      %v8341 = vpack.c.bf16 %v8336, %v8336
      %v8342 = vpack.c.bf16 %v7947, %v7946
      %v8343 = vpack.c.bf16 %v7949, %v7948
      %v8344 = vpack.c.bf16 %v7951, %v7950
      %v8345 = vpack.c.bf16 %v7953, %v7952
      %v8346 = vpack.c.bf16 %v7954, %v7954
      %v8348 = vsel %vm2429, %v8337, 0
      %v8351 = vsel %vm2429, %v8338, 0
      %v8354 = vsel %vm2429, %v8339, 0
      %v8357 = vsel %vm2429, %v8340, 0
      %v8360 = vsel %vm2429, %v8341, 0
      %v8363 = vsel %vm2973, %v8346, 0
      %8365 = vmatprep.subr.bf16.mxu0 0
      %8366 = vmatpush1.bf16.msra.mxu0 %v8342
      %8367 = vmatprep.subr.bf16.mxu0 0
      %8368 = vmatpush1.bf16.msra.mxu0 %v8343
      %8369 = vmatprep.subr.bf16.mxu0 0
      %8370 = vmatpush1.bf16.msra.mxu0 %v8344
      %8371 = vmatprep.subr.bf16.mxu0 0
      %8372 = vmatpush1.bf16.msra.mxu0 %v8345
      %8373 = vmatprep.subr.bf16.mxu0 0
      %8374 = vmatpush1.bf16.msra.mxu0 %v8363
      %8375 = vmatprep.subr.bf16.mxu0 0
      %8376 = vmatpush1.bf16.msra.mxu0 0
      %8377 = vmatprep.subr.bf16.mxu0 0
      %8378 = vmatpush1.bf16.msra.mxu0 0
      %8379 = vmatprep.subr.bf16.mxu0 0
      %8380 = vmatpush1.bf16.msra.mxu0 0
      %8381 = vmatprep.subr.bf16.mxu0 0
      %8382 = vmatpush1.bf16.msra.mxu0 0
      %8383 = vmatprep.subr.bf16.mxu0 0
      %8384 = vmatpush1.bf16.msra.mxu0 0
      %8385 = vmatprep.subr.bf16.mxu0 0
      %8386 = vmatpush1.bf16.msra.mxu0 0
      %8387 = vmatprep.subr.bf16.mxu0 0
      %8388 = vmatpush1.bf16.msra.mxu0 0
      %8389 = vmatprep.subr.bf16.mxu0 0
      %8390 = vmatpush1.bf16.msra.mxu0 0
      %8391 = vmatprep.subr.bf16.mxu0 0
      %8392 = vmatpush1.bf16.msra.mxu0 0
      %8393 = vmatprep.subr.bf16.mxu0 0
      %8394 = vmatpush1.bf16.msra.mxu0 0
      %8395 = vmatprep.subr.bf16.mxu0 0
      %8396 = vmatpush1.bf16.msra.mxu0 0
      %8397 = vmatprep.mubr.bf16.mxu0 0
      %8398 = vmatmul.mubr.bf16.gmra.mrb[0].mxu0 %v8348
      %v8399 = vpop.f32.mrb[0].mxu0
      %v8400 = vadd.f32 0.0, %v8399
      %v8401 = vpop.f32.mrb[0].mxu0
      %v8402 = vpop.f32.mrb[0].mxu0
      %v8403 = vadd.f32 0.0, %v8402
      %v8404 = vpop.f32.mrb[0].mxu0
      %8405 = vmatprep.mubr.bf16.mxu0 0
      %8406 = vmatmul.mubr.bf16.gmra.mrb[0].mxu0 %v8351
      %v8407 = vpop.f32.mrb[0].mxu0
      %v8408 = vadd.f32 0.0, %v8407
      %v8409 = vpop.f32.mrb[0].mxu0
      %v8410 = vpop.f32.mrb[0].mxu0
      %v8411 = vadd.f32 0.0, %v8410
      %v8412 = vpop.f32.mrb[0].mxu0
      %8413 = vmatprep.mubr.bf16.mxu0 0
      %8414 = vmatmul.mubr.bf16.gmra.mrb[0].mxu0 %v8354
      %v8415 = vpop.f32.mrb[0].mxu0
      %v8416 = vadd.f32 0.0, %v8415
      %v8417 = vpop.f32.mrb[0].mxu0
      %v8418 = vpop.f32.mrb[0].mxu0
      %v8419 = vadd.f32 0.0, %v8418
      %v8420 = vpop.f32.mrb[0].mxu0
      %8421 = vmatprep.mubr.bf16.mxu0 0
      %8422 = vmatmul.mubr.bf16.gmra.mrb[0].mxu0 %v8357
      %v8423 = vpop.f32.mrb[0].mxu0
      %v8424 = vadd.f32 0.0, %v8423
      %v8425 = vpop.f32.mrb[0].mxu0
      %v8426 = vpop.f32.mrb[0].mxu0
      %v8427 = vadd.f32 0.0, %v8426
      %v8428 = vpop.f32.mrb[0].mxu0
      %8429 = vmatprep.mubr.bf16.mxu0 0
      %8430 = vmatmul.mubr.bf16.gmra.mrb[0].mxu0 %v8360
      %v8431 = vpop.f32.mrb[0].mxu0
      %v8432 = vpop.f32.mrb[0].mxu0
      %v8433 = vpop.f32.mrb[0].mxu0
      %v8434 = vpop.f32.mrb[0].mxu0
      %8435 = vdwg.mxu0
      %v8436 = vadd.f32 %v7920, %v8400
      %v8437 = vadd.f32 %v7921, %v8403
      %v8438 = vadd.f32 %v7922, %v8408
      %v8439 = vadd.f32 %v7923, %v8411
      %v8440 = vadd.f32 %v7924, %v8416
      %v8441 = vadd.f32 %v7925, %v8419
      %v8442 = vadd.f32 %v7926, %v8424
      %v8443 = vadd.f32 %v7927, %v8427
      %s8444 = scalar_lea.vmem %s12, 64
      %v8445 = vld [vmem:[%s8444] sm:$0xf]
      %v8446 = vld [vmem:[%s8444 + $0x4] sm:$0xf]
      %v8447 = vld [vmem:[%s8444 + $0x8] sm:$0xf]
      %v8448 = vld [vmem:[%s8444 + $0xc] sm:$0xf]
      %v8449 = vld [vmem:[%s8444 + $0x10] sm:$0xf]
      %v8450 = vld [vmem:[%s8444 + $0x14] sm:$0xf]
      %v8451 = vld [vmem:[%s8444 + $0x18] sm:$0xf]
      %v8452 = vld [vmem:[%s8444 + $0x1c] sm:$0xf]
      %s8453 = scalar_lea.vmem %s13, 2
      %v8454 = vld [vmem:[%s8453] sm:$0x1]
      %v8455 = vpack.c.bf16 %v8437, %v8436
      %v8456 = vpack.c.bf16 %v8439, %v8438
      %v8457 = vpack.c.bf16 %v8441, %v8440
      %v8458 = vpack.c.bf16 %v8443, %v8442
      %v8460 = vlaneseq
      %v8461 = vshrl.u32 %v8460, 7
      %v8462 = vsub.s32 0, %v8461
      %v8463 = vrot.slane %v8454, %v8462
      %v8473 = vunpack.c.l.b16 %v8445
      %v8474 = vunpack.c.l.b16 %v8446
      %v8475 = vunpack.c.l.b16 %v8447
      %v8476 = vunpack.c.l.b16 %v8448
      %v8477 = vunpack.c.l.b16 %v8449
      %v8478 = vunpack.c.l.b16 %v8450
      %v8479 = vunpack.c.l.b16 %v8451
      %v8480 = vunpack.c.l.b16 %v8452
      %v8481 = vpack.c.b16 %v8474, %v8473
      %v8482 = vpack.c.b16 %v8476, %v8475
      %v8483 = vpack.c.b16 %v8478, %v8477
      %v8484 = vpack.c.b16 %v8480, %v8479
      %v8490 = vsel %vm1265, %v8455, 0
      %v8493 = vsel %vm1265, %v8456, 0
      %v8496 = vsel %vm1265, %v8457, 0
      %v8499 = vsel %vm1265, %v8458, 0
      %8501 = vmatprep.subr.bf16.mxu0 0
      %8502 = vmatpush1.bf16.msra.mxu0 %v8481
      %8503 = vmatprep.subr.bf16.mxu0 0
      %8504 = vmatpush1.bf16.msra.mxu0 %v8482
      %8505 = vmatprep.subr.bf16.mxu0 0
      %8506 = vmatpush1.bf16.msra.mxu0 %v8483
      %8507 = vmatprep.subr.bf16.mxu0 0
      %8508 = vmatpush1.bf16.msra.mxu0 %v8484
      %8509 = vmatprep.subr.bf16.mxu0 0
      %8510 = vmatpush1.bf16.msra.mxu0 0
      %8511 = vmatprep.subr.bf16.mxu0 0
      %8512 = vmatpush1.bf16.msra.mxu0 0
      %8513 = vmatprep.subr.bf16.mxu0 0
      %8514 = vmatpush1.bf16.msra.mxu0 0
      %8515 = vmatprep.subr.bf16.mxu0 0
      %8516 = vmatpush1.bf16.msra.mxu0 0
      %8517 = vmatprep.subr.bf16.mxu0 0
      %8518 = vmatpush1.bf16.msra.mxu0 0
      %8519 = vmatprep.subr.bf16.mxu0 0
      %8520 = vmatpush1.bf16.msra.mxu0 0
      %8521 = vmatprep.subr.bf16.mxu0 0
      %8522 = vmatpush1.bf16.msra.mxu0 0
      %8523 = vmatprep.subr.bf16.mxu0 0
      %8524 = vmatpush1.bf16.msra.mxu0 0
      %8525 = vmatprep.subr.bf16.mxu0 0
      %8526 = vmatpush1.bf16.msra.mxu0 0
      %8527 = vmatprep.subr.bf16.mxu0 0
      %8528 = vmatpush1.bf16.msra.mxu0 0
      %8529 = vmatprep.subr.bf16.mxu0 0
      %8530 = vmatpush1.bf16.msra.mxu0 0
      %8531 = vmatprep.subr.bf16.mxu0 0
      %8532 = vmatpush1.bf16.msra.mxu0 0
      %8533 = vmatprep.mubr.bf16.mxu0 0
      %8534 = vmatmul.mubr.bf16.gmra.mrb[0].mxu0 %v8490
      %v8535 = vpop.f32.mrb[0].mxu0
      %v8536 = vadd.f32 %v8463, %v8535
      %v8537 = vpop.f32.mrb[0].mxu0
      %v8538 = vpop.f32.mrb[0].mxu0
      %v8539 = vadd.f32 %v8463, %v8538
      %v8540 = vpop.f32.mrb[0].mxu0
      %8541 = vmatprep.mubr.bf16.mxu0 0
      %8542 = vmatmul.mubr.bf16.gmra.mrb[0].mxu0 %v8493
      %v8543 = vpop.f32.mrb[0].mxu0
      %v8544 = vadd.f32 %v8463, %v8543
      %v8545 = vpop.f32.mrb[0].mxu0
      %v8546 = vpop.f32.mrb[0].mxu0
      %v8547 = vadd.f32 %v8463, %v8546
      %v8548 = vpop.f32.mrb[0].mxu0
      %8549 = vmatprep.mubr.bf16.mxu0 0
      %8550 = vmatmul.mubr.bf16.gmra.mrb[0].mxu0 %v8496
      %v8551 = vpop.f32.mrb[0].mxu0
      %v8552 = vadd.f32 %v8463, %v8551
      %v8553 = vpop.f32.mrb[0].mxu0
      %v8554 = vpop.f32.mrb[0].mxu0
      %v8555 = vadd.f32 %v8463, %v8554
      %v8556 = vpop.f32.mrb[0].mxu0
      %8557 = vmatprep.mubr.bf16.mxu0 0
      %8558 = vmatmul.mubr.bf16.gmra.mrb[0].mxu0 %v8499
      %v8559 = vpop.f32.mrb[0].mxu0
      %v8560 = vadd.f32 %v8463, %v8559
      %v8561 = vpop.f32.mrb[0].mxu0
      %v8562 = vpop.f32.mrb[0].mxu0
      %v8563 = vadd.f32 %v8463, %v8562
      %v8564 = vpop.f32.mrb[0].mxu0
      %8565 = vdwg.mxu0
      %v8566 = vlaneseq
      %v8567 = vshrl.u32 %v8566, 7
      %v8568 = vsub.s32 0, %v8567
      %v8569 = vrot.slane %v5702, %v8568
      %v8570 = vmul.f32 %v8569, %v8536
      %v8571 = vmul.f32 %v8569, %v8539
      %v8572 = vmul.f32 %v8569, %v8544
      %v8573 = vmul.f32 %v8569, %v8547
      %v8574 = vmul.f32 %v8569, %v8552
      %v8575 = vmul.f32 %v8569, %v8555
      %v8576 = vmul.f32 %v8569, %v8560
      %v8577 = vmul.f32 %v8569, %v8563
      %v8578 = vadd.f32 %v5042, %v8570
      %v8579 = vadd.f32 %v5043, %v8571
      %v8580 = vadd.f32 %v5044, %v8572
      %v8581 = vadd.f32 %v5045, %v8573
      %v8582 = vadd.f32 %v5046, %v8574
      %v8583 = vadd.f32 %v5047, %v8575
      %v8584 = vadd.f32 %v5048, %v8576
      %v8585 = vadd.f32 %v5049, %v8577
      %v8586 = vsel %vm1265, %v8578, 0.0
      %8587 = vadd.xlane.f32.xlu0 %v8586
      %v8588 = vpop.xlane.xlu0 %8587
      %v8589 = vsel %vm1265, %v8579, 0.0
      %8590 = vadd.xlane.f32.xlu0 %v8589
      %v8591 = vpop.xlane.xlu0 %8590
      %v8592 = vsel %vm1265, %v8580, 0.0
      %8593 = vadd.xlane.f32.xlu0 %v8592
      %v8594 = vpop.xlane.xlu0 %8593
      %v8595 = vsel %vm1265, %v8581, 0.0
      %8596 = vadd.xlane.f32.xlu0 %v8595
      %v8597 = vpop.xlane.xlu0 %8596
      %v8598 = vsel %vm1265, %v8582, 0.0
      %8599 = vadd.xlane.f32.xlu0 %v8598
      %v8600 = vpop.xlane.xlu0 %8599
      %v8601 = vsel %vm1265, %v8583, 0.0
      %8602 = vadd.xlane.f32.xlu0 %v8601
      %v8603 = vpop.xlane.xlu0 %8602
      %v8604 = vsel %vm1265, %v8584, 0.0
      %8605 = vadd.xlane.f32.xlu0 %v8604
      %v8606 = vpop.xlane.xlu0 %8605
      %v8607 = vsel %vm1265, %v8585, 0.0
      %8608 = vadd.xlane.f32.xlu0 %v8607
      %v8609 = vpop.xlane.xlu0 %8608
      %v8610 = vmul.f32 %v8588, %v1539
      %v8611 = vmul.f32 %v8591, %v1539
      %v8612 = vmul.f32 %v8594, %v1539
      %v8613 = vmul.f32 %v8597, %v1539
      %v8614 = vmul.f32 %v8600, %v1539
      %v8615 = vmul.f32 %v8603, %v1539
      %v8616 = vmul.f32 %v8606, %v1539
      %v8617 = vmul.f32 %v8609, %v1539
      %v8618 = vsub.f32 %v8578, %v8610
      %v8619 = vsub.f32 %v8579, %v8611
      %v8620 = vsub.f32 %v8580, %v8612
      %v8621 = vsub.f32 %v8581, %v8613
      %v8622 = vsub.f32 %v8582, %v8614
      %v8623 = vsub.f32 %v8583, %v8615
      %v8624 = vsub.f32 %v8584, %v8616
      %v8625 = vsub.f32 %v8585, %v8617
      %v8626 = vmul.f32 %v8618, %v8618
      %v8627 = vmul.f32 %v8619, %v8619
      %v8628 = vmul.f32 %v8620, %v8620
      %v8629 = vmul.f32 %v8621, %v8621
      %v8630 = vmul.f32 %v8622, %v8622
      %v8631 = vmul.f32 %v8623, %v8623
      %v8632 = vmul.f32 %v8624, %v8624
      %v8633 = vmul.f32 %v8625, %v8625
      %v8634 = vsel %vm1265, %v8626, 0.0
      %8635 = vadd.xlane.f32.xlu0 %v8634
      %v8636 = vpop.xlane.xlu0 %8635
      %v8637 = vsel %vm1265, %v8627, 0.0
      %8638 = vadd.xlane.f32.xlu0 %v8637
      %v8639 = vpop.xlane.xlu0 %8638
      %v8640 = vsel %vm1265, %v8628, 0.0
      %8641 = vadd.xlane.f32.xlu0 %v8640
      %v8642 = vpop.xlane.xlu0 %8641
      %v8643 = vsel %vm1265, %v8629, 0.0
      %8644 = vadd.xlane.f32.xlu0 %v8643
      %v8645 = vpop.xlane.xlu0 %8644
      %v8646 = vsel %vm1265, %v8630, 0.0
      %8647 = vadd.xlane.f32.xlu0 %v8646
      %v8648 = vpop.xlane.xlu0 %8647
      %v8649 = vsel %vm1265, %v8631, 0.0
      %8650 = vadd.xlane.f32.xlu0 %v8649
      %v8651 = vpop.xlane.xlu0 %8650
      %v8652 = vsel %vm1265, %v8632, 0.0
      %8653 = vadd.xlane.f32.xlu0 %v8652
      %v8654 = vpop.xlane.xlu0 %8653
      %v8655 = vsel %vm1265, %v8633, 0.0
      %8656 = vadd.xlane.f32.xlu0 %v8655
      %v8657 = vpop.xlane.xlu0 %8656
      %v8658 = vmul.f32 %v8636, %v1539
      %v8659 = vmul.f32 %v8639, %v1539
      %v8660 = vmul.f32 %v8642, %v1539
      %v8661 = vmul.f32 %v8645, %v1539
      %v8662 = vmul.f32 %v8648, %v1539
      %v8663 = vmul.f32 %v8651, %v1539
      %v8664 = vmul.f32 %v8654, %v1539
      %v8665 = vmul.f32 %v8657, %v1539
      %v8666 = vadd.f32 %v8658, 1e-06
      %v8667 = vadd.f32 %v8659, 1e-06
      %v8668 = vadd.f32 %v8660, 1e-06
      %v8669 = vadd.f32 %v8661, 1e-06
      %v8670 = vadd.f32 %v8662, 1e-06
      %v8671 = vadd.f32 %v8663, 1e-06
      %v8672 = vadd.f32 %v8664, 1e-06
      %v8673 = vadd.f32 %v8665, 1e-06
      %v8674 = vrsqrt.pop %v8666
      %v8675 = vrsqrt.pop %v8667
      %v8676 = vrsqrt.pop %v8668
      %v8677 = vrsqrt.pop %v8669
      %v8678 = vrsqrt.pop %v8670
      %v8679 = vrsqrt.pop %v8671
      %v8680 = vrsqrt.pop %v8672
      %v8681 = vrsqrt.pop %v8673
      %v8682 = vmul.f32 %v8618, %v8674
      %v8683 = vmul.f32 %v8619, %v8675
      %v8684 = vmul.f32 %v8620, %v8676
      %v8685 = vmul.f32 %v8621, %v8677
      %v8686 = vmul.f32 %v8622, %v8678
      %v8687 = vmul.f32 %v8623, %v8679
      %v8688 = vmul.f32 %v8624, %v8680
      %v8689 = vmul.f32 %v8625, %v8681
      %v8690 = vadd.f32 %v5743, 1.0
      %v8691 = vlaneseq
      %v8692 = vshrl.u32 %v8691, 7
      %v8693 = vsub.s32 0, %v8692
      %v8694 = vrot.slane %v8690, %v8693
      %v8695 = vmul.f32 %v8682, %v8694
      %v8696 = vmul.f32 %v8683, %v8694
      %v8697 = vmul.f32 %v8684, %v8694
      %v8698 = vmul.f32 %v8685, %v8694
      %v8699 = vmul.f32 %v8686, %v8694
      %v8700 = vmul.f32 %v8687, %v8694
      %v8701 = vmul.f32 %v8688, %v8694
      %v8702 = vmul.f32 %v8689, %v8694
      %v8703 = vlaneseq
      %v8704 = vshrl.u32 %v8703, 7
      %v8705 = vsub.s32 0, %v8704
      %v8706 = vrot.slane %v5704, %v8705
      %v8707 = vadd.f32 %v8695, %v8706
      %v8708 = vadd.f32 %v8696, %v8706
      %v8709 = vadd.f32 %v8697, %v8706
      %v8710 = vadd.f32 %v8698, %v8706
      %v8711 = vadd.f32 %v8699, %v8706
      %v8712 = vadd.f32 %v8700, %v8706
      %v8713 = vadd.f32 %v8701, %v8706
      %v8714 = vadd.f32 %v8702, %v8706
      %s8715 = scalar_lea.vmem %s14, 128
      %v8716 = vld [vmem:[%s8715] sm:$0xff]
      %v8717 = vld [vmem:[%s8715 + $0x8] sm:$0xff]
      %v8718 = vld [vmem:[%s8715 + $0x10] sm:$0xff]
      %v8719 = vld [vmem:[%s8715 + $0x18] sm:$0xff]
      %v8720 = vld [vmem:[%s8715 + $0x20] sm:$0xff]
      %v8721 = vld [vmem:[%s8715 + $0x28] sm:$0xff]
      %v8722 = vld [vmem:[%s8715 + $0x30] sm:$0xff]
      %v8723 = vld [vmem:[%s8715 + $0x38] sm:$0xff]
      %s8724 = scalar_lea.vmem %s15, 4
      %v8725 = vld [vmem:[%s8724] sm:$0x3]
      %v8726 = vpack.c.bf16 %v8708, %v8707
      %v8727 = vpack.c.bf16 %v8710, %v8709
      %v8728 = vpack.c.bf16 %v8712, %v8711
      %v8729 = vpack.c.bf16 %v8714, %v8713
      %v8731 = vlaneseq
      %v8732 = vshrl.u32 %v8731, 7
      %v8733 = vsub.s32 0, %v8732
      %v8734 = vrot.slane %v8725, %v8733
      %v8735 = vlaneseq
      %v8736 = vshrl.u32 %v8735, 7
      %v8737 = vsub.s32 1, %v8736
      %v8738 = vrot.slane %v8725, %v8737
      %v8749 = vunpack.c.l.b16 %v8716
      %v8750 = vunpack.c.h.b16 %v8716
      %v8751 = vunpack.c.l.b16 %v8717
      %v8752 = vunpack.c.h.b16 %v8717
      %v8753 = vunpack.c.l.b16 %v8718
      %v8754 = vunpack.c.h.b16 %v8718
      %v8755 = vunpack.c.l.b16 %v8719
      %v8756 = vunpack.c.h.b16 %v8719
      %v8757 = vunpack.c.l.b16 %v8720
      %v8758 = vunpack.c.h.b16 %v8720
      %v8759 = vunpack.c.l.b16 %v8721
      %v8760 = vunpack.c.h.b16 %v8721
      %v8761 = vunpack.c.l.b16 %v8722
      %v8762 = vunpack.c.h.b16 %v8722
      %v8763 = vunpack.c.l.b16 %v8723
      %v8764 = vunpack.c.h.b16 %v8723
      %v8765 = vpack.c.b16 %v8751, %v8749
      %v8766 = vpack.c.b16 %v8752, %v8750
      %v8767 = vpack.c.b16 %v8755, %v8753
      %v8768 = vpack.c.b16 %v8756, %v8754
      %v8769 = vpack.c.b16 %v8759, %v8757
      %v8770 = vpack.c.b16 %v8760, %v8758
      %v8771 = vpack.c.b16 %v8763, %v8761
      %v8772 = vpack.c.b16 %v8764, %v8762
      %v8782 = vsel %vm1265, %v8726, 0
      %v8785 = vsel %vm1265, %v8727, 0
      %v8788 = vsel %vm1265, %v8728, 0
      %v8791 = vsel %vm1265, %v8729, 0
      %8793 = vmatprep.subr.bf16.mxu0 %v8766
      %8794 = vmatpush1.bf16.msra.mxu0 %v8765
      %8795 = vmatprep.subr.bf16.mxu0 %v8768
      %8796 = vmatpush1.bf16.msra.mxu0 %v8767
      %8797 = vmatprep.subr.bf16.mxu0 %v8770
      %8798 = vmatpush1.bf16.msra.mxu0 %v8769
      %8799 = vmatprep.subr.bf16.mxu0 %v8772
      %8800 = vmatpush1.bf16.msra.mxu0 %v8771
      %8801 = vmatprep.subr.bf16.mxu0 0
      %8802 = vmatpush1.bf16.msra.mxu0 0
      %8803 = vmatprep.subr.bf16.mxu0 0
      %8804 = vmatpush1.bf16.msra.mxu0 0
      %8805 = vmatprep.subr.bf16.mxu0 0
      %8806 = vmatpush1.bf16.msra.mxu0 0
      %8807 = vmatprep.subr.bf16.mxu0 0
      %8808 = vmatpush1.bf16.msra.mxu0 0
      %8809 = vmatprep.subr.bf16.mxu0 0
      %8810 = vmatpush1.bf16.msra.mxu0 0
      %8811 = vmatprep.subr.bf16.mxu0 0
      %8812 = vmatpush1.bf16.msra.mxu0 0
      %8813 = vmatprep.subr.bf16.mxu0 0
      %8814 = vmatpush1.bf16.msra.mxu0 0
      %8815 = vmatprep.subr.bf16.mxu0 0
      %8816 = vmatpush1.bf16.msra.mxu0 0
      %8817 = vmatprep.subr.bf16.mxu0 0
      %8818 = vmatpush1.bf16.msra.mxu0 0
      %8819 = vmatprep.subr.bf16.mxu0 0
      %8820 = vmatpush1.bf16.msra.mxu0 0
      %8821 = vmatprep.subr.bf16.mxu0 0
      %8822 = vmatpush1.bf16.msra.mxu0 0
      %8823 = vmatprep.subr.bf16.mxu0 0
      %8824 = vmatpush1.bf16.msra.mxu0 0
      %8825 = vmatprep.mubr.bf16.mxu0 0
      %8826 = vmatmul.mubr.bf16.gmra.mrb[0].mxu0 %v8782
      %v8827 = vpop.f32.mrb[0].mxu0
      %v8828 = vadd.f32 %v8734, %v8827
      %v8829 = vpop.f32.mrb[0].mxu0
      %v8830 = vadd.f32 %v8738, %v8829
      %v8831 = vpop.f32.mrb[0].mxu0
      %v8832 = vadd.f32 %v8734, %v8831
      %v8833 = vpop.f32.mrb[0].mxu0
      %v8834 = vadd.f32 %v8738, %v8833
      %8835 = vmatprep.mubr.bf16.mxu0 0
      %8836 = vmatmul.mubr.bf16.gmra.mrb[0].mxu0 %v8785
      %v8837 = vpop.f32.mrb[0].mxu0
      %v8838 = vadd.f32 %v8734, %v8837
      %v8839 = vpop.f32.mrb[0].mxu0
      %v8840 = vadd.f32 %v8738, %v8839
      %v8841 = vpop.f32.mrb[0].mxu0
      %v8842 = vadd.f32 %v8734, %v8841
      %v8843 = vpop.f32.mrb[0].mxu0
      %v8844 = vadd.f32 %v8738, %v8843
      %8845 = vmatprep.mubr.bf16.mxu0 0
      %8846 = vmatmul.mubr.bf16.gmra.mrb[0].mxu0 %v8788
      %v8847 = vpop.f32.mrb[0].mxu0
      %v8848 = vadd.f32 %v8734, %v8847
      %v8849 = vpop.f32.mrb[0].mxu0
      %v8850 = vadd.f32 %v8738, %v8849
      %v8851 = vpop.f32.mrb[0].mxu0
      %v8852 = vadd.f32 %v8734, %v8851
      %v8853 = vpop.f32.mrb[0].mxu0
      %v8854 = vadd.f32 %v8738, %v8853
      %8855 = vmatprep.mubr.bf16.mxu0 0
      %8856 = vmatmul.mubr.bf16.gmra.mrb[0].mxu0 %v8791
      %v8857 = vpop.f32.mrb[0].mxu0
      %v8858 = vadd.f32 %v8734, %v8857
      %v8859 = vpop.f32.mrb[0].mxu0
      %v8860 = vadd.f32 %v8738, %v8859
      %v8861 = vpop.f32.mrb[0].mxu0
      %v8862 = vadd.f32 %v8734, %v8861
      %v8863 = vpop.f32.mrb[0].mxu0
      %v8864 = vadd.f32 %v8738, %v8863
      %8865 = vdwg.mxu0
      %v8866 = vmul.f32 %v8828, %v8828
      %v8867 = vmul.f32 %v8830, %v8830
      %v8868 = vmul.f32 %v8832, %v8832
      %v8869 = vmul.f32 %v8834, %v8834
      %v8870 = vmul.f32 %v8838, %v8838
      %v8871 = vmul.f32 %v8840, %v8840
      %v8872 = vmul.f32 %v8842, %v8842
      %v8873 = vmul.f32 %v8844, %v8844
      %v8874 = vmul.f32 %v8848, %v8848
      %v8875 = vmul.f32 %v8850, %v8850
      %v8876 = vmul.f32 %v8852, %v8852
      %v8877 = vmul.f32 %v8854, %v8854
      %v8878 = vmul.f32 %v8858, %v8858
      %v8879 = vmul.f32 %v8860, %v8860
      %v8880 = vmul.f32 %v8862, %v8862
      %v8881 = vmul.f32 %v8864, %v8864
      %v8882 = vmul.f32 %v8828, %v8866
      %v8883 = vmul.f32 %v8830, %v8867
      %v8884 = vmul.f32 %v8832, %v8868
      %v8885 = vmul.f32 %v8834, %v8869
      %v8886 = vmul.f32 %v8838, %v8870
      %v8887 = vmul.f32 %v8840, %v8871
      %v8888 = vmul.f32 %v8842, %v8872
      %v8889 = vmul.f32 %v8844, %v8873
      %v8890 = vmul.f32 %v8848, %v8874
      %v8891 = vmul.f32 %v8850, %v8875
      %v8892 = vmul.f32 %v8852, %v8876
      %v8893 = vmul.f32 %v8854, %v8877
      %v8894 = vmul.f32 %v8858, %v8878
      %v8895 = vmul.f32 %v8860, %v8879
      %v8896 = vmul.f32 %v8862, %v8880
      %v8897 = vmul.f32 %v8864, %v8881
      %v8898 = vmul.f32 %v8882, 0.044715
      %v8899 = vmul.f32 %v8883, 0.044715
      %v8900 = vmul.f32 %v8884, 0.044715
      %v8901 = vmul.f32 %v8885, 0.044715
      %v8902 = vmul.f32 %v8886, 0.044715
      %v8903 = vmul.f32 %v8887, 0.044715
      %v8904 = vmul.f32 %v8888, 0.044715
      %v8905 = vmul.f32 %v8889, 0.044715
      %v8906 = vmul.f32 %v8890, 0.044715
      %v8907 = vmul.f32 %v8891, 0.044715
      %v8908 = vmul.f32 %v8892, 0.044715
      %v8909 = vmul.f32 %v8893, 0.044715
      %v8910 = vmul.f32 %v8894, 0.044715
      %v8911 = vmul.f32 %v8895, 0.044715
      %v8912 = vmul.f32 %v8896, 0.044715
      %v8913 = vmul.f32 %v8897, 0.044715
      %v8914 = vadd.f32 %v8828, %v8898
      %v8915 = vadd.f32 %v8830, %v8899
      %v8916 = vadd.f32 %v8832, %v8900
      %v8917 = vadd.f32 %v8834, %v8901
      %v8918 = vadd.f32 %v8838, %v8902
      %v8919 = vadd.f32 %v8840, %v8903
      %v8920 = vadd.f32 %v8842, %v8904
      %v8921 = vadd.f32 %v8844, %v8905
      %v8922 = vadd.f32 %v8848, %v8906
      %v8923 = vadd.f32 %v8850, %v8907
      %v8924 = vadd.f32 %v8852, %v8908
      %v8925 = vadd.f32 %v8854, %v8909
      %v8926 = vadd.f32 %v8858, %v8910
      %v8927 = vadd.f32 %v8860, %v8911
      %v8928 = vadd.f32 %v8862, %v8912
      %v8929 = vadd.f32 %v8864, %v8913
      %v8930 = vmul.f32 %v8914, 0.7978846
      %v8931 = vmul.f32 %v8915, 0.7978846
      %v8932 = vmul.f32 %v8916, 0.7978846
      %v8933 = vmul.f32 %v8917, 0.7978846
      %v8934 = vmul.f32 %v8918, 0.7978846
      %v8935 = vmul.f32 %v8919, 0.7978846
      %v8936 = vmul.f32 %v8920, 0.7978846
      %v8937 = vmul.f32 %v8921, 0.7978846
      %v8938 = vmul.f32 %v8922, 0.7978846
      %v8939 = vmul.f32 %v8923, 0.7978846
      %v8940 = vmul.f32 %v8924, 0.7978846
      %v8941 = vmul.f32 %v8925, 0.7978846
      %v8942 = vmul.f32 %v8926, 0.7978846
      %v8943 = vmul.f32 %v8927, 0.7978846
      %v8944 = vmul.f32 %v8928, 0.7978846
      %v8945 = vmul.f32 %v8929, 0.7978846
      %v8946 = vtanh.pop %v8930
      %v8947 = vtanh.pop %v8931
      %v8948 = vtanh.pop %v8932
      %v8949 = vtanh.pop %v8933
      %v8950 = vtanh.pop %v8934
      %v8951 = vtanh.pop %v8935
      %v8952 = vtanh.pop %v8936
      %v8953 = vtanh.pop %v8937
      %v8954 = vtanh.pop %v8938
      %v8955 = vtanh.pop %v8939
      %v8956 = vtanh.pop %v8940
      %v8957 = vtanh.pop %v8941
      %v8958 = vtanh.pop %v8942
      %v8959 = vtanh.pop %v8943
      %v8960 = vtanh.pop %v8944
      %v8961 = vtanh.pop %v8945
      %v8962 = vadd.f32 %v8946, 1.0
      %v8963 = vadd.f32 %v8947, 1.0
      %v8964 = vadd.f32 %v8948, 1.0
      %v8965 = vadd.f32 %v8949, 1.0
      %v8966 = vadd.f32 %v8950, 1.0
      %v8967 = vadd.f32 %v8951, 1.0
      %v8968 = vadd.f32 %v8952, 1.0
      %v8969 = vadd.f32 %v8953, 1.0
      %v8970 = vadd.f32 %v8954, 1.0
      %v8971 = vadd.f32 %v8955, 1.0
      %v8972 = vadd.f32 %v8956, 1.0
      %v8973 = vadd.f32 %v8957, 1.0
      %v8974 = vadd.f32 %v8958, 1.0
      %v8975 = vadd.f32 %v8959, 1.0
      %v8976 = vadd.f32 %v8960, 1.0
      %v8977 = vadd.f32 %v8961, 1.0
      %v8978 = vmul.f32 %v8962, 0.5
      %v8979 = vmul.f32 %v8963, 0.5
      %v8980 = vmul.f32 %v8964, 0.5
      %v8981 = vmul.f32 %v8965, 0.5
      %v8982 = vmul.f32 %v8966, 0.5
      %v8983 = vmul.f32 %v8967, 0.5
      %v8984 = vmul.f32 %v8968, 0.5
      %v8985 = vmul.f32 %v8969, 0.5
      %v8986 = vmul.f32 %v8970, 0.5
      %v8987 = vmul.f32 %v8971, 0.5
      %v8988 = vmul.f32 %v8972, 0.5
      %v8989 = vmul.f32 %v8973, 0.5
      %v8990 = vmul.f32 %v8974, 0.5
      %v8991 = vmul.f32 %v8975, 0.5
      %v8992 = vmul.f32 %v8976, 0.5
      %v8993 = vmul.f32 %v8977, 0.5
      %v8994 = vmul.f32 %v8828, %v8978
      %v8995 = vmul.f32 %v8830, %v8979
      %v8996 = vmul.f32 %v8832, %v8980
      %v8997 = vmul.f32 %v8834, %v8981
      %v8998 = vmul.f32 %v8838, %v8982
      %v8999 = vmul.f32 %v8840, %v8983
      %v9000 = vmul.f32 %v8842, %v8984
      %v9001 = vmul.f32 %v8844, %v8985
      %v9002 = vmul.f32 %v8848, %v8986
      %v9003 = vmul.f32 %v8850, %v8987
      %v9004 = vmul.f32 %v8852, %v8988
      %v9005 = vmul.f32 %v8854, %v8989
      %v9006 = vmul.f32 %v8858, %v8990
      %v9007 = vmul.f32 %v8860, %v8991
      %v9008 = vmul.f32 %v8862, %v8992
      %v9009 = vmul.f32 %v8864, %v8993
      %s9010 = scalar_lea.vmem %s16, 256
      %v9011 = vld [vmem:[%s9010] sm:$0xf]
      %v9012 = vld [vmem:[%s9010 + $0x4] sm:$0xf]
      %v9013 = vld [vmem:[%s9010 + $0x8] sm:$0xf]
      %v9014 = vld [vmem:[%s9010 + $0xc] sm:$0xf]
      %v9015 = vld [vmem:[%s9010 + $0x10] sm:$0xf]
      %v9016 = vld [vmem:[%s9010 + $0x14] sm:$0xf]
      %v9017 = vld [vmem:[%s9010 + $0x18] sm:$0xf]
      %v9018 = vld [vmem:[%s9010 + $0x1c] sm:$0xf]
      %v9019 = vld [vmem:[%s9010 + $0x20] sm:$0xf]
      %v9020 = vld [vmem:[%s9010 + $0x24] sm:$0xf]
      %v9021 = vld [vmem:[%s9010 + $0x28] sm:$0xf]
      %v9022 = vld [vmem:[%s9010 + $0x2c] sm:$0xf]
      %v9023 = vld [vmem:[%s9010 + $0x30] sm:$0xf]
      %v9024 = vld [vmem:[%s9010 + $0x34] sm:$0xf]
      %v9025 = vld [vmem:[%s9010 + $0x38] sm:$0xf]
      %v9026 = vld [vmem:[%s9010 + $0x3c] sm:$0xf]
      %v9027 = vld [vmem:[%s9010 + $0x40] sm:$0xf]
      %v9028 = vld [vmem:[%s9010 + $0x44] sm:$0xf]
      %v9029 = vld [vmem:[%s9010 + $0x48] sm:$0xf]
      %v9030 = vld [vmem:[%s9010 + $0x4c] sm:$0xf]
      %v9031 = vld [vmem:[%s9010 + $0x50] sm:$0xf]
      %v9032 = vld [vmem:[%s9010 + $0x54] sm:$0xf]
      %v9033 = vld [vmem:[%s9010 + $0x58] sm:$0xf]
      %v9034 = vld [vmem:[%s9010 + $0x5c] sm:$0xf]
      %v9035 = vld [vmem:[%s9010 + $0x60] sm:$0xf]
      %v9036 = vld [vmem:[%s9010 + $0x64] sm:$0xf]
      %v9037 = vld [vmem:[%s9010 + $0x68] sm:$0xf]
      %v9038 = vld [vmem:[%s9010 + $0x6c] sm:$0xf]
      %v9039 = vld [vmem:[%s9010 + $0x70] sm:$0xf]
      %v9040 = vld [vmem:[%s9010 + $0x74] sm:$0xf]
      %v9041 = vld [vmem:[%s9010 + $0x78] sm:$0xf]
      %v9042 = vld [vmem:[%s9010 + $0x7c] sm:$0xf]
      %s9043 = scalar_lea.vmem %s17, 2
      %v9044 = vld [vmem:[%s9043] sm:$0x1]
      %v9045 = vpack.c.bf16 %v8996, %v8994
      %v9046 = vpack.c.bf16 %v8997, %v8995
      %v9047 = vpack.c.bf16 %v9000, %v8998
      %v9048 = vpack.c.bf16 %v9001, %v8999
      %v9049 = vpack.c.bf16 %v9004, %v9002
      %v9050 = vpack.c.bf16 %v9005, %v9003
      %v9051 = vpack.c.bf16 %v9008, %v9006
      %v9052 = vpack.c.bf16 %v9009, %v9007
      %v9054 = vlaneseq
      %v9055 = vshrl.u32 %v9054, 7
      %v9056 = vsub.s32 0, %v9055
      %v9057 = vrot.slane %v9044, %v9056
      %v9091 = vunpack.c.l.b16 %v9011
      %v9092 = vunpack.c.l.b16 %v9012
      %v9093 = vunpack.c.l.b16 %v9013
      %v9094 = vunpack.c.l.b16 %v9014
      %v9095 = vunpack.c.l.b16 %v9015
      %v9096 = vunpack.c.l.b16 %v9016
      %v9097 = vunpack.c.l.b16 %v9017
      %v9098 = vunpack.c.l.b16 %v9018
      %v9099 = vunpack.c.l.b16 %v9019
      %v9100 = vunpack.c.l.b16 %v9020
      %v9101 = vunpack.c.l.b16 %v9021
      %v9102 = vunpack.c.l.b16 %v9022
      %v9103 = vunpack.c.l.b16 %v9023
      %v9104 = vunpack.c.l.b16 %v9024
      %v9105 = vunpack.c.l.b16 %v9025
      %v9106 = vunpack.c.l.b16 %v9026
      %v9107 = vunpack.c.l.b16 %v9027
      %v9108 = vunpack.c.l.b16 %v9028
      %v9109 = vunpack.c.l.b16 %v9029
      %v9110 = vunpack.c.l.b16 %v9030
      %v9111 = vunpack.c.l.b16 %v9031
      %v9112 = vunpack.c.l.b16 %v9032
      %v9113 = vunpack.c.l.b16 %v9033
      %v9114 = vunpack.c.l.b16 %v9034
      %v9115 = vunpack.c.l.b16 %v9035
      %v9116 = vunpack.c.l.b16 %v9036
      %v9117 = vunpack.c.l.b16 %v9037
      %v9118 = vunpack.c.l.b16 %v9038
      %v9119 = vunpack.c.l.b16 %v9039
      %v9120 = vunpack.c.l.b16 %v9040
      %v9121 = vunpack.c.l.b16 %v9041
      %v9122 = vunpack.c.l.b16 %v9042
      %v9123 = vpack.c.b16 %v9092, %v9091
      %v9124 = vpack.c.b16 %v9094, %v9093
      %v9125 = vpack.c.b16 %v9096, %v9095
      %v9126 = vpack.c.b16 %v9098, %v9097
      %v9127 = vpack.c.b16 %v9100, %v9099
      %v9128 = vpack.c.b16 %v9102, %v9101
      %v9129 = vpack.c.b16 %v9104, %v9103
      %v9130 = vpack.c.b16 %v9106, %v9105
      %v9131 = vpack.c.b16 %v9108, %v9107
      %v9132 = vpack.c.b16 %v9110, %v9109
      %v9133 = vpack.c.b16 %v9112, %v9111
      %v9134 = vpack.c.b16 %v9114, %v9113
      %v9135 = vpack.c.b16 %v9116, %v9115
      %v9136 = vpack.c.b16 %v9118, %v9117
      %v9137 = vpack.c.b16 %v9120, %v9119
      %v9138 = vpack.c.b16 %v9122, %v9121
      %9155 = vmatprep.subr.bf16.mxu0 0
      %9156 = vmatpush1.bf16.msra.mxu0 %v9123
      %9157 = vmatprep.subr.bf16.mxu0 0
      %9158 = vmatpush1.bf16.msra.mxu0 %v9124
      %9159 = vmatprep.subr.bf16.mxu0 0
      %9160 = vmatpush1.bf16.msra.mxu0 %v9125
      %9161 = vmatprep.subr.bf16.mxu0 0
      %9162 = vmatpush1.bf16.msra.mxu0 %v9126
      %9163 = vmatprep.subr.bf16.mxu0 0
      %9164 = vmatpush1.bf16.msra.mxu0 %v9127
      %9165 = vmatprep.subr.bf16.mxu0 0
      %9166 = vmatpush1.bf16.msra.mxu0 %v9128
      %9167 = vmatprep.subr.bf16.mxu0 0
      %9168 = vmatpush1.bf16.msra.mxu0 %v9129
      %9169 = vmatprep.subr.bf16.mxu0 0
      %9170 = vmatpush1.bf16.msra.mxu0 %v9130
      %9171 = vmatprep.subr.bf16.mxu0 0
      %9172 = vmatpush1.bf16.msra.mxu0 %v9131
      %9173 = vmatprep.subr.bf16.mxu0 0
      %9174 = vmatpush1.bf16.msra.mxu0 %v9132
      %9175 = vmatprep.subr.bf16.mxu0 0
      %9176 = vmatpush1.bf16.msra.mxu0 %v9133
      %9177 = vmatprep.subr.bf16.mxu0 0
      %9178 = vmatpush1.bf16.msra.mxu0 %v9134
      %9179 = vmatprep.subr.bf16.mxu0 0
      %9180 = vmatpush1.bf16.msra.mxu0 %v9135
      %9181 = vmatprep.subr.bf16.mxu0 0
      %9182 = vmatpush1.bf16.msra.mxu0 %v9136
      %9183 = vmatprep.subr.bf16.mxu0 0
      %9184 = vmatpush1.bf16.msra.mxu0 %v9137
      %9185 = vmatprep.subr.bf16.mxu0 0
      %9186 = vmatpush1.bf16.msra.mxu0 %v9138
      %9187 = vmatprep.mubr.bf16.mxu0 %v9046
      %9188 = vmatmul.mubr.bf16.gmra.mrb[0].mxu0 %v9045
      %v9189 = vpop.f32.mrb[0].mxu0
      %v9190 = vadd.f32 %v9057, %v9189
      %v9191 = vpop.f32.mrb[0].mxu0
      %v9192 = vpop.f32.mrb[0].mxu0
      %v9193 = vadd.f32 %v9057, %v9192
      %v9194 = vpop.f32.mrb[0].mxu0
      %9195 = vmatprep.mubr.bf16.mxu0 %v9048
      %9196 = vmatmul.mubr.bf16.gmra.mrb[0].mxu0 %v9047
      %v9197 = vpop.f32.mrb[0].mxu0
      %v9198 = vadd.f32 %v9057, %v9197
      %v9199 = vpop.f32.mrb[0].mxu0
      %v9200 = vpop.f32.mrb[0].mxu0
      %v9201 = vadd.f32 %v9057, %v9200
      %v9202 = vpop.f32.mrb[0].mxu0
      %9203 = vmatprep.mubr.bf16.mxu0 %v9050
      %9204 = vmatmul.mubr.bf16.gmra.mrb[0].mxu0 %v9049
      %v9205 = vpop.f32.mrb[0].mxu0
      %v9206 = vadd.f32 %v9057, %v9205
      %v9207 = vpop.f32.mrb[0].mxu0
      %v9208 = vpop.f32.mrb[0].mxu0
      %v9209 = vadd.f32 %v9057, %v9208
      %v9210 = vpop.f32.mrb[0].mxu0
      %9211 = vmatprep.mubr.bf16.mxu0 %v9052
      %9212 = vmatmul.mubr.bf16.gmra.mrb[0].mxu0 %v9051
      %v9213 = vpop.f32.mrb[0].mxu0
      %v9214 = vadd.f32 %v9057, %v9213
      %v9215 = vpop.f32.mrb[0].mxu0
      %v9216 = vpop.f32.mrb[0].mxu0
      %v9217 = vadd.f32 %v9057, %v9216
      %v9218 = vpop.f32.mrb[0].mxu0
      %9219 = vdwg.mxu0
      %v9220 = vlaneseq
      %v9221 = vshrl.u32 %v9220, 7
      %v9222 = vsub.s32 0, %v9221
      %v9223 = vrot.slane %v5745, %v9222
      %v9224 = vmul.f32 %v9223, %v9190
      %v9225 = vmul.f32 %v9223, %v9193
      %v9226 = vmul.f32 %v9223, %v9198
      %v9227 = vmul.f32 %v9223, %v9201
      %v9228 = vmul.f32 %v9223, %v9206
      %v9229 = vmul.f32 %v9223, %v9209
      %v9230 = vmul.f32 %v9223, %v9214
      %v9231 = vmul.f32 %v9223, %v9217
      %v9232 = vadd.f32 %v8578, %v9224
      %v9233 = vadd.f32 %v8579, %v9225
      %v9234 = vadd.f32 %v8580, %v9226
      %v9235 = vadd.f32 %v8581, %v9227
      %v9236 = vadd.f32 %v8582, %v9228
      %v9237 = vadd.f32 %v8583, %v9229
      %v9238 = vadd.f32 %v8584, %v9230
      %v9239 = vadd.f32 %v8585, %v9231
      %v9240 = vld [vmem:[%s18] sm:$0xff]
      %v9241 = vld [vmem:[%s18 + $0x8] sm:$0xff]
      %v9242 = vld [vmem:[%s18 + $0x10] sm:$0xff]
      %v9243 = vld [vmem:[%s18 + $0x18] sm:$0xff]
      %v9244 = vld [vmem:[%s18 + $0x20] sm:$0xff]
      %v9245 = vld [vmem:[%s18 + $0x28] sm:$0xff]
      %v9246 = vld [vmem:[%s18 + $0x30] sm:$0xff]
      %v9247 = vld [vmem:[%s18 + $0x38] sm:$0xff]
      %v9248 = vld [vmem:[%s19] sm:$0x3]
      %v9257 = vunpack.c.l.b16 %v9240
      %v9258 = vunpack.c.h.b16 %v9240
      %v9259 = vunpack.c.l.b16 %v9241
      %v9260 = vunpack.c.h.b16 %v9241
      %v9261 = vunpack.c.l.b16 %v9242
      %v9262 = vunpack.c.h.b16 %v9242
      %v9263 = vunpack.c.l.b16 %v9243
      %v9264 = vunpack.c.h.b16 %v9243
      %v9265 = vunpack.c.l.b16 %v9244
      %v9266 = vunpack.c.h.b16 %v9244
      %v9267 = vunpack.c.l.b16 %v9245
      %v9268 = vunpack.c.h.b16 %v9245
      %v9269 = vunpack.c.l.b16 %v9246
      %v9270 = vunpack.c.h.b16 %v9246
      %v9271 = vunpack.c.l.b16 %v9247
      %v9272 = vunpack.c.h.b16 %v9247
      %v9273 = vpack.c.b16 %v9259, %v9257
      %v9274 = vpack.c.b16 %v9260, %v9258
      %v9275 = vpack.c.b16 %v9263, %v9261
      %v9276 = vpack.c.b16 %v9264, %v9262
      %v9277 = vpack.c.b16 %v9267, %v9265
      %v9278 = vpack.c.b16 %v9268, %v9266
      %v9279 = vpack.c.b16 %v9271, %v9269
      %v9280 = vpack.c.b16 %v9272, %v9270
      %v9290 = vlaneseq
      %v9291 = vshrl.u32 %v9290, 7
      %v9292 = vsub.s32 0, %v9291
      %v9293 = vrot.slane %v9248, %v9292
      %v9294 = vlaneseq
      %v9295 = vshrl.u32 %v9294, 7
      %v9296 = vsub.s32 1, %v9295
      %v9297 = vrot.slane %v9248, %v9296
      %9300 = vmatprep.subr.bf16.mxu0 %v9274
      %9301 = vmatpush1.bf16.msra.mxu0 %v9273
      %9302 = vmatprep.subr.bf16.mxu0 %v9276
      %9303 = vmatpush1.bf16.msra.mxu0 %v9275
      %9304 = vmatprep.subr.bf16.mxu0 %v9278
      %9305 = vmatpush1.bf16.msra.mxu0 %v9277
      %9306 = vmatprep.subr.bf16.mxu0 %v9280
      %9307 = vmatpush1.bf16.msra.mxu0 %v9279
      %9308 = vmatprep.subr.bf16.mxu0 0
      %9309 = vmatpush1.bf16.msra.mxu0 0
      %9310 = vmatprep.subr.bf16.mxu0 0
      %9311 = vmatpush1.bf16.msra.mxu0 0
      %9312 = vmatprep.subr.bf16.mxu0 0
      %9313 = vmatpush1.bf16.msra.mxu0 0
      %9314 = vmatprep.subr.bf16.mxu0 0
      %9315 = vmatpush1.bf16.msra.mxu0 0
      %9316 = vmatprep.subr.bf16.mxu0 0
      %9317 = vmatpush1.bf16.msra.mxu0 0
      %9318 = vmatprep.subr.bf16.mxu0 0
      %9319 = vmatpush1.bf16.msra.mxu0 0
      %9320 = vmatprep.subr.bf16.mxu0 0
      %9321 = vmatpush1.bf16.msra.mxu0 0
      %9322 = vmatprep.subr.bf16.mxu0 0
      %9323 = vmatpush1.bf16.msra.mxu0 0
      %9324 = vmatprep.subr.bf16.mxu0 0
      %9325 = vmatpush1.bf16.msra.mxu0 0
      %9326 = vmatprep.subr.bf16.mxu0 0
      %9327 = vmatpush1.bf16.msra.mxu0 0
      %9328 = vmatprep.subr.bf16.mxu0 0
      %9329 = vmatpush1.bf16.msra.mxu0 0
      %9330 = vmatprep.subr.bf16.mxu0 0
      %9331 = vmatpush1.bf16.msra.mxu0 0
      %9332 = vmatprep.mubr.bf16.mxu0 0
      %9333 = vmatmul.mubr.bf16.gmra.mrb[0].mxu0 %v1267
      %v9334 = vpop.f32.mrb[0].mxu0
      %v9335 = vadd.f32 %v9293, %v9334
      %v9336 = vpop.f32.mrb[0].mxu0
      %v9337 = vadd.f32 %v9297, %v9336
      %v9338 = vpop.f32.mrb[0].mxu0
      %v9339 = vpop.f32.mrb[0].mxu0
      %9340 = vdwg.mxu0
      %v9341 = vsel %vm1265, %v9232, 0.0
      %9342 = vadd.xlane.f32.xlu0 %v9341
      %v9343 = vpop.xlane.xlu0 %9342
      %v9344 = vsel %vm1265, %v9233, 0.0
      %9345 = vadd.xlane.f32.xlu0 %v9344
      %v9346 = vpop.xlane.xlu0 %9345
      %v9347 = vsel %vm1265, %v9234, 0.0
      %9348 = vadd.xlane.f32.xlu0 %v9347
      %v9349 = vpop.xlane.xlu0 %9348
      %v9350 = vsel %vm1265, %v9235, 0.0
      %9351 = vadd.xlane.f32.xlu0 %v9350
      %v9352 = vpop.xlane.xlu0 %9351
      %v9353 = vsel %vm1265, %v9236, 0.0
      %9354 = vadd.xlane.f32.xlu0 %v9353
      %v9355 = vpop.xlane.xlu0 %9354
      %v9356 = vsel %vm1265, %v9237, 0.0
      %9357 = vadd.xlane.f32.xlu0 %v9356
      %v9358 = vpop.xlane.xlu0 %9357
      %v9359 = vsel %vm1265, %v9238, 0.0
      %9360 = vadd.xlane.f32.xlu0 %v9359
      %v9361 = vpop.xlane.xlu0 %9360
      %v9362 = vsel %vm1265, %v9239, 0.0
      %9363 = vadd.xlane.f32.xlu0 %v9362
      %v9364 = vpop.xlane.xlu0 %9363
      %v9365 = vmul.f32 %v9343, %v1539
      %v9366 = vmul.f32 %v9346, %v1539
      %v9367 = vmul.f32 %v9349, %v1539
      %v9368 = vmul.f32 %v9352, %v1539
      %v9369 = vmul.f32 %v9355, %v1539
      %v9370 = vmul.f32 %v9358, %v1539
      %v9371 = vmul.f32 %v9361, %v1539
      %v9372 = vmul.f32 %v9364, %v1539
      %v9373 = vsub.f32 %v9232, %v9365
      %v9374 = vsub.f32 %v9233, %v9366
      %v9375 = vsub.f32 %v9234, %v9367
      %v9376 = vsub.f32 %v9235, %v9368
      %v9377 = vsub.f32 %v9236, %v9369
      %v9378 = vsub.f32 %v9237, %v9370
      %v9379 = vsub.f32 %v9238, %v9371
      %v9380 = vsub.f32 %v9239, %v9372
      %v9381 = vmul.f32 %v9373, %v9373
      %v9382 = vmul.f32 %v9374, %v9374
      %v9383 = vmul.f32 %v9375, %v9375
      %v9384 = vmul.f32 %v9376, %v9376
      %v9385 = vmul.f32 %v9377, %v9377
      %v9386 = vmul.f32 %v9378, %v9378
      %v9387 = vmul.f32 %v9379, %v9379
      %v9388 = vmul.f32 %v9380, %v9380
      %v9389 = vsel %vm1265, %v9381, 0.0
      %9390 = vadd.xlane.f32.xlu0 %v9389
      %v9391 = vpop.xlane.xlu0 %9390
      %v9392 = vsel %vm1265, %v9382, 0.0
      %9393 = vadd.xlane.f32.xlu0 %v9392
      %v9394 = vpop.xlane.xlu0 %9393
      %v9395 = vsel %vm1265, %v9383, 0.0
      %9396 = vadd.xlane.f32.xlu0 %v9395
      %v9397 = vpop.xlane.xlu0 %9396
      %v9398 = vsel %vm1265, %v9384, 0.0
      %9399 = vadd.xlane.f32.xlu0 %v9398
      %v9400 = vpop.xlane.xlu0 %9399
      %v9401 = vsel %vm1265, %v9385, 0.0
      %9402 = vadd.xlane.f32.xlu0 %v9401
      %v9403 = vpop.xlane.xlu0 %9402
      %v9404 = vsel %vm1265, %v9386, 0.0
      %9405 = vadd.xlane.f32.xlu0 %v9404
      %v9406 = vpop.xlane.xlu0 %9405
      %v9407 = vsel %vm1265, %v9387, 0.0
      %9408 = vadd.xlane.f32.xlu0 %v9407
      %v9409 = vpop.xlane.xlu0 %9408
      %v9410 = vsel %vm1265, %v9388, 0.0
      %9411 = vadd.xlane.f32.xlu0 %v9410
      %v9412 = vpop.xlane.xlu0 %9411
      %v9413 = vmul.f32 %v9391, %v1539
      %v9414 = vmul.f32 %v9394, %v1539
      %v9415 = vmul.f32 %v9397, %v1539
      %v9416 = vmul.f32 %v9400, %v1539
      %v9417 = vmul.f32 %v9403, %v1539
      %v9418 = vmul.f32 %v9406, %v1539
      %v9419 = vmul.f32 %v9409, %v1539
      %v9420 = vmul.f32 %v9412, %v1539
      %v9421 = vadd.f32 %v9413, 1e-06
      %v9422 = vadd.f32 %v9414, 1e-06
      %v9423 = vadd.f32 %v9415, 1e-06
      %v9424 = vadd.f32 %v9416, 1e-06
      %v9425 = vadd.f32 %v9417, 1e-06
      %v9426 = vadd.f32 %v9418, 1e-06
      %v9427 = vadd.f32 %v9419, 1e-06
      %v9428 = vadd.f32 %v9420, 1e-06
      %v9429 = vrsqrt.pop %v9421
      %v9430 = vrsqrt.pop %v9422
      %v9431 = vrsqrt.pop %v9423
      %v9432 = vrsqrt.pop %v9424
      %v9433 = vrsqrt.pop %v9425
      %v9434 = vrsqrt.pop %v9426
      %v9435 = vrsqrt.pop %v9427
      %v9436 = vrsqrt.pop %v9428
      %v9437 = vmul.f32 %v9373, %v9429
      %v9438 = vmul.f32 %v9374, %v9430
      %v9439 = vmul.f32 %v9375, %v9431
      %v9440 = vmul.f32 %v9376, %v9432
      %v9441 = vmul.f32 %v9377, %v9433
      %v9442 = vmul.f32 %v9378, %v9434
      %v9443 = vmul.f32 %v9379, %v9435
      %v9444 = vmul.f32 %v9380, %v9436
      %v9445 = vadd.f32 %v9335, 1.0
      %v9446 = vlaneseq
      %v9447 = vshrl.u32 %v9446, 7
      %v9448 = vsub.s32 0, %v9447
      %v9449 = vrot.slane %v9445, %v9448
      %v9450 = vmul.f32 %v9437, %v9449
      %v9451 = vmul.f32 %v9438, %v9449
      %v9452 = vmul.f32 %v9439, %v9449
      %v9453 = vmul.f32 %v9440, %v9449
      %v9454 = vmul.f32 %v9441, %v9449
      %v9455 = vmul.f32 %v9442, %v9449
      %v9456 = vmul.f32 %v9443, %v9449
      %v9457 = vmul.f32 %v9444, %v9449
      %v9458 = vlaneseq
      %v9459 = vshrl.u32 %v9458, 7
      %v9460 = vsub.s32 0, %v9459
      %v9461 = vrot.slane %v9337, %v9460
      %v9462 = vadd.f32 %v9450, %v9461
      %v9463 = vadd.f32 %v9451, %v9461
      %v9464 = vadd.f32 %v9452, %v9461
      %v9465 = vadd.f32 %v9453, %v9461
      %v9466 = vadd.f32 %v9454, %v9461
      %v9467 = vadd.f32 %v9455, %v9461
      %v9468 = vadd.f32 %v9456, %v9461
      %v9469 = vadd.f32 %v9457, %v9461
      %v9470 = vpack.c.bf16 %v9462, %v9462
      %v9471 = vld [vmem:[%s20] sm:$0xf]
      %v9472 = vld [vmem:[%s20 + $0x4] sm:$0xf]
      %v9473 = vld [vmem:[%s20 + $0x8] sm:$0xf]
      %v9474 = vld [vmem:[%s20 + $0xc] sm:$0xf]
      %v9475 = vld [vmem:[%s20 + $0x10] sm:$0xf]
      %v9476 = vld [vmem:[%s20 + $0x14] sm:$0xf]
      %v9477 = vld [vmem:[%s20 + $0x18] sm:$0xf]
      %v9478 = vld [vmem:[%s20 + $0x1c] sm:$0xf]
      %v9479 = vpack.c.bf16 %v9463, %v9463
      %s9480 = scalar_lea.vmem %s20, 32
      %v9481 = vld [vmem:[%s9480] sm:$0xf]
      %v9482 = vld [vmem:[%s9480 + $0x4] sm:$0xf]
      %v9483 = vld [vmem:[%s9480 + $0x8] sm:$0xf]
      %v9484 = vld [vmem:[%s9480 + $0xc] sm:$0xf]
      %v9485 = vld [vmem:[%s9480 + $0x10] sm:$0xf]
      %v9486 = vld [vmem:[%s9480 + $0x14] sm:$0xf]
      %v9487 = vld [vmem:[%s9480 + $0x18] sm:$0xf]
      %v9488 = vld [vmem:[%s9480 + $0x1c] sm:$0xf]
      %v9497 = vunpack.c.l.b16 %v9481
      %v9498 = vunpack.c.l.b16 %v9482
      %v9499 = vunpack.c.l.b16 %v9483
      %v9500 = vunpack.c.l.b16 %v9484
      %v9501 = vunpack.c.l.b16 %v9485
      %v9502 = vunpack.c.l.b16 %v9486
      %v9503 = vunpack.c.l.b16 %v9487
      %v9504 = vunpack.c.l.b16 %v9488
      %v9505 = vpack.c.b16 %v9498, %v9497
      %v9506 = vpack.c.b16 %v9500, %v9499
      %v9507 = vpack.c.b16 %v9502, %v9501
      %v9508 = vpack.c.b16 %v9504, %v9503
      %v9514 = vsel %vm1265, %v9479, 0
      %9516 = vmatprep.subr.bf16.mxu0 0
      %9517 = vmatpush1.bf16.msra.mxu0 %v9505
      %9518 = vmatprep.subr.bf16.mxu0 0
      %9519 = vmatpush1.bf16.msra.mxu0 %v9506
      %9520 = vmatprep.subr.bf16.mxu0 0
      %9521 = vmatpush1.bf16.msra.mxu0 %v9507
      %9522 = vmatprep.subr.bf16.mxu0 0
      %9523 = vmatpush1.bf16.msra.mxu0 %v9508
      %9524 = vmatprep.subr.bf16.mxu0 0
      %9525 = vmatpush1.bf16.msra.mxu0 0
      %9526 = vmatprep.subr.bf16.mxu0 0
      %9527 = vmatpush1.bf16.msra.mxu0 0
      %9528 = vmatprep.subr.bf16.mxu0 0
      %9529 = vmatpush1.bf16.msra.mxu0 0
      %9530 = vmatprep.subr.bf16.mxu0 0
      %9531 = vmatpush1.bf16.msra.mxu0 0
      %9532 = vmatprep.subr.bf16.mxu0 0
      %9533 = vmatpush1.bf16.msra.mxu0 0
      %9534 = vmatprep.subr.bf16.mxu0 0
      %9535 = vmatpush1.bf16.msra.mxu0 0
      %9536 = vmatprep.subr.bf16.mxu0 0
      %9537 = vmatpush1.bf16.msra.mxu0 0
      %9538 = vmatprep.subr.bf16.mxu0 0
      %9539 = vmatpush1.bf16.msra.mxu0 0
      %9540 = vmatprep.subr.bf16.mxu0 0
      %9541 = vmatpush1.bf16.msra.mxu0 0
      %9542 = vmatprep.subr.bf16.mxu0 0
      %9543 = vmatpush1.bf16.msra.mxu0 0
      %9544 = vmatprep.subr.bf16.mxu0 0
      %9545 = vmatpush1.bf16.msra.mxu0 0
      %9546 = vmatprep.subr.bf16.mxu0 0
      %9547 = vmatpush1.bf16.msra.mxu0 0
      %9548 = vmatprep.mubr.bf16.mxu0 0
      %9549 = vmatmul.mubr.bf16.gmra.mrb[0].mxu0 %v9514
      %v9550 = vpop.f32.mrb[0].mxu0
      %v9551 = vadd.f32 0.0, %v9550
      %v9552 = vpop.f32.mrb[0].mxu0
      %v9553 = vpop.f32.mrb[0].mxu0
      %v9554 = vpop.f32.mrb[0].mxu0
      %9555 = vdwg.mxu0
      %v9564 = vunpack.c.l.b16 %v9471
      %v9565 = vunpack.c.l.b16 %v9472
      %v9566 = vunpack.c.l.b16 %v9473
      %v9567 = vunpack.c.l.b16 %v9474
      %v9568 = vunpack.c.l.b16 %v9475
      %v9569 = vunpack.c.l.b16 %v9476
      %v9570 = vunpack.c.l.b16 %v9477
      %v9571 = vunpack.c.l.b16 %v9478
      %v9572 = vpack.c.b16 %v9565, %v9564
      %v9573 = vpack.c.b16 %v9567, %v9566
      %v9574 = vpack.c.b16 %v9569, %v9568
      %v9575 = vpack.c.b16 %v9571, %v9570
      %v9581 = vsel %vm1265, %v9470, 0
      %9583 = vmatprep.subr.bf16.mxu0 0
      %9584 = vmatpush1.bf16.msra.mxu0 %v9572
      %9585 = vmatprep.subr.bf16.mxu0 0
      %9586 = vmatpush1.bf16.msra.mxu0 %v9573
      %9587 = vmatprep.subr.bf16.mxu0 0
      %9588 = vmatpush1.bf16.msra.mxu0 %v9574
      %9589 = vmatprep.subr.bf16.mxu0 0
      %9590 = vmatpush1.bf16.msra.mxu0 %v9575
      %9591 = vmatprep.subr.bf16.mxu0 0
      %9592 = vmatpush1.bf16.msra.mxu0 0
      %9593 = vmatprep.subr.bf16.mxu0 0
      %9594 = vmatpush1.bf16.msra.mxu0 0
      %9595 = vmatprep.subr.bf16.mxu0 0
      %9596 = vmatpush1.bf16.msra.mxu0 0
      %9597 = vmatprep.subr.bf16.mxu0 0
      %9598 = vmatpush1.bf16.msra.mxu0 0
      %9599 = vmatprep.subr.bf16.mxu0 0
      %9600 = vmatpush1.bf16.msra.mxu0 0
      %9601 = vmatprep.subr.bf16.mxu0 0
      %9602 = vmatpush1.bf16.msra.mxu0 0
      %9603 = vmatprep.subr.bf16.mxu0 0
      %9604 = vmatpush1.bf16.msra.mxu0 0
      %9605 = vmatprep.subr.bf16.mxu0 0
      %9606 = vmatpush1.bf16.msra.mxu0 0
      %9607 = vmatprep.subr.bf16.mxu0 0
      %9608 = vmatpush1.bf16.msra.mxu0 0
      %9609 = vmatprep.subr.bf16.mxu0 0
      %9610 = vmatpush1.bf16.msra.mxu0 0
      %9611 = vmatprep.subr.bf16.mxu0 0
      %9612 = vmatpush1.bf16.msra.mxu0 0
      %9613 = vmatprep.subr.bf16.mxu0 0
      %9614 = vmatpush1.bf16.msra.mxu0 0
      %9615 = vmatprep.mubr.bf16.mxu0 0
      %9616 = vmatmul.mubr.bf16.gmra.mrb[0].mxu0 %v9581
      %v9617 = vpop.f32.mrb[0].mxu0
      %v9618 = vadd.f32 %v9551, %v9617
      %v9619 = vpop.f32.mrb[0].mxu0
      %v9620 = vpop.f32.mrb[0].mxu0
      %v9621 = vpop.f32.mrb[0].mxu0
      %9622 = vdwg.mxu0
      %v9623 = vpack.c.bf16 %v9464, %v9464
      %s9624 = scalar_lea.vmem %s20, 64
      %v9625 = vld [vmem:[%s9624] sm:$0xf]
      %v9626 = vld [vmem:[%s9624 + $0x4] sm:$0xf]
      %v9627 = vld [vmem:[%s9624 + $0x8] sm:$0xf]
      %v9628 = vld [vmem:[%s9624 + $0xc] sm:$0xf]
      %v9629 = vld [vmem:[%s9624 + $0x10] sm:$0xf]
      %v9630 = vld [vmem:[%s9624 + $0x14] sm:$0xf]
      %v9631 = vld [vmem:[%s9624 + $0x18] sm:$0xf]
      %v9632 = vld [vmem:[%s9624 + $0x1c] sm:$0xf]
      %v9641 = vunpack.c.l.b16 %v9625
      %v9642 = vunpack.c.l.b16 %v9626
      %v9643 = vunpack.c.l.b16 %v9627
      %v9644 = vunpack.c.l.b16 %v9628
      %v9645 = vunpack.c.l.b16 %v9629
      %v9646 = vunpack.c.l.b16 %v9630
      %v9647 = vunpack.c.l.b16 %v9631
      %v9648 = vunpack.c.l.b16 %v9632
      %v9649 = vpack.c.b16 %v9642, %v9641
      %v9650 = vpack.c.b16 %v9644, %v9643
      %v9651 = vpack.c.b16 %v9646, %v9645
      %v9652 = vpack.c.b16 %v9648, %v9647
      %v9658 = vsel %vm1265, %v9623, 0
      %9660 = vmatprep.subr.bf16.mxu0 0
      %9661 = vmatpush1.bf16.msra.mxu0 %v9649
      %9662 = vmatprep.subr.bf16.mxu0 0
      %9663 = vmatpush1.bf16.msra.mxu0 %v9650
      %9664 = vmatprep.subr.bf16.mxu0 0
      %9665 = vmatpush1.bf16.msra.mxu0 %v9651
      %9666 = vmatprep.subr.bf16.mxu0 0
      %9667 = vmatpush1.bf16.msra.mxu0 %v9652
      %9668 = vmatprep.subr.bf16.mxu0 0
      %9669 = vmatpush1.bf16.msra.mxu0 0
      %9670 = vmatprep.subr.bf16.mxu0 0
      %9671 = vmatpush1.bf16.msra.mxu0 0
      %9672 = vmatprep.subr.bf16.mxu0 0
      %9673 = vmatpush1.bf16.msra.mxu0 0
      %9674 = vmatprep.subr.bf16.mxu0 0
      %9675 = vmatpush1.bf16.msra.mxu0 0
      %9676 = vmatprep.subr.bf16.mxu0 0
      %9677 = vmatpush1.bf16.msra.mxu0 0
      %9678 = vmatprep.subr.bf16.mxu0 0
      %9679 = vmatpush1.bf16.msra.mxu0 0
      %9680 = vmatprep.subr.bf16.mxu0 0
      %9681 = vmatpush1.bf16.msra.mxu0 0
      %9682 = vmatprep.subr.bf16.mxu0 0
      %9683 = vmatpush1.bf16.msra.mxu0 0
      %9684 = vmatprep.subr.bf16.mxu0 0
      %9685 = vmatpush1.bf16.msra.mxu0 0
      %9686 = vmatprep.subr.bf16.mxu0 0
      %9687 = vmatpush1.bf16.msra.mxu0 0
      %9688 = vmatprep.subr.bf16.mxu0 0
      %9689 = vmatpush1.bf16.msra.mxu0 0
      %9690 = vmatprep.subr.bf16.mxu0 0
      %9691 = vmatpush1.bf16.msra.mxu0 0
      %9692 = vmatprep.mubr.bf16.mxu0 0
      %9693 = vmatmul.mubr.bf16.gmra.mrb[0].mxu0 %v9658
      %v9694 = vpop.f32.mrb[0].mxu0
      %v9695 = vadd.f32 0.0, %v9694
      %v9696 = vpop.f32.mrb[0].mxu0
      %v9697 = vpop.f32.mrb[0].mxu0
      %v9698 = vpop.f32.mrb[0].mxu0
      %9699 = vdwg.mxu0
      %v9700 = vadd.f32 %v9618, %v9695
      %v9701 = vpack.c.bf16 %v9465, %v9465
      %s9702 = scalar_lea.vmem %s20, 96
      %v9703 = vld [vmem:[%s9702] sm:$0xf]
      %v9704 = vld [vmem:[%s9702 + $0x4] sm:$0xf]
      %v9705 = vld [vmem:[%s9702 + $0x8] sm:$0xf]
      %v9706 = vld [vmem:[%s9702 + $0xc] sm:$0xf]
      %v9707 = vld [vmem:[%s9702 + $0x10] sm:$0xf]
      %v9708 = vld [vmem:[%s9702 + $0x14] sm:$0xf]
      %v9709 = vld [vmem:[%s9702 + $0x18] sm:$0xf]
      %v9710 = vld [vmem:[%s9702 + $0x1c] sm:$0xf]
      %v9719 = vunpack.c.l.b16 %v9703
      %v9720 = vunpack.c.l.b16 %v9704
      %v9721 = vunpack.c.l.b16 %v9705
      %v9722 = vunpack.c.l.b16 %v9706
      %v9723 = vunpack.c.l.b16 %v9707
      %v9724 = vunpack.c.l.b16 %v9708
      %v9725 = vunpack.c.l.b16 %v9709
      %v9726 = vunpack.c.l.b16 %v9710
      %v9727 = vpack.c.b16 %v9720, %v9719
      %v9728 = vpack.c.b16 %v9722, %v9721
      %v9729 = vpack.c.b16 %v9724, %v9723
      %v9730 = vpack.c.b16 %v9726, %v9725
      %v9736 = vsel %vm1265, %v9701, 0
      %9738 = vmatprep.subr.bf16.mxu0 0
      %9739 = vmatpush1.bf16.msra.mxu0 %v9727
      %9740 = vmatprep.subr.bf16.mxu0 0
      %9741 = vmatpush1.bf16.msra.mxu0 %v9728
      %9742 = vmatprep.subr.bf16.mxu0 0
      %9743 = vmatpush1.bf16.msra.mxu0 %v9729
      %9744 = vmatprep.subr.bf16.mxu0 0
      %9745 = vmatpush1.bf16.msra.mxu0 %v9730
      %9746 = vmatprep.subr.bf16.mxu0 0
      %9747 = vmatpush1.bf16.msra.mxu0 0
      %9748 = vmatprep.subr.bf16.mxu0 0
      %9749 = vmatpush1.bf16.msra.mxu0 0
      %9750 = vmatprep.subr.bf16.mxu0 0
      %9751 = vmatpush1.bf16.msra.mxu0 0
      %9752 = vmatprep.subr.bf16.mxu0 0
      %9753 = vmatpush1.bf16.msra.mxu0 0
      %9754 = vmatprep.subr.bf16.mxu0 0
      %9755 = vmatpush1.bf16.msra.mxu0 0
      %9756 = vmatprep.subr.bf16.mxu0 0
      %9757 = vmatpush1.bf16.msra.mxu0 0
      %9758 = vmatprep.subr.bf16.mxu0 0
      %9759 = vmatpush1.bf16.msra.mxu0 0
      %9760 = vmatprep.subr.bf16.mxu0 0
      %9761 = vmatpush1.bf16.msra.mxu0 0
      %9762 = vmatprep.subr.bf16.mxu0 0
      %9763 = vmatpush1.bf16.msra.mxu0 0
      %9764 = vmatprep.subr.bf16.mxu0 0
      %9765 = vmatpush1.bf16.msra.mxu0 0
      %9766 = vmatprep.subr.bf16.mxu0 0
      %9767 = vmatpush1.bf16.msra.mxu0 0
      %9768 = vmatprep.subr.bf16.mxu0 0
      %9769 = vmatpush1.bf16.msra.mxu0 0
      %9770 = vmatprep.mubr.bf16.mxu0 0
      %9771 = vmatmul.mubr.bf16.gmra.mrb[0].mxu0 %v9736
      %v9772 = vpop.f32.mrb[0].mxu0
      %v9773 = vadd.f32 0.0, %v9772
      %v9774 = vpop.f32.mrb[0].mxu0
      %v9775 = vpop.f32.mrb[0].mxu0
      %v9776 = vpop.f32.mrb[0].mxu0
      %9777 = vdwg.mxu0
      %v9778 = vadd.f32 %v9700, %v9773
      %v9779 = vpack.c.bf16 %v9466, %v9466
      %s9780 = scalar_lea.vmem %s20, 128
      %v9781 = vld [vmem:[%s9780] sm:$0xf]
      %v9782 = vld [vmem:[%s9780 + $0x4] sm:$0xf]
      %v9783 = vld [vmem:[%s9780 + $0x8] sm:$0xf]
      %v9784 = vld [vmem:[%s9780 + $0xc] sm:$0xf]
      %v9785 = vld [vmem:[%s9780 + $0x10] sm:$0xf]
      %v9786 = vld [vmem:[%s9780 + $0x14] sm:$0xf]
      %v9787 = vld [vmem:[%s9780 + $0x18] sm:$0xf]
      %v9788 = vld [vmem:[%s9780 + $0x1c] sm:$0xf]
      %v9797 = vunpack.c.l.b16 %v9781
      %v9798 = vunpack.c.l.b16 %v9782
      %v9799 = vunpack.c.l.b16 %v9783
      %v9800 = vunpack.c.l.b16 %v9784
      %v9801 = vunpack.c.l.b16 %v9785
      %v9802 = vunpack.c.l.b16 %v9786
      %v9803 = vunpack.c.l.b16 %v9787
      %v9804 = vunpack.c.l.b16 %v9788
      %v9805 = vpack.c.b16 %v9798, %v9797
      %v9806 = vpack.c.b16 %v9800, %v9799
      %v9807 = vpack.c.b16 %v9802, %v9801
      %v9808 = vpack.c.b16 %v9804, %v9803
      %v9814 = vsel %vm1265, %v9779, 0
      %9816 = vmatprep.subr.bf16.mxu0 0
      %9817 = vmatpush1.bf16.msra.mxu0 %v9805
      %9818 = vmatprep.subr.bf16.mxu0 0
      %9819 = vmatpush1.bf16.msra.mxu0 %v9806
      %9820 = vmatprep.subr.bf16.mxu0 0
      %9821 = vmatpush1.bf16.msra.mxu0 %v9807
      %9822 = vmatprep.subr.bf16.mxu0 0
      %9823 = vmatpush1.bf16.msra.mxu0 %v9808
      %9824 = vmatprep.subr.bf16.mxu0 0
      %9825 = vmatpush1.bf16.msra.mxu0 0
      %9826 = vmatprep.subr.bf16.mxu0 0
      %9827 = vmatpush1.bf16.msra.mxu0 0
      %9828 = vmatprep.subr.bf16.mxu0 0
      %9829 = vmatpush1.bf16.msra.mxu0 0
      %9830 = vmatprep.subr.bf16.mxu0 0
      %9831 = vmatpush1.bf16.msra.mxu0 0
      %9832 = vmatprep.subr.bf16.mxu0 0
      %9833 = vmatpush1.bf16.msra.mxu0 0
      %9834 = vmatprep.subr.bf16.mxu0 0
      %9835 = vmatpush1.bf16.msra.mxu0 0
      %9836 = vmatprep.subr.bf16.mxu0 0
      %9837 = vmatpush1.bf16.msra.mxu0 0
      %9838 = vmatprep.subr.bf16.mxu0 0
      %9839 = vmatpush1.bf16.msra.mxu0 0
      %9840 = vmatprep.subr.bf16.mxu0 0
      %9841 = vmatpush1.bf16.msra.mxu0 0
      %9842 = vmatprep.subr.bf16.mxu0 0
      %9843 = vmatpush1.bf16.msra.mxu0 0
      %9844 = vmatprep.subr.bf16.mxu0 0
      %9845 = vmatpush1.bf16.msra.mxu0 0
      %9846 = vmatprep.subr.bf16.mxu0 0
      %9847 = vmatpush1.bf16.msra.mxu0 0
      %9848 = vmatprep.mubr.bf16.mxu0 0
      %9849 = vmatmul.mubr.bf16.gmra.mrb[0].mxu0 %v9814
      %v9850 = vpop.f32.mrb[0].mxu0
      %v9851 = vadd.f32 0.0, %v9850
      %v9852 = vpop.f32.mrb[0].mxu0
      %v9853 = vpop.f32.mrb[0].mxu0
      %v9854 = vpop.f32.mrb[0].mxu0
      %9855 = vdwg.mxu0
      %v9856 = vadd.f32 %v9778, %v9851
      %v9857 = vpack.c.bf16 %v9467, %v9467
      %s9858 = scalar_lea.vmem %s20, 160
      %v9859 = vld [vmem:[%s9858] sm:$0xf]
      %v9860 = vld [vmem:[%s9858 + $0x4] sm:$0xf]
      %v9861 = vld [vmem:[%s9858 + $0x8] sm:$0xf]
      %v9862 = vld [vmem:[%s9858 + $0xc] sm:$0xf]
      %v9863 = vld [vmem:[%s9858 + $0x10] sm:$0xf]
      %v9864 = vld [vmem:[%s9858 + $0x14] sm:$0xf]
      %v9865 = vld [vmem:[%s9858 + $0x18] sm:$0xf]
      %v9866 = vld [vmem:[%s9858 + $0x1c] sm:$0xf]
      %v9875 = vunpack.c.l.b16 %v9859
      %v9876 = vunpack.c.l.b16 %v9860
      %v9877 = vunpack.c.l.b16 %v9861
      %v9878 = vunpack.c.l.b16 %v9862
      %v9879 = vunpack.c.l.b16 %v9863
      %v9880 = vunpack.c.l.b16 %v9864
      %v9881 = vunpack.c.l.b16 %v9865
      %v9882 = vunpack.c.l.b16 %v9866
      %v9883 = vpack.c.b16 %v9876, %v9875
      %v9884 = vpack.c.b16 %v9878, %v9877
      %v9885 = vpack.c.b16 %v9880, %v9879
      %v9886 = vpack.c.b16 %v9882, %v9881
      %v9892 = vsel %vm1265, %v9857, 0
      %9894 = vmatprep.subr.bf16.mxu0 0
      %9895 = vmatpush1.bf16.msra.mxu0 %v9883
      %9896 = vmatprep.subr.bf16.mxu0 0
      %9897 = vmatpush1.bf16.msra.mxu0 %v9884
      %9898 = vmatprep.subr.bf16.mxu0 0
      %9899 = vmatpush1.bf16.msra.mxu0 %v9885
      %9900 = vmatprep.subr.bf16.mxu0 0
      %9901 = vmatpush1.bf16.msra.mxu0 %v9886
      %9902 = vmatprep.subr.bf16.mxu0 0
      %9903 = vmatpush1.bf16.msra.mxu0 0
      %9904 = vmatprep.subr.bf16.mxu0 0
      %9905 = vmatpush1.bf16.msra.mxu0 0
      %9906 = vmatprep.subr.bf16.mxu0 0
      %9907 = vmatpush1.bf16.msra.mxu0 0
      %9908 = vmatprep.subr.bf16.mxu0 0
      %9909 = vmatpush1.bf16.msra.mxu0 0
      %9910 = vmatprep.subr.bf16.mxu0 0
      %9911 = vmatpush1.bf16.msra.mxu0 0
      %9912 = vmatprep.subr.bf16.mxu0 0
      %9913 = vmatpush1.bf16.msra.mxu0 0
      %9914 = vmatprep.subr.bf16.mxu0 0
      %9915 = vmatpush1.bf16.msra.mxu0 0
      %9916 = vmatprep.subr.bf16.mxu0 0
      %9917 = vmatpush1.bf16.msra.mxu0 0
      %9918 = vmatprep.subr.bf16.mxu0 0
      %9919 = vmatpush1.bf16.msra.mxu0 0
      %9920 = vmatprep.subr.bf16.mxu0 0
      %9921 = vmatpush1.bf16.msra.mxu0 0
      %9922 = vmatprep.subr.bf16.mxu0 0
      %9923 = vmatpush1.bf16.msra.mxu0 0
      %9924 = vmatprep.subr.bf16.mxu0 0
      %9925 = vmatpush1.bf16.msra.mxu0 0
      %9926 = vmatprep.mubr.bf16.mxu0 0
      %9927 = vmatmul.mubr.bf16.gmra.mrb[0].mxu0 %v9892
      %v9928 = vpop.f32.mrb[0].mxu0
      %v9929 = vadd.f32 0.0, %v9928
      %v9930 = vpop.f32.mrb[0].mxu0
      %v9931 = vpop.f32.mrb[0].mxu0
      %v9932 = vpop.f32.mrb[0].mxu0
      %9933 = vdwg.mxu0
      %v9934 = vadd.f32 %v9856, %v9929
      %v9935 = vpack.c.bf16 %v9468, %v9468
      %s9936 = scalar_lea.vmem %s20, 192
      %v9937 = vld [vmem:[%s9936] sm:$0xf]
      %v9938 = vld [vmem:[%s9936 + $0x4] sm:$0xf]
      %v9939 = vld [vmem:[%s9936 + $0x8] sm:$0xf]
      %v9940 = vld [vmem:[%s9936 + $0xc] sm:$0xf]
      %v9941 = vld [vmem:[%s9936 + $0x10] sm:$0xf]
      %v9942 = vld [vmem:[%s9936 + $0x14] sm:$0xf]
      %v9943 = vld [vmem:[%s9936 + $0x18] sm:$0xf]
      %v9944 = vld [vmem:[%s9936 + $0x1c] sm:$0xf]
      %v9953 = vunpack.c.l.b16 %v9937
      %v9954 = vunpack.c.l.b16 %v9938
      %v9955 = vunpack.c.l.b16 %v9939
      %v9956 = vunpack.c.l.b16 %v9940
      %v9957 = vunpack.c.l.b16 %v9941
      %v9958 = vunpack.c.l.b16 %v9942
      %v9959 = vunpack.c.l.b16 %v9943
      %v9960 = vunpack.c.l.b16 %v9944
      %v9961 = vpack.c.b16 %v9954, %v9953
      %v9962 = vpack.c.b16 %v9956, %v9955
      %v9963 = vpack.c.b16 %v9958, %v9957
      %v9964 = vpack.c.b16 %v9960, %v9959
      %v9970 = vsel %vm1265, %v9935, 0
      %9972 = vmatprep.subr.bf16.mxu0 0
      %9973 = vmatpush1.bf16.msra.mxu0 %v9961
      %9974 = vmatprep.subr.bf16.mxu0 0
      %9975 = vmatpush1.bf16.msra.mxu0 %v9962
      %9976 = vmatprep.subr.bf16.mxu0 0
      %9977 = vmatpush1.bf16.msra.mxu0 %v9963
      %9978 = vmatprep.subr.bf16.mxu0 0
      %9979 = vmatpush1.bf16.msra.mxu0 %v9964
      %9980 = vmatprep.subr.bf16.mxu0 0
      %9981 = vmatpush1.bf16.msra.mxu0 0
      %9982 = vmatprep.subr.bf16.mxu0 0
      %9983 = vmatpush1.bf16.msra.mxu0 0
      %9984 = vmatprep.subr.bf16.mxu0 0
      %9985 = vmatpush1.bf16.msra.mxu0 0
      %9986 = vmatprep.subr.bf16.mxu0 0
      %9987 = vmatpush1.bf16.msra.mxu0 0
      %9988 = vmatprep.subr.bf16.mxu0 0
      %9989 = vmatpush1.bf16.msra.mxu0 0
      %9990 = vmatprep.subr.bf16.mxu0 0
      %9991 = vmatpush1.bf16.msra.mxu0 0
      %9992 = vmatprep.subr.bf16.mxu0 0
      %9993 = vmatpush1.bf16.msra.mxu0 0
      %9994 = vmatprep.subr.bf16.mxu0 0
      %9995 = vmatpush1.bf16.msra.mxu0 0
      %9996 = vmatprep.subr.bf16.mxu0 0
      %9997 = vmatpush1.bf16.msra.mxu0 0
      %9998 = vmatprep.subr.bf16.mxu0 0
      %9999 = vmatpush1.bf16.msra.mxu0 0
      %10000 = vmatprep.subr.bf16.mxu0 0
      %10001 = vmatpush1.bf16.msra.mxu0 0
      %10002 = vmatprep.subr.bf16.mxu0 0
      %10003 = vmatpush1.bf16.msra.mxu0 0
      %10004 = vmatprep.mubr.bf16.mxu0 0
      %10005 = vmatmul.mubr.bf16.gmra.mrb[0].mxu0 %v9970
      %v10006 = vpop.f32.mrb[0].mxu0
      %v10007 = vadd.f32 0.0, %v10006
      %v10008 = vpop.f32.mrb[0].mxu0
      %v10009 = vpop.f32.mrb[0].mxu0
      %v10010 = vpop.f32.mrb[0].mxu0
      %10011 = vdwg.mxu0
      %v10012 = vadd.f32 %v9934, %v10007
      %v10013 = vpack.c.bf16 %v9469, %v9469
      %s10014 = scalar_lea.vmem %s20, 224
      %v10015 = vld [vmem:[%s10014] sm:$0xf]
      %v10016 = vld [vmem:[%s10014 + $0x4] sm:$0xf]
      %v10017 = vld [vmem:[%s10014 + $0x8] sm:$0xf]
      %v10018 = vld [vmem:[%s10014 + $0xc] sm:$0xf]
      %v10019 = vld [vmem:[%s10014 + $0x10] sm:$0xf]
      %v10020 = vld [vmem:[%s10014 + $0x14] sm:$0xf]
      %v10021 = vld [vmem:[%s10014 + $0x18] sm:$0xf]
      %v10022 = vld [vmem:[%s10014 + $0x1c] sm:$0xf]
      %v10031 = vunpack.c.l.b16 %v10015
      %v10032 = vunpack.c.l.b16 %v10016
      %v10033 = vunpack.c.l.b16 %v10017
      %v10034 = vunpack.c.l.b16 %v10018
      %v10035 = vunpack.c.l.b16 %v10019
      %v10036 = vunpack.c.l.b16 %v10020
      %v10037 = vunpack.c.l.b16 %v10021
      %v10038 = vunpack.c.l.b16 %v10022
      %v10039 = vpack.c.b16 %v10032, %v10031
      %v10040 = vpack.c.b16 %v10034, %v10033
      %v10041 = vpack.c.b16 %v10036, %v10035
      %v10042 = vpack.c.b16 %v10038, %v10037
      %v10048 = vsel %vm1265, %v10013, 0
      %10050 = vmatprep.subr.bf16.mxu0 0
      %10051 = vmatpush1.bf16.msra.mxu0 %v10039
      %10052 = vmatprep.subr.bf16.mxu0 0
      %10053 = vmatpush1.bf16.msra.mxu0 %v10040
      %10054 = vmatprep.subr.bf16.mxu0 0
      %10055 = vmatpush1.bf16.msra.mxu0 %v10041
      %10056 = vmatprep.subr.bf16.mxu0 0
      %10057 = vmatpush1.bf16.msra.mxu0 %v10042
      %10058 = vmatprep.subr.bf16.mxu0 0
      %10059 = vmatpush1.bf16.msra.mxu0 0
      %10060 = vmatprep.subr.bf16.mxu0 0
      %10061 = vmatpush1.bf16.msra.mxu0 0
      %10062 = vmatprep.subr.bf16.mxu0 0
      %10063 = vmatpush1.bf16.msra.mxu0 0
      %10064 = vmatprep.subr.bf16.mxu0 0
      %10065 = vmatpush1.bf16.msra.mxu0 0
      %10066 = vmatprep.subr.bf16.mxu0 0
      %10067 = vmatpush1.bf16.msra.mxu0 0
      %10068 = vmatprep.subr.bf16.mxu0 0
      %10069 = vmatpush1.bf16.msra.mxu0 0
      %10070 = vmatprep.subr.bf16.mxu0 0
      %10071 = vmatpush1.bf16.msra.mxu0 0
      %10072 = vmatprep.subr.bf16.mxu0 0
      %10073 = vmatpush1.bf16.msra.mxu0 0
      %10074 = vmatprep.subr.bf16.mxu0 0
      %10075 = vmatpush1.bf16.msra.mxu0 0
      %10076 = vmatprep.subr.bf16.mxu0 0
      %10077 = vmatpush1.bf16.msra.mxu0 0
      %10078 = vmatprep.subr.bf16.mxu0 0
      %10079 = vmatpush1.bf16.msra.mxu0 0
      %10080 = vmatprep.subr.bf16.mxu0 0
      %10081 = vmatpush1.bf16.msra.mxu0 0
      %10082 = vmatprep.mubr.bf16.mxu0 0
      %10083 = vmatmul.mubr.bf16.gmra.mrb[0].mxu0 %v10048
      %v10084 = vpop.f32.mrb[0].mxu0
      %v10085 = vadd.f32 0.0, %v10084
      %v10086 = vpop.f32.mrb[0].mxu0
      %v10087 = vpop.f32.mrb[0].mxu0
      %v10088 = vpop.f32.mrb[0].mxu0
      %10089 = vdwg.mxu0
      %v10090 = vadd.f32 %v10012, %v10085
      %v10091 = vld [vmem:[%s21] sm:$0x1]
      %v10093 = vlaneseq
      %v10094 = vshrl.u32 %v10093, 7
      %v10095 = vsub.s32 0, %v10094
      %v10096 = vrot.slane %v10091, %v10095
      %v10098 = vadd.f32 %v10090, %v10096
      %10099 = vst [vmem:[%s712] sm:$0xff] %v10098
      %p10100 = scmp.lt.s32.totalorder %s33, 1
      %s10101 = scalar_select %p10100, %s33, 1
      %s10102 = smul.addr %s10101, 8
      %s10103 = scalar_lea.vmem %s22, %s10102
      // Predicated region
      $region109: #{stable_diffusion_wrapper_forward.1} parent=107 // pred_check
        %p10104 = pneg %p528
      $region110: #{stable_diffusion_wrapper_forward.1} parent=107 // pred_check_branch
        %10106 = sbr.rel (%p10104) target = $region112
      $region111: #{stable_diffusion_wrapper_forward.1} parent=107 // pred_region
        _
      $region112: #{stable_diffusion_wrapper_forward.1} parent=107 // pred_fallthru
        _
    $region108: #{stable_diffusion_wrapper_forward.1} parent=5 // pred_fallthru
      _
    %p10107 = scmp.le.s32.totalorder 2, %s28
    // Predicated region
    $region113: #{stable_diffusion_wrapper_forward.1} parent=5 // pred_check
      %p10108 = pneg %p10107
    $region114: #{stable_diffusion_wrapper_forward.1} parent=5 // pred_check_branch
      %10110 = sbr.rel (%p10108) target = $region116
    $region115: #{stable_diffusion_wrapper_forward.1} parent=5 // pred_region
      %s10111 = ssub.s32 %s28, 2
      // Predicated region
      $region117: #{stable_diffusion_wrapper_forward.1} parent=115 // pred_check
        %p10112 = pneg %p534
      $region118: #{stable_diffusion_wrapper_forward.1} parent=115 // pred_check_branch
        %10114 = sbr.rel (%p10112) target = $region120
      $region119: #{stable_diffusion_wrapper_forward.1} parent=115 // pred_region
        %p10115 = scmp.lt.s32.totalorder %s34, 1
        %s10116 = scalar_select %p10115, %s34, 1
        %s10117 = smul.addr %s10116, 8
        %s10118 = scalar_lea.vmem %s22, %s10117
      $region120: #{stable_diffusion_wrapper_forward.1} parent=115 // pred_fallthru
        _
    $region116: #{stable_diffusion_wrapper_forward.1} parent=5 // pred_fallthru
      _
  $region6: #{stable_diffusion_wrapper_forward.1} parent=0 // loop_footer
    %s32 = sadd.s32 1, %s28
  $region7: #{stable_diffusion_wrapper_forward.1} parent=0 // loop_footer_branch
    %27 = sbr.rel target = $region3
  $region8: #{stable_diffusion_wrapper_forward.1} parent=0 // loop_exit
    _

</llo_original>
